<compile_context>
chip_gen: v5e
topology: v5e:2x2
jax: 0.10.0
libtpu: 0.0.40
codegen_flags: <defaults>
</compile_context>

<pallas_src>
import math

import jax
import jax.numpy as jnp
import numpy as np
from jax.experimental import pallas as pl
from jax.experimental.pallas import tpu as pltpu

# ---------------- configuration (small shapes) ----------------
B = 2            # batch
S = 8            # target sequence length
S_MEM = 16       # source / memory sequence length
D = 32           # model dim
H = 4            # attention heads
DK = D // H      # per-head dim
DFF = 64         # feed-forward hidden dim
N_LAYERS = 2     # number of decoder layers
EPS = 1e-6
NEG_INF = -1e9


# ============================ Pallas kernel ============================

def _layer_norm(x, g, b):
    # Matches the PyTorch module: mean over last dim, unbiased std, then
    # a_2 * (x - mean) / sqrt(std + eps) + b_2   (note: sqrt of (std + eps)).
    mean = jnp.mean(x, axis=-1, keepdims=True)
    var = jnp.sum((x - mean) ** 2, axis=-1, keepdims=True) * (1.0 / (x.shape[-1] - 1))
    std = jnp.sqrt(var)
    inv = jax.lax.rsqrt(std + EPS)              # EUP rsqrt instead of sqrt + divide
    return g * ((x - mean) * inv) + b


def _attention(q_flat, k_flat, v_flat, Tq, Tk, biases, w_o, b_o, scale):
    """Masked multi-head attention core.

    q_flat: (B*Tq, D), k_flat/v_flat: (B*Tk, D) — heads concatenated on lanes.
    biases: list of B additive masks broadcastable to (H, Tq, Tk).
    w_o: (D, D) output projection (heads merged inside the K=32 contraction).
    Returns (B*Tq, D).
    """
    ctx_rows = []
    for b in range(B):                           # per-batch only for masked softmax
        qh = q_flat[b * Tq:(b + 1) * Tq].reshape(Tq, H, DK).transpose(1, 0, 2)  # (H,Tq,DK)
        kh = k_flat[b * Tk:(b + 1) * Tk].reshape(Tk, H, DK).transpose(1, 0, 2)  # (H,Tk,DK)
        vh = v_flat[b * Tk:(b + 1) * Tk].reshape(Tk, H, DK).transpose(1, 0, 2)  # (H,Tk,DK)

        s = jnp.einsum('hqd,hkd->hqk', qh, kh,
                       preferred_element_type=jnp.float32) * scale + biases[b]
        m = jnp.max(s, axis=-1, keepdims=True)
        e = jnp.exp(s - m)
        p = e * pl.reciprocal(jnp.sum(e, axis=-1, keepdims=True), approx=True)  # EUP
        ctx = jnp.einsum('hqk,hkd->hqd', p, vh,
                         preferred_element_type=jnp.float32)                    # (H,Tq,DK)
        ctx_rows.append(ctx.transpose(1, 0, 2).reshape(Tq, D))                  # heads->lanes

    ctx_all = jnp.concatenate(ctx_rows, axis=0)                                 # (B*Tq, D)
    # concat(heads) @ Wo — single lane-dense K=32 matmul merges the heads.
    return jnp.dot(ctx_all, w_o, preferred_element_type=jnp.float32) + b_o


def decoder_kernel(x_ref, mem_ref, tgt_bias_ref, src_bias_ref,
                   w_attn_ref, w_ff1_ref, b_ff1_ref, w_ff2_ref,
                   vec_ref, lnf_ref, o_ref):
    scale = 1.0 / math.sqrt(DK)

    # Fold batch into the sublane axis for all batch-independent math.
    x = x_ref[...].reshape(B * S, D)             # (16, 32)
    mem = mem_ref[...].reshape(B * S_MEM, D)     # (32, 32)

    # Additive mask biases (0 / -1e9), hoisted once and reused by every layer.
    tgt_biases = [tgt_bias_ref[b][None] for b in range(B)]    # each (1, S, S)
    src_biases = [src_bias_ref[b][None] for b in range(B)]    # each (1, 1, S_MEM)

    for l in range(N_LAYERS):                    # static unroll over layers
        w = w_attn_ref[l]                        # (8, D, D): leading-dim weight slices
        vec = vec_ref[l]                         # (15, D):   LN params + biases
        w1 = w_ff1_ref[l]                        # (D, DFF)
        b1 = b_ff1_ref[l]                        # (1, DFF)
        w2 = w_ff2_ref[l]                        # (DFF, D)

        # ---- sublayer 0: masked self attention ----
        xn = _layer_norm(x, vec[0:1], vec[1:2])
        q = jnp.dot(xn, w[0], preferred_element_type=jnp.float32) + vec[6:7]
        k = jnp.dot(xn, w[1], preferred_element_type=jnp.float32) + vec[7:8]
        v = jnp.dot(xn, w[2], preferred_element_type=jnp.float32) + vec[8:9]
        x = x + _attention(q, k, v, S, S, tgt_biases, w[3], vec[9:10], scale)

        # ---- sublayer 1: cross (source) attention ----
        xn = _layer_norm(x, vec[2:3], vec[3:4])
        q = jnp.dot(xn, w[4], preferred_element_type=jnp.float32) + vec[10:11]
        k = jnp.dot(mem, w[5], preferred_element_type=jnp.float32) + vec[11:12]
        v = jnp.dot(mem, w[6], preferred_element_type=jnp.float32) + vec[12:13]
        x = x + _attention(q, k, v, S, S_MEM, src_biases, w[7], vec[13:14], scale)

        # ---- sublayer 2: feed forward ----
        xn = _layer_norm(x, vec[4:5], vec[5:6])
        h = jnp.maximum(
            jnp.dot(xn, w1, preferred_element_type=jnp.float32) + b1, 0.0)
        x = x + jnp.dot(h, w2, preferred_element_type=jnp.float32) + vec[14:15]

    # ---- final LayerNorm of the Decoder ----
    lnf = lnf_ref[...]                           # (2, D)
    o_ref[...] = _layer_norm(x, lnf[0:1], lnf[1:2]).reshape(B, S, D)


def decoder_pallas(x, memory, src_mask, tgt_mask, packed):
    """x:(B,S,D) memory:(B,S_MEM,D) src_mask:(B,1,S_MEM) tgt_mask:(B,S,S) -> (B,S,D)."""
    (w_attn, w_ff1, b_ff1, w_ff2, vecs, lnf) = packed

    # Precompute additive masks in the wrapper (0 where allowed, -1e9 where masked).
    tgt_bias = jnp.where(tgt_mask == 0.0, NEG_INF, 0.0).astype(jnp.float32)  # (B, S, S)
    src_bias = jnp.where(src_mask == 0.0, NEG_INF, 0.0).astype(jnp.float32)  # (B, 1, S_MEM)

    # Single invocation (no grid): total footprint ~200 KiB, trivially VMEM-resident
    # on all generations.  Whole arrays are the blocks; pin them to VMEM explicitly.
    # (On v7x one would instead use grid=(B,), dimension_semantics=("parallel",)
    #  to shard the batch over the two TensorCores.)
    vmem = lambda: pl.BlockSpec(memory_space=pltpu.MemorySpace.VMEM)
    return pl.pallas_call(
        decoder_kernel,
        out_shape=jax.ShapeDtypeStruct((B, S, D), jnp.float32),
        in_specs=[vmem() for _ in range(10)],
        out_specs=vmem(),
    )(x, memory, tgt_bias, src_bias,
      w_attn, w_ff1, b_ff1, w_ff2, vecs, lnf)


# ---------------- parameter construction & packing ----------------

def init_params(key):
    def normal(k, shape, s=0.05):
        return s * jax.random.normal(k, shape, jnp.float32)

    layers = []
    keys = jax.random.split(key, N_LAYERS + 1)
    for l in range(N_LAYERS):
        ks = jax.random.split(keys[l], 26)
        lp = {
            'self_wq': normal(ks[0], (D, D)),  'self_bq': normal(ks[1], (D,), 0.02),
            'self_wk': normal(ks[2], (D, D)),  'self_bk': normal(ks[3], (D,), 0.02),
            'self_wv': normal(ks[4], (D, D)),  'self_bv': normal(ks[5], (D,), 0.02),
            'self_wo': normal(ks[6], (D, D)),  'self_bo': normal(ks[7], (D,), 0.02),
            'src_wq':  normal(ks[8], (D, D)),  'src_bq':  normal(ks[9], (D,), 0.02),
            'src_wk':  normal(ks[10], (D, D)), 'src_bk':  normal(ks[11], (D,), 0.02),
            'src_wv':  normal(ks[12], (D, D)), 'src_bv':  normal(ks[13], (D,), 0.02),
            'src_wo':  normal(ks[14], (D, D)), 'src_bo':  normal(ks[15], (D,), 0.02),
            'w1': normal(ks[16], (D, DFF)),    'b1': normal(ks[17], (DFF,), 0.02),
            'w2': normal(ks[18], (DFF, D)),    'b2': normal(ks[19], (D,), 0.02),
            'ln1_g': 1.0 + normal(ks[20], (D,), 0.1), 'ln1_b': normal(ks[21], (D,), 0.05),
            'ln2_g': 1.0 + normal(ks[22], (D,), 0.1), 'ln2_b': normal(ks[23], (D,), 0.05),
            'ln3_g': 1.0 + normal(ks[24], (D,), 0.05), 'ln3_b': normal(ks[25], (D,), 0.02),
        }
        layers.append(lp)
    kf = jax.random.split(keys[N_LAYERS], 2)
    return {'layers': layers,
            'lnf_g': 1.0 + (0.1 * jax.random.normal(kf[0], (D,), jnp.float32)),
            'lnf_b': 0.05 * jax.random.normal(kf[1], (D,), jnp.float32)}


def pack_params(params):
    """Pack the many tiny parameter tensors into a few slabs for the kernel.

    All projection matrices are kept lane-dense (D, D) and separated on a
    LEADING dim (no lane-axis packing / slicing inside the kernel).
    """
    w_attn, w_ff1, b_ff1, w_ff2, vecs = [], [], [], [], []
    for lp in params['layers']:
        w_attn.append(jnp.stack(
            [lp['self_wq'], lp['self_wk'], lp['self_wv'], lp['self_wo'],
             lp['src_wq'], lp['src_wk'], lp['src_wv'], lp['src_wo']], axis=0))  # (8, D, D)
        w_ff1.append(lp['w1'])
        b_ff1.append(lp['b1'][None, :])                                         # (1, DFF)
        w_ff2.append(lp['w2'])
        vecs.append(jnp.stack(
            [lp['ln1_g'], lp['ln1_b'], lp['ln2_g'], lp['ln2_b'],
             lp['ln3_g'], lp['ln3_b'],
             lp['self_bq'], lp['self_bk'], lp['self_bv'], lp['self_bo'],
             lp['src_bq'], lp['src_bk'], lp['src_bv'], lp['src_bo'],
             lp['b2']], axis=0))                                                # (15, D)

    return (jnp.stack(w_attn),                                    # (N, 8, D, D)
            jnp.stack(w_ff1),                                     # (N, D, DFF)
            jnp.stack(b_ff1),                                     # (N, 1, DFF)
            jnp.stack(w_ff2),                                     # (N, DFF, D)
            jnp.stack(vecs),                                      # (N, 15, D)
            jnp.stack([params['lnf_g'], params['lnf_b']]))        # (2, D)


# ---------------- pure-JAX reference (semantic check) ----------------

def decoder_ref(x, memory, src_mask, tgt_mask, params):
    def ln(t, g, b):
        mean = jnp.mean(t, axis=-1, keepdims=True)
        var = jnp.sum((t - mean) ** 2, axis=-1, keepdims=True) / (t.shape[-1] - 1)
        std = jnp.sqrt(var)
        return g * (t - mean) / jnp.sqrt(std + EPS) + b

    def mha(q_in, kv_in, mask, lp, pre):
        Tq, Tk = q_in.shape[1], kv_in.shape[1]
        q = q_in @ lp[pre + '_wq'] + lp[pre + '_bq']
        k = kv_in @ lp[pre + '_wk'] + lp[pre + '_bk']
        v = kv_in @ lp[pre + '_wv'] + lp[pre + '_bv']
        qh = q.reshape(B, Tq, H, DK).transpose(0, 2, 1, 3)
        kh = k.reshape(B, Tk, H, DK).transpose(0, 2, 1, 3)
        vh = v.reshape(B, Tk, H, DK).transpose(0, 2, 1, 3)
        sc = jnp.einsum('bhqd,bhkd->bhqk', qh, kh) / math.sqrt(DK)
        sc = jnp.where(mask[:, None] == 0, NEG_INF, sc)
        pr = jax.nn.softmax(sc, axis=-1)                      # dropout == identity
        ctx = jnp.einsum('bhqk,bhkd->bhqd', pr, vh)
        ctx = ctx.transpose(0, 2, 1, 3).reshape(B, Tq, D)
        return ctx @ lp[pre + '_wo'] + lp[pre + '_bo']

    for lp in params['layers']:
        xn = ln(x, lp['ln1_g'], lp['ln1_b'])
        x = x + mha(xn, xn, tgt_mask, lp, 'self')
        xn = ln(x, lp['ln2_g'], lp['ln2_b'])
        x = x + mha(xn, memory, src_mask, lp, 'src')
        xn = ln(x, lp['ln3_g'], lp['ln3_b'])
        x = x + (jnp.maximum(xn @ lp['w1'] + lp['b1'], 0.0) @ lp['w2'] + lp['b2'])
    return ln(x, params['lnf_g'], params['lnf_b'])


if __name__ == "__main__":
    key = jax.random.PRNGKey(0)
    kx, km, kp = jax.random.split(key, 3)
    x = jax.random.normal(kx, (B, S, D), jnp.float32)
    memory = jax.random.normal(km, (B, S_MEM, D), jnp.float32)

    # target mask: causal (subsequent) mask, shared across batch
    tgt_mask = jnp.broadcast_to(jnp.tril(jnp.ones((S, S), jnp.float32))[None], (B, S, S))
    # source mask: last 3 memory positions of batch 1 are padding (0 => masked)
    src_mask = jnp.ones((B, 1, S_MEM), jnp.float32).at[1, :, S_MEM - 3:].set(0.0)

    params = init_params(kp)
    packed = pack_params(params)

    out = decoder_pallas(x, memory, src_mask, tgt_mask, packed)
    out = jax.block_until_ready(out)

    with jax.default_matmul_precision("highest"):
        ref = decoder_ref(x, memory, src_mask, tgt_mask, params)

    # Tolerance accounts for the EUP approximate-reciprocal softmax denominator
    # (still tight enough to catch any semantic error).
    np.testing.assert_allclose(np.asarray(out), np.asarray(ref),
                               rtol=1e-3, atol=1e-3)
    print("KERNEL_OK")
</pallas_src>

<mosaic_0001>
module attributes {stable_mosaic.version = 11 : i64} {
  func.func @decoder_kernel(%arg0: memref<2x8x32xf32, #tpu.memory_space<vmem>>, %arg1: memref<2x16x32xf32, #tpu.memory_space<vmem>>, %arg2: memref<2x8x8xf32, #tpu.memory_space<vmem>>, %arg3: memref<2x1x16xf32, #tpu.memory_space<vmem>>, %arg4: memref<2x8x32x32xf32, #tpu.memory_space<vmem>>, %arg5: memref<2x32x64xf32, #tpu.memory_space<vmem>>, %arg6: memref<2x1x64xf32, #tpu.memory_space<vmem>>, %arg7: memref<2x64x32xf32, #tpu.memory_space<vmem>>, %arg8: memref<2x15x32xf32, #tpu.memory_space<vmem>>, %arg9: memref<2x32xf32, #tpu.memory_space<vmem>>, %arg10: memref<2x8x32xf32, #tpu.memory_space<vmem>>) attributes {dimension_semantics = [], scalar_prefetch = 0 : i64, scratch_operands = 0 : i64, tpu.core_type = #tpu.core_type<tc>} {
    %c0 = arith.constant 0 : index
    %c0_0 = arith.constant 0 : index
    %c0_1 = arith.constant 0 : index
    %0 = vector.load %arg0[%c0, %c0_0, %c0_1] : memref<2x8x32xf32, #tpu.memory_space<vmem>>, vector<2x8x32xf32>
    %1 = vector.shape_cast %0 : vector<2x8x32xf32> to vector<16x32xf32>
    %c0_2 = arith.constant 0 : index
    %c0_3 = arith.constant 0 : index
    %c0_4 = arith.constant 0 : index
    %2 = vector.load %arg1[%c0_2, %c0_3, %c0_4] : memref<2x16x32xf32, #tpu.memory_space<vmem>>, vector<2x16x32xf32>
    %3 = vector.shape_cast %2 : vector<2x16x32xf32> to vector<32x32xf32>
    %c0_5 = arith.constant 0 : index
    %c0_6 = arith.constant 0 : index
    %c0_7 = arith.constant 0 : index
    %4 = vector.load %arg2[%c0_5, %c0_6, %c0_7] : memref<2x8x8xf32, #tpu.memory_space<vmem>>, vector<1x8x8xf32>
    %5 = vector.shape_cast %4 : vector<1x8x8xf32> to vector<8x8xf32>
    %6 = vector.shape_cast %5 : vector<8x8xf32> to vector<1x8x8xf32>
    %c1 = arith.constant 1 : index
    %c0_8 = arith.constant 0 : index
    %c0_9 = arith.constant 0 : index
    %7 = vector.load %arg2[%c1, %c0_8, %c0_9] : memref<2x8x8xf32, #tpu.memory_space<vmem>>, vector<1x8x8xf32>
    %8 = vector.shape_cast %7 : vector<1x8x8xf32> to vector<8x8xf32>
    %9 = vector.shape_cast %8 : vector<8x8xf32> to vector<1x8x8xf32>
    %c0_10 = arith.constant 0 : index
    %c0_11 = arith.constant 0 : index
    %c0_12 = arith.constant 0 : index
    %10 = vector.load %arg3[%c0_10, %c0_11, %c0_12] : memref<2x1x16xf32, #tpu.memory_space<vmem>>, vector<1x1x16xf32>
    %11 = vector.shape_cast %10 : vector<1x1x16xf32> to vector<1x16xf32>
    %12 = vector.shape_cast %11 : vector<1x16xf32> to vector<1x1x16xf32>
    %c1_13 = arith.constant 1 : index
    %c0_14 = arith.constant 0 : index
    %c0_15 = arith.constant 0 : index
    %13 = vector.load %arg3[%c1_13, %c0_14, %c0_15] : memref<2x1x16xf32, #tpu.memory_space<vmem>>, vector<1x1x16xf32>
    %14 = vector.shape_cast %13 : vector<1x1x16xf32> to vector<1x16xf32>
    %15 = vector.shape_cast %14 : vector<1x16xf32> to vector<1x1x16xf32>
    %c0_16 = arith.constant 0 : index
    %c0_17 = arith.constant 0 : index
    %c0_18 = arith.constant 0 : index
    %c0_19 = arith.constant 0 : index
    %16 = vector.load %arg4[%c0_16, %c0_17, %c0_18, %c0_19] : memref<2x8x32x32xf32, #tpu.memory_space<vmem>>, vector<1x8x32x32xf32>
    %17 = vector.shape_cast %16 : vector<1x8x32x32xf32> to vector<8x32x32xf32>
    %c0_20 = arith.constant 0 : index
    %c0_21 = arith.constant 0 : index
    %c0_22 = arith.constant 0 : index
    %18 = vector.load %arg8[%c0_20, %c0_21, %c0_22] : memref<2x15x32xf32, #tpu.memory_space<vmem>>, vector<1x15x32xf32>
    %19 = vector.shape_cast %18 : vector<1x15x32xf32> to vector<15x32xf32>
    %c0_23 = arith.constant 0 : index
    %c0_24 = arith.constant 0 : index
    %c0_25 = arith.constant 0 : index
    %20 = vector.load %arg5[%c0_23, %c0_24, %c0_25] : memref<2x32x64xf32, #tpu.memory_space<vmem>>, vector<1x32x64xf32>
    %21 = vector.shape_cast %20 : vector<1x32x64xf32> to vector<32x64xf32>
    %c0_26 = arith.constant 0 : index
    %c0_27 = arith.constant 0 : index
    %c0_28 = arith.constant 0 : index
    %22 = vector.load %arg6[%c0_26, %c0_27, %c0_28] : memref<2x1x64xf32, #tpu.memory_space<vmem>>, vector<1x1x64xf32>
    %23 = vector.shape_cast %22 : vector<1x1x64xf32> to vector<1x64xf32>
    %c0_29 = arith.constant 0 : index
    %c0_30 = arith.constant 0 : index
    %c0_31 = arith.constant 0 : index
    %24 = vector.load %arg7[%c0_29, %c0_30, %c0_31] : memref<2x64x32xf32, #tpu.memory_space<vmem>>, vector<1x64x32xf32>
    %25 = vector.shape_cast %24 : vector<1x64x32xf32> to vector<64x32xf32>
    %26 = vector.extract_strided_slice %19 {offsets = [0, 0], sizes = [1, 32], strides = [1, 1]} : vector<15x32xf32> to vector<1x32xf32>
    %27 = vector.extract_strided_slice %19 {offsets = [1, 0], sizes = [1, 32], strides = [1, 1]} : vector<15x32xf32> to vector<1x32xf32>
    %cst = arith.constant dense<0.000000e+00> : vector<16xf32>
    %28 = vector.multi_reduction <add>, %1, %cst [1] : vector<16x32xf32> to vector<16xf32>
    %29 = vector.shape_cast %28 : vector<16xf32> to vector<16x1xf32>
    %cst_32 = arith.constant 3.200000e+01 : f32
    %30 = vector.broadcast %cst_32 : f32 to vector<16x1xf32>
    %31 = arith.divf %29, %30 : vector<16x1xf32>
    %32 = vector.broadcast %31 : vector<16x1xf32> to vector<16x32xf32>
    %33 = arith.subf %1, %32 : vector<16x32xf32>
    %34 = arith.mulf %33, %33 : vector<16x32xf32>
    %cst_33 = arith.constant dense<0.000000e+00> : vector<16xf32>
    %35 = vector.multi_reduction <add>, %34, %cst_33 [1] : vector<16x32xf32> to vector<16xf32>
    %36 = vector.shape_cast %35 : vector<16xf32> to vector<16x1xf32>
    %cst_34 = arith.constant 0.0322580636 : f32
    %37 = vector.broadcast %cst_34 : f32 to vector<16x1xf32>
    %38 = arith.mulf %36, %37 : vector<16x1xf32>
    %39 = math.sqrt %38 : vector<16x1xf32>
    %cst_35 = arith.constant 9.99999997E-7 : f32
    %40 = vector.broadcast %cst_35 : f32 to vector<16x1xf32>
    %41 = arith.addf %39, %40 : vector<16x1xf32>
    %42 = math.rsqrt %41 : vector<16x1xf32>
    %43 = vector.broadcast %31 : vector<16x1xf32> to vector<16x32xf32>
    %44 = arith.subf %1, %43 : vector<16x32xf32>
    %45 = vector.broadcast %42 : vector<16x1xf32> to vector<16x32xf32>
    %46 = arith.mulf %44, %45 : vector<16x32xf32>
    %47 = vector.broadcast %26 : vector<1x32xf32> to vector<16x32xf32>
    %48 = arith.mulf %47, %46 : vector<16x32xf32>
    %49 = vector.broadcast %27 : vector<1x32xf32> to vector<16x32xf32>
    %50 = arith.addf %48, %49 : vector<16x32xf32>
    %51 = vector.extract_strided_slice %17 {offsets = [0, 0, 0], sizes = [1, 32, 32], strides = [1, 1, 1]} : vector<8x32x32xf32> to vector<1x32x32xf32>
    %52 = vector.shape_cast %51 : vector<1x32x32xf32> to vector<32x32xf32>
    %cst_36 = arith.constant dense<0.000000e+00> : vector<16x32xf32>
    %53 = tpu.matmul %50, %52, %cst_36 {dimension_numbers = #tpu.dot_dimension_numbers<[1], [0], [0], [1], [0, 0, 1, 1], [], []>} : vector<16x32xf32>, vector<32x32xf32>, vector<16x32xf32> -> vector<16x32xf32>
    %54 = vector.extract_strided_slice %19 {offsets = [6, 0], sizes = [1, 32], strides = [1, 1]} : vector<15x32xf32> to vector<1x32xf32>
    %55 = vector.broadcast %54 : vector<1x32xf32> to vector<16x32xf32>
    %56 = arith.addf %53, %55 : vector<16x32xf32>
    %57 = vector.extract_strided_slice %17 {offsets = [1, 0, 0], sizes = [1, 32, 32], strides = [1, 1, 1]} : vector<8x32x32xf32> to vector<1x32x32xf32>
    %58 = vector.shape_cast %57 : vector<1x32x32xf32> to vector<32x32xf32>
    %cst_37 = arith.constant dense<0.000000e+00> : vector<16x32xf32>
    %59 = tpu.matmul %50, %58, %cst_37 {dimension_numbers = #tpu.dot_dimension_numbers<[1], [0], [0], [1], [0, 0, 1, 1], [], []>} : vector<16x32xf32>, vector<32x32xf32>, vector<16x32xf32> -> vector<16x32xf32>
    %60 = vector.extract_strided_slice %19 {offsets = [7, 0], sizes = [1, 32], strides = [1, 1]} : vector<15x32xf32> to vector<1x32xf32>
    %61 = vector.broadcast %60 : vector<1x32xf32> to vector<16x32xf32>
    %62 = arith.addf %59, %61 : vector<16x32xf32>
    %63 = vector.extract_strided_slice %17 {offsets = [2, 0, 0], sizes = [1, 32, 32], strides = [1, 1, 1]} : vector<8x32x32xf32> to vector<1x32x32xf32>
    %64 = vector.shape_cast %63 : vector<1x32x32xf32> to vector<32x32xf32>
    %cst_38 = arith.constant dense<0.000000e+00> : vector<16x32xf32>
    %65 = tpu.matmul %50, %64, %cst_38 {dimension_numbers = #tpu.dot_dimension_numbers<[1], [0], [0], [1], [0, 0, 1, 1], [], []>} : vector<16x32xf32>, vector<32x32xf32>, vector<16x32xf32> -> vector<16x32xf32>
    %66 = vector.extract_strided_slice %19 {offsets = [8, 0], sizes = [1, 32], strides = [1, 1]} : vector<15x32xf32> to vector<1x32xf32>
    %67 = vector.broadcast %66 : vector<1x32xf32> to vector<16x32xf32>
    %68 = arith.addf %65, %67 : vector<16x32xf32>
    %69 = vector.extract_strided_slice %17 {offsets = [3, 0, 0], sizes = [1, 32, 32], strides = [1, 1, 1]} : vector<8x32x32xf32> to vector<1x32x32xf32>
    %70 = vector.shape_cast %69 : vector<1x32x32xf32> to vector<32x32xf32>
    %71 = vector.extract_strided_slice %19 {offsets = [9, 0], sizes = [1, 32], strides = [1, 1]} : vector<15x32xf32> to vector<1x32xf32>
    %72 = vector.extract_strided_slice %56 {offsets = [0, 0], sizes = [8, 32], strides = [1, 1]} : vector<16x32xf32> to vector<8x32xf32>
    %73 = vector.shape_cast %72 : vector<8x32xf32> to vector<8x4x8xf32>
    %74 = tpu.transpose %73, [1, 0, 2] : vector<8x4x8xf32> -> vector<4x8x8xf32>
    %75 = vector.extract_strided_slice %62 {offsets = [0, 0], sizes = [8, 32], strides = [1, 1]} : vector<16x32xf32> to vector<8x32xf32>
    %76 = vector.shape_cast %75 : vector<8x32xf32> to vector<8x4x8xf32>
    %77 = tpu.transpose %76, [1, 0, 2] : vector<8x4x8xf32> -> vector<4x8x8xf32>
    %78 = vector.extract_strided_slice %68 {offsets = [0, 0], sizes = [8, 32], strides = [1, 1]} : vector<16x32xf32> to vector<8x32xf32>
    %79 = vector.shape_cast %78 : vector<8x32xf32> to vector<8x4x8xf32>
    %80 = tpu.transpose %79, [1, 0, 2] : vector<8x4x8xf32> -> vector<4x8x8xf32>
    "tpu.trace_start"() <{level = 10 : i32, message = "hqd,hkd->hqk"}> : () -> ()
    %cst_39 = arith.constant dense<0.000000e+00> : vector<4x8x8xf32>
    %81 = tpu.matmul %74, %77, %cst_39 {dimension_numbers = #tpu.dot_dimension_numbers<[2], [2], [1], [1], [0, 0, 0, 1, 1, 1], [0], [0]>} : vector<4x8x8xf32>, vector<4x8x8xf32>, vector<4x8x8xf32> -> vector<4x8x8xf32>
    "tpu.trace_stop"() : () -> ()
    %cst_40 = arith.constant 0.353553385 : f32
    %82 = vector.broadcast %cst_40 : f32 to vector<4x8x8xf32>
    %83 = arith.mulf %81, %82 : vector<4x8x8xf32>
    %84 = vector.broadcast %6 : vector<1x8x8xf32> to vector<4x8x8xf32>
    %85 = arith.addf %83, %84 : vector<4x8x8xf32>
    %cst_41 = arith.constant dense<0xFF800000> : vector<4x8xf32>
    %86 = vector.multi_reduction <maximumf>, %85, %cst_41 [2] : vector<4x8x8xf32> to vector<4x8xf32>
    %87 = vector.shape_cast %86 : vector<4x8xf32> to vector<4x8x1xf32>
    %88 = vector.broadcast %87 : vector<4x8x1xf32> to vector<4x8x8xf32>
    %89 = arith.subf %85, %88 : vector<4x8x8xf32>
    %90 = math.exp %89 : vector<4x8x8xf32>
    %cst_42 = arith.constant dense<0.000000e+00> : vector<4x8xf32>
    %91 = vector.multi_reduction <add>, %90, %cst_42 [2] : vector<4x8x8xf32> to vector<4x8xf32>
    %92 = vector.shape_cast %91 : vector<4x8xf32> to vector<4x8x1xf32>
    %93 = tpu.reciprocal %92 {approx = true} : vector<4x8x1xf32> -> vector<4x8x1xf32>
    %94 = vector.broadcast %93 : vector<4x8x1xf32> to vector<4x8x8xf32>
    %95 = arith.mulf %90, %94 : vector<4x8x8xf32>
    "tpu.trace_start"() <{level = 10 : i32, message = "hqk,hkd->hqd"}> : () -> ()
    %cst_43 = arith.constant dense<0.000000e+00> : vector<4x8x8xf32>
    %96 = tpu.matmul %95, %80, %cst_43 {dimension_numbers = #tpu.dot_dimension_numbers<[2], [1], [1], [2], [0, 0, 0, 1, 1, 2], [0], [0]>} : vector<4x8x8xf32>, vector<4x8x8xf32>, vector<4x8x8xf32> -> vector<4x8x8xf32>
    "tpu.trace_stop"() : () -> ()
    %97 = tpu.transpose %96, [1, 0, 2] : vector<4x8x8xf32> -> vector<8x4x8xf32>
    %98 = vector.shape_cast %97 : vector<8x4x8xf32> to vector<8x32xf32>
    %99 = vector.extract_strided_slice %56 {offsets = [8, 0], sizes = [8, 32], strides = [1, 1]} : vector<16x32xf32> to vector<8x32xf32>
    %100 = vector.shape_cast %99 : vector<8x32xf32> to vector<8x4x8xf32>
    %101 = tpu.transpose %100, [1, 0, 2] : vector<8x4x8xf32> -> vector<4x8x8xf32>
    %102 = vector.extract_strided_slice %62 {offsets = [8, 0], sizes = [8, 32], strides = [1, 1]} : vector<16x32xf32> to vector<8x32xf32>
    %103 = vector.shape_cast %102 : vector<8x32xf32> to vector<8x4x8xf32>
    %104 = tpu.transpose %103, [1, 0, 2] : vector<8x4x8xf32> -> vector<4x8x8xf32>
    %105 = vector.extract_strided_slice %68 {offsets = [8, 0], sizes = [8, 32], strides = [1, 1]} : vector<16x32xf32> to vector<8x32xf32>
    %106 = vector.shape_cast %105 : vector<8x32xf32> to vector<8x4x8xf32>
    %107 = tpu.transpose %106, [1, 0, 2] : vector<8x4x8xf32> -> vector<4x8x8xf32>
    "tpu.trace_start"() <{level = 10 : i32, message = "hqd,hkd->hqk"}> : () -> ()
    %cst_44 = arith.constant dense<0.000000e+00> : vector<4x8x8xf32>
    %108 = tpu.matmul %101, %104, %cst_44 {dimension_numbers = #tpu.dot_dimension_numbers<[2], [2], [1], [1], [0, 0, 0, 1, 1, 1], [0], [0]>} : vector<4x8x8xf32>, vector<4x8x8xf32>, vector<4x8x8xf32> -> vector<4x8x8xf32>
    "tpu.trace_stop"() : () -> ()
    %cst_45 = arith.constant 0.353553385 : f32
    %109 = vector.broadcast %cst_45 : f32 to vector<4x8x8xf32>
    %110 = arith.mulf %108, %109 : vector<4x8x8xf32>
    %111 = vector.broadcast %9 : vector<1x8x8xf32> to vector<4x8x8xf32>
    %112 = arith.addf %110, %111 : vector<4x8x8xf32>
    %cst_46 = arith.constant dense<0xFF800000> : vector<4x8xf32>
    %113 = vector.multi_reduction <maximumf>, %112, %cst_46 [2] : vector<4x8x8xf32> to vector<4x8xf32>
    %114 = vector.shape_cast %113 : vector<4x8xf32> to vector<4x8x1xf32>
    %115 = vector.broadcast %114 : vector<4x8x1xf32> to vector<4x8x8xf32>
    %116 = arith.subf %112, %115 : vector<4x8x8xf32>
    %117 = math.exp %116 : vector<4x8x8xf32>
    %cst_47 = arith.constant dense<0.000000e+00> : vector<4x8xf32>
    %118 = vector.multi_reduction <add>, %117, %cst_47 [2] : vector<4x8x8xf32> to vector<4x8xf32>
    %119 = vector.shape_cast %118 : vector<4x8xf32> to vector<4x8x1xf32>
    %120 = tpu.reciprocal %119 {approx = true} : vector<4x8x1xf32> -> vector<4x8x1xf32>
    %121 = vector.broadcast %120 : vector<4x8x1xf32> to vector<4x8x8xf32>
    %122 = arith.mulf %117, %121 : vector<4x8x8xf32>
    "tpu.trace_start"() <{level = 10 : i32, message = "hqk,hkd->hqd"}> : () -> ()
    %cst_48 = arith.constant dense<0.000000e+00> : vector<4x8x8xf32>
    %123 = tpu.matmul %122, %107, %cst_48 {dimension_numbers = #tpu.dot_dimension_numbers<[2], [1], [1], [2], [0, 0, 0, 1, 1, 2], [0], [0]>} : vector<4x8x8xf32>, vector<4x8x8xf32>, vector<4x8x8xf32> -> vector<4x8x8xf32>
    "tpu.trace_stop"() : () -> ()
    %124 = tpu.transpose %123, [1, 0, 2] : vector<4x8x8xf32> -> vector<8x4x8xf32>
    %125 = vector.shape_cast %124 : vector<8x4x8xf32> to vector<8x32xf32>
    %126 = tpu.concatenate %98, %125 in 0 : vector<8x32xf32>, vector<8x32xf32> -> vector<16x32xf32>
    %cst_49 = arith.constant dense<0.000000e+00> : vector<16x32xf32>
    %127 = tpu.matmul %126, %70, %cst_49 {dimension_numbers = #tpu.dot_dimension_numbers<[1], [0], [0], [1], [0, 0, 1, 1], [], []>} : vector<16x32xf32>, vector<32x32xf32>, vector<16x32xf32> -> vector<16x32xf32>
    %128 = vector.broadcast %71 : vector<1x32xf32> to vector<16x32xf32>
    %129 = arith.addf %127, %128 : vector<16x32xf32>
    %130 = arith.addf %1, %129 : vector<16x32xf32>
    %131 = vector.extract_strided_slice %19 {offsets = [2, 0], sizes = [1, 32], strides = [1, 1]} : vector<15x32xf32> to vector<1x32xf32>
    %132 = vector.extract_strided_slice %19 {offsets = [3, 0], sizes = [1, 32], strides = [1, 1]} : vector<15x32xf32> to vector<1x32xf32>
    %cst_50 = arith.constant dense<0.000000e+00> : vector<16xf32>
    %133 = vector.multi_reduction <add>, %130, %cst_50 [1] : vector<16x32xf32> to vector<16xf32>
    %134 = vector.shape_cast %133 : vector<16xf32> to vector<16x1xf32>
    %cst_51 = arith.constant 3.200000e+01 : f32
    %135 = vector.broadcast %cst_51 : f32 to vector<16x1xf32>
    %136 = arith.divf %134, %135 : vector<16x1xf32>
    %137 = vector.broadcast %136 : vector<16x1xf32> to vector<16x32xf32>
    %138 = arith.subf %130, %137 : vector<16x32xf32>
    %139 = arith.mulf %138, %138 : vector<16x32xf32>
    %cst_52 = arith.constant dense<0.000000e+00> : vector<16xf32>
    %140 = vector.multi_reduction <add>, %139, %cst_52 [1] : vector<16x32xf32> to vector<16xf32>
    %141 = vector.shape_cast %140 : vector<16xf32> to vector<16x1xf32>
    %cst_53 = arith.constant 0.0322580636 : f32
    %142 = vector.broadcast %cst_53 : f32 to vector<16x1xf32>
    %143 = arith.mulf %141, %142 : vector<16x1xf32>
    %144 = math.sqrt %143 : vector<16x1xf32>
    %cst_54 = arith.constant 9.99999997E-7 : f32
    %145 = vector.broadcast %cst_54 : f32 to vector<16x1xf32>
    %146 = arith.addf %144, %145 : vector<16x1xf32>
    %147 = math.rsqrt %146 : vector<16x1xf32>
    %148 = vector.broadcast %136 : vector<16x1xf32> to vector<16x32xf32>
    %149 = arith.subf %130, %148 : vector<16x32xf32>
    %150 = vector.broadcast %147 : vector<16x1xf32> to vector<16x32xf32>
    %151 = arith.mulf %149, %150 : vector<16x32xf32>
    %152 = vector.broadcast %131 : vector<1x32xf32> to vector<16x32xf32>
    %153 = arith.mulf %152, %151 : vector<16x32xf32>
    %154 = vector.broadcast %132 : vector<1x32xf32> to vector<16x32xf32>
    %155 = arith.addf %153, %154 : vector<16x32xf32>
    %156 = vector.extract_strided_slice %17 {offsets = [4, 0, 0], sizes = [1, 32, 32], strides = [1, 1, 1]} : vector<8x32x32xf32> to vector<1x32x32xf32>
    %157 = vector.shape_cast %156 : vector<1x32x32xf32> to vector<32x32xf32>
    %cst_55 = arith.constant dense<0.000000e+00> : vector<16x32xf32>
    %158 = tpu.matmul %155, %157, %cst_55 {dimension_numbers = #tpu.dot_dimension_numbers<[1], [0], [0], [1], [0, 0, 1, 1], [], []>} : vector<16x32xf32>, vector<32x32xf32>, vector<16x32xf32> -> vector<16x32xf32>
    %159 = vector.extract_strided_slice %19 {offsets = [10, 0], sizes = [1, 32], strides = [1, 1]} : vector<15x32xf32> to vector<1x32xf32>
    %160 = vector.broadcast %159 : vector<1x32xf32> to vector<16x32xf32>
    %161 = arith.addf %158, %160 : vector<16x32xf32>
    %162 = vector.extract_strided_slice %17 {offsets = [5, 0, 0], sizes = [1, 32, 32], strides = [1, 1, 1]} : vector<8x32x32xf32> to vector<1x32x32xf32>
    %163 = vector.shape_cast %162 : vector<1x32x32xf32> to vector<32x32xf32>
    %cst_56 = arith.constant dense<0.000000e+00> : vector<32x32xf32>
    %164 = tpu.matmul %3, %163, %cst_56 {dimension_numbers = #tpu.dot_dimension_numbers<[1], [0], [0], [1], [0, 0, 1, 1], [], []>} : vector<32x32xf32>, vector<32x32xf32>, vector<32x32xf32> -> vector<32x32xf32>
    %165 = vector.extract_strided_slice %19 {offsets = [11, 0], sizes = [1, 32], strides = [1, 1]} : vector<15x32xf32> to vector<1x32xf32>
    %166 = vector.broadcast %165 : vector<1x32xf32> to vector<32x32xf32>
    %167 = arith.addf %164, %166 : vector<32x32xf32>
    %168 = vector.extract_strided_slice %17 {offsets = [6, 0, 0], sizes = [1, 32, 32], strides = [1, 1, 1]} : vector<8x32x32xf32> to vector<1x32x32xf32>
    %169 = vector.shape_cast %168 : vector<1x32x32xf32> to vector<32x32xf32>
    %cst_57 = arith.constant dense<0.000000e+00> : vector<32x32xf32>
    %170 = tpu.matmul %3, %169, %cst_57 {dimension_numbers = #tpu.dot_dimension_numbers<[1], [0], [0], [1], [0, 0, 1, 1], [], []>} : vector<32x32xf32>, vector<32x32xf32>, vector<32x32xf32> -> vector<32x32xf32>
    %171 = vector.extract_strided_slice %19 {offsets = [12, 0], sizes = [1, 32], strides = [1, 1]} : vector<15x32xf32> to vector<1x32xf32>
    %172 = vector.broadcast %171 : vector<1x32xf32> to vector<32x32xf32>
    %173 = arith.addf %170, %172 : vector<32x32xf32>
    %174 = vector.extract_strided_slice %17 {offsets = [7, 0, 0], sizes = [1, 32, 32], strides = [1, 1, 1]} : vector<8x32x32xf32> to vector<1x32x32xf32>
    %175 = vector.shape_cast %174 : vector<1x32x32xf32> to vector<32x32xf32>
    %176 = vector.extract_strided_slice %19 {offsets = [13, 0], sizes = [1, 32], strides = [1, 1]} : vector<15x32xf32> to vector<1x32xf32>
    %177 = vector.extract_strided_slice %161 {offsets = [0, 0], sizes = [8, 32], strides = [1, 1]} : vector<16x32xf32> to vector<8x32xf32>
    %178 = vector.shape_cast %177 : vector<8x32xf32> to vector<8x4x8xf32>
    %179 = tpu.transpose %178, [1, 0, 2] : vector<8x4x8xf32> -> vector<4x8x8xf32>
    %180 = vector.extract_strided_slice %167 {offsets = [0, 0], sizes = [16, 32], strides = [1, 1]} : vector<32x32xf32> to vector<16x32xf32>
    %181 = vector.shape_cast %180 : vector<16x32xf32> to vector<16x4x8xf32>
    %182 = tpu.transpose %181, [1, 0, 2] : vector<16x4x8xf32> -> vector<4x16x8xf32>
    %183 = vector.extract_strided_slice %173 {offsets = [0, 0], sizes = [16, 32], strides = [1, 1]} : vector<32x32xf32> to vector<16x32xf32>
    %184 = vector.shape_cast %183 : vector<16x32xf32> to vector<16x4x8xf32>
    %185 = tpu.transpose %184, [1, 0, 2] : vector<16x4x8xf32> -> vector<4x16x8xf32>
    "tpu.trace_start"() <{level = 10 : i32, message = "hqd,hkd->hqk"}> : () -> ()
    %cst_58 = arith.constant dense<0.000000e+00> : vector<4x8x16xf32>
    %186 = tpu.matmul %179, %182, %cst_58 {dimension_numbers = #tpu.dot_dimension_numbers<[2], [2], [1], [1], [0, 0, 0, 1, 1, 1], [0], [0]>} : vector<4x8x8xf32>, vector<4x16x8xf32>, vector<4x8x16xf32> -> vector<4x8x16xf32>
    "tpu.trace_stop"() : () -> ()
    %cst_59 = arith.constant 0.353553385 : f32
    %187 = vector.broadcast %cst_59 : f32 to vector<4x8x16xf32>
    %188 = arith.mulf %186, %187 : vector<4x8x16xf32>
    %189 = vector.broadcast %12 : vector<1x1x16xf32> to vector<4x8x16xf32>
    %190 = arith.addf %188, %189 : vector<4x8x16xf32>
    %cst_60 = arith.constant dense<0xFF800000> : vector<4x8xf32>
    %191 = vector.multi_reduction <maximumf>, %190, %cst_60 [2] : vector<4x8x16xf32> to vector<4x8xf32>
    %192 = vector.shape_cast %191 : vector<4x8xf32> to vector<4x8x1xf32>
    %193 = vector.broadcast %192 : vector<4x8x1xf32> to vector<4x8x16xf32>
    %194 = arith.subf %190, %193 : vector<4x8x16xf32>
    %195 = math.exp %194 : vector<4x8x16xf32>
    %cst_61 = arith.constant dense<0.000000e+00> : vector<4x8xf32>
    %196 = vector.multi_reduction <add>, %195, %cst_61 [2] : vector<4x8x16xf32> to vector<4x8xf32>
    %197 = vector.shape_cast %196 : vector<4x8xf32> to vector<4x8x1xf32>
    %198 = tpu.reciprocal %197 {approx = true} : vector<4x8x1xf32> -> vector<4x8x1xf32>
    %199 = vector.broadcast %198 : vector<4x8x1xf32> to vector<4x8x16xf32>
    %200 = arith.mulf %195, %199 : vector<4x8x16xf32>
    "tpu.trace_start"() <{level = 10 : i32, message = "hqk,hkd->hqd"}> : () -> ()
    %cst_62 = arith.constant dense<0.000000e+00> : vector<4x8x8xf32>
    %201 = tpu.matmul %200, %185, %cst_62 {dimension_numbers = #tpu.dot_dimension_numbers<[2], [1], [1], [2], [0, 0, 0, 1, 1, 2], [0], [0]>} : vector<4x8x16xf32>, vector<4x16x8xf32>, vector<4x8x8xf32> -> vector<4x8x8xf32>
    "tpu.trace_stop"() : () -> ()
    %202 = tpu.transpose %201, [1, 0, 2] : vector<4x8x8xf32> -> vector<8x4x8xf32>
    %203 = vector.shape_cast %202 : vector<8x4x8xf32> to vector<8x32xf32>
    %204 = vector.extract_strided_slice %161 {offsets = [8, 0], sizes = [8, 32], strides = [1, 1]} : vector<16x32xf32> to vector<8x32xf32>
    %205 = vector.shape_cast %204 : vector<8x32xf32> to vector<8x4x8xf32>
    %206 = tpu.transpose %205, [1, 0, 2] : vector<8x4x8xf32> -> vector<4x8x8xf32>
    %207 = vector.extract_strided_slice %167 {offsets = [16, 0], sizes = [16, 32], strides = [1, 1]} : vector<32x32xf32> to vector<16x32xf32>
    %208 = vector.shape_cast %207 : vector<16x32xf32> to vector<16x4x8xf32>
    %209 = tpu.transpose %208, [1, 0, 2] : vector<16x4x8xf32> -> vector<4x16x8xf32>
    %210 = vector.extract_strided_slice %173 {offsets = [16, 0], sizes = [16, 32], strides = [1, 1]} : vector<32x32xf32> to vector<16x32xf32>
    %211 = vector.shape_cast %210 : vector<16x32xf32> to vector<16x4x8xf32>
    %212 = tpu.transpose %211, [1, 0, 2] : vector<16x4x8xf32> -> vector<4x16x8xf32>
    "tpu.trace_start"() <{level = 10 : i32, message = "hqd,hkd->hqk"}> : () -> ()
    %cst_63 = arith.constant dense<0.000000e+00> : vector<4x8x16xf32>
    %213 = tpu.matmul %206, %209, %cst_63 {dimension_numbers = #tpu.dot_dimension_numbers<[2], [2], [1], [1], [0, 0, 0, 1, 1, 1], [0], [0]>} : vector<4x8x8xf32>, vector<4x16x8xf32>, vector<4x8x16xf32> -> vector<4x8x16xf32>
    "tpu.trace_stop"() : () -> ()
    %cst_64 = arith.constant 0.353553385 : f32
    %214 = vector.broadcast %cst_64 : f32 to vector<4x8x16xf32>
    %215 = arith.mulf %213, %214 : vector<4x8x16xf32>
    %216 = vector.broadcast %15 : vector<1x1x16xf32> to vector<4x8x16xf32>
    %217 = arith.addf %215, %216 : vector<4x8x16xf32>
    %cst_65 = arith.constant dense<0xFF800000> : vector<4x8xf32>
    %218 = vector.multi_reduction <maximumf>, %217, %cst_65 [2] : vector<4x8x16xf32> to vector<4x8xf32>
    %219 = vector.shape_cast %218 : vector<4x8xf32> to vector<4x8x1xf32>
    %220 = vector.broadcast %219 : vector<4x8x1xf32> to vector<4x8x16xf32>
    %221 = arith.subf %217, %220 : vector<4x8x16xf32>
    %222 = math.exp %221 : vector<4x8x16xf32>
    %cst_66 = arith.constant dense<0.000000e+00> : vector<4x8xf32>
    %223 = vector.multi_reduction <add>, %222, %cst_66 [2] : vector<4x8x16xf32> to vector<4x8xf32>
    %224 = vector.shape_cast %223 : vector<4x8xf32> to vector<4x8x1xf32>
    %225 = tpu.reciprocal %224 {approx = true} : vector<4x8x1xf32> -> vector<4x8x1xf32>
    %226 = vector.broadcast %225 : vector<4x8x1xf32> to vector<4x8x16xf32>
    %227 = arith.mulf %222, %226 : vector<4x8x16xf32>
    "tpu.trace_start"() <{level = 10 : i32, message = "hqk,hkd->hqd"}> : () -> ()
    %cst_67 = arith.constant dense<0.000000e+00> : vector<4x8x8xf32>
    %228 = tpu.matmul %227, %212, %cst_67 {dimension_numbers = #tpu.dot_dimension_numbers<[2], [1], [1], [2], [0, 0, 0, 1, 1, 2], [0], [0]>} : vector<4x8x16xf32>, vector<4x16x8xf32>, vector<4x8x8xf32> -> vector<4x8x8xf32>
    "tpu.trace_stop"() : () -> ()
    %229 = tpu.transpose %228, [1, 0, 2] : vector<4x8x8xf32> -> vector<8x4x8xf32>
    %230 = vector.shape_cast %229 : vector<8x4x8xf32> to vector<8x32xf32>
    %231 = tpu.concatenate %203, %230 in 0 : vector<8x32xf32>, vector<8x32xf32> -> vector<16x32xf32>
    %cst_68 = arith.constant dense<0.000000e+00> : vector<16x32xf32>
    %232 = tpu.matmul %231, %175, %cst_68 {dimension_numbers = #tpu.dot_dimension_numbers<[1], [0], [0], [1], [0, 0, 1, 1], [], []>} : vector<16x32xf32>, vector<32x32xf32>, vector<16x32xf32> -> vector<16x32xf32>
    %233 = vector.broadcast %176 : vector<1x32xf32> to vector<16x32xf32>
    %234 = arith.addf %232, %233 : vector<16x32xf32>
    %235 = arith.addf %130, %234 : vector<16x32xf32>
    %236 = vector.extract_strided_slice %19 {offsets = [4, 0], sizes = [1, 32], strides = [1, 1]} : vector<15x32xf32> to vector<1x32xf32>
    %237 = vector.extract_strided_slice %19 {offsets = [5, 0], sizes = [1, 32], strides = [1, 1]} : vector<15x32xf32> to vector<1x32xf32>
    %cst_69 = arith.constant dense<0.000000e+00> : vector<16xf32>
    %238 = vector.multi_reduction <add>, %235, %cst_69 [1] : vector<16x32xf32> to vector<16xf32>
    %239 = vector.shape_cast %238 : vector<16xf32> to vector<16x1xf32>
    %cst_70 = arith.constant 3.200000e+01 : f32
    %240 = vector.broadcast %cst_70 : f32 to vector<16x1xf32>
    %241 = arith.divf %239, %240 : vector<16x1xf32>
    %242 = vector.broadcast %241 : vector<16x1xf32> to vector<16x32xf32>
    %243 = arith.subf %235, %242 : vector<16x32xf32>
    %244 = arith.mulf %243, %243 : vector<16x32xf32>
    %cst_71 = arith.constant dense<0.000000e+00> : vector<16xf32>
    %245 = vector.multi_reduction <add>, %244, %cst_71 [1] : vector<16x32xf32> to vector<16xf32>
    %246 = vector.shape_cast %245 : vector<16xf32> to vector<16x1xf32>
    %cst_72 = arith.constant 0.0322580636 : f32
    %247 = vector.broadcast %cst_72 : f32 to vector<16x1xf32>
    %248 = arith.mulf %246, %247 : vector<16x1xf32>
    %249 = math.sqrt %248 : vector<16x1xf32>
    %cst_73 = arith.constant 9.99999997E-7 : f32
    %250 = vector.broadcast %cst_73 : f32 to vector<16x1xf32>
    %251 = arith.addf %249, %250 : vector<16x1xf32>
    %252 = math.rsqrt %251 : vector<16x1xf32>
    %253 = vector.broadcast %241 : vector<16x1xf32> to vector<16x32xf32>
    %254 = arith.subf %235, %253 : vector<16x32xf32>
    %255 = vector.broadcast %252 : vector<16x1xf32> to vector<16x32xf32>
    %256 = arith.mulf %254, %255 : vector<16x32xf32>
    %257 = vector.broadcast %236 : vector<1x32xf32> to vector<16x32xf32>
    %258 = arith.mulf %257, %256 : vector<16x32xf32>
    %259 = vector.broadcast %237 : vector<1x32xf32> to vector<16x32xf32>
    %260 = arith.addf %258, %259 : vector<16x32xf32>
    %cst_74 = arith.constant dense<0.000000e+00> : vector<16x64xf32>
    %261 = tpu.matmul %260, %21, %cst_74 {dimension_numbers = #tpu.dot_dimension_numbers<[1], [0], [0], [1], [0, 0, 1, 1], [], []>} : vector<16x32xf32>, vector<32x64xf32>, vector<16x64xf32> -> vector<16x64xf32>
    %262 = vector.broadcast %23 : vector<1x64xf32> to vector<16x64xf32>
    %263 = arith.addf %261, %262 : vector<16x64xf32>
    %cst_75 = arith.constant 0.000000e+00 : f32
    %264 = vector.broadcast %cst_75 : f32 to vector<16x64xf32>
    %265 = arith.maximumf %263, %264 : vector<16x64xf32>
    %cst_76 = arith.constant dense<0.000000e+00> : vector<16x32xf32>
    %266 = tpu.matmul %265, %25, %cst_76 {dimension_numbers = #tpu.dot_dimension_numbers<[1], [0], [0], [1], [0, 0, 1, 1], [], []>} : vector<16x64xf32>, vector<64x32xf32>, vector<16x32xf32> -> vector<16x32xf32>
    %267 = arith.addf %235, %266 : vector<16x32xf32>
    %268 = vector.extract_strided_slice %19 {offsets = [14, 0], sizes = [1, 32], strides = [1, 1]} : vector<15x32xf32> to vector<1x32xf32>
    %269 = vector.broadcast %268 : vector<1x32xf32> to vector<16x32xf32>
    %270 = arith.addf %267, %269 : vector<16x32xf32>
    %c1_77 = arith.constant 1 : index
    %c0_78 = arith.constant 0 : index
    %c0_79 = arith.constant 0 : index
    %c0_80 = arith.constant 0 : index
    %271 = vector.load %arg4[%c1_77, %c0_78, %c0_79, %c0_80] : memref<2x8x32x32xf32, #tpu.memory_space<vmem>>, vector<1x8x32x32xf32>
    %272 = vector.shape_cast %271 : vector<1x8x32x32xf32> to vector<8x32x32xf32>
    %c1_81 = arith.constant 1 : index
    %c0_82 = arith.constant 0 : index
    %c0_83 = arith.constant 0 : index
    %273 = vector.load %arg8[%c1_81, %c0_82, %c0_83] : memref<2x15x32xf32, #tpu.memory_space<vmem>>, vector<1x15x32xf32>
    %274 = vector.shape_cast %273 : vector<1x15x32xf32> to vector<15x32xf32>
    %c1_84 = arith.constant 1 : index
    %c0_85 = arith.constant 0 : index
    %c0_86 = arith.constant 0 : index
    %275 = vector.load %arg5[%c1_84, %c0_85, %c0_86] : memref<2x32x64xf32, #tpu.memory_space<vmem>>, vector<1x32x64xf32>
    %276 = vector.shape_cast %275 : vector<1x32x64xf32> to vector<32x64xf32>
    %c1_87 = arith.constant 1 : index
    %c0_88 = arith.constant 0 : index
    %c0_89 = arith.constant 0 : index
    %277 = vector.load %arg6[%c1_87, %c0_88, %c0_89] : memref<2x1x64xf32, #tpu.memory_space<vmem>>, vector<1x1x64xf32>
    %278 = vector.shape_cast %277 : vector<1x1x64xf32> to vector<1x64xf32>
    %c1_90 = arith.constant 1 : index
    %c0_91 = arith.constant 0 : index
    %c0_92 = arith.constant 0 : index
    %279 = vector.load %arg7[%c1_90, %c0_91, %c0_92] : memref<2x64x32xf32, #tpu.memory_space<vmem>>, vector<1x64x32xf32>
    %280 = vector.shape_cast %279 : vector<1x64x32xf32> to vector<64x32xf32>
    %281 = vector.extract_strided_slice %274 {offsets = [0, 0], sizes = [1, 32], strides = [1, 1]} : vector<15x32xf32> to vector<1x32xf32>
    %282 = vector.extract_strided_slice %274 {offsets = [1, 0], sizes = [1, 32], strides = [1, 1]} : vector<15x32xf32> to vector<1x32xf32>
    %cst_93 = arith.constant dense<0.000000e+00> : vector<16xf32>
    %283 = vector.multi_reduction <add>, %270, %cst_93 [1] : vector<16x32xf32> to vector<16xf32>
    %284 = vector.shape_cast %283 : vector<16xf32> to vector<16x1xf32>
    %cst_94 = arith.constant 3.200000e+01 : f32
    %285 = vector.broadcast %cst_94 : f32 to vector<16x1xf32>
    %286 = arith.divf %284, %285 : vector<16x1xf32>
    %287 = vector.broadcast %286 : vector<16x1xf32> to vector<16x32xf32>
    %288 = arith.subf %270, %287 : vector<16x32xf32>
    %289 = arith.mulf %288, %288 : vector<16x32xf32>
    %cst_95 = arith.constant dense<0.000000e+00> : vector<16xf32>
    %290 = vector.multi_reduction <add>, %289, %cst_95 [1] : vector<16x32xf32> to vector<16xf32>
    %291 = vector.shape_cast %290 : vector<16xf32> to vector<16x1xf32>
    %cst_96 = arith.constant 0.0322580636 : f32
    %292 = vector.broadcast %cst_96 : f32 to vector<16x1xf32>
    %293 = arith.mulf %291, %292 : vector<16x1xf32>
    %294 = math.sqrt %293 : vector<16x1xf32>
    %cst_97 = arith.constant 9.99999997E-7 : f32
    %295 = vector.broadcast %cst_97 : f32 to vector<16x1xf32>
    %296 = arith.addf %294, %295 : vector<16x1xf32>
    %297 = math.rsqrt %296 : vector<16x1xf32>
    %298 = vector.broadcast %286 : vector<16x1xf32> to vector<16x32xf32>
    %299 = arith.subf %270, %298 : vector<16x32xf32>
    %300 = vector.broadcast %297 : vector<16x1xf32> to vector<16x32xf32>
    %301 = arith.mulf %299, %300 : vector<16x32xf32>
    %302 = vector.broadcast %281 : vector<1x32xf32> to vector<16x32xf32>
    %303 = arith.mulf %302, %301 : vector<16x32xf32>
    %304 = vector.broadcast %282 : vector<1x32xf32> to vector<16x32xf32>
    %305 = arith.addf %303, %304 : vector<16x32xf32>
    %306 = vector.extract_strided_slice %272 {offsets = [0, 0, 0], sizes = [1, 32, 32], strides = [1, 1, 1]} : vector<8x32x32xf32> to vector<1x32x32xf32>
    %307 = vector.shape_cast %306 : vector<1x32x32xf32> to vector<32x32xf32>
    %cst_98 = arith.constant dense<0.000000e+00> : vector<16x32xf32>
    %308 = tpu.matmul %305, %307, %cst_98 {dimension_numbers = #tpu.dot_dimension_numbers<[1], [0], [0], [1], [0, 0, 1, 1], [], []>} : vector<16x32xf32>, vector<32x32xf32>, vector<16x32xf32> -> vector<16x32xf32>
    %309 = vector.extract_strided_slice %274 {offsets = [6, 0], sizes = [1, 32], strides = [1, 1]} : vector<15x32xf32> to vector<1x32xf32>
    %310 = vector.broadcast %309 : vector<1x32xf32> to vector<16x32xf32>
    %311 = arith.addf %308, %310 : vector<16x32xf32>
    %312 = vector.extract_strided_slice %272 {offsets = [1, 0, 0], sizes = [1, 32, 32], strides = [1, 1, 1]} : vector<8x32x32xf32> to vector<1x32x32xf32>
    %313 = vector.shape_cast %312 : vector<1x32x32xf32> to vector<32x32xf32>
    %cst_99 = arith.constant dense<0.000000e+00> : vector<16x32xf32>
    %314 = tpu.matmul %305, %313, %cst_99 {dimension_numbers = #tpu.dot_dimension_numbers<[1], [0], [0], [1], [0, 0, 1, 1], [], []>} : vector<16x32xf32>, vector<32x32xf32>, vector<16x32xf32> -> vector<16x32xf32>
    %315 = vector.extract_strided_slice %274 {offsets = [7, 0], sizes = [1, 32], strides = [1, 1]} : vector<15x32xf32> to vector<1x32xf32>
    %316 = vector.broadcast %315 : vector<1x32xf32> to vector<16x32xf32>
    %317 = arith.addf %314, %316 : vector<16x32xf32>
    %318 = vector.extract_strided_slice %272 {offsets = [2, 0, 0], sizes = [1, 32, 32], strides = [1, 1, 1]} : vector<8x32x32xf32> to vector<1x32x32xf32>
    %319 = vector.shape_cast %318 : vector<1x32x32xf32> to vector<32x32xf32>
    %cst_100 = arith.constant dense<0.000000e+00> : vector<16x32xf32>
    %320 = tpu.matmul %305, %319, %cst_100 {dimension_numbers = #tpu.dot_dimension_numbers<[1], [0], [0], [1], [0, 0, 1, 1], [], []>} : vector<16x32xf32>, vector<32x32xf32>, vector<16x32xf32> -> vector<16x32xf32>
    %321 = vector.extract_strided_slice %274 {offsets = [8, 0], sizes = [1, 32], strides = [1, 1]} : vector<15x32xf32> to vector<1x32xf32>
    %322 = vector.broadcast %321 : vector<1x32xf32> to vector<16x32xf32>
    %323 = arith.addf %320, %322 : vector<16x32xf32>
    %324 = vector.extract_strided_slice %272 {offsets = [3, 0, 0], sizes = [1, 32, 32], strides = [1, 1, 1]} : vector<8x32x32xf32> to vector<1x32x32xf32>
    %325 = vector.shape_cast %324 : vector<1x32x32xf32> to vector<32x32xf32>
    %326 = vector.extract_strided_slice %274 {offsets = [9, 0], sizes = [1, 32], strides = [1, 1]} : vector<15x32xf32> to vector<1x32xf32>
    %327 = vector.extract_strided_slice %311 {offsets = [0, 0], sizes = [8, 32], strides = [1, 1]} : vector<16x32xf32> to vector<8x32xf32>
    %328 = vector.shape_cast %327 : vector<8x32xf32> to vector<8x4x8xf32>
    %329 = tpu.transpose %328, [1, 0, 2] : vector<8x4x8xf32> -> vector<4x8x8xf32>
    %330 = vector.extract_strided_slice %317 {offsets = [0, 0], sizes = [8, 32], strides = [1, 1]} : vector<16x32xf32> to vector<8x32xf32>
    %331 = vector.shape_cast %330 : vector<8x32xf32> to vector<8x4x8xf32>
    %332 = tpu.transpose %331, [1, 0, 2] : vector<8x4x8xf32> -> vector<4x8x8xf32>
    %333 = vector.extract_strided_slice %323 {offsets = [0, 0], sizes = [8, 32], strides = [1, 1]} : vector<16x32xf32> to vector<8x32xf32>
    %334 = vector.shape_cast %333 : vector<8x32xf32> to vector<8x4x8xf32>
    %335 = tpu.transpose %334, [1, 0, 2] : vector<8x4x8xf32> -> vector<4x8x8xf32>
    "tpu.trace_start"() <{level = 10 : i32, message = "hqd,hkd->hqk"}> : () -> ()
    %cst_101 = arith.constant dense<0.000000e+00> : vector<4x8x8xf32>
    %336 = tpu.matmul %329, %332, %cst_101 {dimension_numbers = #tpu.dot_dimension_numbers<[2], [2], [1], [1], [0, 0, 0, 1, 1, 1], [0], [0]>} : vector<4x8x8xf32>, vector<4x8x8xf32>, vector<4x8x8xf32> -> vector<4x8x8xf32>
    "tpu.trace_stop"() : () -> ()
    %cst_102 = arith.constant 0.353553385 : f32
    %337 = vector.broadcast %cst_102 : f32 to vector<4x8x8xf32>
    %338 = arith.mulf %336, %337 : vector<4x8x8xf32>
    %339 = vector.broadcast %6 : vector<1x8x8xf32> to vector<4x8x8xf32>
    %340 = arith.addf %338, %339 : vector<4x8x8xf32>
    %cst_103 = arith.constant dense<0xFF800000> : vector<4x8xf32>
    %341 = vector.multi_reduction <maximumf>, %340, %cst_103 [2] : vector<4x8x8xf32> to vector<4x8xf32>
    %342 = vector.shape_cast %341 : vector<4x8xf32> to vector<4x8x1xf32>
    %343 = vector.broadcast %342 : vector<4x8x1xf32> to vector<4x8x8xf32>
    %344 = arith.subf %340, %343 : vector<4x8x8xf32>
    %345 = math.exp %344 : vector<4x8x8xf32>
    %cst_104 = arith.constant dense<0.000000e+00> : vector<4x8xf32>
    %346 = vector.multi_reduction <add>, %345, %cst_104 [2] : vector<4x8x8xf32> to vector<4x8xf32>
    %347 = vector.shape_cast %346 : vector<4x8xf32> to vector<4x8x1xf32>
    %348 = tpu.reciprocal %347 {approx = true} : vector<4x8x1xf32> -> vector<4x8x1xf32>
    %349 = vector.broadcast %348 : vector<4x8x1xf32> to vector<4x8x8xf32>
    %350 = arith.mulf %345, %349 : vector<4x8x8xf32>
    "tpu.trace_start"() <{level = 10 : i32, message = "hqk,hkd->hqd"}> : () -> ()
    %cst_105 = arith.constant dense<0.000000e+00> : vector<4x8x8xf32>
    %351 = tpu.matmul %350, %335, %cst_105 {dimension_numbers = #tpu.dot_dimension_numbers<[2], [1], [1], [2], [0, 0, 0, 1, 1, 2], [0], [0]>} : vector<4x8x8xf32>, vector<4x8x8xf32>, vector<4x8x8xf32> -> vector<4x8x8xf32>
    "tpu.trace_stop"() : () -> ()
    %352 = tpu.transpose %351, [1, 0, 2] : vector<4x8x8xf32> -> vector<8x4x8xf32>
    %353 = vector.shape_cast %352 : vector<8x4x8xf32> to vector<8x32xf32>
    %354 = vector.extract_strided_slice %311 {offsets = [8, 0], sizes = [8, 32], strides = [1, 1]} : vector<16x32xf32> to vector<8x32xf32>
    %355 = vector.shape_cast %354 : vector<8x32xf32> to vector<8x4x8xf32>
    %356 = tpu.transpose %355, [1, 0, 2] : vector<8x4x8xf32> -> vector<4x8x8xf32>
    %357 = vector.extract_strided_slice %317 {offsets = [8, 0], sizes = [8, 32], strides = [1, 1]} : vector<16x32xf32> to vector<8x32xf32>
    %358 = vector.shape_cast %357 : vector<8x32xf32> to vector<8x4x8xf32>
    %359 = tpu.transpose %358, [1, 0, 2] : vector<8x4x8xf32> -> vector<4x8x8xf32>
    %360 = vector.extract_strided_slice %323 {offsets = [8, 0], sizes = [8, 32], strides = [1, 1]} : vector<16x32xf32> to vector<8x32xf32>
    %361 = vector.shape_cast %360 : vector<8x32xf32> to vector<8x4x8xf32>
    %362 = tpu.transpose %361, [1, 0, 2] : vector<8x4x8xf32> -> vector<4x8x8xf32>
    "tpu.trace_start"() <{level = 10 : i32, message = "hqd,hkd->hqk"}> : () -> ()
    %cst_106 = arith.constant dense<0.000000e+00> : vector<4x8x8xf32>
    %363 = tpu.matmul %356, %359, %cst_106 {dimension_numbers = #tpu.dot_dimension_numbers<[2], [2], [1], [1], [0, 0, 0, 1, 1, 1], [0], [0]>} : vector<4x8x8xf32>, vector<4x8x8xf32>, vector<4x8x8xf32> -> vector<4x8x8xf32>
    "tpu.trace_stop"() : () -> ()
    %cst_107 = arith.constant 0.353553385 : f32
    %364 = vector.broadcast %cst_107 : f32 to vector<4x8x8xf32>
    %365 = arith.mulf %363, %364 : vector<4x8x8xf32>
    %366 = vector.broadcast %9 : vector<1x8x8xf32> to vector<4x8x8xf32>
    %367 = arith.addf %365, %366 : vector<4x8x8xf32>
    %cst_108 = arith.constant dense<0xFF800000> : vector<4x8xf32>
    %368 = vector.multi_reduction <maximumf>, %367, %cst_108 [2] : vector<4x8x8xf32> to vector<4x8xf32>
    %369 = vector.shape_cast %368 : vector<4x8xf32> to vector<4x8x1xf32>
    %370 = vector.broadcast %369 : vector<4x8x1xf32> to vector<4x8x8xf32>
    %371 = arith.subf %367, %370 : vector<4x8x8xf32>
    %372 = math.exp %371 : vector<4x8x8xf32>
    %cst_109 = arith.constant dense<0.000000e+00> : vector<4x8xf32>
    %373 = vector.multi_reduction <add>, %372, %cst_109 [2] : vector<4x8x8xf32> to vector<4x8xf32>
    %374 = vector.shape_cast %373 : vector<4x8xf32> to vector<4x8x1xf32>
    %375 = tpu.reciprocal %374 {approx = true} : vector<4x8x1xf32> -> vector<4x8x1xf32>
    %376 = vector.broadcast %375 : vector<4x8x1xf32> to vector<4x8x8xf32>
    %377 = arith.mulf %372, %376 : vector<4x8x8xf32>
    "tpu.trace_start"() <{level = 10 : i32, message = "hqk,hkd->hqd"}> : () -> ()
    %cst_110 = arith.constant dense<0.000000e+00> : vector<4x8x8xf32>
    %378 = tpu.matmul %377, %362, %cst_110 {dimension_numbers = #tpu.dot_dimension_numbers<[2], [1], [1], [2], [0, 0, 0, 1, 1, 2], [0], [0]>} : vector<4x8x8xf32>, vector<4x8x8xf32>, vector<4x8x8xf32> -> vector<4x8x8xf32>
    "tpu.trace_stop"() : () -> ()
    %379 = tpu.transpose %378, [1, 0, 2] : vector<4x8x8xf32> -> vector<8x4x8xf32>
    %380 = vector.shape_cast %379 : vector<8x4x8xf32> to vector<8x32xf32>
    %381 = tpu.concatenate %353, %380 in 0 : vector<8x32xf32>, vector<8x32xf32> -> vector<16x32xf32>
    %cst_111 = arith.constant dense<0.000000e+00> : vector<16x32xf32>
    %382 = tpu.matmul %381, %325, %cst_111 {dimension_numbers = #tpu.dot_dimension_numbers<[1], [0], [0], [1], [0, 0, 1, 1], [], []>} : vector<16x32xf32>, vector<32x32xf32>, vector<16x32xf32> -> vector<16x32xf32>
    %383 = vector.broadcast %326 : vector<1x32xf32> to vector<16x32xf32>
    %384 = arith.addf %382, %383 : vector<16x32xf32>
    %385 = arith.addf %270, %384 : vector<16x32xf32>
    %386 = vector.extract_strided_slice %274 {offsets = [2, 0], sizes = [1, 32], strides = [1, 1]} : vector<15x32xf32> to vector<1x32xf32>
    %387 = vector.extract_strided_slice %274 {offsets = [3, 0], sizes = [1, 32], strides = [1, 1]} : vector<15x32xf32> to vector<1x32xf32>
    %cst_112 = arith.constant dense<0.000000e+00> : vector<16xf32>
    %388 = vector.multi_reduction <add>, %385, %cst_112 [1] : vector<16x32xf32> to vector<16xf32>
    %389 = vector.shape_cast %388 : vector<16xf32> to vector<16x1xf32>
    %cst_113 = arith.constant 3.200000e+01 : f32
    %390 = vector.broadcast %cst_113 : f32 to vector<16x1xf32>
    %391 = arith.divf %389, %390 : vector<16x1xf32>
    %392 = vector.broadcast %391 : vector<16x1xf32> to vector<16x32xf32>
    %393 = arith.subf %385, %392 : vector<16x32xf32>
    %394 = arith.mulf %393, %393 : vector<16x32xf32>
    %cst_114 = arith.constant dense<0.000000e+00> : vector<16xf32>
    %395 = vector.multi_reduction <add>, %394, %cst_114 [1] : vector<16x32xf32> to vector<16xf32>
    %396 = vector.shape_cast %395 : vector<16xf32> to vector<16x1xf32>
    %cst_115 = arith.constant 0.0322580636 : f32
    %397 = vector.broadcast %cst_115 : f32 to vector<16x1xf32>
    %398 = arith.mulf %396, %397 : vector<16x1xf32>
    %399 = math.sqrt %398 : vector<16x1xf32>
    %cst_116 = arith.constant 9.99999997E-7 : f32
    %400 = vector.broadcast %cst_116 : f32 to vector<16x1xf32>
    %401 = arith.addf %399, %400 : vector<16x1xf32>
    %402 = math.rsqrt %401 : vector<16x1xf32>
    %403 = vector.broadcast %391 : vector<16x1xf32> to vector<16x32xf32>
    %404 = arith.subf %385, %403 : vector<16x32xf32>
    %405 = vector.broadcast %402 : vector<16x1xf32> to vector<16x32xf32>
    %406 = arith.mulf %404, %405 : vector<16x32xf32>
    %407 = vector.broadcast %386 : vector<1x32xf32> to vector<16x32xf32>
    %408 = arith.mulf %407, %406 : vector<16x32xf32>
    %409 = vector.broadcast %387 : vector<1x32xf32> to vector<16x32xf32>
    %410 = arith.addf %408, %409 : vector<16x32xf32>
    %411 = vector.extract_strided_slice %272 {offsets = [4, 0, 0], sizes = [1, 32, 32], strides = [1, 1, 1]} : vector<8x32x32xf32> to vector<1x32x32xf32>
    %412 = vector.shape_cast %411 : vector<1x32x32xf32> to vector<32x32xf32>
    %cst_117 = arith.constant dense<0.000000e+00> : vector<16x32xf32>
    %413 = tpu.matmul %410, %412, %cst_117 {dimension_numbers = #tpu.dot_dimension_numbers<[1], [0], [0], [1], [0, 0, 1, 1], [], []>} : vector<16x32xf32>, vector<32x32xf32>, vector<16x32xf32> -> vector<16x32xf32>
    %414 = vector.extract_strided_slice %274 {offsets = [10, 0], sizes = [1, 32], strides = [1, 1]} : vector<15x32xf32> to vector<1x32xf32>
    %415 = vector.broadcast %414 : vector<1x32xf32> to vector<16x32xf32>
    %416 = arith.addf %413, %415 : vector<16x32xf32>
    %417 = vector.extract_strided_slice %272 {offsets = [5, 0, 0], sizes = [1, 32, 32], strides = [1, 1, 1]} : vector<8x32x32xf32> to vector<1x32x32xf32>
    %418 = vector.shape_cast %417 : vector<1x32x32xf32> to vector<32x32xf32>
    %cst_118 = arith.constant dense<0.000000e+00> : vector<32x32xf32>
    %419 = tpu.matmul %3, %418, %cst_118 {dimension_numbers = #tpu.dot_dimension_numbers<[1], [0], [0], [1], [0, 0, 1, 1], [], []>} : vector<32x32xf32>, vector<32x32xf32>, vector<32x32xf32> -> vector<32x32xf32>
    %420 = vector.extract_strided_slice %274 {offsets = [11, 0], sizes = [1, 32], strides = [1, 1]} : vector<15x32xf32> to vector<1x32xf32>
    %421 = vector.broadcast %420 : vector<1x32xf32> to vector<32x32xf32>
    %422 = arith.addf %419, %421 : vector<32x32xf32>
    %423 = vector.extract_strided_slice %272 {offsets = [6, 0, 0], sizes = [1, 32, 32], strides = [1, 1, 1]} : vector<8x32x32xf32> to vector<1x32x32xf32>
    %424 = vector.shape_cast %423 : vector<1x32x32xf32> to vector<32x32xf32>
    %cst_119 = arith.constant dense<0.000000e+00> : vector<32x32xf32>
    %425 = tpu.matmul %3, %424, %cst_119 {dimension_numbers = #tpu.dot_dimension_numbers<[1], [0], [0], [1], [0, 0, 1, 1], [], []>} : vector<32x32xf32>, vector<32x32xf32>, vector<32x32xf32> -> vector<32x32xf32>
    %426 = vector.extract_strided_slice %274 {offsets = [12, 0], sizes = [1, 32], strides = [1, 1]} : vector<15x32xf32> to vector<1x32xf32>
    %427 = vector.broadcast %426 : vector<1x32xf32> to vector<32x32xf32>
    %428 = arith.addf %425, %427 : vector<32x32xf32>
    %429 = vector.extract_strided_slice %272 {offsets = [7, 0, 0], sizes = [1, 32, 32], strides = [1, 1, 1]} : vector<8x32x32xf32> to vector<1x32x32xf32>
    %430 = vector.shape_cast %429 : vector<1x32x32xf32> to vector<32x32xf32>
    %431 = vector.extract_strided_slice %274 {offsets = [13, 0], sizes = [1, 32], strides = [1, 1]} : vector<15x32xf32> to vector<1x32xf32>
    %432 = vector.extract_strided_slice %416 {offsets = [0, 0], sizes = [8, 32], strides = [1, 1]} : vector<16x32xf32> to vector<8x32xf32>
    %433 = vector.shape_cast %432 : vector<8x32xf32> to vector<8x4x8xf32>
    %434 = tpu.transpose %433, [1, 0, 2] : vector<8x4x8xf32> -> vector<4x8x8xf32>
    %435 = vector.extract_strided_slice %422 {offsets = [0, 0], sizes = [16, 32], strides = [1, 1]} : vector<32x32xf32> to vector<16x32xf32>
    %436 = vector.shape_cast %435 : vector<16x32xf32> to vector<16x4x8xf32>
    %437 = tpu.transpose %436, [1, 0, 2] : vector<16x4x8xf32> -> vector<4x16x8xf32>
    %438 = vector.extract_strided_slice %428 {offsets = [0, 0], sizes = [16, 32], strides = [1, 1]} : vector<32x32xf32> to vector<16x32xf32>
    %439 = vector.shape_cast %438 : vector<16x32xf32> to vector<16x4x8xf32>
    %440 = tpu.transpose %439, [1, 0, 2] : vector<16x4x8xf32> -> vector<4x16x8xf32>
    "tpu.trace_start"() <{level = 10 : i32, message = "hqd,hkd->hqk"}> : () -> ()
    %cst_120 = arith.constant dense<0.000000e+00> : vector<4x8x16xf32>
    %441 = tpu.matmul %434, %437, %cst_120 {dimension_numbers = #tpu.dot_dimension_numbers<[2], [2], [1], [1], [0, 0, 0, 1, 1, 1], [0], [0]>} : vector<4x8x8xf32>, vector<4x16x8xf32>, vector<4x8x16xf32> -> vector<4x8x16xf32>
    "tpu.trace_stop"() : () -> ()
    %cst_121 = arith.constant 0.353553385 : f32
    %442 = vector.broadcast %cst_121 : f32 to vector<4x8x16xf32>
    %443 = arith.mulf %441, %442 : vector<4x8x16xf32>
    %444 = vector.broadcast %12 : vector<1x1x16xf32> to vector<4x8x16xf32>
    %445 = arith.addf %443, %444 : vector<4x8x16xf32>
    %cst_122 = arith.constant dense<0xFF800000> : vector<4x8xf32>
    %446 = vector.multi_reduction <maximumf>, %445, %cst_122 [2] : vector<4x8x16xf32> to vector<4x8xf32>
    %447 = vector.shape_cast %446 : vector<4x8xf32> to vector<4x8x1xf32>
    %448 = vector.broadcast %447 : vector<4x8x1xf32> to vector<4x8x16xf32>
    %449 = arith.subf %445, %448 : vector<4x8x16xf32>
    %450 = math.exp %449 : vector<4x8x16xf32>
    %cst_123 = arith.constant dense<0.000000e+00> : vector<4x8xf32>
    %451 = vector.multi_reduction <add>, %450, %cst_123 [2] : vector<4x8x16xf32> to vector<4x8xf32>
    %452 = vector.shape_cast %451 : vector<4x8xf32> to vector<4x8x1xf32>
    %453 = tpu.reciprocal %452 {approx = true} : vector<4x8x1xf32> -> vector<4x8x1xf32>
    %454 = vector.broadcast %453 : vector<4x8x1xf32> to vector<4x8x16xf32>
    %455 = arith.mulf %450, %454 : vector<4x8x16xf32>
    "tpu.trace_start"() <{level = 10 : i32, message = "hqk,hkd->hqd"}> : () -> ()
    %cst_124 = arith.constant dense<0.000000e+00> : vector<4x8x8xf32>
    %456 = tpu.matmul %455, %440, %cst_124 {dimension_numbers = #tpu.dot_dimension_numbers<[2], [1], [1], [2], [0, 0, 0, 1, 1, 2], [0], [0]>} : vector<4x8x16xf32>, vector<4x16x8xf32>, vector<4x8x8xf32> -> vector<4x8x8xf32>
    "tpu.trace_stop"() : () -> ()
    %457 = tpu.transpose %456, [1, 0, 2] : vector<4x8x8xf32> -> vector<8x4x8xf32>
    %458 = vector.shape_cast %457 : vector<8x4x8xf32> to vector<8x32xf32>
    %459 = vector.extract_strided_slice %416 {offsets = [8, 0], sizes = [8, 32], strides = [1, 1]} : vector<16x32xf32> to vector<8x32xf32>
    %460 = vector.shape_cast %459 : vector<8x32xf32> to vector<8x4x8xf32>
    %461 = tpu.transpose %460, [1, 0, 2] : vector<8x4x8xf32> -> vector<4x8x8xf32>
    %462 = vector.extract_strided_slice %422 {offsets = [16, 0], sizes = [16, 32], strides = [1, 1]} : vector<32x32xf32> to vector<16x32xf32>
    %463 = vector.shape_cast %462 : vector<16x32xf32> to vector<16x4x8xf32>
    %464 = tpu.transpose %463, [1, 0, 2] : vector<16x4x8xf32> -> vector<4x16x8xf32>
    %465 = vector.extract_strided_slice %428 {offsets = [16, 0], sizes = [16, 32], strides = [1, 1]} : vector<32x32xf32> to vector<16x32xf32>
    %466 = vector.shape_cast %465 : vector<16x32xf32> to vector<16x4x8xf32>
    %467 = tpu.transpose %466, [1, 0, 2] : vector<16x4x8xf32> -> vector<4x16x8xf32>
    "tpu.trace_start"() <{level = 10 : i32, message = "hqd,hkd->hqk"}> : () -> ()
    %cst_125 = arith.constant dense<0.000000e+00> : vector<4x8x16xf32>
    %468 = tpu.matmul %461, %464, %cst_125 {dimension_numbers = #tpu.dot_dimension_numbers<[2], [2], [1], [1], [0, 0, 0, 1, 1, 1], [0], [0]>} : vector<4x8x8xf32>, vector<4x16x8xf32>, vector<4x8x16xf32> -> vector<4x8x16xf32>
    "tpu.trace_stop"() : () -> ()
    %cst_126 = arith.constant 0.353553385 : f32
    %469 = vector.broadcast %cst_126 : f32 to vector<4x8x16xf32>
    %470 = arith.mulf %468, %469 : vector<4x8x16xf32>
    %471 = vector.broadcast %15 : vector<1x1x16xf32> to vector<4x8x16xf32>
    %472 = arith.addf %470, %471 : vector<4x8x16xf32>
    %cst_127 = arith.constant dense<0xFF800000> : vector<4x8xf32>
    %473 = vector.multi_reduction <maximumf>, %472, %cst_127 [2] : vector<4x8x16xf32> to vector<4x8xf32>
    %474 = vector.shape_cast %473 : vector<4x8xf32> to vector<4x8x1xf32>
    %475 = vector.broadcast %474 : vector<4x8x1xf32> to vector<4x8x16xf32>
    %476 = arith.subf %472, %475 : vector<4x8x16xf32>
    %477 = math.exp %476 : vector<4x8x16xf32>
    %cst_128 = arith.constant dense<0.000000e+00> : vector<4x8xf32>
    %478 = vector.multi_reduction <add>, %477, %cst_128 [2] : vector<4x8x16xf32> to vector<4x8xf32>
    %479 = vector.shape_cast %478 : vector<4x8xf32> to vector<4x8x1xf32>
    %480 = tpu.reciprocal %479 {approx = true} : vector<4x8x1xf32> -> vector<4x8x1xf32>
    %481 = vector.broadcast %480 : vector<4x8x1xf32> to vector<4x8x16xf32>
    %482 = arith.mulf %477, %481 : vector<4x8x16xf32>
    "tpu.trace_start"() <{level = 10 : i32, message = "hqk,hkd->hqd"}> : () -> ()
    %cst_129 = arith.constant dense<0.000000e+00> : vector<4x8x8xf32>
    %483 = tpu.matmul %482, %467, %cst_129 {dimension_numbers = #tpu.dot_dimension_numbers<[2], [1], [1], [2], [0, 0, 0, 1, 1, 2], [0], [0]>} : vector<4x8x16xf32>, vector<4x16x8xf32>, vector<4x8x8xf32> -> vector<4x8x8xf32>
    "tpu.trace_stop"() : () -> ()
    %484 = tpu.transpose %483, [1, 0, 2] : vector<4x8x8xf32> -> vector<8x4x8xf32>
    %485 = vector.shape_cast %484 : vector<8x4x8xf32> to vector<8x32xf32>
    %486 = tpu.concatenate %458, %485 in 0 : vector<8x32xf32>, vector<8x32xf32> -> vector<16x32xf32>
    %cst_130 = arith.constant dense<0.000000e+00> : vector<16x32xf32>
    %487 = tpu.matmul %486, %430, %cst_130 {dimension_numbers = #tpu.dot_dimension_numbers<[1], [0], [0], [1], [0, 0, 1, 1], [], []>} : vector<16x32xf32>, vector<32x32xf32>, vector<16x32xf32> -> vector<16x32xf32>
    %488 = vector.broadcast %431 : vector<1x32xf32> to vector<16x32xf32>
    %489 = arith.addf %487, %488 : vector<16x32xf32>
    %490 = arith.addf %385, %489 : vector<16x32xf32>
    %491 = vector.extract_strided_slice %274 {offsets = [4, 0], sizes = [1, 32], strides = [1, 1]} : vector<15x32xf32> to vector<1x32xf32>
    %492 = vector.extract_strided_slice %274 {offsets = [5, 0], sizes = [1, 32], strides = [1, 1]} : vector<15x32xf32> to vector<1x32xf32>
    %cst_131 = arith.constant dense<0.000000e+00> : vector<16xf32>
    %493 = vector.multi_reduction <add>, %490, %cst_131 [1] : vector<16x32xf32> to vector<16xf32>
    %494 = vector.shape_cast %493 : vector<16xf32> to vector<16x1xf32>
    %cst_132 = arith.constant 3.200000e+01 : f32
    %495 = vector.broadcast %cst_132 : f32 to vector<16x1xf32>
    %496 = arith.divf %494, %495 : vector<16x1xf32>
    %497 = vector.broadcast %496 : vector<16x1xf32> to vector<16x32xf32>
    %498 = arith.subf %490, %497 : vector<16x32xf32>
    %499 = arith.mulf %498, %498 : vector<16x32xf32>
    %cst_133 = arith.constant dense<0.000000e+00> : vector<16xf32>
    %500 = vector.multi_reduction <add>, %499, %cst_133 [1] : vector<16x32xf32> to vector<16xf32>
    %501 = vector.shape_cast %500 : vector<16xf32> to vector<16x1xf32>
    %cst_134 = arith.constant 0.0322580636 : f32
    %502 = vector.broadcast %cst_134 : f32 to vector<16x1xf32>
    %503 = arith.mulf %501, %502 : vector<16x1xf32>
    %504 = math.sqrt %503 : vector<16x1xf32>
    %cst_135 = arith.constant 9.99999997E-7 : f32
    %505 = vector.broadcast %cst_135 : f32 to vector<16x1xf32>
    %506 = arith.addf %504, %505 : vector<16x1xf32>
    %507 = math.rsqrt %506 : vector<16x1xf32>
    %508 = vector.broadcast %496 : vector<16x1xf32> to vector<16x32xf32>
    %509 = arith.subf %490, %508 : vector<16x32xf32>
    %510 = vector.broadcast %507 : vector<16x1xf32> to vector<16x32xf32>
    %511 = arith.mulf %509, %510 : vector<16x32xf32>
    %512 = vector.broadcast %491 : vector<1x32xf32> to vector<16x32xf32>
    %513 = arith.mulf %512, %511 : vector<16x32xf32>
    %514 = vector.broadcast %492 : vector<1x32xf32> to vector<16x32xf32>
    %515 = arith.addf %513, %514 : vector<16x32xf32>
    %cst_136 = arith.constant dense<0.000000e+00> : vector<16x64xf32>
    %516 = tpu.matmul %515, %276, %cst_136 {dimension_numbers = #tpu.dot_dimension_numbers<[1], [0], [0], [1], [0, 0, 1, 1], [], []>} : vector<16x32xf32>, vector<32x64xf32>, vector<16x64xf32> -> vector<16x64xf32>
    %517 = vector.broadcast %278 : vector<1x64xf32> to vector<16x64xf32>
    %518 = arith.addf %516, %517 : vector<16x64xf32>
    %cst_137 = arith.constant 0.000000e+00 : f32
    %519 = vector.broadcast %cst_137 : f32 to vector<16x64xf32>
    %520 = arith.maximumf %518, %519 : vector<16x64xf32>
    %cst_138 = arith.constant dense<0.000000e+00> : vector<16x32xf32>
    %521 = tpu.matmul %520, %280, %cst_138 {dimension_numbers = #tpu.dot_dimension_numbers<[1], [0], [0], [1], [0, 0, 1, 1], [], []>} : vector<16x64xf32>, vector<64x32xf32>, vector<16x32xf32> -> vector<16x32xf32>
    %522 = arith.addf %490, %521 : vector<16x32xf32>
    %523 = vector.extract_strided_slice %274 {offsets = [14, 0], sizes = [1, 32], strides = [1, 1]} : vector<15x32xf32> to vector<1x32xf32>
    %524 = vector.broadcast %523 : vector<1x32xf32> to vector<16x32xf32>
    %525 = arith.addf %522, %524 : vector<16x32xf32>
    %c0_139 = arith.constant 0 : index
    %c0_140 = arith.constant 0 : index
    %526 = vector.load %arg9[%c0_139, %c0_140] : memref<2x32xf32, #tpu.memory_space<vmem>>, vector<2x32xf32>
    %527 = vector.extract_strided_slice %526 {offsets = [0, 0], sizes = [1, 32], strides = [1, 1]} : vector<2x32xf32> to vector<1x32xf32>
    %528 = vector.extract_strided_slice %526 {offsets = [1, 0], sizes = [1, 32], strides = [1, 1]} : vector<2x32xf32> to vector<1x32xf32>
    %cst_141 = arith.constant dense<0.000000e+00> : vector<16xf32>
    %529 = vector.multi_reduction <add>, %525, %cst_141 [1] : vector<16x32xf32> to vector<16xf32>
    %530 = vector.shape_cast %529 : vector<16xf32> to vector<16x1xf32>
    %cst_142 = arith.constant 3.200000e+01 : f32
    %531 = vector.broadcast %cst_142 : f32 to vector<16x1xf32>
    %532 = arith.divf %530, %531 : vector<16x1xf32>
    %533 = vector.broadcast %532 : vector<16x1xf32> to vector<16x32xf32>
    %534 = arith.subf %525, %533 : vector<16x32xf32>
    %535 = arith.mulf %534, %534 : vector<16x32xf32>
    %cst_143 = arith.constant dense<0.000000e+00> : vector<16xf32>
    %536 = vector.multi_reduction <add>, %535, %cst_143 [1] : vector<16x32xf32> to vector<16xf32>
    %537 = vector.shape_cast %536 : vector<16xf32> to vector<16x1xf32>
    %cst_144 = arith.constant 0.0322580636 : f32
    %538 = vector.broadcast %cst_144 : f32 to vector<16x1xf32>
    %539 = arith.mulf %537, %538 : vector<16x1xf32>
    %540 = math.sqrt %539 : vector<16x1xf32>
    %cst_145 = arith.constant 9.99999997E-7 : f32
    %541 = vector.broadcast %cst_145 : f32 to vector<16x1xf32>
    %542 = arith.addf %540, %541 : vector<16x1xf32>
    %543 = math.rsqrt %542 : vector<16x1xf32>
    %544 = vector.broadcast %532 : vector<16x1xf32> to vector<16x32xf32>
    %545 = arith.subf %525, %544 : vector<16x32xf32>
    %546 = vector.broadcast %543 : vector<16x1xf32> to vector<16x32xf32>
    %547 = arith.mulf %545, %546 : vector<16x32xf32>
    %548 = vector.broadcast %527 : vector<1x32xf32> to vector<16x32xf32>
    %549 = arith.mulf %548, %547 : vector<16x32xf32>
    %550 = vector.broadcast %528 : vector<1x32xf32> to vector<16x32xf32>
    %551 = arith.addf %549, %550 : vector<16x32xf32>
    %552 = vector.shape_cast %551 : vector<16x32xf32> to vector<2x8x32xf32>
    %c0_146 = arith.constant 0 : index
    %c0_147 = arith.constant 0 : index
    %c0_148 = arith.constant 0 : index
    %553 = vector.load %arg10[%c0_146, %c0_147, %c0_148] : memref<2x8x32xf32, #tpu.memory_space<vmem>>, vector<2x8x32xf32>
    tpu.vector_store %arg10[%c0_146, %c0_147, %c0_148], %552 {strides = array<i32>} : memref<2x8x32xf32, #tpu.memory_space<vmem>>, vector<2x8x32xf32>,
    return
  }
}

</mosaic_0001>

<llo_original>
// kernel: tpu_custom_call.1
$region0: #{tpu_custom_call.1}
  #allocation0 [shape = 'u32[]', space=smem, size = 0x4, offset = 0x4, fixed_abs, tag = 'smem constant byte address 0x4 - core index']
  #allocation1 [shape = 'u32[72,128]{1,0:T(1,128)}', space=vmem, size = 0x9000, scoped, tag = 'internal scratch']
  %s0 = inlined_call_operand.vmem [shape: f32[2,8,32], index: 0, kind: input, shape index: {}]
  %s1 = inlined_call_operand.vmem [shape: f32[2,16,32], index: 1, kind: input, shape index: {}]
  %s2 = inlined_call_operand.vmem [shape: f32[2,8,8], index: 2, kind: input, shape index: {}]
  %s3 = inlined_call_operand.vmem [shape: f32[2,1,16], index: 3, kind: input, shape index: {}]
  %s4 = inlined_call_operand.hbm [shape: f32[2,8,32,32], index: 4, kind: input, shape index: {}]
  %s5 = inlined_call_operand.vmem [shape: f32[2,32,64], index: 5, kind: input, shape index: {}]
  %s6 = inlined_call_operand.vmem [shape: f32[2,1,64], index: 6, kind: input, shape index: {}]
  %s7 = inlined_call_operand.vmem [shape: f32[2,64,32], index: 7, kind: input, shape index: {}]
  %s8 = inlined_call_operand.vmem [shape: f32[2,15,32], index: 8, kind: input, shape index: {}]
  %s9 = inlined_call_operand.vmem [shape: f32[2,32], index: 9, kind: input, shape index: {}]
  %s10 = inlined_call_operand.hbm [shape: f32[2,8,32], index: 10, kind: output, shape index: {}]
  %s11 = sld [smem:[#allocation0]]
  $region54: #{tpu_custom_call.1} parent=0
    _
  %s13 = ssub.s32 1, %s11
  %s14 = scalar_select 0, %s13, %s11
  $region1: #{tpu_custom_call.1} parent=0
    #allocation2 [shape = 'u8[262144]{0}', space=vmem, size = 0x40000, scoped, tag = 'input window, operand 4, single buffered']
    #allocation3 [shape = 's32[1]{0}', space=sflag, size = 0x4, scoped, tag = 'scoped memory for tpu_custom_call.1']
    #allocation4 [shape = 's32[1]{0}', space=sflag, size = 0x4, scoped, tag = 'scoped memory for tpu_custom_call.1']
    #allocation5 [shape = 'u8[8192]{0}', space=vmem, size = 0x2000, scoped, tag = 'output window, operand 0, single buffered']
    %15 = vsyncpa [#allocation3], 0
    %16 = vsyncpa [#allocation4], 0
    // Predicated region
    $region2: #{tpu_custom_call.1} parent=1 // pred_check
      _
    $region3: #{tpu_custom_call.1} parent=1 // pred_check_branch
      %18 = sbr.rel (0) target = $region5
    $region4: #{tpu_custom_call.1} parent=1 // pred_region
      _
    $region5: #{tpu_custom_call.1} parent=1 // pred_fallthru
      _
    // Predicated region
    $region6: #{tpu_custom_call.1} parent=1 // pred_check
      _
    $region7: #{tpu_custom_call.1} parent=1 // pred_check_branch
      %20 = sbr.rel (0) target = $region9
    $region8: #{tpu_custom_call.1} parent=1 // pred_region
      _
    $region9: #{tpu_custom_call.1} parent=1 // pred_fallthru
      _
    // Predicated region
    $region10: #{tpu_custom_call.1} parent=1 // pred_check
      _
    $region11: #{tpu_custom_call.1} parent=1 // pred_check_branch
      %22 = sbr.rel (0) target = $region13
    $region12: #{tpu_custom_call.1} parent=1 // pred_region
      _
    $region13: #{tpu_custom_call.1} parent=1 // pred_fallthru
      _
    // Predicated region
    $region14: #{tpu_custom_call.1} parent=1 // pred_check
      _
    $region15: #{tpu_custom_call.1} parent=1 // pred_check_branch
      %24 = sbr.rel (0) target = $region17
    $region16: #{tpu_custom_call.1} parent=1 // pred_region
      _
    $region17: #{tpu_custom_call.1} parent=1 // pred_fallthru
      _
    // Predicated region
    $region18: #{tpu_custom_call.1} parent=1 // pred_check
      _
    $region19: #{tpu_custom_call.1} parent=1 // pred_check_branch
      %26 = sbr.rel (0) target = $region21
    $region20: #{tpu_custom_call.1} parent=1 // pred_region
      %28 = vsyncadd [#allocation3], 0
      %s29 = sshll.u32 %s4, 4
      %s30 = int_to_ptr.hbm [resolvable:$true] %s29
      %s31 = sshll.u32 [#allocation2], 4
      %s32 = int_to_ptr.vmem [resolvable:$true] %s31
      %37 = dma.hbm_to_vmem [thread:$0]  %s30, 8192, %s32, [#allocation3], 128, 128, 8
    $region21: #{tpu_custom_call.1} parent=1 // pred_fallthru
      _
    // Predicated region
    $region22: #{tpu_custom_call.1} parent=1 // pred_check
      _
    $region23: #{tpu_custom_call.1} parent=1 // pred_check_branch
      %39 = sbr.rel (0) target = $region25
    $region24: #{tpu_custom_call.1} parent=1 // pred_region
      _
    $region25: #{tpu_custom_call.1} parent=1 // pred_fallthru
      _
    // Predicated region
    $region26: #{tpu_custom_call.1} parent=1 // pred_check
      _
    $region27: #{tpu_custom_call.1} parent=1 // pred_check_branch
      %41 = sbr.rel (0) target = $region29
    $region28: #{tpu_custom_call.1} parent=1 // pred_region
      _
    $region29: #{tpu_custom_call.1} parent=1 // pred_fallthru
      _
    // Predicated region
    $region30: #{tpu_custom_call.1} parent=1 // pred_check
      _
    $region31: #{tpu_custom_call.1} parent=1 // pred_check_branch
      %43 = sbr.rel (0) target = $region33
    $region32: #{tpu_custom_call.1} parent=1 // pred_region
      _
    $region33: #{tpu_custom_call.1} parent=1 // pred_fallthru
      _
    // Predicated region
    $region34: #{tpu_custom_call.1} parent=1 // pred_check
      _
    $region35: #{tpu_custom_call.1} parent=1 // pred_check_branch
      %45 = sbr.rel (0) target = $region37
    $region36: #{tpu_custom_call.1} parent=1 // pred_region
      _
    $region37: #{tpu_custom_call.1} parent=1 // pred_fallthru
      _
    // Predicated region
    $region38: #{tpu_custom_call.1} parent=1 // pred_check
      _
    $region39: #{tpu_custom_call.1} parent=1 // pred_check_branch
      %47 = sbr.rel (0) target = $region41
    $region40: #{tpu_custom_call.1} parent=1 // pred_region
      _
    $region41: #{tpu_custom_call.1} parent=1 // pred_fallthru
      _
    // Predicated region
    $region42: #{tpu_custom_call.1} parent=1 // pred_check
      _
    $region43: #{tpu_custom_call.1} parent=1 // pred_check_branch
      %49 = sbr.rel (0) target = $region45
    $region44: #{tpu_custom_call.1} parent=1 // pred_region
      %51 = dma.done [#allocation3], 8192
    $region45: #{tpu_custom_call.1} parent=1 // pred_fallthru
      _
    %v52 = vld [vmem:[%s0] sm:$0xff]
    %v53 = vld [vmem:[%s0 + $0x8] sm:$0xff]
    %v54 = vld [vmem:[%s1] sm:$0xff]
    %v55 = vld [vmem:[%s1 + $0x8] sm:$0xff]
    %v56 = vld [vmem:[%s1 + $0x10] sm:$0xff]
    %v57 = vld [vmem:[%s1 + $0x18] sm:$0xff]
    %v58 = vld [vmem:[%s2] sm:$0xff]
    %s59 = scalar_lea.vmem %s2, 8
    %v60 = vld [vmem:[%s59] sm:$0xff]
    %v61 = vld [vmem:[%s3] sm:$0x1]
    %s62 = scalar_lea.vmem %s3, 1
    %v63 = vld [vmem:[%s62] sm:$0x1]
    %v64 = vld [vmem:[#allocation2] sm:$0xff]
    %v65 = vld [vmem:[#allocation2 + $0x8] sm:$0xff]
    %v66 = vld [vmem:[#allocation2 + $0x10] sm:$0xff]
    %v67 = vld [vmem:[#allocation2 + $0x18] sm:$0xff]
    %v68 = vld [vmem:[#allocation2 + $0x20] sm:$0xff]
    %v69 = vld [vmem:[#allocation2 + $0x28] sm:$0xff]
    %v70 = vld [vmem:[#allocation2 + $0x30] sm:$0xff]
    %v71 = vld [vmem:[#allocation2 + $0x38] sm:$0xff]
    %v72 = vld [vmem:[#allocation2 + $0x40] sm:$0xff]
    %v73 = vld [vmem:[#allocation2 + $0x48] sm:$0xff]
    %v74 = vld [vmem:[#allocation2 + $0x50] sm:$0xff]
    %v75 = vld [vmem:[#allocation2 + $0x58] sm:$0xff]
    %v76 = vld [vmem:[#allocation2 + $0x60] sm:$0xff]
    %v77 = vld [vmem:[#allocation2 + $0x68] sm:$0xff]
    %v78 = vld [vmem:[#allocation2 + $0x70] sm:$0xff]
    %v79 = vld [vmem:[#allocation2 + $0x78] sm:$0xff]
    %v80 = vld [vmem:[#allocation2 + $0x80] sm:$0xff]
    %v81 = vld [vmem:[#allocation2 + $0x88] sm:$0xff]
    %v82 = vld [vmem:[#allocation2 + $0x90] sm:$0xff]
    %v83 = vld [vmem:[#allocation2 + $0x98] sm:$0xff]
    %v84 = vld [vmem:[#allocation2 + $0xa0] sm:$0xff]
    %v85 = vld [vmem:[#allocation2 + $0xa8] sm:$0xff]
    %v86 = vld [vmem:[#allocation2 + $0xb0] sm:$0xff]
    %v87 = vld [vmem:[#allocation2 + $0xb8] sm:$0xff]
    %v88 = vld [vmem:[#allocation2 + $0xc0] sm:$0xff]
    %v89 = vld [vmem:[#allocation2 + $0xc8] sm:$0xff]
    %v90 = vld [vmem:[#allocation2 + $0xd0] sm:$0xff]
    %v91 = vld [vmem:[#allocation2 + $0xd8] sm:$0xff]
    %v92 = vld [vmem:[#allocation2 + $0xe0] sm:$0xff]
    %v93 = vld [vmem:[#allocation2 + $0xe8] sm:$0xff]
    %v94 = vld [vmem:[#allocation2 + $0xf0] sm:$0xff]
    %v95 = vld [vmem:[#allocation2 + $0xf8] sm:$0xff]
    %v96 = vld [vmem:[%s8] sm:$0xff]
    %v97 = vld [vmem:[%s8 + $0x8] sm:$0x7f]
    %v98 = vld [vmem:[%s5] sm:$0xff]
    %v99 = vld [vmem:[%s5 + $0x8] sm:$0xff]
    %v100 = vld [vmem:[%s5 + $0x10] sm:$0xff]
    %v101 = vld [vmem:[%s5 + $0x18] sm:$0xff]
    %v102 = vld [vmem:[%s6] sm:$0x1]
    %v103 = vld [vmem:[%s7] sm:$0xff]
    %v104 = vld [vmem:[%s7 + $0x8] sm:$0xff]
    %v105 = vld [vmem:[%s7 + $0x10] sm:$0xff]
    %v106 = vld [vmem:[%s7 + $0x18] sm:$0xff]
    %v107 = vld [vmem:[%s7 + $0x20] sm:$0xff]
    %v108 = vld [vmem:[%s7 + $0x28] sm:$0xff]
    %v109 = vld [vmem:[%s7 + $0x30] sm:$0xff]
    %v110 = vld [vmem:[%s7 + $0x38] sm:$0xff]
    %vm111 = vcmask 261120
    %v112 = vsel %vm111, %v52, 0.0
    %113 = vadd.xlane.f32.xlu0 %v112
    %v114 = vpop.xlane.xlu0 %113
    %v115 = vsel %vm111, %v53, 0.0
    %116 = vadd.xlane.f32.xlu0 %v115
    %v117 = vpop.xlane.xlu0 %116
    %v118 = vrcp.pop 32.0
    %v119 = vmul.f32 32.0, %v118
    %v120 = vsub.f32 1.0, %v119
    %v121 = vmul.f32 %v118, %v120
    %v122 = vadd.f32 %v118, %v121
    %vm123 = vweird.f32 %v118
    %v124 = vsel %vm123, %v118, %v122
    %v125 = vmul.f32 %v114, %v124
    %v126 = vmul.f32 %v117, %v124
    %v127 = vsub.f32 %v52, %v125
    %v128 = vsub.f32 %v53, %v126
    %v129 = vmul.f32 %v127, %v127
    %v130 = vmul.f32 %v128, %v128
    %v131 = vsel %vm111, %v129, 0.0
    %132 = vadd.xlane.f32.xlu0 %v131
    %v133 = vpop.xlane.xlu0 %132
    %v134 = vsel %vm111, %v130, 0.0
    %135 = vadd.xlane.f32.xlu0 %v134
    %v136 = vpop.xlane.xlu0 %135
    %v137 = vmul.f32 %v133, 0.032258064
    %v138 = vmul.f32 %v136, 0.032258064
    %v139 = vrsqrt.pop %v137
    %v140 = vmul.f32 %v139, %v137
    %v141 = vmul.f32 %v140, %v139
    %v142 = vmul.f32 0.5, %v141
    %v143 = vsub.f32 1.5, %v142
    %v144 = vmul.f32 %v139, %v143
    %v145 = vmul.f32 %v137, %v144
    %vm146 = vcmp.eq.f32.partialorder %v137, inf
    %v147 = vsel %vm146, %v137, %v145
    %vm148 = vcmp.eq.f32.partialorder %v137, 0.0
    %v149 = vand.u32 %v137, 2147483648
    %v150 = vsel %vm148, %v149, %v147
    %v151 = vrsqrt.pop %v138
    %v152 = vmul.f32 %v151, %v138
    %v153 = vmul.f32 %v152, %v151
    %v154 = vmul.f32 0.5, %v153
    %v155 = vsub.f32 1.5, %v154
    %v156 = vmul.f32 %v151, %v155
    %v157 = vmul.f32 %v138, %v156
    %vm158 = vcmp.eq.f32.partialorder %v138, inf
    %v159 = vsel %vm158, %v138, %v157
    %vm160 = vcmp.eq.f32.partialorder %v138, 0.0
    %v161 = vand.u32 %v138, 2147483648
    %v162 = vsel %vm160, %v161, %v159
    %v163 = vadd.f32 %v150, 1e-06
    %v164 = vadd.f32 %v162, 1e-06
    %v165 = vrsqrt.pop %v163
    %v166 = vmul.f32 %v165, %v163
    %v167 = vmul.f32 %v166, %v165
    %v168 = vmul.f32 0.5, %v167
    %v169 = vsub.f32 1.5, %v168
    %v170 = vmul.f32 %v165, %v169
    %vm171 = vweird.f32 %v163
    %vm172 = vweird.f32 %v165
    %vm173 = vmor %vm171, %vm172
    %v174 = vsel %vm173, %v165, %v170
    %v175 = vrsqrt.pop %v164
    %v176 = vmul.f32 %v175, %v164
    %v177 = vmul.f32 %v176, %v175
    %v178 = vmul.f32 0.5, %v177
    %v179 = vsub.f32 1.5, %v178
    %v180 = vmul.f32 %v175, %v179
    %vm181 = vweird.f32 %v164
    %vm182 = vweird.f32 %v175
    %vm183 = vmor %vm181, %vm182
    %v184 = vsel %vm183, %v175, %v180
    %v185 = vmul.f32 %v127, %v174
    %v186 = vmul.f32 %v128, %v184
    %v187 = vperm.slane %v96, 0
    %v188 = vmul.f32 %v187, %v185
    %v189 = vmul.f32 %v187, %v186
    %v190 = vperm.slane %v96, 1
    %v191 = vadd.f32 %v188, %v190
    %v192 = vadd.f32 %v189, %v190
    %v193 = vperm.slane %v96, 6
    %v195 = vsel %vm111, %v191, 0
    %v198 = vsel %vm111, %v192, 0
    %200 = vmatpush.msra.mxu0 0.0
    %201 = vmatpush.msra.mxu0 0.0
    %202 = vmatpush.msra.mxu0 0.0
    %203 = vmatpush.msra.mxu0 0.0
    %204 = vmatpush.msra.mxu0 0.0
    %205 = vmatpush.msra.mxu0 0.0
    %206 = vmatpush.msra.mxu0 0.0
    %207 = vmatpush.msra.mxu0 0.0
    %208 = vmatpush.msra.mxu0 0.0
    %209 = vmatpush.msra.mxu0 0.0
    %210 = vmatpush.msra.mxu0 0.0
    %211 = vmatpush.msra.mxu0 0.0
    %212 = vmatpush.msra.mxu0 %v67
    %213 = vmatpush.msra.mxu0 %v66
    %214 = vmatpush.msra.mxu0 %v65
    %215 = vmatpush.msra.mxu0 %v64
    %216 = vmatmul.f32.gmra.mxu0 %v195
    %v217 = vpop.f32.mrf.mxu0
    %v218 = vadd.f32 %v193, %v217
    %219 = vmatmul.f32.gmra.mxu0 %v198
    %v220 = vpop.f32.mrf.mxu0
    %v221 = vadd.f32 %v193, %v220
    %222 = vdwg.mxu0
    %v223 = vperm.slane %v96, 7
    %224 = vmatpush.msra.mxu0 0.0
    %225 = vmatpush.msra.mxu0 0.0
    %226 = vmatpush.msra.mxu0 0.0
    %227 = vmatpush.msra.mxu0 0.0
    %228 = vmatpush.msra.mxu0 0.0
    %229 = vmatpush.msra.mxu0 0.0
    %230 = vmatpush.msra.mxu0 0.0
    %231 = vmatpush.msra.mxu0 0.0
    %232 = vmatpush.msra.mxu0 0.0
    %233 = vmatpush.msra.mxu0 0.0
    %234 = vmatpush.msra.mxu0 0.0
    %235 = vmatpush.msra.mxu0 0.0
    %236 = vmatpush.msra.mxu0 %v71
    %237 = vmatpush.msra.mxu0 %v70
    %238 = vmatpush.msra.mxu0 %v69
    %239 = vmatpush.msra.mxu0 %v68
    %240 = vmatmul.f32.gmra.mxu0 %v195
    %v241 = vpop.f32.mrf.mxu0
    %v242 = vadd.f32 %v223, %v241
    %243 = vmatmul.f32.gmra.mxu0 %v198
    %v244 = vpop.f32.mrf.mxu0
    %v245 = vadd.f32 %v223, %v244
    %246 = vdwg.mxu0
    %v247 = vperm.slane %v97, 0
    %248 = vmatpush.msra.mxu0 0.0
    %249 = vmatpush.msra.mxu0 0.0
    %250 = vmatpush.msra.mxu0 0.0
    %251 = vmatpush.msra.mxu0 0.0
    %252 = vmatpush.msra.mxu0 0.0
    %253 = vmatpush.msra.mxu0 0.0
    %254 = vmatpush.msra.mxu0 0.0
    %255 = vmatpush.msra.mxu0 0.0
    %256 = vmatpush.msra.mxu0 0.0
    %257 = vmatpush.msra.mxu0 0.0
    %258 = vmatpush.msra.mxu0 0.0
    %259 = vmatpush.msra.mxu0 0.0
    %260 = vmatpush.msra.mxu0 %v75
    %261 = vmatpush.msra.mxu0 %v74
    %262 = vmatpush.msra.mxu0 %v73
    %263 = vmatpush.msra.mxu0 %v72
    %264 = vmatmul.f32.gmra.mxu0 %v195
    %v265 = vpop.f32.mrf.mxu0
    %v266 = vadd.f32 %v247, %v265
    %267 = vmatmul.f32.gmra.mxu0 %v198
    %v268 = vpop.f32.mrf.mxu0
    %v269 = vadd.f32 %v247, %v268
    %270 = vdwg.mxu0
    %272 = vrot.lane.b32.xlu0 %v218, 120
    %v273 = vpop.permute.xlu0 %272
    %275 = vrot.lane.b32.xlu0 %v218, 112
    %v276 = vpop.permute.xlu0 %275
    %278 = vrot.lane.b32.xlu0 %v218, 104
    %v279 = vpop.permute.xlu0 %278
    %v281 = vrot.slane %v276, 4
    %vm282 = vcmask 1047556
    %v283 = vsel %vm282, %v281, %v218
    %v284 = vrot.slane %v218, 4
    %v285 = vsel %vm282, %v276, %v284
    %v287 = vunpack.c.l.s4 1983009808
    %v288 = vunpack.c.0.s8 %v287
    %v289 = vperm.slane %v283, %v288
    %v291 = vunpack.c.l.s4 1983009808
    %v292 = vunpack.c.0.s8 %v291
    %v293 = vperm.slane %v285, %v292
    %v294 = vrot.slane %v279, 4
    %v295 = vsel %vm282, %v294, %v273
    %v296 = vrot.slane %v273, 4
    %v297 = vsel %vm282, %v279, %v296
    %v299 = vunpack.c.l.s4 1983009808
    %v300 = vunpack.c.0.s8 %v299
    %v301 = vperm.slane %v295, %v300
    %v303 = vunpack.c.l.s4 1983009808
    %v304 = vunpack.c.0.s8 %v303
    %v305 = vperm.slane %v297, %v304
    %v306 = vrot.slane %v301, 4
    %v307 = vsel %vm282, %v306, %v289
    %v308 = vrot.slane %v289, 4
    %v309 = vsel %vm282, %v301, %v308
    %v311 = vunpack.c.l.s4 1934713408
    %v312 = vunpack.c.0.s8 %v311
    %v313 = vperm.slane %v307, %v312
    %v315 = vunpack.c.l.s4 1934713408
    %v316 = vunpack.c.0.s8 %v315
    %v317 = vperm.slane %v309, %v316
    %v318 = vrot.slane %v305, 4
    %v319 = vsel %vm282, %v318, %v293
    %v320 = vrot.slane %v293, 4
    %v321 = vsel %vm282, %v305, %v320
    %v323 = vunpack.c.l.s4 1934713408
    %v324 = vunpack.c.0.s8 %v323
    %v325 = vperm.slane %v319, %v324
    %v327 = vunpack.c.l.s4 1934713408
    %v328 = vunpack.c.0.s8 %v327
    %v329 = vperm.slane %v321, %v328
    %v330 = vrot.slane %v313, 4
    %v331 = vsel %vm282, 0.0, %v330
    %v332 = vrot.slane %v317, 4
    %v333 = vsel %vm282, 0.0, %v332
    %v334 = vrot.slane %v325, 4
    %v335 = vsel %vm282, 0.0, %v334
    %v336 = vrot.slane %v329, 4
    %v337 = vsel %vm282, 0.0, %v336
    %v338 = vsel %vm282, %v332, %v313
    %v340 = vunpack.c.l.s4 1983009808
    %v341 = vunpack.c.0.s8 %v340
    %v342 = vperm.slane %v338, %v341
    %v343 = vrot.slane %v333, 4
    %v344 = vsel %vm282, %v343, %v331
    %v346 = vunpack.c.l.s4 1983009808
    %v347 = vunpack.c.0.s8 %v346
    %v348 = vperm.slane %v344, %v347
    %v349 = vsel %vm282, %v336, %v325
    %v351 = vunpack.c.l.s4 1983009808
    %v352 = vunpack.c.0.s8 %v351
    %v353 = vperm.slane %v349, %v352
    %v354 = vrot.slane %v337, 4
    %v355 = vsel %vm282, %v354, %v335
    %v357 = vunpack.c.l.s4 1983009808
    %v358 = vunpack.c.0.s8 %v357
    %v359 = vperm.slane %v355, %v358
    %v360 = vrot.slane %v348, 4
    %v361 = vsel %vm282, %v360, %v342
    %v362 = vrot.slane %v342, 4
    %v363 = vsel %vm282, %v348, %v362
    %v365 = vunpack.c.l.s4 1934713408
    %v366 = vunpack.c.0.s8 %v365
    %v367 = vperm.slane %v361, %v366
    %v369 = vunpack.c.l.s4 1934713408
    %v370 = vunpack.c.0.s8 %v369
    %v371 = vperm.slane %v363, %v370
    %v372 = vrot.slane %v359, 4
    %v373 = vsel %vm282, %v372, %v353
    %v374 = vrot.slane %v353, 4
    %v375 = vsel %vm282, %v359, %v374
    %v377 = vunpack.c.l.s4 1934713408
    %v378 = vunpack.c.0.s8 %v377
    %v379 = vperm.slane %v373, %v378
    %v381 = vunpack.c.l.s4 1934713408
    %v382 = vunpack.c.0.s8 %v381
    %v383 = vperm.slane %v375, %v382
    %v384 = vrot.slane %v379, 4
    %v385 = vsel %vm282, %v384, %v367
    %v386 = vrot.slane %v367, 4
    %v387 = vsel %vm282, %v379, %v386
    %v388 = vrot.slane %v383, 4
    %v389 = vsel %vm282, %v388, %v371
    %v390 = vrot.slane %v371, 4
    %v391 = vsel %vm282, %v383, %v390
    %393 = vrot.lane.b32.xlu0 %v242, 120
    %v394 = vpop.permute.xlu0 %393
    %396 = vrot.lane.b32.xlu0 %v242, 112
    %v397 = vpop.permute.xlu0 %396
    %399 = vrot.lane.b32.xlu0 %v242, 104
    %v400 = vpop.permute.xlu0 %399
    %v402 = vrot.slane %v397, 4
    %v403 = vsel %vm282, %v402, %v242
    %v404 = vrot.slane %v242, 4
    %v405 = vsel %vm282, %v397, %v404
    %v407 = vunpack.c.l.s4 1983009808
    %v408 = vunpack.c.0.s8 %v407
    %v409 = vperm.slane %v403, %v408
    %v411 = vunpack.c.l.s4 1983009808
    %v412 = vunpack.c.0.s8 %v411
    %v413 = vperm.slane %v405, %v412
    %v414 = vrot.slane %v400, 4
    %v415 = vsel %vm282, %v414, %v394
    %v416 = vrot.slane %v394, 4
    %v417 = vsel %vm282, %v400, %v416
    %v419 = vunpack.c.l.s4 1983009808
    %v420 = vunpack.c.0.s8 %v419
    %v421 = vperm.slane %v415, %v420
    %v423 = vunpack.c.l.s4 1983009808
    %v424 = vunpack.c.0.s8 %v423
    %v425 = vperm.slane %v417, %v424
    %v426 = vrot.slane %v421, 4
    %v427 = vsel %vm282, %v426, %v409
    %v428 = vrot.slane %v409, 4
    %v429 = vsel %vm282, %v421, %v428
    %v431 = vunpack.c.l.s4 1934713408
    %v432 = vunpack.c.0.s8 %v431
    %v433 = vperm.slane %v427, %v432
    %v435 = vunpack.c.l.s4 1934713408
    %v436 = vunpack.c.0.s8 %v435
    %v437 = vperm.slane %v429, %v436
    %v438 = vrot.slane %v425, 4
    %v439 = vsel %vm282, %v438, %v413
    %v440 = vrot.slane %v413, 4
    %v441 = vsel %vm282, %v425, %v440
    %v443 = vunpack.c.l.s4 1934713408
    %v444 = vunpack.c.0.s8 %v443
    %v445 = vperm.slane %v439, %v444
    %v447 = vunpack.c.l.s4 1934713408
    %v448 = vunpack.c.0.s8 %v447
    %v449 = vperm.slane %v441, %v448
    %v450 = vrot.slane %v433, 4
    %v451 = vsel %vm282, 0.0, %v450
    %v452 = vrot.slane %v437, 4
    %v453 = vsel %vm282, 0.0, %v452
    %v454 = vrot.slane %v445, 4
    %v455 = vsel %vm282, 0.0, %v454
    %v456 = vrot.slane %v449, 4
    %v457 = vsel %vm282, 0.0, %v456
    %v458 = vsel %vm282, %v452, %v433
    %v460 = vunpack.c.l.s4 1983009808
    %v461 = vunpack.c.0.s8 %v460
    %v462 = vperm.slane %v458, %v461
    %v463 = vrot.slane %v453, 4
    %v464 = vsel %vm282, %v463, %v451
    %v466 = vunpack.c.l.s4 1983009808
    %v467 = vunpack.c.0.s8 %v466
    %v468 = vperm.slane %v464, %v467
    %v469 = vsel %vm282, %v456, %v445
    %v471 = vunpack.c.l.s4 1983009808
    %v472 = vunpack.c.0.s8 %v471
    %v473 = vperm.slane %v469, %v472
    %v474 = vrot.slane %v457, 4
    %v475 = vsel %vm282, %v474, %v455
    %v477 = vunpack.c.l.s4 1983009808
    %v478 = vunpack.c.0.s8 %v477
    %v479 = vperm.slane %v475, %v478
    %v480 = vrot.slane %v468, 4
    %v481 = vsel %vm282, %v480, %v462
    %v482 = vrot.slane %v462, 4
    %v483 = vsel %vm282, %v468, %v482
    %v485 = vunpack.c.l.s4 1934713408
    %v486 = vunpack.c.0.s8 %v485
    %v487 = vperm.slane %v481, %v486
    %v489 = vunpack.c.l.s4 1934713408
    %v490 = vunpack.c.0.s8 %v489
    %v491 = vperm.slane %v483, %v490
    %v492 = vrot.slane %v479, 4
    %v493 = vsel %vm282, %v492, %v473
    %v494 = vrot.slane %v473, 4
    %v495 = vsel %vm282, %v479, %v494
    %v497 = vunpack.c.l.s4 1934713408
    %v498 = vunpack.c.0.s8 %v497
    %v499 = vperm.slane %v493, %v498
    %v501 = vunpack.c.l.s4 1934713408
    %v502 = vunpack.c.0.s8 %v501
    %v503 = vperm.slane %v495, %v502
    %v504 = vrot.slane %v499, 4
    %v505 = vsel %vm282, %v504, %v487
    %v506 = vrot.slane %v487, 4
    %v507 = vsel %vm282, %v499, %v506
    %v508 = vrot.slane %v503, 4
    %v509 = vsel %vm282, %v508, %v491
    %v510 = vrot.slane %v491, 4
    %v511 = vsel %vm282, %v503, %v510
    %513 = vrot.lane.b32.xlu0 %v266, 120
    %v514 = vpop.permute.xlu0 %513
    %516 = vrot.lane.b32.xlu0 %v266, 112
    %v517 = vpop.permute.xlu0 %516
    %519 = vrot.lane.b32.xlu0 %v266, 104
    %v520 = vpop.permute.xlu0 %519
    %v522 = vrot.slane %v517, 4
    %v523 = vsel %vm282, %v522, %v266
    %v524 = vrot.slane %v266, 4
    %v525 = vsel %vm282, %v517, %v524
    %v527 = vunpack.c.l.s4 1983009808
    %v528 = vunpack.c.0.s8 %v527
    %v529 = vperm.slane %v523, %v528
    %v531 = vunpack.c.l.s4 1983009808
    %v532 = vunpack.c.0.s8 %v531
    %v533 = vperm.slane %v525, %v532
    %v534 = vrot.slane %v520, 4
    %v535 = vsel %vm282, %v534, %v514
    %v536 = vrot.slane %v514, 4
    %v537 = vsel %vm282, %v520, %v536
    %v539 = vunpack.c.l.s4 1983009808
    %v540 = vunpack.c.0.s8 %v539
    %v541 = vperm.slane %v535, %v540
    %v543 = vunpack.c.l.s4 1983009808
    %v544 = vunpack.c.0.s8 %v543
    %v545 = vperm.slane %v537, %v544
    %v546 = vrot.slane %v541, 4
    %v547 = vsel %vm282, %v546, %v529
    %v548 = vrot.slane %v529, 4
    %v549 = vsel %vm282, %v541, %v548
    %v551 = vunpack.c.l.s4 1934713408
    %v552 = vunpack.c.0.s8 %v551
    %v553 = vperm.slane %v547, %v552
    %v555 = vunpack.c.l.s4 1934713408
    %v556 = vunpack.c.0.s8 %v555
    %v557 = vperm.slane %v549, %v556
    %v558 = vrot.slane %v545, 4
    %v559 = vsel %vm282, %v558, %v533
    %v560 = vrot.slane %v533, 4
    %v561 = vsel %vm282, %v545, %v560
    %v563 = vunpack.c.l.s4 1934713408
    %v564 = vunpack.c.0.s8 %v563
    %v565 = vperm.slane %v559, %v564
    %v567 = vunpack.c.l.s4 1934713408
    %v568 = vunpack.c.0.s8 %v567
    %v569 = vperm.slane %v561, %v568
    %v570 = vrot.slane %v553, 4
    %v571 = vsel %vm282, 0.0, %v570
    %v572 = vrot.slane %v557, 4
    %v573 = vsel %vm282, 0.0, %v572
    %v574 = vrot.slane %v565, 4
    %v575 = vsel %vm282, 0.0, %v574
    %v576 = vrot.slane %v569, 4
    %v577 = vsel %vm282, 0.0, %v576
    %v578 = vsel %vm282, %v572, %v553
    %v580 = vunpack.c.l.s4 1983009808
    %v581 = vunpack.c.0.s8 %v580
    %v582 = vperm.slane %v578, %v581
    %v583 = vrot.slane %v573, 4
    %v584 = vsel %vm282, %v583, %v571
    %v586 = vunpack.c.l.s4 1983009808
    %v587 = vunpack.c.0.s8 %v586
    %v588 = vperm.slane %v584, %v587
    %v589 = vsel %vm282, %v576, %v565
    %v591 = vunpack.c.l.s4 1983009808
    %v592 = vunpack.c.0.s8 %v591
    %v593 = vperm.slane %v589, %v592
    %v594 = vrot.slane %v577, 4
    %v595 = vsel %vm282, %v594, %v575
    %v597 = vunpack.c.l.s4 1983009808
    %v598 = vunpack.c.0.s8 %v597
    %v599 = vperm.slane %v595, %v598
    %v600 = vrot.slane %v588, 4
    %v601 = vsel %vm282, %v600, %v582
    %v602 = vrot.slane %v582, 4
    %v603 = vsel %vm282, %v588, %v602
    %v605 = vunpack.c.l.s4 1934713408
    %v606 = vunpack.c.0.s8 %v605
    %v607 = vperm.slane %v601, %v606
    %v609 = vunpack.c.l.s4 1934713408
    %v610 = vunpack.c.0.s8 %v609
    %v611 = vperm.slane %v603, %v610
    %v612 = vrot.slane %v599, 4
    %v613 = vsel %vm282, %v612, %v593
    %v614 = vrot.slane %v593, 4
    %v615 = vsel %vm282, %v599, %v614
    %v617 = vunpack.c.l.s4 1934713408
    %v618 = vunpack.c.0.s8 %v617
    %v619 = vperm.slane %v613, %v618
    %v621 = vunpack.c.l.s4 1934713408
    %v622 = vunpack.c.0.s8 %v621
    %v623 = vperm.slane %v615, %v622
    %v624 = vrot.slane %v619, 4
    %v625 = vsel %vm282, %v624, %v607
    %v626 = vrot.slane %v607, 4
    %v627 = vsel %vm282, %v619, %v626
    %v628 = vrot.slane %v623, 4
    %v629 = vsel %vm282, %v628, %v611
    %v630 = vrot.slane %v611, 4
    %v631 = vsel %vm282, %v623, %v630
    %vm632 = vcmask 64512
    %v634 = vsel %vm632, %v385, 0
    %v637 = vsel %vm632, %v505, 0
    %639 = vmatpush.xpose.msra.mxu0 0.0
    %640 = vmatpush.xpose.msra.mxu0 0.0
    %641 = vmatpush.xpose.msra.mxu0 0.0
    %642 = vmatpush.xpose.msra.mxu0 0.0
    %643 = vmatpush.xpose.msra.mxu0 0.0
    %644 = vmatpush.xpose.msra.mxu0 0.0
    %645 = vmatpush.xpose.msra.mxu0 0.0
    %646 = vmatpush.xpose.msra.mxu0 0.0
    %647 = vmatpush.xpose.msra.mxu0 0.0
    %648 = vmatpush.xpose.msra.mxu0 0.0
    %649 = vmatpush.xpose.msra.mxu0 0.0
    %650 = vmatpush.xpose.msra.mxu0 0.0
    %651 = vmatpush.xpose.msra.mxu0 0.0
    %652 = vmatpush.xpose.msra.mxu0 0.0
    %653 = vmatpush.xpose.msra.mxu0 0.0
    %654 = vmatpush.xpose.msra.mxu0 %v637
    %655 = vmatmul.f32.gmra.mxu0 %v634
    %v656 = vpop.f32.mrf.mxu0
    %v657 = vadd.f32 0.0, %v656
    %658 = vdwg.mxu0
    %v660 = vsel %vm632, %v387, 0
    %v663 = vsel %vm632, %v507, 0
    %665 = vmatpush.xpose.msra.mxu0 0.0
    %666 = vmatpush.xpose.msra.mxu0 0.0
    %667 = vmatpush.xpose.msra.mxu0 0.0
    %668 = vmatpush.xpose.msra.mxu0 0.0
    %669 = vmatpush.xpose.msra.mxu0 0.0
    %670 = vmatpush.xpose.msra.mxu0 0.0
    %671 = vmatpush.xpose.msra.mxu0 0.0
    %672 = vmatpush.xpose.msra.mxu0 0.0
    %673 = vmatpush.xpose.msra.mxu0 0.0
    %674 = vmatpush.xpose.msra.mxu0 0.0
    %675 = vmatpush.xpose.msra.mxu0 0.0
    %676 = vmatpush.xpose.msra.mxu0 0.0
    %677 = vmatpush.xpose.msra.mxu0 0.0
    %678 = vmatpush.xpose.msra.mxu0 0.0
    %679 = vmatpush.xpose.msra.mxu0 0.0
    %680 = vmatpush.xpose.msra.mxu0 %v663
    %681 = vmatmul.f32.gmra.mxu0 %v660
    %v682 = vpop.f32.mrf.mxu0
    %v683 = vadd.f32 0.0, %v682
    %684 = vdwg.mxu0
    %v686 = vsel %vm632, %v389, 0
    %v689 = vsel %vm632, %v509, 0
    %691 = vmatpush.xpose.msra.mxu0 0.0
    %692 = vmatpush.xpose.msra.mxu0 0.0
    %693 = vmatpush.xpose.msra.mxu0 0.0
    %694 = vmatpush.xpose.msra.mxu0 0.0
    %695 = vmatpush.xpose.msra.mxu0 0.0
    %696 = vmatpush.xpose.msra.mxu0 0.0
    %697 = vmatpush.xpose.msra.mxu0 0.0
    %698 = vmatpush.xpose.msra.mxu0 0.0
    %699 = vmatpush.xpose.msra.mxu0 0.0
    %700 = vmatpush.xpose.msra.mxu0 0.0
    %701 = vmatpush.xpose.msra.mxu0 0.0
    %702 = vmatpush.xpose.msra.mxu0 0.0
    %703 = vmatpush.xpose.msra.mxu0 0.0
    %704 = vmatpush.xpose.msra.mxu0 0.0
    %705 = vmatpush.xpose.msra.mxu0 0.0
    %706 = vmatpush.xpose.msra.mxu0 %v689
    %707 = vmatmul.f32.gmra.mxu0 %v686
    %v708 = vpop.f32.mrf.mxu0
    %v709 = vadd.f32 0.0, %v708
    %710 = vdwg.mxu0
    %v712 = vsel %vm632, %v391, 0
    %v715 = vsel %vm632, %v511, 0
    %717 = vmatpush.xpose.msra.mxu0 0.0
    %718 = vmatpush.xpose.msra.mxu0 0.0
    %719 = vmatpush.xpose.msra.mxu0 0.0
    %720 = vmatpush.xpose.msra.mxu0 0.0
    %721 = vmatpush.xpose.msra.mxu0 0.0
    %722 = vmatpush.xpose.msra.mxu0 0.0
    %723 = vmatpush.xpose.msra.mxu0 0.0
    %724 = vmatpush.xpose.msra.mxu0 0.0
    %725 = vmatpush.xpose.msra.mxu0 0.0
    %726 = vmatpush.xpose.msra.mxu0 0.0
    %727 = vmatpush.xpose.msra.mxu0 0.0
    %728 = vmatpush.xpose.msra.mxu0 0.0
    %729 = vmatpush.xpose.msra.mxu0 0.0
    %730 = vmatpush.xpose.msra.mxu0 0.0
    %731 = vmatpush.xpose.msra.mxu0 0.0
    %732 = vmatpush.xpose.msra.mxu0 %v715
    %733 = vmatmul.f32.gmra.mxu0 %v712
    %v734 = vpop.f32.mrf.mxu0
    %v735 = vadd.f32 0.0, %v734
    %736 = vdwg.mxu0
    %v737 = vmul.f32 %v657, 0.35355338
    %v738 = vmul.f32 %v683, 0.35355338
    %v739 = vmul.f32 %v709, 0.35355338
    %v740 = vmul.f32 %v735, 0.35355338
    %v741 = vadd.f32 %v737, %v58
    %v742 = vadd.f32 %v738, %v58
    %v743 = vadd.f32 %v739, %v58
    %v744 = vadd.f32 %v740, %v58
    %v745 = vsel %vm632, %v741, -inf
    %746 = vmax.xlane.f32.xlu0 %v745
    %v747 = vpop.xlane.xlu0 %746
    %v748 = vsel %vm632, %v742, -inf
    %749 = vmax.xlane.f32.xlu0 %v748
    %v750 = vpop.xlane.xlu0 %749
    %v751 = vsel %vm632, %v743, -inf
    %752 = vmax.xlane.f32.xlu0 %v751
    %v753 = vpop.xlane.xlu0 %752
    %v754 = vsel %vm632, %v744, -inf
    %755 = vmax.xlane.f32.xlu0 %v754
    %v756 = vpop.xlane.xlu0 %755
    %v757 = vsub.f32 %v741, %v747
    %v758 = vsub.f32 %v742, %v750
    %v759 = vsub.f32 %v743, %v753
    %v760 = vsub.f32 %v744, %v756
    %v761 = vmul.f32 %v757, 1.442695
    %v762 = vpow.pop %v761
    %v763 = vmul.f32 %v758, 1.442695
    %v764 = vpow.pop %v763
    %v765 = vmul.f32 %v759, 1.442695
    %v766 = vpow.pop %v765
    %v767 = vmul.f32 %v760, 1.442695
    %v768 = vpow.pop %v767
    %v769 = vsel %vm632, %v762, 0.0
    %770 = vadd.xlane.f32.xlu0 %v769
    %v771 = vpop.xlane.xlu0 %770
    %v772 = vsel %vm632, %v764, 0.0
    %773 = vadd.xlane.f32.xlu0 %v772
    %v774 = vpop.xlane.xlu0 %773
    %v775 = vsel %vm632, %v766, 0.0
    %776 = vadd.xlane.f32.xlu0 %v775
    %v777 = vpop.xlane.xlu0 %776
    %v778 = vsel %vm632, %v768, 0.0
    %779 = vadd.xlane.f32.xlu0 %v778
    %v780 = vpop.xlane.xlu0 %779
    %v781 = vrcp.pop %v771
    %v782 = vrcp.pop %v774
    %v783 = vrcp.pop %v777
    %v784 = vrcp.pop %v780
    %v785 = vmul.f32 %v762, %v781
    %v786 = vmul.f32 %v764, %v782
    %v787 = vmul.f32 %v766, %v783
    %v788 = vmul.f32 %v768, %v784
    %v790 = vsel %vm632, %v785, 0
    %792 = vmatpush.msra.mxu0 0.0
    %793 = vmatpush.msra.mxu0 0.0
    %794 = vmatpush.msra.mxu0 0.0
    %795 = vmatpush.msra.mxu0 0.0
    %796 = vmatpush.msra.mxu0 0.0
    %797 = vmatpush.msra.mxu0 0.0
    %798 = vmatpush.msra.mxu0 0.0
    %799 = vmatpush.msra.mxu0 0.0
    %800 = vmatpush.msra.mxu0 0.0
    %801 = vmatpush.msra.mxu0 0.0
    %802 = vmatpush.msra.mxu0 0.0
    %803 = vmatpush.msra.mxu0 0.0
    %804 = vmatpush.msra.mxu0 0.0
    %805 = vmatpush.msra.mxu0 0.0
    %806 = vmatpush.msra.mxu0 0.0
    %807 = vmatpush.msra.mxu0 %v625
    %808 = vmatmul.f32.gmra.mxu0 %v790
    %v809 = vpop.f32.mrf.mxu0
    %v810 = vadd.f32 0.0, %v809
    %811 = vdwg.mxu0
    %v813 = vsel %vm632, %v786, 0
    %815 = vmatpush.msra.mxu0 0.0
    %816 = vmatpush.msra.mxu0 0.0
    %817 = vmatpush.msra.mxu0 0.0
    %818 = vmatpush.msra.mxu0 0.0
    %819 = vmatpush.msra.mxu0 0.0
    %820 = vmatpush.msra.mxu0 0.0
    %821 = vmatpush.msra.mxu0 0.0
    %822 = vmatpush.msra.mxu0 0.0
    %823 = vmatpush.msra.mxu0 0.0
    %824 = vmatpush.msra.mxu0 0.0
    %825 = vmatpush.msra.mxu0 0.0
    %826 = vmatpush.msra.mxu0 0.0
    %827 = vmatpush.msra.mxu0 0.0
    %828 = vmatpush.msra.mxu0 0.0
    %829 = vmatpush.msra.mxu0 0.0
    %830 = vmatpush.msra.mxu0 %v627
    %831 = vmatmul.f32.gmra.mxu0 %v813
    %v832 = vpop.f32.mrf.mxu0
    %v833 = vadd.f32 0.0, %v832
    %834 = vdwg.mxu0
    %v836 = vsel %vm632, %v787, 0
    %838 = vmatpush.msra.mxu0 0.0
    %839 = vmatpush.msra.mxu0 0.0
    %840 = vmatpush.msra.mxu0 0.0
    %841 = vmatpush.msra.mxu0 0.0
    %842 = vmatpush.msra.mxu0 0.0
    %843 = vmatpush.msra.mxu0 0.0
    %844 = vmatpush.msra.mxu0 0.0
    %845 = vmatpush.msra.mxu0 0.0
    %846 = vmatpush.msra.mxu0 0.0
    %847 = vmatpush.msra.mxu0 0.0
    %848 = vmatpush.msra.mxu0 0.0
    %849 = vmatpush.msra.mxu0 0.0
    %850 = vmatpush.msra.mxu0 0.0
    %851 = vmatpush.msra.mxu0 0.0
    %852 = vmatpush.msra.mxu0 0.0
    %853 = vmatpush.msra.mxu0 %v629
    %854 = vmatmul.f32.gmra.mxu0 %v836
    %v855 = vpop.f32.mrf.mxu0
    %v856 = vadd.f32 0.0, %v855
    %857 = vdwg.mxu0
    %v859 = vsel %vm632, %v788, 0
    %861 = vmatpush.msra.mxu0 0.0
    %862 = vmatpush.msra.mxu0 0.0
    %863 = vmatpush.msra.mxu0 0.0
    %864 = vmatpush.msra.mxu0 0.0
    %865 = vmatpush.msra.mxu0 0.0
    %866 = vmatpush.msra.mxu0 0.0
    %867 = vmatpush.msra.mxu0 0.0
    %868 = vmatpush.msra.mxu0 0.0
    %869 = vmatpush.msra.mxu0 0.0
    %870 = vmatpush.msra.mxu0 0.0
    %871 = vmatpush.msra.mxu0 0.0
    %872 = vmatpush.msra.mxu0 0.0
    %873 = vmatpush.msra.mxu0 0.0
    %874 = vmatpush.msra.mxu0 0.0
    %875 = vmatpush.msra.mxu0 0.0
    %876 = vmatpush.msra.mxu0 %v631
    %877 = vmatmul.f32.gmra.mxu0 %v859
    %v878 = vpop.f32.mrf.mxu0
    %v879 = vadd.f32 0.0, %v878
    %880 = vdwg.mxu0
    %v881 = vrot.slane %v856, 4
    %v882 = vsel %vm282, %v881, %v810
    %v883 = vrot.slane %v810, 4
    %v884 = vsel %vm282, %v856, %v883
    %v886 = vunpack.c.l.s4 1983009808
    %v887 = vunpack.c.0.s8 %v886
    %v888 = vperm.slane %v882, %v887
    %v890 = vunpack.c.l.s4 1983009808
    %v891 = vunpack.c.0.s8 %v890
    %v892 = vperm.slane %v884, %v891
    %v893 = vrot.slane %v879, 4
    %v894 = vsel %vm282, %v893, %v833
    %v895 = vrot.slane %v833, 4
    %v896 = vsel %vm282, %v879, %v895
    %v898 = vunpack.c.l.s4 1983009808
    %v899 = vunpack.c.0.s8 %v898
    %v900 = vperm.slane %v894, %v899
    %v902 = vunpack.c.l.s4 1983009808
    %v903 = vunpack.c.0.s8 %v902
    %v904 = vperm.slane %v896, %v903
    %v905 = vrot.slane %v900, 4
    %v906 = vsel %vm282, %v905, %v888
    %v907 = vrot.slane %v888, 4
    %v908 = vsel %vm282, %v900, %v907
    %v910 = vunpack.c.l.s4 1934713408
    %v911 = vunpack.c.0.s8 %v910
    %v912 = vperm.slane %v906, %v911
    %v914 = vunpack.c.l.s4 1934713408
    %v915 = vunpack.c.0.s8 %v914
    %v916 = vperm.slane %v908, %v915
    %v917 = vrot.slane %v904, 4
    %v918 = vsel %vm282, %v917, %v892
    %v919 = vrot.slane %v892, 4
    %v920 = vsel %vm282, %v904, %v919
    %v922 = vunpack.c.l.s4 1934713408
    %v923 = vunpack.c.0.s8 %v922
    %v924 = vperm.slane %v918, %v923
    %v926 = vunpack.c.l.s4 1934713408
    %v927 = vunpack.c.0.s8 %v926
    %v928 = vperm.slane %v920, %v927
    %v929 = vrot.slane %v912, 4
    %v930 = vsel %vm282, 0.0, %v929
    %v931 = vrot.slane %v916, 4
    %v932 = vsel %vm282, 0.0, %v931
    %v933 = vrot.slane %v924, 4
    %v934 = vsel %vm282, 0.0, %v933
    %v935 = vrot.slane %v928, 4
    %v936 = vsel %vm282, 0.0, %v935
    %v937 = vsel %vm282, %v931, %v912
    %v939 = vunpack.c.l.s4 1983009808
    %v940 = vunpack.c.0.s8 %v939
    %v941 = vperm.slane %v937, %v940
    %v942 = vrot.slane %v932, 4
    %v943 = vsel %vm282, %v942, %v930
    %v945 = vunpack.c.l.s4 1983009808
    %v946 = vunpack.c.0.s8 %v945
    %v947 = vperm.slane %v943, %v946
    %v948 = vsel %vm282, %v935, %v924
    %v950 = vunpack.c.l.s4 1983009808
    %v951 = vunpack.c.0.s8 %v950
    %v952 = vperm.slane %v948, %v951
    %v953 = vrot.slane %v936, 4
    %v954 = vsel %vm282, %v953, %v934
    %v956 = vunpack.c.l.s4 1983009808
    %v957 = vunpack.c.0.s8 %v956
    %v958 = vperm.slane %v954, %v957
    %v959 = vrot.slane %v947, 4
    %v960 = vsel %vm282, %v959, %v941
    %v961 = vrot.slane %v941, 4
    %v962 = vsel %vm282, %v947, %v961
    %v964 = vunpack.c.l.s4 1934713408
    %v965 = vunpack.c.0.s8 %v964
    %v966 = vperm.slane %v960, %v965
    %v968 = vunpack.c.l.s4 1934713408
    %v969 = vunpack.c.0.s8 %v968
    %v970 = vperm.slane %v962, %v969
    %v971 = vrot.slane %v958, 4
    %v972 = vsel %vm282, %v971, %v952
    %v973 = vrot.slane %v952, 4
    %v974 = vsel %vm282, %v958, %v973
    %v976 = vunpack.c.l.s4 1934713408
    %v977 = vunpack.c.0.s8 %v976
    %v978 = vperm.slane %v972, %v977
    %v980 = vunpack.c.l.s4 1934713408
    %v981 = vunpack.c.0.s8 %v980
    %v982 = vperm.slane %v974, %v981
    %v983 = vrot.slane %v978, 4
    %v984 = vsel %vm282, %v983, %v966
    %v985 = vrot.slane %v966, 4
    %v986 = vsel %vm282, %v978, %v985
    %v987 = vrot.slane %v982, 4
    %v988 = vsel %vm282, %v987, %v970
    %v989 = vrot.slane %v970, 4
    %v990 = vsel %vm282, %v982, %v989
    %992 = vrot.lane.b32.xlu0 %v986, 8
    %v993 = vpop.permute.xlu0 %992
    %996 = vrot.lane.b32.xlu0 %v988, 16
    %v997 = vpop.permute.xlu0 %996
    %1000 = vrot.lane.b32.xlu0 %v990, 24
    %v1001 = vpop.permute.xlu0 %1000
    %v1003 = vsel %vm632, %v984, %v993
    %vm1004 = vcmask 130048
    %v1005 = vsel %vm1004, %v1003, %v997
    %vm1006 = vcmask 195584
    %v1007 = vsel %vm1006, %v1005, %v1001
    %1009 = vrot.lane.b32.xlu0 %v221, 120
    %v1010 = vpop.permute.xlu0 %1009
    %1012 = vrot.lane.b32.xlu0 %v221, 112
    %v1013 = vpop.permute.xlu0 %1012
    %1015 = vrot.lane.b32.xlu0 %v221, 104
    %v1016 = vpop.permute.xlu0 %1015
    %v1018 = vrot.slane %v1013, 4
    %v1019 = vsel %vm282, %v1018, %v221
    %v1020 = vrot.slane %v221, 4
    %v1021 = vsel %vm282, %v1013, %v1020
    %v1023 = vunpack.c.l.s4 1983009808
    %v1024 = vunpack.c.0.s8 %v1023
    %v1025 = vperm.slane %v1019, %v1024
    %v1027 = vunpack.c.l.s4 1983009808
    %v1028 = vunpack.c.0.s8 %v1027
    %v1029 = vperm.slane %v1021, %v1028
    %v1030 = vrot.slane %v1016, 4
    %v1031 = vsel %vm282, %v1030, %v1010
    %v1032 = vrot.slane %v1010, 4
    %v1033 = vsel %vm282, %v1016, %v1032
    %v1035 = vunpack.c.l.s4 1983009808
    %v1036 = vunpack.c.0.s8 %v1035
    %v1037 = vperm.slane %v1031, %v1036
    %v1039 = vunpack.c.l.s4 1983009808
    %v1040 = vunpack.c.0.s8 %v1039
    %v1041 = vperm.slane %v1033, %v1040
    %v1042 = vrot.slane %v1037, 4
    %v1043 = vsel %vm282, %v1042, %v1025
    %v1044 = vrot.slane %v1025, 4
    %v1045 = vsel %vm282, %v1037, %v1044
    %v1047 = vunpack.c.l.s4 1934713408
    %v1048 = vunpack.c.0.s8 %v1047
    %v1049 = vperm.slane %v1043, %v1048
    %v1051 = vunpack.c.l.s4 1934713408
    %v1052 = vunpack.c.0.s8 %v1051
    %v1053 = vperm.slane %v1045, %v1052
    %v1054 = vrot.slane %v1041, 4
    %v1055 = vsel %vm282, %v1054, %v1029
    %v1056 = vrot.slane %v1029, 4
    %v1057 = vsel %vm282, %v1041, %v1056
    %v1059 = vunpack.c.l.s4 1934713408
    %v1060 = vunpack.c.0.s8 %v1059
    %v1061 = vperm.slane %v1055, %v1060
    %v1063 = vunpack.c.l.s4 1934713408
    %v1064 = vunpack.c.0.s8 %v1063
    %v1065 = vperm.slane %v1057, %v1064
    %v1066 = vrot.slane %v1049, 4
    %v1067 = vsel %vm282, 0.0, %v1066
    %v1068 = vrot.slane %v1053, 4
    %v1069 = vsel %vm282, 0.0, %v1068
    %v1070 = vrot.slane %v1061, 4
    %v1071 = vsel %vm282, 0.0, %v1070
    %v1072 = vrot.slane %v1065, 4
    %v1073 = vsel %vm282, 0.0, %v1072
    %v1074 = vsel %vm282, %v1068, %v1049
    %v1076 = vunpack.c.l.s4 1983009808
    %v1077 = vunpack.c.0.s8 %v1076
    %v1078 = vperm.slane %v1074, %v1077
    %v1079 = vrot.slane %v1069, 4
    %v1080 = vsel %vm282, %v1079, %v1067
    %v1082 = vunpack.c.l.s4 1983009808
    %v1083 = vunpack.c.0.s8 %v1082
    %v1084 = vperm.slane %v1080, %v1083
    %v1085 = vsel %vm282, %v1072, %v1061
    %v1087 = vunpack.c.l.s4 1983009808
    %v1088 = vunpack.c.0.s8 %v1087
    %v1089 = vperm.slane %v1085, %v1088
    %v1090 = vrot.slane %v1073, 4
    %v1091 = vsel %vm282, %v1090, %v1071
    %v1093 = vunpack.c.l.s4 1983009808
    %v1094 = vunpack.c.0.s8 %v1093
    %v1095 = vperm.slane %v1091, %v1094
    %v1096 = vrot.slane %v1084, 4
    %v1097 = vsel %vm282, %v1096, %v1078
    %v1098 = vrot.slane %v1078, 4
    %v1099 = vsel %vm282, %v1084, %v1098
    %v1101 = vunpack.c.l.s4 1934713408
    %v1102 = vunpack.c.0.s8 %v1101
    %v1103 = vperm.slane %v1097, %v1102
    %v1105 = vunpack.c.l.s4 1934713408
    %v1106 = vunpack.c.0.s8 %v1105
    %v1107 = vperm.slane %v1099, %v1106
    %v1108 = vrot.slane %v1095, 4
    %v1109 = vsel %vm282, %v1108, %v1089
    %v1110 = vrot.slane %v1089, 4
    %v1111 = vsel %vm282, %v1095, %v1110
    %v1113 = vunpack.c.l.s4 1934713408
    %v1114 = vunpack.c.0.s8 %v1113
    %v1115 = vperm.slane %v1109, %v1114
    %v1117 = vunpack.c.l.s4 1934713408
    %v1118 = vunpack.c.0.s8 %v1117
    %v1119 = vperm.slane %v1111, %v1118
    %v1120 = vrot.slane %v1115, 4
    %v1121 = vsel %vm282, %v1120, %v1103
    %v1122 = vrot.slane %v1103, 4
    %v1123 = vsel %vm282, %v1115, %v1122
    %v1124 = vrot.slane %v1119, 4
    %v1125 = vsel %vm282, %v1124, %v1107
    %v1126 = vrot.slane %v1107, 4
    %v1127 = vsel %vm282, %v1119, %v1126
    %1129 = vrot.lane.b32.xlu0 %v245, 120
    %v1130 = vpop.permute.xlu0 %1129
    %1132 = vrot.lane.b32.xlu0 %v245, 112
    %v1133 = vpop.permute.xlu0 %1132
    %1135 = vrot.lane.b32.xlu0 %v245, 104
    %v1136 = vpop.permute.xlu0 %1135
    %v1138 = vrot.slane %v1133, 4
    %v1139 = vsel %vm282, %v1138, %v245
    %v1140 = vrot.slane %v245, 4
    %v1141 = vsel %vm282, %v1133, %v1140
    %v1143 = vunpack.c.l.s4 1983009808
    %v1144 = vunpack.c.0.s8 %v1143
    %v1145 = vperm.slane %v1139, %v1144
    %v1147 = vunpack.c.l.s4 1983009808
    %v1148 = vunpack.c.0.s8 %v1147
    %v1149 = vperm.slane %v1141, %v1148
    %v1150 = vrot.slane %v1136, 4
    %v1151 = vsel %vm282, %v1150, %v1130
    %v1152 = vrot.slane %v1130, 4
    %v1153 = vsel %vm282, %v1136, %v1152
    %v1155 = vunpack.c.l.s4 1983009808
    %v1156 = vunpack.c.0.s8 %v1155
    %v1157 = vperm.slane %v1151, %v1156
    %v1159 = vunpack.c.l.s4 1983009808
    %v1160 = vunpack.c.0.s8 %v1159
    %v1161 = vperm.slane %v1153, %v1160
    %v1162 = vrot.slane %v1157, 4
    %v1163 = vsel %vm282, %v1162, %v1145
    %v1164 = vrot.slane %v1145, 4
    %v1165 = vsel %vm282, %v1157, %v1164
    %v1167 = vunpack.c.l.s4 1934713408
    %v1168 = vunpack.c.0.s8 %v1167
    %v1169 = vperm.slane %v1163, %v1168
    %v1171 = vunpack.c.l.s4 1934713408
    %v1172 = vunpack.c.0.s8 %v1171
    %v1173 = vperm.slane %v1165, %v1172
    %v1174 = vrot.slane %v1161, 4
    %v1175 = vsel %vm282, %v1174, %v1149
    %v1176 = vrot.slane %v1149, 4
    %v1177 = vsel %vm282, %v1161, %v1176
    %v1179 = vunpack.c.l.s4 1934713408
    %v1180 = vunpack.c.0.s8 %v1179
    %v1181 = vperm.slane %v1175, %v1180
    %v1183 = vunpack.c.l.s4 1934713408
    %v1184 = vunpack.c.0.s8 %v1183
    %v1185 = vperm.slane %v1177, %v1184
    %v1186 = vrot.slane %v1169, 4
    %v1187 = vsel %vm282, 0.0, %v1186
    %v1188 = vrot.slane %v1173, 4
    %v1189 = vsel %vm282, 0.0, %v1188
    %v1190 = vrot.slane %v1181, 4
    %v1191 = vsel %vm282, 0.0, %v1190
    %v1192 = vrot.slane %v1185, 4
    %v1193 = vsel %vm282, 0.0, %v1192
    %v1194 = vsel %vm282, %v1188, %v1169
    %v1196 = vunpack.c.l.s4 1983009808
    %v1197 = vunpack.c.0.s8 %v1196
    %v1198 = vperm.slane %v1194, %v1197
    %v1199 = vrot.slane %v1189, 4
    %v1200 = vsel %vm282, %v1199, %v1187
    %v1202 = vunpack.c.l.s4 1983009808
    %v1203 = vunpack.c.0.s8 %v1202
    %v1204 = vperm.slane %v1200, %v1203
    %v1205 = vsel %vm282, %v1192, %v1181
    %v1207 = vunpack.c.l.s4 1983009808
    %v1208 = vunpack.c.0.s8 %v1207
    %v1209 = vperm.slane %v1205, %v1208
    %v1210 = vrot.slane %v1193, 4
    %v1211 = vsel %vm282, %v1210, %v1191
    %v1213 = vunpack.c.l.s4 1983009808
    %v1214 = vunpack.c.0.s8 %v1213
    %v1215 = vperm.slane %v1211, %v1214
    %v1216 = vrot.slane %v1204, 4
    %v1217 = vsel %vm282, %v1216, %v1198
    %v1218 = vrot.slane %v1198, 4
    %v1219 = vsel %vm282, %v1204, %v1218
    %v1221 = vunpack.c.l.s4 1934713408
    %v1222 = vunpack.c.0.s8 %v1221
    %v1223 = vperm.slane %v1217, %v1222
    %v1225 = vunpack.c.l.s4 1934713408
    %v1226 = vunpack.c.0.s8 %v1225
    %v1227 = vperm.slane %v1219, %v1226
    %v1228 = vrot.slane %v1215, 4
    %v1229 = vsel %vm282, %v1228, %v1209
    %v1230 = vrot.slane %v1209, 4
    %v1231 = vsel %vm282, %v1215, %v1230
    %v1233 = vunpack.c.l.s4 1934713408
    %v1234 = vunpack.c.0.s8 %v1233
    %v1235 = vperm.slane %v1229, %v1234
    %v1237 = vunpack.c.l.s4 1934713408
    %v1238 = vunpack.c.0.s8 %v1237
    %v1239 = vperm.slane %v1231, %v1238
    %v1240 = vrot.slane %v1235, 4
    %v1241 = vsel %vm282, %v1240, %v1223
    %v1242 = vrot.slane %v1223, 4
    %v1243 = vsel %vm282, %v1235, %v1242
    %v1244 = vrot.slane %v1239, 4
    %v1245 = vsel %vm282, %v1244, %v1227
    %v1246 = vrot.slane %v1227, 4
    %v1247 = vsel %vm282, %v1239, %v1246
    %1249 = vrot.lane.b32.xlu0 %v269, 120
    %v1250 = vpop.permute.xlu0 %1249
    %1252 = vrot.lane.b32.xlu0 %v269, 112
    %v1253 = vpop.permute.xlu0 %1252
    %1255 = vrot.lane.b32.xlu0 %v269, 104
    %v1256 = vpop.permute.xlu0 %1255
    %v1258 = vrot.slane %v1253, 4
    %v1259 = vsel %vm282, %v1258, %v269
    %v1260 = vrot.slane %v269, 4
    %v1261 = vsel %vm282, %v1253, %v1260
    %v1263 = vunpack.c.l.s4 1983009808
    %v1264 = vunpack.c.0.s8 %v1263
    %v1265 = vperm.slane %v1259, %v1264
    %v1267 = vunpack.c.l.s4 1983009808
    %v1268 = vunpack.c.0.s8 %v1267
    %v1269 = vperm.slane %v1261, %v1268
    %v1270 = vrot.slane %v1256, 4
    %v1271 = vsel %vm282, %v1270, %v1250
    %v1272 = vrot.slane %v1250, 4
    %v1273 = vsel %vm282, %v1256, %v1272
    %v1275 = vunpack.c.l.s4 1983009808
    %v1276 = vunpack.c.0.s8 %v1275
    %v1277 = vperm.slane %v1271, %v1276
    %v1279 = vunpack.c.l.s4 1983009808
    %v1280 = vunpack.c.0.s8 %v1279
    %v1281 = vperm.slane %v1273, %v1280
    %v1282 = vrot.slane %v1277, 4
    %v1283 = vsel %vm282, %v1282, %v1265
    %v1284 = vrot.slane %v1265, 4
    %v1285 = vsel %vm282, %v1277, %v1284
    %v1287 = vunpack.c.l.s4 1934713408
    %v1288 = vunpack.c.0.s8 %v1287
    %v1289 = vperm.slane %v1283, %v1288
    %v1291 = vunpack.c.l.s4 1934713408
    %v1292 = vunpack.c.0.s8 %v1291
    %v1293 = vperm.slane %v1285, %v1292
    %v1294 = vrot.slane %v1281, 4
    %v1295 = vsel %vm282, %v1294, %v1269
    %v1296 = vrot.slane %v1269, 4
    %v1297 = vsel %vm282, %v1281, %v1296
    %v1299 = vunpack.c.l.s4 1934713408
    %v1300 = vunpack.c.0.s8 %v1299
    %v1301 = vperm.slane %v1295, %v1300
    %v1303 = vunpack.c.l.s4 1934713408
    %v1304 = vunpack.c.0.s8 %v1303
    %v1305 = vperm.slane %v1297, %v1304
    %v1306 = vrot.slane %v1289, 4
    %v1307 = vsel %vm282, 0.0, %v1306
    %v1308 = vrot.slane %v1293, 4
    %v1309 = vsel %vm282, 0.0, %v1308
    %v1310 = vrot.slane %v1301, 4
    %v1311 = vsel %vm282, 0.0, %v1310
    %v1312 = vrot.slane %v1305, 4
    %v1313 = vsel %vm282, 0.0, %v1312
    %v1314 = vsel %vm282, %v1308, %v1289
    %v1316 = vunpack.c.l.s4 1983009808
    %v1317 = vunpack.c.0.s8 %v1316
    %v1318 = vperm.slane %v1314, %v1317
    %v1319 = vrot.slane %v1309, 4
    %v1320 = vsel %vm282, %v1319, %v1307
    %v1322 = vunpack.c.l.s4 1983009808
    %v1323 = vunpack.c.0.s8 %v1322
    %v1324 = vperm.slane %v1320, %v1323
    %v1325 = vsel %vm282, %v1312, %v1301
    %v1327 = vunpack.c.l.s4 1983009808
    %v1328 = vunpack.c.0.s8 %v1327
    %v1329 = vperm.slane %v1325, %v1328
    %v1330 = vrot.slane %v1313, 4
    %v1331 = vsel %vm282, %v1330, %v1311
    %v1333 = vunpack.c.l.s4 1983009808
    %v1334 = vunpack.c.0.s8 %v1333
    %v1335 = vperm.slane %v1331, %v1334
    %v1336 = vrot.slane %v1324, 4
    %v1337 = vsel %vm282, %v1336, %v1318
    %v1338 = vrot.slane %v1318, 4
    %v1339 = vsel %vm282, %v1324, %v1338
    %v1341 = vunpack.c.l.s4 1934713408
    %v1342 = vunpack.c.0.s8 %v1341
    %v1343 = vperm.slane %v1337, %v1342
    %v1345 = vunpack.c.l.s4 1934713408
    %v1346 = vunpack.c.0.s8 %v1345
    %v1347 = vperm.slane %v1339, %v1346
    %v1348 = vrot.slane %v1335, 4
    %v1349 = vsel %vm282, %v1348, %v1329
    %v1350 = vrot.slane %v1329, 4
    %v1351 = vsel %vm282, %v1335, %v1350
    %v1353 = vunpack.c.l.s4 1934713408
    %v1354 = vunpack.c.0.s8 %v1353
    %v1355 = vperm.slane %v1349, %v1354
    %v1357 = vunpack.c.l.s4 1934713408
    %v1358 = vunpack.c.0.s8 %v1357
    %v1359 = vperm.slane %v1351, %v1358
    %v1360 = vrot.slane %v1355, 4
    %v1361 = vsel %vm282, %v1360, %v1343
    %v1362 = vrot.slane %v1343, 4
    %v1363 = vsel %vm282, %v1355, %v1362
    %v1364 = vrot.slane %v1359, 4
    %v1365 = vsel %vm282, %v1364, %v1347
    %v1366 = vrot.slane %v1347, 4
    %v1367 = vsel %vm282, %v1359, %v1366
    %v1369 = vsel %vm632, %v1121, 0
    %v1372 = vsel %vm632, %v1241, 0
    %1374 = vmatpush.xpose.msra.mxu0 0.0
    %1375 = vmatpush.xpose.msra.mxu0 0.0
    %1376 = vmatpush.xpose.msra.mxu0 0.0
    %1377 = vmatpush.xpose.msra.mxu0 0.0
    %1378 = vmatpush.xpose.msra.mxu0 0.0
    %1379 = vmatpush.xpose.msra.mxu0 0.0
    %1380 = vmatpush.xpose.msra.mxu0 0.0
    %1381 = vmatpush.xpose.msra.mxu0 0.0
    %1382 = vmatpush.xpose.msra.mxu0 0.0
    %1383 = vmatpush.xpose.msra.mxu0 0.0
    %1384 = vmatpush.xpose.msra.mxu0 0.0
    %1385 = vmatpush.xpose.msra.mxu0 0.0
    %1386 = vmatpush.xpose.msra.mxu0 0.0
    %1387 = vmatpush.xpose.msra.mxu0 0.0
    %1388 = vmatpush.xpose.msra.mxu0 0.0
    %1389 = vmatpush.xpose.msra.mxu0 %v1372
    %1390 = vmatmul.f32.gmra.mxu0 %v1369
    %v1391 = vpop.f32.mrf.mxu0
    %v1392 = vadd.f32 0.0, %v1391
    %1393 = vdwg.mxu0
    %v1395 = vsel %vm632, %v1123, 0
    %v1398 = vsel %vm632, %v1243, 0
    %1400 = vmatpush.xpose.msra.mxu0 0.0
    %1401 = vmatpush.xpose.msra.mxu0 0.0
    %1402 = vmatpush.xpose.msra.mxu0 0.0
    %1403 = vmatpush.xpose.msra.mxu0 0.0
    %1404 = vmatpush.xpose.msra.mxu0 0.0
    %1405 = vmatpush.xpose.msra.mxu0 0.0
    %1406 = vmatpush.xpose.msra.mxu0 0.0
    %1407 = vmatpush.xpose.msra.mxu0 0.0
    %1408 = vmatpush.xpose.msra.mxu0 0.0
    %1409 = vmatpush.xpose.msra.mxu0 0.0
    %1410 = vmatpush.xpose.msra.mxu0 0.0
    %1411 = vmatpush.xpose.msra.mxu0 0.0
    %1412 = vmatpush.xpose.msra.mxu0 0.0
    %1413 = vmatpush.xpose.msra.mxu0 0.0
    %1414 = vmatpush.xpose.msra.mxu0 0.0
    %1415 = vmatpush.xpose.msra.mxu0 %v1398
    %1416 = vmatmul.f32.gmra.mxu0 %v1395
    %v1417 = vpop.f32.mrf.mxu0
    %v1418 = vadd.f32 0.0, %v1417
    %1419 = vdwg.mxu0
    %v1421 = vsel %vm632, %v1125, 0
    %v1424 = vsel %vm632, %v1245, 0
    %1426 = vmatpush.xpose.msra.mxu0 0.0
    %1427 = vmatpush.xpose.msra.mxu0 0.0
    %1428 = vmatpush.xpose.msra.mxu0 0.0
    %1429 = vmatpush.xpose.msra.mxu0 0.0
    %1430 = vmatpush.xpose.msra.mxu0 0.0
    %1431 = vmatpush.xpose.msra.mxu0 0.0
    %1432 = vmatpush.xpose.msra.mxu0 0.0
    %1433 = vmatpush.xpose.msra.mxu0 0.0
    %1434 = vmatpush.xpose.msra.mxu0 0.0
    %1435 = vmatpush.xpose.msra.mxu0 0.0
    %1436 = vmatpush.xpose.msra.mxu0 0.0
    %1437 = vmatpush.xpose.msra.mxu0 0.0
    %1438 = vmatpush.xpose.msra.mxu0 0.0
    %1439 = vmatpush.xpose.msra.mxu0 0.0
    %1440 = vmatpush.xpose.msra.mxu0 0.0
    %1441 = vmatpush.xpose.msra.mxu0 %v1424
    %1442 = vmatmul.f32.gmra.mxu0 %v1421
    %v1443 = vpop.f32.mrf.mxu0
    %v1444 = vadd.f32 0.0, %v1443
    %1445 = vdwg.mxu0
    %v1447 = vsel %vm632, %v1127, 0
    %v1450 = vsel %vm632, %v1247, 0
    %1452 = vmatpush.xpose.msra.mxu0 0.0
    %1453 = vmatpush.xpose.msra.mxu0 0.0
    %1454 = vmatpush.xpose.msra.mxu0 0.0
    %1455 = vmatpush.xpose.msra.mxu0 0.0
    %1456 = vmatpush.xpose.msra.mxu0 0.0
    %1457 = vmatpush.xpose.msra.mxu0 0.0
    %1458 = vmatpush.xpose.msra.mxu0 0.0
    %1459 = vmatpush.xpose.msra.mxu0 0.0
    %1460 = vmatpush.xpose.msra.mxu0 0.0
    %1461 = vmatpush.xpose.msra.mxu0 0.0
    %1462 = vmatpush.xpose.msra.mxu0 0.0
    %1463 = vmatpush.xpose.msra.mxu0 0.0
    %1464 = vmatpush.xpose.msra.mxu0 0.0
    %1465 = vmatpush.xpose.msra.mxu0 0.0
    %1466 = vmatpush.xpose.msra.mxu0 0.0
    %1467 = vmatpush.xpose.msra.mxu0 %v1450
    %1468 = vmatmul.f32.gmra.mxu0 %v1447
    %v1469 = vpop.f32.mrf.mxu0
    %v1470 = vadd.f32 0.0, %v1469
    %1471 = vdwg.mxu0
    %v1472 = vmul.f32 %v1392, 0.35355338
    %v1473 = vmul.f32 %v1418, 0.35355338
    %v1474 = vmul.f32 %v1444, 0.35355338
    %v1475 = vmul.f32 %v1470, 0.35355338
    %v1476 = vadd.f32 %v1472, %v60
    %v1477 = vadd.f32 %v1473, %v60
    %v1478 = vadd.f32 %v1474, %v60
    %v1479 = vadd.f32 %v1475, %v60
    %v1480 = vsel %vm632, %v1476, -inf
    %1481 = vmax.xlane.f32.xlu0 %v1480
    %v1482 = vpop.xlane.xlu0 %1481
    %v1483 = vsel %vm632, %v1477, -inf
    %1484 = vmax.xlane.f32.xlu0 %v1483
    %v1485 = vpop.xlane.xlu0 %1484
    %v1486 = vsel %vm632, %v1478, -inf
    %1487 = vmax.xlane.f32.xlu0 %v1486
    %v1488 = vpop.xlane.xlu0 %1487
    %v1489 = vsel %vm632, %v1479, -inf
    %1490 = vmax.xlane.f32.xlu0 %v1489
    %v1491 = vpop.xlane.xlu0 %1490
    %v1492 = vsub.f32 %v1476, %v1482
    %v1493 = vsub.f32 %v1477, %v1485
    %v1494 = vsub.f32 %v1478, %v1488
    %v1495 = vsub.f32 %v1479, %v1491
    %v1496 = vmul.f32 %v1492, 1.442695
    %v1497 = vpow.pop %v1496
    %v1498 = vmul.f32 %v1493, 1.442695
    %v1499 = vpow.pop %v1498
    %v1500 = vmul.f32 %v1494, 1.442695
    %v1501 = vpow.pop %v1500
    %v1502 = vmul.f32 %v1495, 1.442695
    %v1503 = vpow.pop %v1502
    %v1504 = vsel %vm632, %v1497, 0.0
    %1505 = vadd.xlane.f32.xlu0 %v1504
    %v1506 = vpop.xlane.xlu0 %1505
    %v1507 = vsel %vm632, %v1499, 0.0
    %1508 = vadd.xlane.f32.xlu0 %v1507
    %v1509 = vpop.xlane.xlu0 %1508
    %v1510 = vsel %vm632, %v1501, 0.0
    %1511 = vadd.xlane.f32.xlu0 %v1510
    %v1512 = vpop.xlane.xlu0 %1511
    %v1513 = vsel %vm632, %v1503, 0.0
    %1514 = vadd.xlane.f32.xlu0 %v1513
    %v1515 = vpop.xlane.xlu0 %1514
    %v1516 = vrcp.pop %v1506
    %v1517 = vrcp.pop %v1509
    %v1518 = vrcp.pop %v1512
    %v1519 = vrcp.pop %v1515
    %v1520 = vmul.f32 %v1497, %v1516
    %v1521 = vmul.f32 %v1499, %v1517
    %v1522 = vmul.f32 %v1501, %v1518
    %v1523 = vmul.f32 %v1503, %v1519
    %v1525 = vsel %vm632, %v1520, 0
    %1527 = vmatpush.msra.mxu0 0.0
    %1528 = vmatpush.msra.mxu0 0.0
    %1529 = vmatpush.msra.mxu0 0.0
    %1530 = vmatpush.msra.mxu0 0.0
    %1531 = vmatpush.msra.mxu0 0.0
    %1532 = vmatpush.msra.mxu0 0.0
    %1533 = vmatpush.msra.mxu0 0.0
    %1534 = vmatpush.msra.mxu0 0.0
    %1535 = vmatpush.msra.mxu0 0.0
    %1536 = vmatpush.msra.mxu0 0.0
    %1537 = vmatpush.msra.mxu0 0.0
    %1538 = vmatpush.msra.mxu0 0.0
    %1539 = vmatpush.msra.mxu0 0.0
    %1540 = vmatpush.msra.mxu0 0.0
    %1541 = vmatpush.msra.mxu0 0.0
    %1542 = vmatpush.msra.mxu0 %v1361
    %1543 = vmatmul.f32.gmra.mxu0 %v1525
    %v1544 = vpop.f32.mrf.mxu0
    %v1545 = vadd.f32 0.0, %v1544
    %1546 = vdwg.mxu0
    %v1548 = vsel %vm632, %v1521, 0
    %1550 = vmatpush.msra.mxu0 0.0
    %1551 = vmatpush.msra.mxu0 0.0
    %1552 = vmatpush.msra.mxu0 0.0
    %1553 = vmatpush.msra.mxu0 0.0
    %1554 = vmatpush.msra.mxu0 0.0
    %1555 = vmatpush.msra.mxu0 0.0
    %1556 = vmatpush.msra.mxu0 0.0
    %1557 = vmatpush.msra.mxu0 0.0
    %1558 = vmatpush.msra.mxu0 0.0
    %1559 = vmatpush.msra.mxu0 0.0
    %1560 = vmatpush.msra.mxu0 0.0
    %1561 = vmatpush.msra.mxu0 0.0
    %1562 = vmatpush.msra.mxu0 0.0
    %1563 = vmatpush.msra.mxu0 0.0
    %1564 = vmatpush.msra.mxu0 0.0
    %1565 = vmatpush.msra.mxu0 %v1363
    %1566 = vmatmul.f32.gmra.mxu0 %v1548
    %v1567 = vpop.f32.mrf.mxu0
    %v1568 = vadd.f32 0.0, %v1567
    %1569 = vdwg.mxu0
    %v1571 = vsel %vm632, %v1522, 0
    %1573 = vmatpush.msra.mxu0 0.0
    %1574 = vmatpush.msra.mxu0 0.0
    %1575 = vmatpush.msra.mxu0 0.0
    %1576 = vmatpush.msra.mxu0 0.0
    %1577 = vmatpush.msra.mxu0 0.0
    %1578 = vmatpush.msra.mxu0 0.0
    %1579 = vmatpush.msra.mxu0 0.0
    %1580 = vmatpush.msra.mxu0 0.0
    %1581 = vmatpush.msra.mxu0 0.0
    %1582 = vmatpush.msra.mxu0 0.0
    %1583 = vmatpush.msra.mxu0 0.0
    %1584 = vmatpush.msra.mxu0 0.0
    %1585 = vmatpush.msra.mxu0 0.0
    %1586 = vmatpush.msra.mxu0 0.0
    %1587 = vmatpush.msra.mxu0 0.0
    %1588 = vmatpush.msra.mxu0 %v1365
    %1589 = vmatmul.f32.gmra.mxu0 %v1571
    %v1590 = vpop.f32.mrf.mxu0
    %v1591 = vadd.f32 0.0, %v1590
    %1592 = vdwg.mxu0
    %v1594 = vsel %vm632, %v1523, 0
    %1596 = vmatpush.msra.mxu0 0.0
    %1597 = vmatpush.msra.mxu0 0.0
    %1598 = vmatpush.msra.mxu0 0.0
    %1599 = vmatpush.msra.mxu0 0.0
    %1600 = vmatpush.msra.mxu0 0.0
    %1601 = vmatpush.msra.mxu0 0.0
    %1602 = vmatpush.msra.mxu0 0.0
    %1603 = vmatpush.msra.mxu0 0.0
    %1604 = vmatpush.msra.mxu0 0.0
    %1605 = vmatpush.msra.mxu0 0.0
    %1606 = vmatpush.msra.mxu0 0.0
    %1607 = vmatpush.msra.mxu0 0.0
    %1608 = vmatpush.msra.mxu0 0.0
    %1609 = vmatpush.msra.mxu0 0.0
    %1610 = vmatpush.msra.mxu0 0.0
    %1611 = vmatpush.msra.mxu0 %v1367
    %1612 = vmatmul.f32.gmra.mxu0 %v1594
    %v1613 = vpop.f32.mrf.mxu0
    %v1614 = vadd.f32 0.0, %v1613
    %1615 = vdwg.mxu0
    %v1616 = vrot.slane %v1591, 4
    %v1617 = vsel %vm282, %v1616, %v1545
    %v1618 = vrot.slane %v1545, 4
    %v1619 = vsel %vm282, %v1591, %v1618
    %v1621 = vunpack.c.l.s4 1983009808
    %v1622 = vunpack.c.0.s8 %v1621
    %v1623 = vperm.slane %v1617, %v1622
    %v1625 = vunpack.c.l.s4 1983009808
    %v1626 = vunpack.c.0.s8 %v1625
    %v1627 = vperm.slane %v1619, %v1626
    %v1628 = vrot.slane %v1614, 4
    %v1629 = vsel %vm282, %v1628, %v1568
    %v1630 = vrot.slane %v1568, 4
    %v1631 = vsel %vm282, %v1614, %v1630
    %v1633 = vunpack.c.l.s4 1983009808
    %v1634 = vunpack.c.0.s8 %v1633
    %v1635 = vperm.slane %v1629, %v1634
    %v1637 = vunpack.c.l.s4 1983009808
    %v1638 = vunpack.c.0.s8 %v1637
    %v1639 = vperm.slane %v1631, %v1638
    %v1640 = vrot.slane %v1635, 4
    %v1641 = vsel %vm282, %v1640, %v1623
    %v1642 = vrot.slane %v1623, 4
    %v1643 = vsel %vm282, %v1635, %v1642
    %v1645 = vunpack.c.l.s4 1934713408
    %v1646 = vunpack.c.0.s8 %v1645
    %v1647 = vperm.slane %v1641, %v1646
    %v1649 = vunpack.c.l.s4 1934713408
    %v1650 = vunpack.c.0.s8 %v1649
    %v1651 = vperm.slane %v1643, %v1650
    %v1652 = vrot.slane %v1639, 4
    %v1653 = vsel %vm282, %v1652, %v1627
    %v1654 = vrot.slane %v1627, 4
    %v1655 = vsel %vm282, %v1639, %v1654
    %v1657 = vunpack.c.l.s4 1934713408
    %v1658 = vunpack.c.0.s8 %v1657
    %v1659 = vperm.slane %v1653, %v1658
    %v1661 = vunpack.c.l.s4 1934713408
    %v1662 = vunpack.c.0.s8 %v1661
    %v1663 = vperm.slane %v1655, %v1662
    %v1664 = vrot.slane %v1647, 4
    %v1665 = vsel %vm282, 0.0, %v1664
    %v1666 = vrot.slane %v1651, 4
    %v1667 = vsel %vm282, 0.0, %v1666
    %v1668 = vrot.slane %v1659, 4
    %v1669 = vsel %vm282, 0.0, %v1668
    %v1670 = vrot.slane %v1663, 4
    %v1671 = vsel %vm282, 0.0, %v1670
    %v1672 = vsel %vm282, %v1666, %v1647
    %v1674 = vunpack.c.l.s4 1983009808
    %v1675 = vunpack.c.0.s8 %v1674
    %v1676 = vperm.slane %v1672, %v1675
    %v1677 = vrot.slane %v1667, 4
    %v1678 = vsel %vm282, %v1677, %v1665
    %v1680 = vunpack.c.l.s4 1983009808
    %v1681 = vunpack.c.0.s8 %v1680
    %v1682 = vperm.slane %v1678, %v1681
    %v1683 = vsel %vm282, %v1670, %v1659
    %v1685 = vunpack.c.l.s4 1983009808
    %v1686 = vunpack.c.0.s8 %v1685
    %v1687 = vperm.slane %v1683, %v1686
    %v1688 = vrot.slane %v1671, 4
    %v1689 = vsel %vm282, %v1688, %v1669
    %v1691 = vunpack.c.l.s4 1983009808
    %v1692 = vunpack.c.0.s8 %v1691
    %v1693 = vperm.slane %v1689, %v1692
    %v1694 = vrot.slane %v1682, 4
    %v1695 = vsel %vm282, %v1694, %v1676
    %v1696 = vrot.slane %v1676, 4
    %v1697 = vsel %vm282, %v1682, %v1696
    %v1699 = vunpack.c.l.s4 1934713408
    %v1700 = vunpack.c.0.s8 %v1699
    %v1701 = vperm.slane %v1695, %v1700
    %v1703 = vunpack.c.l.s4 1934713408
    %v1704 = vunpack.c.0.s8 %v1703
    %v1705 = vperm.slane %v1697, %v1704
    %v1706 = vrot.slane %v1693, 4
    %v1707 = vsel %vm282, %v1706, %v1687
    %v1708 = vrot.slane %v1687, 4
    %v1709 = vsel %vm282, %v1693, %v1708
    %v1711 = vunpack.c.l.s4 1934713408
    %v1712 = vunpack.c.0.s8 %v1711
    %v1713 = vperm.slane %v1707, %v1712
    %v1715 = vunpack.c.l.s4 1934713408
    %v1716 = vunpack.c.0.s8 %v1715
    %v1717 = vperm.slane %v1709, %v1716
    %v1718 = vrot.slane %v1713, 4
    %v1719 = vsel %vm282, %v1718, %v1701
    %v1720 = vrot.slane %v1701, 4
    %v1721 = vsel %vm282, %v1713, %v1720
    %v1722 = vrot.slane %v1717, 4
    %v1723 = vsel %vm282, %v1722, %v1705
    %v1724 = vrot.slane %v1705, 4
    %v1725 = vsel %vm282, %v1717, %v1724
    %1727 = vrot.lane.b32.xlu0 %v1721, 8
    %v1728 = vpop.permute.xlu0 %1727
    %1731 = vrot.lane.b32.xlu0 %v1723, 16
    %v1732 = vpop.permute.xlu0 %1731
    %1735 = vrot.lane.b32.xlu0 %v1725, 24
    %v1736 = vpop.permute.xlu0 %1735
    %v1738 = vsel %vm632, %v1719, %v1728
    %v1739 = vsel %vm1004, %v1738, %v1732
    %v1740 = vsel %vm1006, %v1739, %v1736
    %v1741 = vperm.slane %v97, 1
    %v1743 = vsel %vm111, %v1007, 0
    %v1746 = vsel %vm111, %v1740, 0
    %1748 = vmatpush.msra.mxu0 0.0
    %1749 = vmatpush.msra.mxu0 0.0
    %1750 = vmatpush.msra.mxu0 0.0
    %1751 = vmatpush.msra.mxu0 0.0
    %1752 = vmatpush.msra.mxu0 0.0
    %1753 = vmatpush.msra.mxu0 0.0
    %1754 = vmatpush.msra.mxu0 0.0
    %1755 = vmatpush.msra.mxu0 0.0
    %1756 = vmatpush.msra.mxu0 0.0
    %1757 = vmatpush.msra.mxu0 0.0
    %1758 = vmatpush.msra.mxu0 0.0
    %1759 = vmatpush.msra.mxu0 0.0
    %1760 = vmatpush.msra.mxu0 %v79
    %1761 = vmatpush.msra.mxu0 %v78
    %1762 = vmatpush.msra.mxu0 %v77
    %1763 = vmatpush.msra.mxu0 %v76
    %1764 = vmatmul.f32.gmra.mxu0 %v1743
    %v1765 = vpop.f32.mrf.mxu0
    %v1766 = vadd.f32 %v1741, %v1765
    %1767 = vmatmul.f32.gmra.mxu0 %v1746
    %v1768 = vpop.f32.mrf.mxu0
    %v1769 = vadd.f32 %v1741, %v1768
    %1770 = vdwg.mxu0
    %v1771 = vadd.f32 %v52, %v1766
    %v1772 = vadd.f32 %v53, %v1769
    %v1773 = vsel %vm111, %v1771, 0.0
    %1774 = vadd.xlane.f32.xlu0 %v1773
    %v1775 = vpop.xlane.xlu0 %1774
    %v1776 = vsel %vm111, %v1772, 0.0
    %1777 = vadd.xlane.f32.xlu0 %v1776
    %v1778 = vpop.xlane.xlu0 %1777
    %v1779 = vmul.f32 %v1775, %v124
    %v1780 = vmul.f32 %v1778, %v124
    %v1781 = vsub.f32 %v1771, %v1779
    %v1782 = vsub.f32 %v1772, %v1780
    %v1783 = vmul.f32 %v1781, %v1781
    %v1784 = vmul.f32 %v1782, %v1782
    %v1785 = vsel %vm111, %v1783, 0.0
    %1786 = vadd.xlane.f32.xlu0 %v1785
    %v1787 = vpop.xlane.xlu0 %1786
    %v1788 = vsel %vm111, %v1784, 0.0
    %1789 = vadd.xlane.f32.xlu0 %v1788
    %v1790 = vpop.xlane.xlu0 %1789
    %v1791 = vmul.f32 %v1787, 0.032258064
    %v1792 = vmul.f32 %v1790, 0.032258064
    %v1793 = vrsqrt.pop %v1791
    %v1794 = vmul.f32 %v1793, %v1791
    %v1795 = vmul.f32 %v1794, %v1793
    %v1796 = vmul.f32 0.5, %v1795
    %v1797 = vsub.f32 1.5, %v1796
    %v1798 = vmul.f32 %v1793, %v1797
    %v1799 = vmul.f32 %v1791, %v1798
    %vm1800 = vcmp.eq.f32.partialorder %v1791, inf
    %v1801 = vsel %vm1800, %v1791, %v1799
    %vm1802 = vcmp.eq.f32.partialorder %v1791, 0.0
    %v1803 = vand.u32 %v1791, 2147483648
    %v1804 = vsel %vm1802, %v1803, %v1801
    %v1805 = vrsqrt.pop %v1792
    %v1806 = vmul.f32 %v1805, %v1792
    %v1807 = vmul.f32 %v1806, %v1805
    %v1808 = vmul.f32 0.5, %v1807
    %v1809 = vsub.f32 1.5, %v1808
    %v1810 = vmul.f32 %v1805, %v1809
    %v1811 = vmul.f32 %v1792, %v1810
    %vm1812 = vcmp.eq.f32.partialorder %v1792, inf
    %v1813 = vsel %vm1812, %v1792, %v1811
    %vm1814 = vcmp.eq.f32.partialorder %v1792, 0.0
    %v1815 = vand.u32 %v1792, 2147483648
    %v1816 = vsel %vm1814, %v1815, %v1813
    %v1817 = vadd.f32 %v1804, 1e-06
    %v1818 = vadd.f32 %v1816, 1e-06
    %v1819 = vrsqrt.pop %v1817
    %v1820 = vmul.f32 %v1819, %v1817
    %v1821 = vmul.f32 %v1820, %v1819
    %v1822 = vmul.f32 0.5, %v1821
    %v1823 = vsub.f32 1.5, %v1822
    %v1824 = vmul.f32 %v1819, %v1823
    %vm1825 = vweird.f32 %v1817
    %vm1826 = vweird.f32 %v1819
    %vm1827 = vmor %vm1825, %vm1826
    %v1828 = vsel %vm1827, %v1819, %v1824
    %v1829 = vrsqrt.pop %v1818
    %v1830 = vmul.f32 %v1829, %v1818
    %v1831 = vmul.f32 %v1830, %v1829
    %v1832 = vmul.f32 0.5, %v1831
    %v1833 = vsub.f32 1.5, %v1832
    %v1834 = vmul.f32 %v1829, %v1833
    %vm1835 = vweird.f32 %v1818
    %vm1836 = vweird.f32 %v1829
    %vm1837 = vmor %vm1835, %vm1836
    %v1838 = vsel %vm1837, %v1829, %v1834
    %v1839 = vmul.f32 %v1781, %v1828
    %v1840 = vmul.f32 %v1782, %v1838
    %v1841 = vperm.slane %v96, 2
    %v1842 = vmul.f32 %v1841, %v1839
    %v1843 = vmul.f32 %v1841, %v1840
    %v1844 = vperm.slane %v96, 3
    %v1845 = vadd.f32 %v1842, %v1844
    %v1846 = vadd.f32 %v1843, %v1844
    %v1847 = vperm.slane %v97, 2
    %v1849 = vsel %vm111, %v1845, 0
    %v1852 = vsel %vm111, %v1846, 0
    %1854 = vmatpush.msra.mxu0 0.0
    %1855 = vmatpush.msra.mxu0 0.0
    %1856 = vmatpush.msra.mxu0 0.0
    %1857 = vmatpush.msra.mxu0 0.0
    %1858 = vmatpush.msra.mxu0 0.0
    %1859 = vmatpush.msra.mxu0 0.0
    %1860 = vmatpush.msra.mxu0 0.0
    %1861 = vmatpush.msra.mxu0 0.0
    %1862 = vmatpush.msra.mxu0 0.0
    %1863 = vmatpush.msra.mxu0 0.0
    %1864 = vmatpush.msra.mxu0 0.0
    %1865 = vmatpush.msra.mxu0 0.0
    %1866 = vmatpush.msra.mxu0 %v83
    %1867 = vmatpush.msra.mxu0 %v82
    %1868 = vmatpush.msra.mxu0 %v81
    %1869 = vmatpush.msra.mxu0 %v80
    %1870 = vmatmul.f32.gmra.mxu0 %v1849
    %v1871 = vpop.f32.mrf.mxu0
    %v1872 = vadd.f32 %v1847, %v1871
    %1873 = vmatmul.f32.gmra.mxu0 %v1852
    %v1874 = vpop.f32.mrf.mxu0
    %v1875 = vadd.f32 %v1847, %v1874
    %1876 = vdwg.mxu0
    %v1877 = vperm.slane %v97, 3
    %v1879 = vsel %vm111, %v54, 0
    %v1882 = vsel %vm111, %v55, 0
    %v1885 = vsel %vm111, %v56, 0
    %v1888 = vsel %vm111, %v57, 0
    %1890 = vmatpush.msra.mxu0 0.0
    %1891 = vmatpush.msra.mxu0 0.0
    %1892 = vmatpush.msra.mxu0 0.0
    %1893 = vmatpush.msra.mxu0 0.0
    %1894 = vmatpush.msra.mxu0 0.0
    %1895 = vmatpush.msra.mxu0 0.0
    %1896 = vmatpush.msra.mxu0 0.0
    %1897 = vmatpush.msra.mxu0 0.0
    %1898 = vmatpush.msra.mxu0 0.0
    %1899 = vmatpush.msra.mxu0 0.0
    %1900 = vmatpush.msra.mxu0 0.0
    %1901 = vmatpush.msra.mxu0 0.0
    %1902 = vmatpush.msra.mxu0 %v87
    %1903 = vmatpush.msra.mxu0 %v86
    %1904 = vmatpush.msra.mxu0 %v85
    %1905 = vmatpush.msra.mxu0 %v84
    %1906 = vmatmul.f32.gmra.mxu0 %v1879
    %v1907 = vpop.f32.mrf.mxu0
    %v1908 = vadd.f32 %v1877, %v1907
    %1909 = vmatmul.f32.gmra.mxu0 %v1882
    %v1910 = vpop.f32.mrf.mxu0
    %v1911 = vadd.f32 %v1877, %v1910
    %1912 = vmatmul.f32.gmra.mxu0 %v1885
    %v1913 = vpop.f32.mrf.mxu0
    %v1914 = vadd.f32 %v1877, %v1913
    %1915 = vmatmul.f32.gmra.mxu0 %v1888
    %v1916 = vpop.f32.mrf.mxu0
    %v1917 = vadd.f32 %v1877, %v1916
    %1918 = vdwg.mxu0
    %v1919 = vperm.slane %v97, 4
    %1920 = vmatpush.msra.mxu0 0.0
    %1921 = vmatpush.msra.mxu0 0.0
    %1922 = vmatpush.msra.mxu0 0.0
    %1923 = vmatpush.msra.mxu0 0.0
    %1924 = vmatpush.msra.mxu0 0.0
    %1925 = vmatpush.msra.mxu0 0.0
    %1926 = vmatpush.msra.mxu0 0.0
    %1927 = vmatpush.msra.mxu0 0.0
    %1928 = vmatpush.msra.mxu0 0.0
    %1929 = vmatpush.msra.mxu0 0.0
    %1930 = vmatpush.msra.mxu0 0.0
    %1931 = vmatpush.msra.mxu0 0.0
    %1932 = vmatpush.msra.mxu0 %v91
    %1933 = vmatpush.msra.mxu0 %v90
    %1934 = vmatpush.msra.mxu0 %v89
    %1935 = vmatpush.msra.mxu0 %v88
    %1936 = vmatmul.f32.gmra.mxu0 %v1879
    %v1937 = vpop.f32.mrf.mxu0
    %v1938 = vadd.f32 %v1919, %v1937
    %1939 = vmatmul.f32.gmra.mxu0 %v1882
    %v1940 = vpop.f32.mrf.mxu0
    %v1941 = vadd.f32 %v1919, %v1940
    %1942 = vmatmul.f32.gmra.mxu0 %v1885
    %v1943 = vpop.f32.mrf.mxu0
    %v1944 = vadd.f32 %v1919, %v1943
    %1945 = vmatmul.f32.gmra.mxu0 %v1888
    %v1946 = vpop.f32.mrf.mxu0
    %v1947 = vadd.f32 %v1919, %v1946
    %1948 = vdwg.mxu0
    %1950 = vrot.lane.b32.xlu0 %v1872, 120
    %v1951 = vpop.permute.xlu0 %1950
    %1953 = vrot.lane.b32.xlu0 %v1872, 112
    %v1954 = vpop.permute.xlu0 %1953
    %1956 = vrot.lane.b32.xlu0 %v1872, 104
    %v1957 = vpop.permute.xlu0 %1956
    %v1959 = vrot.slane %v1954, 4
    %v1960 = vsel %vm282, %v1959, %v1872
    %v1961 = vrot.slane %v1872, 4
    %v1962 = vsel %vm282, %v1954, %v1961
    %v1964 = vunpack.c.l.s4 1983009808
    %v1965 = vunpack.c.0.s8 %v1964
    %v1966 = vperm.slane %v1960, %v1965
    %v1968 = vunpack.c.l.s4 1983009808
    %v1969 = vunpack.c.0.s8 %v1968
    %v1970 = vperm.slane %v1962, %v1969
    %v1971 = vrot.slane %v1957, 4
    %v1972 = vsel %vm282, %v1971, %v1951
    %v1973 = vrot.slane %v1951, 4
    %v1974 = vsel %vm282, %v1957, %v1973
    %v1976 = vunpack.c.l.s4 1983009808
    %v1977 = vunpack.c.0.s8 %v1976
    %v1978 = vperm.slane %v1972, %v1977
    %v1980 = vunpack.c.l.s4 1983009808
    %v1981 = vunpack.c.0.s8 %v1980
    %v1982 = vperm.slane %v1974, %v1981
    %v1983 = vrot.slane %v1978, 4
    %v1984 = vsel %vm282, %v1983, %v1966
    %v1985 = vrot.slane %v1966, 4
    %v1986 = vsel %vm282, %v1978, %v1985
    %v1988 = vunpack.c.l.s4 1934713408
    %v1989 = vunpack.c.0.s8 %v1988
    %v1990 = vperm.slane %v1984, %v1989
    %v1992 = vunpack.c.l.s4 1934713408
    %v1993 = vunpack.c.0.s8 %v1992
    %v1994 = vperm.slane %v1986, %v1993
    %v1995 = vrot.slane %v1982, 4
    %v1996 = vsel %vm282, %v1995, %v1970
    %v1997 = vrot.slane %v1970, 4
    %v1998 = vsel %vm282, %v1982, %v1997
    %v2000 = vunpack.c.l.s4 1934713408
    %v2001 = vunpack.c.0.s8 %v2000
    %v2002 = vperm.slane %v1996, %v2001
    %v2004 = vunpack.c.l.s4 1934713408
    %v2005 = vunpack.c.0.s8 %v2004
    %v2006 = vperm.slane %v1998, %v2005
    %v2007 = vrot.slane %v1990, 4
    %v2008 = vsel %vm282, 0.0, %v2007
    %v2009 = vrot.slane %v1994, 4
    %v2010 = vsel %vm282, 0.0, %v2009
    %v2011 = vrot.slane %v2002, 4
    %v2012 = vsel %vm282, 0.0, %v2011
    %v2013 = vrot.slane %v2006, 4
    %v2014 = vsel %vm282, 0.0, %v2013
    %v2015 = vsel %vm282, %v2009, %v1990
    %v2017 = vunpack.c.l.s4 1983009808
    %v2018 = vunpack.c.0.s8 %v2017
    %v2019 = vperm.slane %v2015, %v2018
    %v2020 = vrot.slane %v2010, 4
    %v2021 = vsel %vm282, %v2020, %v2008
    %v2023 = vunpack.c.l.s4 1983009808
    %v2024 = vunpack.c.0.s8 %v2023
    %v2025 = vperm.slane %v2021, %v2024
    %v2026 = vsel %vm282, %v2013, %v2002
    %v2028 = vunpack.c.l.s4 1983009808
    %v2029 = vunpack.c.0.s8 %v2028
    %v2030 = vperm.slane %v2026, %v2029
    %v2031 = vrot.slane %v2014, 4
    %v2032 = vsel %vm282, %v2031, %v2012
    %v2034 = vunpack.c.l.s4 1983009808
    %v2035 = vunpack.c.0.s8 %v2034
    %v2036 = vperm.slane %v2032, %v2035
    %v2037 = vrot.slane %v2025, 4
    %v2038 = vsel %vm282, %v2037, %v2019
    %v2039 = vrot.slane %v2019, 4
    %v2040 = vsel %vm282, %v2025, %v2039
    %v2042 = vunpack.c.l.s4 1934713408
    %v2043 = vunpack.c.0.s8 %v2042
    %v2044 = vperm.slane %v2038, %v2043
    %v2046 = vunpack.c.l.s4 1934713408
    %v2047 = vunpack.c.0.s8 %v2046
    %v2048 = vperm.slane %v2040, %v2047
    %v2049 = vrot.slane %v2036, 4
    %v2050 = vsel %vm282, %v2049, %v2030
    %v2051 = vrot.slane %v2030, 4
    %v2052 = vsel %vm282, %v2036, %v2051
    %v2054 = vunpack.c.l.s4 1934713408
    %v2055 = vunpack.c.0.s8 %v2054
    %v2056 = vperm.slane %v2050, %v2055
    %v2058 = vunpack.c.l.s4 1934713408
    %v2059 = vunpack.c.0.s8 %v2058
    %v2060 = vperm.slane %v2052, %v2059
    %v2061 = vrot.slane %v2056, 4
    %v2062 = vsel %vm282, %v2061, %v2044
    %v2063 = vrot.slane %v2044, 4
    %v2064 = vsel %vm282, %v2056, %v2063
    %v2065 = vrot.slane %v2060, 4
    %v2066 = vsel %vm282, %v2065, %v2048
    %v2067 = vrot.slane %v2048, 4
    %v2068 = vsel %vm282, %v2060, %v2067
    %2071 = vrot.lane.b32.xlu0 %v1908, 120
    %v2072 = vpop.permute.xlu0 %2071
    %2073 = vrot.lane.b32.xlu0 %v1911, 120
    %v2074 = vpop.permute.xlu0 %2073
    %2077 = vrot.lane.b32.xlu0 %v1908, 112
    %v2078 = vpop.permute.xlu0 %2077
    %2079 = vrot.lane.b32.xlu0 %v1911, 112
    %v2080 = vpop.permute.xlu0 %2079
    %2083 = vrot.lane.b32.xlu0 %v1908, 104
    %v2084 = vpop.permute.xlu0 %2083
    %2085 = vrot.lane.b32.xlu0 %v1911, 104
    %v2086 = vpop.permute.xlu0 %2085
    %v2089 = vrot.slane %v2078, 4
    %v2090 = vsel %vm282, %v2089, %v1908
    %v2091 = vrot.slane %v1908, 4
    %v2092 = vsel %vm282, %v2078, %v2091
    %v2094 = vunpack.c.l.s4 1983009808
    %v2095 = vunpack.c.0.s8 %v2094
    %v2096 = vperm.slane %v2090, %v2095
    %v2098 = vunpack.c.l.s4 1983009808
    %v2099 = vunpack.c.0.s8 %v2098
    %v2100 = vperm.slane %v2092, %v2099
    %v2101 = vrot.slane %v2084, 4
    %v2102 = vsel %vm282, %v2101, %v2072
    %v2103 = vrot.slane %v2072, 4
    %v2104 = vsel %vm282, %v2084, %v2103
    %v2106 = vunpack.c.l.s4 1983009808
    %v2107 = vunpack.c.0.s8 %v2106
    %v2108 = vperm.slane %v2102, %v2107
    %v2110 = vunpack.c.l.s4 1983009808
    %v2111 = vunpack.c.0.s8 %v2110
    %v2112 = vperm.slane %v2104, %v2111
    %v2113 = vrot.slane %v2108, 4
    %v2114 = vsel %vm282, %v2113, %v2096
    %v2115 = vrot.slane %v2096, 4
    %v2116 = vsel %vm282, %v2108, %v2115
    %v2118 = vunpack.c.l.s4 1934713408
    %v2119 = vunpack.c.0.s8 %v2118
    %v2120 = vperm.slane %v2114, %v2119
    %v2122 = vunpack.c.l.s4 1934713408
    %v2123 = vunpack.c.0.s8 %v2122
    %v2124 = vperm.slane %v2116, %v2123
    %v2125 = vrot.slane %v2112, 4
    %v2126 = vsel %vm282, %v2125, %v2100
    %v2127 = vrot.slane %v2100, 4
    %v2128 = vsel %vm282, %v2112, %v2127
    %v2130 = vunpack.c.l.s4 1934713408
    %v2131 = vunpack.c.0.s8 %v2130
    %v2132 = vperm.slane %v2126, %v2131
    %v2134 = vunpack.c.l.s4 1934713408
    %v2135 = vunpack.c.0.s8 %v2134
    %v2136 = vperm.slane %v2128, %v2135
    %v2137 = vrot.slane %v2120, 4
    %v2138 = vsel %vm282, 0.0, %v2137
    %v2139 = vrot.slane %v2124, 4
    %v2140 = vsel %vm282, 0.0, %v2139
    %v2141 = vrot.slane %v2132, 4
    %v2142 = vsel %vm282, 0.0, %v2141
    %v2143 = vrot.slane %v2136, 4
    %v2144 = vsel %vm282, 0.0, %v2143
    %v2145 = vrot.slane %v2080, 4
    %v2146 = vsel %vm282, %v2145, %v1911
    %v2147 = vrot.slane %v1911, 4
    %v2148 = vsel %vm282, %v2080, %v2147
    %v2150 = vunpack.c.l.s4 1983009808
    %v2151 = vunpack.c.0.s8 %v2150
    %v2152 = vperm.slane %v2146, %v2151
    %v2154 = vunpack.c.l.s4 1983009808
    %v2155 = vunpack.c.0.s8 %v2154
    %v2156 = vperm.slane %v2148, %v2155
    %v2157 = vrot.slane %v2086, 4
    %v2158 = vsel %vm282, %v2157, %v2074
    %v2159 = vrot.slane %v2074, 4
    %v2160 = vsel %vm282, %v2086, %v2159
    %v2162 = vunpack.c.l.s4 1983009808
    %v2163 = vunpack.c.0.s8 %v2162
    %v2164 = vperm.slane %v2158, %v2163
    %v2166 = vunpack.c.l.s4 1983009808
    %v2167 = vunpack.c.0.s8 %v2166
    %v2168 = vperm.slane %v2160, %v2167
    %v2169 = vrot.slane %v2164, 4
    %v2170 = vsel %vm282, %v2169, %v2152
    %v2171 = vrot.slane %v2152, 4
    %v2172 = vsel %vm282, %v2164, %v2171
    %v2174 = vunpack.c.l.s4 1934713408
    %v2175 = vunpack.c.0.s8 %v2174
    %v2176 = vperm.slane %v2170, %v2175
    %v2178 = vunpack.c.l.s4 1934713408
    %v2179 = vunpack.c.0.s8 %v2178
    %v2180 = vperm.slane %v2172, %v2179
    %v2181 = vrot.slane %v2168, 4
    %v2182 = vsel %vm282, %v2181, %v2156
    %v2183 = vrot.slane %v2156, 4
    %v2184 = vsel %vm282, %v2168, %v2183
    %v2186 = vunpack.c.l.s4 1934713408
    %v2187 = vunpack.c.0.s8 %v2186
    %v2188 = vperm.slane %v2182, %v2187
    %v2190 = vunpack.c.l.s4 1934713408
    %v2191 = vunpack.c.0.s8 %v2190
    %v2192 = vperm.slane %v2184, %v2191
    %v2193 = vrot.slane %v2176, 4
    %v2194 = vsel %vm282, 0.0, %v2193
    %v2195 = vrot.slane %v2180, 4
    %v2196 = vsel %vm282, 0.0, %v2195
    %v2197 = vrot.slane %v2188, 4
    %v2198 = vsel %vm282, 0.0, %v2197
    %v2199 = vrot.slane %v2192, 4
    %v2200 = vsel %vm282, 0.0, %v2199
    %v2201 = vsel %vm282, %v2139, %v2120
    %v2203 = vunpack.c.l.s4 1983009808
    %v2204 = vunpack.c.0.s8 %v2203
    %v2205 = vperm.slane %v2201, %v2204
    %v2206 = vrot.slane %v2140, 4
    %v2207 = vsel %vm282, %v2206, %v2138
    %v2209 = vunpack.c.l.s4 1983009808
    %v2210 = vunpack.c.0.s8 %v2209
    %v2211 = vperm.slane %v2207, %v2210
    %v2212 = vsel %vm282, %v2143, %v2132
    %v2214 = vunpack.c.l.s4 1983009808
    %v2215 = vunpack.c.0.s8 %v2214
    %v2216 = vperm.slane %v2212, %v2215
    %v2217 = vrot.slane %v2144, 4
    %v2218 = vsel %vm282, %v2217, %v2142
    %v2220 = vunpack.c.l.s4 1983009808
    %v2221 = vunpack.c.0.s8 %v2220
    %v2222 = vperm.slane %v2218, %v2221
    %v2223 = vrot.slane %v2211, 4
    %v2224 = vsel %vm282, %v2223, %v2205
    %v2225 = vrot.slane %v2205, 4
    %v2226 = vsel %vm282, %v2211, %v2225
    %v2228 = vunpack.c.l.s4 1934713408
    %v2229 = vunpack.c.0.s8 %v2228
    %v2230 = vperm.slane %v2224, %v2229
    %v2232 = vunpack.c.l.s4 1934713408
    %v2233 = vunpack.c.0.s8 %v2232
    %v2234 = vperm.slane %v2226, %v2233
    %v2235 = vrot.slane %v2222, 4
    %v2236 = vsel %vm282, %v2235, %v2216
    %v2237 = vrot.slane %v2216, 4
    %v2238 = vsel %vm282, %v2222, %v2237
    %v2240 = vunpack.c.l.s4 1934713408
    %v2241 = vunpack.c.0.s8 %v2240
    %v2242 = vperm.slane %v2236, %v2241
    %v2244 = vunpack.c.l.s4 1934713408
    %v2245 = vunpack.c.0.s8 %v2244
    %v2246 = vperm.slane %v2238, %v2245
    %v2247 = vrot.slane %v2242, 4
    %v2248 = vsel %vm282, %v2247, %v2230
    %v2249 = vrot.slane %v2230, 4
    %v2250 = vsel %vm282, %v2242, %v2249
    %v2251 = vrot.slane %v2246, 4
    %v2252 = vsel %vm282, %v2251, %v2234
    %v2253 = vrot.slane %v2234, 4
    %v2254 = vsel %vm282, %v2246, %v2253
    %v2255 = vsel %vm282, %v2195, %v2176
    %v2257 = vunpack.c.l.s4 1983009808
    %v2258 = vunpack.c.0.s8 %v2257
    %v2259 = vperm.slane %v2255, %v2258
    %v2260 = vrot.slane %v2196, 4
    %v2261 = vsel %vm282, %v2260, %v2194
    %v2263 = vunpack.c.l.s4 1983009808
    %v2264 = vunpack.c.0.s8 %v2263
    %v2265 = vperm.slane %v2261, %v2264
    %v2266 = vsel %vm282, %v2199, %v2188
    %v2268 = vunpack.c.l.s4 1983009808
    %v2269 = vunpack.c.0.s8 %v2268
    %v2270 = vperm.slane %v2266, %v2269
    %v2271 = vrot.slane %v2200, 4
    %v2272 = vsel %vm282, %v2271, %v2198
    %v2274 = vunpack.c.l.s4 1983009808
    %v2275 = vunpack.c.0.s8 %v2274
    %v2276 = vperm.slane %v2272, %v2275
    %v2277 = vrot.slane %v2265, 4
    %v2278 = vsel %vm282, %v2277, %v2259
    %v2279 = vrot.slane %v2259, 4
    %v2280 = vsel %vm282, %v2265, %v2279
    %v2282 = vunpack.c.l.s4 1934713408
    %v2283 = vunpack.c.0.s8 %v2282
    %v2284 = vperm.slane %v2278, %v2283
    %v2286 = vunpack.c.l.s4 1934713408
    %v2287 = vunpack.c.0.s8 %v2286
    %v2288 = vperm.slane %v2280, %v2287
    %v2289 = vrot.slane %v2276, 4
    %v2290 = vsel %vm282, %v2289, %v2270
    %v2291 = vrot.slane %v2270, 4
    %v2292 = vsel %vm282, %v2276, %v2291
    %v2294 = vunpack.c.l.s4 1934713408
    %v2295 = vunpack.c.0.s8 %v2294
    %v2296 = vperm.slane %v2290, %v2295
    %v2298 = vunpack.c.l.s4 1934713408
    %v2299 = vunpack.c.0.s8 %v2298
    %v2300 = vperm.slane %v2292, %v2299
    %v2301 = vrot.slane %v2296, 4
    %v2302 = vsel %vm282, %v2301, %v2284
    %v2303 = vrot.slane %v2284, 4
    %v2304 = vsel %vm282, %v2296, %v2303
    %v2305 = vrot.slane %v2300, 4
    %v2306 = vsel %vm282, %v2305, %v2288
    %v2307 = vrot.slane %v2288, 4
    %v2308 = vsel %vm282, %v2300, %v2307
    %2311 = vrot.lane.b32.xlu0 %v1938, 120
    %v2312 = vpop.permute.xlu0 %2311
    %2313 = vrot.lane.b32.xlu0 %v1941, 120
    %v2314 = vpop.permute.xlu0 %2313
    %2317 = vrot.lane.b32.xlu0 %v1938, 112
    %v2318 = vpop.permute.xlu0 %2317
    %2319 = vrot.lane.b32.xlu0 %v1941, 112
    %v2320 = vpop.permute.xlu0 %2319
    %2323 = vrot.lane.b32.xlu0 %v1938, 104
    %v2324 = vpop.permute.xlu0 %2323
    %2325 = vrot.lane.b32.xlu0 %v1941, 104
    %v2326 = vpop.permute.xlu0 %2325
    %v2329 = vrot.slane %v2318, 4
    %v2330 = vsel %vm282, %v2329, %v1938
    %v2331 = vrot.slane %v1938, 4
    %v2332 = vsel %vm282, %v2318, %v2331
    %v2334 = vunpack.c.l.s4 1983009808
    %v2335 = vunpack.c.0.s8 %v2334
    %v2336 = vperm.slane %v2330, %v2335
    %v2338 = vunpack.c.l.s4 1983009808
    %v2339 = vunpack.c.0.s8 %v2338
    %v2340 = vperm.slane %v2332, %v2339
    %v2341 = vrot.slane %v2324, 4
    %v2342 = vsel %vm282, %v2341, %v2312
    %v2343 = vrot.slane %v2312, 4
    %v2344 = vsel %vm282, %v2324, %v2343
    %v2346 = vunpack.c.l.s4 1983009808
    %v2347 = vunpack.c.0.s8 %v2346
    %v2348 = vperm.slane %v2342, %v2347
    %v2350 = vunpack.c.l.s4 1983009808
    %v2351 = vunpack.c.0.s8 %v2350
    %v2352 = vperm.slane %v2344, %v2351
    %v2353 = vrot.slane %v2348, 4
    %v2354 = vsel %vm282, %v2353, %v2336
    %v2355 = vrot.slane %v2336, 4
    %v2356 = vsel %vm282, %v2348, %v2355
    %v2358 = vunpack.c.l.s4 1934713408
    %v2359 = vunpack.c.0.s8 %v2358
    %v2360 = vperm.slane %v2354, %v2359
    %v2362 = vunpack.c.l.s4 1934713408
    %v2363 = vunpack.c.0.s8 %v2362
    %v2364 = vperm.slane %v2356, %v2363
    %v2365 = vrot.slane %v2352, 4
    %v2366 = vsel %vm282, %v2365, %v2340
    %v2367 = vrot.slane %v2340, 4
    %v2368 = vsel %vm282, %v2352, %v2367
    %v2370 = vunpack.c.l.s4 1934713408
    %v2371 = vunpack.c.0.s8 %v2370
    %v2372 = vperm.slane %v2366, %v2371
    %v2374 = vunpack.c.l.s4 1934713408
    %v2375 = vunpack.c.0.s8 %v2374
    %v2376 = vperm.slane %v2368, %v2375
    %v2377 = vrot.slane %v2360, 4
    %v2378 = vsel %vm282, 0.0, %v2377
    %v2379 = vrot.slane %v2364, 4
    %v2380 = vsel %vm282, 0.0, %v2379
    %v2381 = vrot.slane %v2372, 4
    %v2382 = vsel %vm282, 0.0, %v2381
    %v2383 = vrot.slane %v2376, 4
    %v2384 = vsel %vm282, 0.0, %v2383
    %v2385 = vrot.slane %v2320, 4
    %v2386 = vsel %vm282, %v2385, %v1941
    %v2387 = vrot.slane %v1941, 4
    %v2388 = vsel %vm282, %v2320, %v2387
    %v2390 = vunpack.c.l.s4 1983009808
    %v2391 = vunpack.c.0.s8 %v2390
    %v2392 = vperm.slane %v2386, %v2391
    %v2394 = vunpack.c.l.s4 1983009808
    %v2395 = vunpack.c.0.s8 %v2394
    %v2396 = vperm.slane %v2388, %v2395
    %v2397 = vrot.slane %v2326, 4
    %v2398 = vsel %vm282, %v2397, %v2314
    %v2399 = vrot.slane %v2314, 4
    %v2400 = vsel %vm282, %v2326, %v2399
    %v2402 = vunpack.c.l.s4 1983009808
    %v2403 = vunpack.c.0.s8 %v2402
    %v2404 = vperm.slane %v2398, %v2403
    %v2406 = vunpack.c.l.s4 1983009808
    %v2407 = vunpack.c.0.s8 %v2406
    %v2408 = vperm.slane %v2400, %v2407
    %v2409 = vrot.slane %v2404, 4
    %v2410 = vsel %vm282, %v2409, %v2392
    %v2411 = vrot.slane %v2392, 4
    %v2412 = vsel %vm282, %v2404, %v2411
    %v2414 = vunpack.c.l.s4 1934713408
    %v2415 = vunpack.c.0.s8 %v2414
    %v2416 = vperm.slane %v2410, %v2415
    %v2418 = vunpack.c.l.s4 1934713408
    %v2419 = vunpack.c.0.s8 %v2418
    %v2420 = vperm.slane %v2412, %v2419
    %v2421 = vrot.slane %v2408, 4
    %v2422 = vsel %vm282, %v2421, %v2396
    %v2423 = vrot.slane %v2396, 4
    %v2424 = vsel %vm282, %v2408, %v2423
    %v2426 = vunpack.c.l.s4 1934713408
    %v2427 = vunpack.c.0.s8 %v2426
    %v2428 = vperm.slane %v2422, %v2427
    %v2430 = vunpack.c.l.s4 1934713408
    %v2431 = vunpack.c.0.s8 %v2430
    %v2432 = vperm.slane %v2424, %v2431
    %v2433 = vrot.slane %v2416, 4
    %v2434 = vsel %vm282, 0.0, %v2433
    %v2435 = vrot.slane %v2420, 4
    %v2436 = vsel %vm282, 0.0, %v2435
    %v2437 = vrot.slane %v2428, 4
    %v2438 = vsel %vm282, 0.0, %v2437
    %v2439 = vrot.slane %v2432, 4
    %v2440 = vsel %vm282, 0.0, %v2439
    %v2441 = vsel %vm282, %v2379, %v2360
    %v2443 = vunpack.c.l.s4 1983009808
    %v2444 = vunpack.c.0.s8 %v2443
    %v2445 = vperm.slane %v2441, %v2444
    %v2446 = vrot.slane %v2380, 4
    %v2447 = vsel %vm282, %v2446, %v2378
    %v2449 = vunpack.c.l.s4 1983009808
    %v2450 = vunpack.c.0.s8 %v2449
    %v2451 = vperm.slane %v2447, %v2450
    %v2452 = vsel %vm282, %v2383, %v2372
    %v2454 = vunpack.c.l.s4 1983009808
    %v2455 = vunpack.c.0.s8 %v2454
    %v2456 = vperm.slane %v2452, %v2455
    %v2457 = vrot.slane %v2384, 4
    %v2458 = vsel %vm282, %v2457, %v2382
    %v2460 = vunpack.c.l.s4 1983009808
    %v2461 = vunpack.c.0.s8 %v2460
    %v2462 = vperm.slane %v2458, %v2461
    %v2463 = vrot.slane %v2451, 4
    %v2464 = vsel %vm282, %v2463, %v2445
    %v2465 = vrot.slane %v2445, 4
    %v2466 = vsel %vm282, %v2451, %v2465
    %v2468 = vunpack.c.l.s4 1934713408
    %v2469 = vunpack.c.0.s8 %v2468
    %v2470 = vperm.slane %v2464, %v2469
    %v2472 = vunpack.c.l.s4 1934713408
    %v2473 = vunpack.c.0.s8 %v2472
    %v2474 = vperm.slane %v2466, %v2473
    %v2475 = vrot.slane %v2462, 4
    %v2476 = vsel %vm282, %v2475, %v2456
    %v2477 = vrot.slane %v2456, 4
    %v2478 = vsel %vm282, %v2462, %v2477
    %v2480 = vunpack.c.l.s4 1934713408
    %v2481 = vunpack.c.0.s8 %v2480
    %v2482 = vperm.slane %v2476, %v2481
    %v2484 = vunpack.c.l.s4 1934713408
    %v2485 = vunpack.c.0.s8 %v2484
    %v2486 = vperm.slane %v2478, %v2485
    %v2487 = vrot.slane %v2482, 4
    %v2488 = vsel %vm282, %v2487, %v2470
    %v2489 = vrot.slane %v2470, 4
    %v2490 = vsel %vm282, %v2482, %v2489
    %v2491 = vrot.slane %v2486, 4
    %v2492 = vsel %vm282, %v2491, %v2474
    %v2493 = vrot.slane %v2474, 4
    %v2494 = vsel %vm282, %v2486, %v2493
    %v2495 = vsel %vm282, %v2435, %v2416
    %v2497 = vunpack.c.l.s4 1983009808
    %v2498 = vunpack.c.0.s8 %v2497
    %v2499 = vperm.slane %v2495, %v2498
    %v2500 = vrot.slane %v2436, 4
    %v2501 = vsel %vm282, %v2500, %v2434
    %v2503 = vunpack.c.l.s4 1983009808
    %v2504 = vunpack.c.0.s8 %v2503
    %v2505 = vperm.slane %v2501, %v2504
    %v2506 = vsel %vm282, %v2439, %v2428
    %v2508 = vunpack.c.l.s4 1983009808
    %v2509 = vunpack.c.0.s8 %v2508
    %v2510 = vperm.slane %v2506, %v2509
    %v2511 = vrot.slane %v2440, 4
    %v2512 = vsel %vm282, %v2511, %v2438
    %v2514 = vunpack.c.l.s4 1983009808
    %v2515 = vunpack.c.0.s8 %v2514
    %v2516 = vperm.slane %v2512, %v2515
    %v2517 = vrot.slane %v2505, 4
    %v2518 = vsel %vm282, %v2517, %v2499
    %v2519 = vrot.slane %v2499, 4
    %v2520 = vsel %vm282, %v2505, %v2519
    %v2522 = vunpack.c.l.s4 1934713408
    %v2523 = vunpack.c.0.s8 %v2522
    %v2524 = vperm.slane %v2518, %v2523
    %v2526 = vunpack.c.l.s4 1934713408
    %v2527 = vunpack.c.0.s8 %v2526
    %v2528 = vperm.slane %v2520, %v2527
    %v2529 = vrot.slane %v2516, 4
    %v2530 = vsel %vm282, %v2529, %v2510
    %v2531 = vrot.slane %v2510, 4
    %v2532 = vsel %vm282, %v2516, %v2531
    %v2534 = vunpack.c.l.s4 1934713408
    %v2535 = vunpack.c.0.s8 %v2534
    %v2536 = vperm.slane %v2530, %v2535
    %v2538 = vunpack.c.l.s4 1934713408
    %v2539 = vunpack.c.0.s8 %v2538
    %v2540 = vperm.slane %v2532, %v2539
    %v2541 = vrot.slane %v2536, 4
    %v2542 = vsel %vm282, %v2541, %v2524
    %v2543 = vrot.slane %v2524, 4
    %v2544 = vsel %vm282, %v2536, %v2543
    %v2545 = vrot.slane %v2540, 4
    %v2546 = vsel %vm282, %v2545, %v2528
    %v2547 = vrot.slane %v2528, 4
    %v2548 = vsel %vm282, %v2540, %v2547
    %v2550 = vsel %vm632, %v2062, 0
    %v2553 = vsel %vm632, %v2248, 0
    %v2556 = vsel %vm632, %v2302, 0
    %2558 = vmatpush.xpose.msra.mxu0 0.0
    %2559 = vmatpush.xpose.msra.mxu0 0.0
    %2560 = vmatpush.xpose.msra.mxu0 0.0
    %2561 = vmatpush.xpose.msra.mxu0 0.0
    %2562 = vmatpush.xpose.msra.mxu0 0.0
    %2563 = vmatpush.xpose.msra.mxu0 0.0
    %2564 = vmatpush.xpose.msra.mxu0 0.0
    %2565 = vmatpush.xpose.msra.mxu0 0.0
    %2566 = vmatpush.xpose.msra.mxu0 0.0
    %2567 = vmatpush.xpose.msra.mxu0 0.0
    %2568 = vmatpush.xpose.msra.mxu0 0.0
    %2569 = vmatpush.xpose.msra.mxu0 0.0
    %2570 = vmatpush.xpose.msra.mxu0 0.0
    %2571 = vmatpush.xpose.msra.mxu0 0.0
    %2572 = vmatpush.xpose.msra.mxu0 %v2556
    %2573 = vmatpush.xpose.msra.mxu0 %v2553
    %2574 = vmatmul.f32.gmra.mxu0 %v2550
    %v2575 = vpop.f32.mrf.mxu0
    %v2576 = vadd.f32 0.0, %v2575
    %2577 = vdwg.mxu0
    %v2579 = vsel %vm632, %v2064, 0
    %v2582 = vsel %vm632, %v2250, 0
    %v2585 = vsel %vm632, %v2304, 0
    %2587 = vmatpush.xpose.msra.mxu0 0.0
    %2588 = vmatpush.xpose.msra.mxu0 0.0
    %2589 = vmatpush.xpose.msra.mxu0 0.0
    %2590 = vmatpush.xpose.msra.mxu0 0.0
    %2591 = vmatpush.xpose.msra.mxu0 0.0
    %2592 = vmatpush.xpose.msra.mxu0 0.0
    %2593 = vmatpush.xpose.msra.mxu0 0.0
    %2594 = vmatpush.xpose.msra.mxu0 0.0
    %2595 = vmatpush.xpose.msra.mxu0 0.0
    %2596 = vmatpush.xpose.msra.mxu0 0.0
    %2597 = vmatpush.xpose.msra.mxu0 0.0
    %2598 = vmatpush.xpose.msra.mxu0 0.0
    %2599 = vmatpush.xpose.msra.mxu0 0.0
    %2600 = vmatpush.xpose.msra.mxu0 0.0
    %2601 = vmatpush.xpose.msra.mxu0 %v2585
    %2602 = vmatpush.xpose.msra.mxu0 %v2582
    %2603 = vmatmul.f32.gmra.mxu0 %v2579
    %v2604 = vpop.f32.mrf.mxu0
    %v2605 = vadd.f32 0.0, %v2604
    %2606 = vdwg.mxu0
    %v2608 = vsel %vm632, %v2066, 0
    %v2611 = vsel %vm632, %v2252, 0
    %v2614 = vsel %vm632, %v2306, 0
    %2616 = vmatpush.xpose.msra.mxu0 0.0
    %2617 = vmatpush.xpose.msra.mxu0 0.0
    %2618 = vmatpush.xpose.msra.mxu0 0.0
    %2619 = vmatpush.xpose.msra.mxu0 0.0
    %2620 = vmatpush.xpose.msra.mxu0 0.0
    %2621 = vmatpush.xpose.msra.mxu0 0.0
    %2622 = vmatpush.xpose.msra.mxu0 0.0
    %2623 = vmatpush.xpose.msra.mxu0 0.0
    %2624 = vmatpush.xpose.msra.mxu0 0.0
    %2625 = vmatpush.xpose.msra.mxu0 0.0
    %2626 = vmatpush.xpose.msra.mxu0 0.0
    %2627 = vmatpush.xpose.msra.mxu0 0.0
    %2628 = vmatpush.xpose.msra.mxu0 0.0
    %2629 = vmatpush.xpose.msra.mxu0 0.0
    %2630 = vmatpush.xpose.msra.mxu0 %v2614
    %2631 = vmatpush.xpose.msra.mxu0 %v2611
    %2632 = vmatmul.f32.gmra.mxu0 %v2608
    %v2633 = vpop.f32.mrf.mxu0
    %v2634 = vadd.f32 0.0, %v2633
    %2635 = vdwg.mxu0
    %v2637 = vsel %vm632, %v2068, 0
    %v2640 = vsel %vm632, %v2254, 0
    %v2643 = vsel %vm632, %v2308, 0
    %2645 = vmatpush.xpose.msra.mxu0 0.0
    %2646 = vmatpush.xpose.msra.mxu0 0.0
    %2647 = vmatpush.xpose.msra.mxu0 0.0
    %2648 = vmatpush.xpose.msra.mxu0 0.0
    %2649 = vmatpush.xpose.msra.mxu0 0.0
    %2650 = vmatpush.xpose.msra.mxu0 0.0
    %2651 = vmatpush.xpose.msra.mxu0 0.0
    %2652 = vmatpush.xpose.msra.mxu0 0.0
    %2653 = vmatpush.xpose.msra.mxu0 0.0
    %2654 = vmatpush.xpose.msra.mxu0 0.0
    %2655 = vmatpush.xpose.msra.mxu0 0.0
    %2656 = vmatpush.xpose.msra.mxu0 0.0
    %2657 = vmatpush.xpose.msra.mxu0 0.0
    %2658 = vmatpush.xpose.msra.mxu0 0.0
    %2659 = vmatpush.xpose.msra.mxu0 %v2643
    %2660 = vmatpush.xpose.msra.mxu0 %v2640
    %2661 = vmatmul.f32.gmra.mxu0 %v2637
    %v2662 = vpop.f32.mrf.mxu0
    %v2663 = vadd.f32 0.0, %v2662
    %2664 = vdwg.mxu0
    %v2665 = vmul.f32 %v2576, 0.35355338
    %v2666 = vmul.f32 %v2605, 0.35355338
    %v2667 = vmul.f32 %v2634, 0.35355338
    %v2668 = vmul.f32 %v2663, 0.35355338
    %v2670 = vperm.slane %v61, 0
    %v2672 = vadd.f32 %v2665, %v2670
    %v2673 = vadd.f32 %v2666, %v2670
    %v2674 = vadd.f32 %v2667, %v2670
    %v2675 = vadd.f32 %v2668, %v2670
    %v2676 = vsel %vm1004, %v2672, -inf
    %2677 = vmax.xlane.f32.xlu0 %v2676
    %v2678 = vpop.xlane.xlu0 %2677
    %v2679 = vsel %vm1004, %v2673, -inf
    %2680 = vmax.xlane.f32.xlu0 %v2679
    %v2681 = vpop.xlane.xlu0 %2680
    %v2682 = vsel %vm1004, %v2674, -inf
    %2683 = vmax.xlane.f32.xlu0 %v2682
    %v2684 = vpop.xlane.xlu0 %2683
    %v2685 = vsel %vm1004, %v2675, -inf
    %2686 = vmax.xlane.f32.xlu0 %v2685
    %v2687 = vpop.xlane.xlu0 %2686
    %v2688 = vsub.f32 %v2672, %v2678
    %v2689 = vsub.f32 %v2673, %v2681
    %v2690 = vsub.f32 %v2674, %v2684
    %v2691 = vsub.f32 %v2675, %v2687
    %v2692 = vmul.f32 %v2688, 1.442695
    %v2693 = vpow.pop %v2692
    %v2694 = vmul.f32 %v2689, 1.442695
    %v2695 = vpow.pop %v2694
    %v2696 = vmul.f32 %v2690, 1.442695
    %v2697 = vpow.pop %v2696
    %v2698 = vmul.f32 %v2691, 1.442695
    %v2699 = vpow.pop %v2698
    %v2700 = vsel %vm1004, %v2693, 0.0
    %2701 = vadd.xlane.f32.xlu0 %v2700
    %v2702 = vpop.xlane.xlu0 %2701
    %v2703 = vsel %vm1004, %v2695, 0.0
    %2704 = vadd.xlane.f32.xlu0 %v2703
    %v2705 = vpop.xlane.xlu0 %2704
    %v2706 = vsel %vm1004, %v2697, 0.0
    %2707 = vadd.xlane.f32.xlu0 %v2706
    %v2708 = vpop.xlane.xlu0 %2707
    %v2709 = vsel %vm1004, %v2699, 0.0
    %2710 = vadd.xlane.f32.xlu0 %v2709
    %v2711 = vpop.xlane.xlu0 %2710
    %v2712 = vrcp.pop %v2702
    %v2713 = vrcp.pop %v2705
    %v2714 = vrcp.pop %v2708
    %v2715 = vrcp.pop %v2711
    %v2716 = vmul.f32 %v2693, %v2712
    %v2717 = vmul.f32 %v2695, %v2713
    %v2718 = vmul.f32 %v2697, %v2714
    %v2719 = vmul.f32 %v2699, %v2715
    %v2721 = vsel %vm1004, %v2716, 0
    %2723 = vmatpush.msra.mxu0 0.0
    %2724 = vmatpush.msra.mxu0 0.0
    %2725 = vmatpush.msra.mxu0 0.0
    %2726 = vmatpush.msra.mxu0 0.0
    %2727 = vmatpush.msra.mxu0 0.0
    %2728 = vmatpush.msra.mxu0 0.0
    %2729 = vmatpush.msra.mxu0 0.0
    %2730 = vmatpush.msra.mxu0 0.0
    %2731 = vmatpush.msra.mxu0 0.0
    %2732 = vmatpush.msra.mxu0 0.0
    %2733 = vmatpush.msra.mxu0 0.0
    %2734 = vmatpush.msra.mxu0 0.0
    %2735 = vmatpush.msra.mxu0 0.0
    %2736 = vmatpush.msra.mxu0 0.0
    %2737 = vmatpush.msra.mxu0 %v2542
    %2738 = vmatpush.msra.mxu0 %v2488
    %2739 = vmatmul.f32.gmra.mxu0 %v2721
    %v2740 = vpop.f32.mrf.mxu0
    %v2741 = vadd.f32 0.0, %v2740
    %2742 = vdwg.mxu0
    %v2744 = vsel %vm1004, %v2717, 0
    %2746 = vmatpush.msra.mxu0 0.0
    %2747 = vmatpush.msra.mxu0 0.0
    %2748 = vmatpush.msra.mxu0 0.0
    %2749 = vmatpush.msra.mxu0 0.0
    %2750 = vmatpush.msra.mxu0 0.0
    %2751 = vmatpush.msra.mxu0 0.0
    %2752 = vmatpush.msra.mxu0 0.0
    %2753 = vmatpush.msra.mxu0 0.0
    %2754 = vmatpush.msra.mxu0 0.0
    %2755 = vmatpush.msra.mxu0 0.0
    %2756 = vmatpush.msra.mxu0 0.0
    %2757 = vmatpush.msra.mxu0 0.0
    %2758 = vmatpush.msra.mxu0 0.0
    %2759 = vmatpush.msra.mxu0 0.0
    %2760 = vmatpush.msra.mxu0 %v2544
    %2761 = vmatpush.msra.mxu0 %v2490
    %2762 = vmatmul.f32.gmra.mxu0 %v2744
    %v2763 = vpop.f32.mrf.mxu0
    %v2764 = vadd.f32 0.0, %v2763
    %2765 = vdwg.mxu0
    %v2767 = vsel %vm1004, %v2718, 0
    %2769 = vmatpush.msra.mxu0 0.0
    %2770 = vmatpush.msra.mxu0 0.0
    %2771 = vmatpush.msra.mxu0 0.0
    %2772 = vmatpush.msra.mxu0 0.0
    %2773 = vmatpush.msra.mxu0 0.0
    %2774 = vmatpush.msra.mxu0 0.0
    %2775 = vmatpush.msra.mxu0 0.0
    %2776 = vmatpush.msra.mxu0 0.0
    %2777 = vmatpush.msra.mxu0 0.0
    %2778 = vmatpush.msra.mxu0 0.0
    %2779 = vmatpush.msra.mxu0 0.0
    %2780 = vmatpush.msra.mxu0 0.0
    %2781 = vmatpush.msra.mxu0 0.0
    %2782 = vmatpush.msra.mxu0 0.0
    %2783 = vmatpush.msra.mxu0 %v2546
    %2784 = vmatpush.msra.mxu0 %v2492
    %2785 = vmatmul.f32.gmra.mxu0 %v2767
    %v2786 = vpop.f32.mrf.mxu0
    %v2787 = vadd.f32 0.0, %v2786
    %2788 = vdwg.mxu0
    %v2790 = vsel %vm1004, %v2719, 0
    %2792 = vmatpush.msra.mxu0 0.0
    %2793 = vmatpush.msra.mxu0 0.0
    %2794 = vmatpush.msra.mxu0 0.0
    %2795 = vmatpush.msra.mxu0 0.0
    %2796 = vmatpush.msra.mxu0 0.0
    %2797 = vmatpush.msra.mxu0 0.0
    %2798 = vmatpush.msra.mxu0 0.0
    %2799 = vmatpush.msra.mxu0 0.0
    %2800 = vmatpush.msra.mxu0 0.0
    %2801 = vmatpush.msra.mxu0 0.0
    %2802 = vmatpush.msra.mxu0 0.0
    %2803 = vmatpush.msra.mxu0 0.0
    %2804 = vmatpush.msra.mxu0 0.0
    %2805 = vmatpush.msra.mxu0 0.0
    %2806 = vmatpush.msra.mxu0 %v2548
    %2807 = vmatpush.msra.mxu0 %v2494
    %2808 = vmatmul.f32.gmra.mxu0 %v2790
    %v2809 = vpop.f32.mrf.mxu0
    %v2810 = vadd.f32 0.0, %v2809
    %2811 = vdwg.mxu0
    %v2812 = vrot.slane %v2787, 4
    %v2813 = vsel %vm282, %v2812, %v2741
    %v2814 = vrot.slane %v2741, 4
    %v2815 = vsel %vm282, %v2787, %v2814
    %v2817 = vunpack.c.l.s4 1983009808
    %v2818 = vunpack.c.0.s8 %v2817
    %v2819 = vperm.slane %v2813, %v2818
    %v2821 = vunpack.c.l.s4 1983009808
    %v2822 = vunpack.c.0.s8 %v2821
    %v2823 = vperm.slane %v2815, %v2822
    %v2824 = vrot.slane %v2810, 4
    %v2825 = vsel %vm282, %v2824, %v2764
    %v2826 = vrot.slane %v2764, 4
    %v2827 = vsel %vm282, %v2810, %v2826
    %v2829 = vunpack.c.l.s4 1983009808
    %v2830 = vunpack.c.0.s8 %v2829
    %v2831 = vperm.slane %v2825, %v2830
    %v2833 = vunpack.c.l.s4 1983009808
    %v2834 = vunpack.c.0.s8 %v2833
    %v2835 = vperm.slane %v2827, %v2834
    %v2836 = vrot.slane %v2831, 4
    %v2837 = vsel %vm282, %v2836, %v2819
    %v2838 = vrot.slane %v2819, 4
    %v2839 = vsel %vm282, %v2831, %v2838
    %v2841 = vunpack.c.l.s4 1934713408
    %v2842 = vunpack.c.0.s8 %v2841
    %v2843 = vperm.slane %v2837, %v2842
    %v2845 = vunpack.c.l.s4 1934713408
    %v2846 = vunpack.c.0.s8 %v2845
    %v2847 = vperm.slane %v2839, %v2846
    %v2848 = vrot.slane %v2835, 4
    %v2849 = vsel %vm282, %v2848, %v2823
    %v2850 = vrot.slane %v2823, 4
    %v2851 = vsel %vm282, %v2835, %v2850
    %v2853 = vunpack.c.l.s4 1934713408
    %v2854 = vunpack.c.0.s8 %v2853
    %v2855 = vperm.slane %v2849, %v2854
    %v2857 = vunpack.c.l.s4 1934713408
    %v2858 = vunpack.c.0.s8 %v2857
    %v2859 = vperm.slane %v2851, %v2858
    %v2860 = vrot.slane %v2843, 4
    %v2861 = vsel %vm282, 0.0, %v2860
    %v2862 = vrot.slane %v2847, 4
    %v2863 = vsel %vm282, 0.0, %v2862
    %v2864 = vrot.slane %v2855, 4
    %v2865 = vsel %vm282, 0.0, %v2864
    %v2866 = vrot.slane %v2859, 4
    %v2867 = vsel %vm282, 0.0, %v2866
    %v2868 = vsel %vm282, %v2862, %v2843
    %v2870 = vunpack.c.l.s4 1983009808
    %v2871 = vunpack.c.0.s8 %v2870
    %v2872 = vperm.slane %v2868, %v2871
    %v2873 = vrot.slane %v2863, 4
    %v2874 = vsel %vm282, %v2873, %v2861
    %v2876 = vunpack.c.l.s4 1983009808
    %v2877 = vunpack.c.0.s8 %v2876
    %v2878 = vperm.slane %v2874, %v2877
    %v2879 = vsel %vm282, %v2866, %v2855
    %v2881 = vunpack.c.l.s4 1983009808
    %v2882 = vunpack.c.0.s8 %v2881
    %v2883 = vperm.slane %v2879, %v2882
    %v2884 = vrot.slane %v2867, 4
    %v2885 = vsel %vm282, %v2884, %v2865
    %v2887 = vunpack.c.l.s4 1983009808
    %v2888 = vunpack.c.0.s8 %v2887
    %v2889 = vperm.slane %v2885, %v2888
    %v2890 = vrot.slane %v2878, 4
    %v2891 = vsel %vm282, %v2890, %v2872
    %v2892 = vrot.slane %v2872, 4
    %v2893 = vsel %vm282, %v2878, %v2892
    %v2895 = vunpack.c.l.s4 1934713408
    %v2896 = vunpack.c.0.s8 %v2895
    %v2897 = vperm.slane %v2891, %v2896
    %v2899 = vunpack.c.l.s4 1934713408
    %v2900 = vunpack.c.0.s8 %v2899
    %v2901 = vperm.slane %v2893, %v2900
    %v2902 = vrot.slane %v2889, 4
    %v2903 = vsel %vm282, %v2902, %v2883
    %v2904 = vrot.slane %v2883, 4
    %v2905 = vsel %vm282, %v2889, %v2904
    %v2907 = vunpack.c.l.s4 1934713408
    %v2908 = vunpack.c.0.s8 %v2907
    %v2909 = vperm.slane %v2903, %v2908
    %v2911 = vunpack.c.l.s4 1934713408
    %v2912 = vunpack.c.0.s8 %v2911
    %v2913 = vperm.slane %v2905, %v2912
    %v2914 = vrot.slane %v2909, 4
    %v2915 = vsel %vm282, %v2914, %v2897
    %v2916 = vrot.slane %v2897, 4
    %v2917 = vsel %vm282, %v2909, %v2916
    %v2918 = vrot.slane %v2913, 4
    %v2919 = vsel %vm282, %v2918, %v2901
    %v2920 = vrot.slane %v2901, 4
    %v2921 = vsel %vm282, %v2913, %v2920
    %2923 = vrot.lane.b32.xlu0 %v2917, 8
    %v2924 = vpop.permute.xlu0 %2923
    %2927 = vrot.lane.b32.xlu0 %v2919, 16
    %v2928 = vpop.permute.xlu0 %2927
    %2931 = vrot.lane.b32.xlu0 %v2921, 24
    %v2932 = vpop.permute.xlu0 %2931
    %v2934 = vsel %vm632, %v2915, %v2924
    %v2935 = vsel %vm1004, %v2934, %v2928
    %v2936 = vsel %vm1006, %v2935, %v2932
    %2938 = vrot.lane.b32.xlu0 %v1875, 120
    %v2939 = vpop.permute.xlu0 %2938
    %2941 = vrot.lane.b32.xlu0 %v1875, 112
    %v2942 = vpop.permute.xlu0 %2941
    %2944 = vrot.lane.b32.xlu0 %v1875, 104
    %v2945 = vpop.permute.xlu0 %2944
    %v2947 = vrot.slane %v2942, 4
    %v2948 = vsel %vm282, %v2947, %v1875
    %v2949 = vrot.slane %v1875, 4
    %v2950 = vsel %vm282, %v2942, %v2949
    %v2952 = vunpack.c.l.s4 1983009808
    %v2953 = vunpack.c.0.s8 %v2952
    %v2954 = vperm.slane %v2948, %v2953
    %v2956 = vunpack.c.l.s4 1983009808
    %v2957 = vunpack.c.0.s8 %v2956
    %v2958 = vperm.slane %v2950, %v2957
    %v2959 = vrot.slane %v2945, 4
    %v2960 = vsel %vm282, %v2959, %v2939
    %v2961 = vrot.slane %v2939, 4
    %v2962 = vsel %vm282, %v2945, %v2961
    %v2964 = vunpack.c.l.s4 1983009808
    %v2965 = vunpack.c.0.s8 %v2964
    %v2966 = vperm.slane %v2960, %v2965
    %v2968 = vunpack.c.l.s4 1983009808
    %v2969 = vunpack.c.0.s8 %v2968
    %v2970 = vperm.slane %v2962, %v2969
    %v2971 = vrot.slane %v2966, 4
    %v2972 = vsel %vm282, %v2971, %v2954
    %v2973 = vrot.slane %v2954, 4
    %v2974 = vsel %vm282, %v2966, %v2973
    %v2976 = vunpack.c.l.s4 1934713408
    %v2977 = vunpack.c.0.s8 %v2976
    %v2978 = vperm.slane %v2972, %v2977
    %v2980 = vunpack.c.l.s4 1934713408
    %v2981 = vunpack.c.0.s8 %v2980
    %v2982 = vperm.slane %v2974, %v2981
    %v2983 = vrot.slane %v2970, 4
    %v2984 = vsel %vm282, %v2983, %v2958
    %v2985 = vrot.slane %v2958, 4
    %v2986 = vsel %vm282, %v2970, %v2985
    %v2988 = vunpack.c.l.s4 1934713408
    %v2989 = vunpack.c.0.s8 %v2988
    %v2990 = vperm.slane %v2984, %v2989
    %v2992 = vunpack.c.l.s4 1934713408
    %v2993 = vunpack.c.0.s8 %v2992
    %v2994 = vperm.slane %v2986, %v2993
    %v2995 = vrot.slane %v2978, 4
    %v2996 = vsel %vm282, 0.0, %v2995
    %v2997 = vrot.slane %v2982, 4
    %v2998 = vsel %vm282, 0.0, %v2997
    %v2999 = vrot.slane %v2990, 4
    %v3000 = vsel %vm282, 0.0, %v2999
    %v3001 = vrot.slane %v2994, 4
    %v3002 = vsel %vm282, 0.0, %v3001
    %v3003 = vsel %vm282, %v2997, %v2978
    %v3005 = vunpack.c.l.s4 1983009808
    %v3006 = vunpack.c.0.s8 %v3005
    %v3007 = vperm.slane %v3003, %v3006
    %v3008 = vrot.slane %v2998, 4
    %v3009 = vsel %vm282, %v3008, %v2996
    %v3011 = vunpack.c.l.s4 1983009808
    %v3012 = vunpack.c.0.s8 %v3011
    %v3013 = vperm.slane %v3009, %v3012
    %v3014 = vsel %vm282, %v3001, %v2990
    %v3016 = vunpack.c.l.s4 1983009808
    %v3017 = vunpack.c.0.s8 %v3016
    %v3018 = vperm.slane %v3014, %v3017
    %v3019 = vrot.slane %v3002, 4
    %v3020 = vsel %vm282, %v3019, %v3000
    %v3022 = vunpack.c.l.s4 1983009808
    %v3023 = vunpack.c.0.s8 %v3022
    %v3024 = vperm.slane %v3020, %v3023
    %v3025 = vrot.slane %v3013, 4
    %v3026 = vsel %vm282, %v3025, %v3007
    %v3027 = vrot.slane %v3007, 4
    %v3028 = vsel %vm282, %v3013, %v3027
    %v3030 = vunpack.c.l.s4 1934713408
    %v3031 = vunpack.c.0.s8 %v3030
    %v3032 = vperm.slane %v3026, %v3031
    %v3034 = vunpack.c.l.s4 1934713408
    %v3035 = vunpack.c.0.s8 %v3034
    %v3036 = vperm.slane %v3028, %v3035
    %v3037 = vrot.slane %v3024, 4
    %v3038 = vsel %vm282, %v3037, %v3018
    %v3039 = vrot.slane %v3018, 4
    %v3040 = vsel %vm282, %v3024, %v3039
    %v3042 = vunpack.c.l.s4 1934713408
    %v3043 = vunpack.c.0.s8 %v3042
    %v3044 = vperm.slane %v3038, %v3043
    %v3046 = vunpack.c.l.s4 1934713408
    %v3047 = vunpack.c.0.s8 %v3046
    %v3048 = vperm.slane %v3040, %v3047
    %v3049 = vrot.slane %v3044, 4
    %v3050 = vsel %vm282, %v3049, %v3032
    %v3051 = vrot.slane %v3032, 4
    %v3052 = vsel %vm282, %v3044, %v3051
    %v3053 = vrot.slane %v3048, 4
    %v3054 = vsel %vm282, %v3053, %v3036
    %v3055 = vrot.slane %v3036, 4
    %v3056 = vsel %vm282, %v3048, %v3055
    %3059 = vrot.lane.b32.xlu0 %v1914, 120
    %v3060 = vpop.permute.xlu0 %3059
    %3061 = vrot.lane.b32.xlu0 %v1917, 120
    %v3062 = vpop.permute.xlu0 %3061
    %3065 = vrot.lane.b32.xlu0 %v1914, 112
    %v3066 = vpop.permute.xlu0 %3065
    %3067 = vrot.lane.b32.xlu0 %v1917, 112
    %v3068 = vpop.permute.xlu0 %3067
    %3071 = vrot.lane.b32.xlu0 %v1914, 104
    %v3072 = vpop.permute.xlu0 %3071
    %3073 = vrot.lane.b32.xlu0 %v1917, 104
    %v3074 = vpop.permute.xlu0 %3073
    %v3077 = vrot.slane %v3066, 4
    %v3078 = vsel %vm282, %v3077, %v1914
    %v3079 = vrot.slane %v1914, 4
    %v3080 = vsel %vm282, %v3066, %v3079
    %v3082 = vunpack.c.l.s4 1983009808
    %v3083 = vunpack.c.0.s8 %v3082
    %v3084 = vperm.slane %v3078, %v3083
    %v3086 = vunpack.c.l.s4 1983009808
    %v3087 = vunpack.c.0.s8 %v3086
    %v3088 = vperm.slane %v3080, %v3087
    %v3089 = vrot.slane %v3072, 4
    %v3090 = vsel %vm282, %v3089, %v3060
    %v3091 = vrot.slane %v3060, 4
    %v3092 = vsel %vm282, %v3072, %v3091
    %v3094 = vunpack.c.l.s4 1983009808
    %v3095 = vunpack.c.0.s8 %v3094
    %v3096 = vperm.slane %v3090, %v3095
    %v3098 = vunpack.c.l.s4 1983009808
    %v3099 = vunpack.c.0.s8 %v3098
    %v3100 = vperm.slane %v3092, %v3099
    %v3101 = vrot.slane %v3096, 4
    %v3102 = vsel %vm282, %v3101, %v3084
    %v3103 = vrot.slane %v3084, 4
    %v3104 = vsel %vm282, %v3096, %v3103
    %v3106 = vunpack.c.l.s4 1934713408
    %v3107 = vunpack.c.0.s8 %v3106
    %v3108 = vperm.slane %v3102, %v3107
    %v3110 = vunpack.c.l.s4 1934713408
    %v3111 = vunpack.c.0.s8 %v3110
    %v3112 = vperm.slane %v3104, %v3111
    %v3113 = vrot.slane %v3100, 4
    %v3114 = vsel %vm282, %v3113, %v3088
    %v3115 = vrot.slane %v3088, 4
    %v3116 = vsel %vm282, %v3100, %v3115
    %v3118 = vunpack.c.l.s4 1934713408
    %v3119 = vunpack.c.0.s8 %v3118
    %v3120 = vperm.slane %v3114, %v3119
    %v3122 = vunpack.c.l.s4 1934713408
    %v3123 = vunpack.c.0.s8 %v3122
    %v3124 = vperm.slane %v3116, %v3123
    %v3125 = vrot.slane %v3108, 4
    %v3126 = vsel %vm282, 0.0, %v3125
    %v3127 = vrot.slane %v3112, 4
    %v3128 = vsel %vm282, 0.0, %v3127
    %v3129 = vrot.slane %v3120, 4
    %v3130 = vsel %vm282, 0.0, %v3129
    %v3131 = vrot.slane %v3124, 4
    %v3132 = vsel %vm282, 0.0, %v3131
    %v3133 = vrot.slane %v3068, 4
    %v3134 = vsel %vm282, %v3133, %v1917
    %v3135 = vrot.slane %v1917, 4
    %v3136 = vsel %vm282, %v3068, %v3135
    %v3138 = vunpack.c.l.s4 1983009808
    %v3139 = vunpack.c.0.s8 %v3138
    %v3140 = vperm.slane %v3134, %v3139
    %v3142 = vunpack.c.l.s4 1983009808
    %v3143 = vunpack.c.0.s8 %v3142
    %v3144 = vperm.slane %v3136, %v3143
    %v3145 = vrot.slane %v3074, 4
    %v3146 = vsel %vm282, %v3145, %v3062
    %v3147 = vrot.slane %v3062, 4
    %v3148 = vsel %vm282, %v3074, %v3147
    %v3150 = vunpack.c.l.s4 1983009808
    %v3151 = vunpack.c.0.s8 %v3150
    %v3152 = vperm.slane %v3146, %v3151
    %v3154 = vunpack.c.l.s4 1983009808
    %v3155 = vunpack.c.0.s8 %v3154
    %v3156 = vperm.slane %v3148, %v3155
    %v3157 = vrot.slane %v3152, 4
    %v3158 = vsel %vm282, %v3157, %v3140
    %v3159 = vrot.slane %v3140, 4
    %v3160 = vsel %vm282, %v3152, %v3159
    %v3162 = vunpack.c.l.s4 1934713408
    %v3163 = vunpack.c.0.s8 %v3162
    %v3164 = vperm.slane %v3158, %v3163
    %v3166 = vunpack.c.l.s4 1934713408
    %v3167 = vunpack.c.0.s8 %v3166
    %v3168 = vperm.slane %v3160, %v3167
    %v3169 = vrot.slane %v3156, 4
    %v3170 = vsel %vm282, %v3169, %v3144
    %v3171 = vrot.slane %v3144, 4
    %v3172 = vsel %vm282, %v3156, %v3171
    %v3174 = vunpack.c.l.s4 1934713408
    %v3175 = vunpack.c.0.s8 %v3174
    %v3176 = vperm.slane %v3170, %v3175
    %v3178 = vunpack.c.l.s4 1934713408
    %v3179 = vunpack.c.0.s8 %v3178
    %v3180 = vperm.slane %v3172, %v3179
    %v3181 = vrot.slane %v3164, 4
    %v3182 = vsel %vm282, 0.0, %v3181
    %v3183 = vrot.slane %v3168, 4
    %v3184 = vsel %vm282, 0.0, %v3183
    %v3185 = vrot.slane %v3176, 4
    %v3186 = vsel %vm282, 0.0, %v3185
    %v3187 = vrot.slane %v3180, 4
    %v3188 = vsel %vm282, 0.0, %v3187
    %v3189 = vsel %vm282, %v3127, %v3108
    %v3191 = vunpack.c.l.s4 1983009808
    %v3192 = vunpack.c.0.s8 %v3191
    %v3193 = vperm.slane %v3189, %v3192
    %v3194 = vrot.slane %v3128, 4
    %v3195 = vsel %vm282, %v3194, %v3126
    %v3197 = vunpack.c.l.s4 1983009808
    %v3198 = vunpack.c.0.s8 %v3197
    %v3199 = vperm.slane %v3195, %v3198
    %v3200 = vsel %vm282, %v3131, %v3120
    %v3202 = vunpack.c.l.s4 1983009808
    %v3203 = vunpack.c.0.s8 %v3202
    %v3204 = vperm.slane %v3200, %v3203
    %v3205 = vrot.slane %v3132, 4
    %v3206 = vsel %vm282, %v3205, %v3130
    %v3208 = vunpack.c.l.s4 1983009808
    %v3209 = vunpack.c.0.s8 %v3208
    %v3210 = vperm.slane %v3206, %v3209
    %v3211 = vrot.slane %v3199, 4
    %v3212 = vsel %vm282, %v3211, %v3193
    %v3213 = vrot.slane %v3193, 4
    %v3214 = vsel %vm282, %v3199, %v3213
    %v3216 = vunpack.c.l.s4 1934713408
    %v3217 = vunpack.c.0.s8 %v3216
    %v3218 = vperm.slane %v3212, %v3217
    %v3220 = vunpack.c.l.s4 1934713408
    %v3221 = vunpack.c.0.s8 %v3220
    %v3222 = vperm.slane %v3214, %v3221
    %v3223 = vrot.slane %v3210, 4
    %v3224 = vsel %vm282, %v3223, %v3204
    %v3225 = vrot.slane %v3204, 4
    %v3226 = vsel %vm282, %v3210, %v3225
    %v3228 = vunpack.c.l.s4 1934713408
    %v3229 = vunpack.c.0.s8 %v3228
    %v3230 = vperm.slane %v3224, %v3229
    %v3232 = vunpack.c.l.s4 1934713408
    %v3233 = vunpack.c.0.s8 %v3232
    %v3234 = vperm.slane %v3226, %v3233
    %v3235 = vrot.slane %v3230, 4
    %v3236 = vsel %vm282, %v3235, %v3218
    %v3237 = vrot.slane %v3218, 4
    %v3238 = vsel %vm282, %v3230, %v3237
    %v3239 = vrot.slane %v3234, 4
    %v3240 = vsel %vm282, %v3239, %v3222
    %v3241 = vrot.slane %v3222, 4
    %v3242 = vsel %vm282, %v3234, %v3241
    %v3243 = vsel %vm282, %v3183, %v3164
    %v3245 = vunpack.c.l.s4 1983009808
    %v3246 = vunpack.c.0.s8 %v3245
    %v3247 = vperm.slane %v3243, %v3246
    %v3248 = vrot.slane %v3184, 4
    %v3249 = vsel %vm282, %v3248, %v3182
    %v3251 = vunpack.c.l.s4 1983009808
    %v3252 = vunpack.c.0.s8 %v3251
    %v3253 = vperm.slane %v3249, %v3252
    %v3254 = vsel %vm282, %v3187, %v3176
    %v3256 = vunpack.c.l.s4 1983009808
    %v3257 = vunpack.c.0.s8 %v3256
    %v3258 = vperm.slane %v3254, %v3257
    %v3259 = vrot.slane %v3188, 4
    %v3260 = vsel %vm282, %v3259, %v3186
    %v3262 = vunpack.c.l.s4 1983009808
    %v3263 = vunpack.c.0.s8 %v3262
    %v3264 = vperm.slane %v3260, %v3263
    %v3265 = vrot.slane %v3253, 4
    %v3266 = vsel %vm282, %v3265, %v3247
    %v3267 = vrot.slane %v3247, 4
    %v3268 = vsel %vm282, %v3253, %v3267
    %v3270 = vunpack.c.l.s4 1934713408
    %v3271 = vunpack.c.0.s8 %v3270
    %v3272 = vperm.slane %v3266, %v3271
    %v3274 = vunpack.c.l.s4 1934713408
    %v3275 = vunpack.c.0.s8 %v3274
    %v3276 = vperm.slane %v3268, %v3275
    %v3277 = vrot.slane %v3264, 4
    %v3278 = vsel %vm282, %v3277, %v3258
    %v3279 = vrot.slane %v3258, 4
    %v3280 = vsel %vm282, %v3264, %v3279
    %v3282 = vunpack.c.l.s4 1934713408
    %v3283 = vunpack.c.0.s8 %v3282
    %v3284 = vperm.slane %v3278, %v3283
    %v3286 = vunpack.c.l.s4 1934713408
    %v3287 = vunpack.c.0.s8 %v3286
    %v3288 = vperm.slane %v3280, %v3287
    %v3289 = vrot.slane %v3284, 4
    %v3290 = vsel %vm282, %v3289, %v3272
    %v3291 = vrot.slane %v3272, 4
    %v3292 = vsel %vm282, %v3284, %v3291
    %v3293 = vrot.slane %v3288, 4
    %v3294 = vsel %vm282, %v3293, %v3276
    %v3295 = vrot.slane %v3276, 4
    %v3296 = vsel %vm282, %v3288, %v3295
    %3299 = vrot.lane.b32.xlu0 %v1944, 120
    %v3300 = vpop.permute.xlu0 %3299
    %3301 = vrot.lane.b32.xlu0 %v1947, 120
    %v3302 = vpop.permute.xlu0 %3301
    %3305 = vrot.lane.b32.xlu0 %v1944, 112
    %v3306 = vpop.permute.xlu0 %3305
    %3307 = vrot.lane.b32.xlu0 %v1947, 112
    %v3308 = vpop.permute.xlu0 %3307
    %3311 = vrot.lane.b32.xlu0 %v1944, 104
    %v3312 = vpop.permute.xlu0 %3311
    %3313 = vrot.lane.b32.xlu0 %v1947, 104
    %v3314 = vpop.permute.xlu0 %3313
    %v3317 = vrot.slane %v3306, 4
    %v3318 = vsel %vm282, %v3317, %v1944
    %v3319 = vrot.slane %v1944, 4
    %v3320 = vsel %vm282, %v3306, %v3319
    %v3322 = vunpack.c.l.s4 1983009808
    %v3323 = vunpack.c.0.s8 %v3322
    %v3324 = vperm.slane %v3318, %v3323
    %v3326 = vunpack.c.l.s4 1983009808
    %v3327 = vunpack.c.0.s8 %v3326
    %v3328 = vperm.slane %v3320, %v3327
    %v3329 = vrot.slane %v3312, 4
    %v3330 = vsel %vm282, %v3329, %v3300
    %v3331 = vrot.slane %v3300, 4
    %v3332 = vsel %vm282, %v3312, %v3331
    %v3334 = vunpack.c.l.s4 1983009808
    %v3335 = vunpack.c.0.s8 %v3334
    %v3336 = vperm.slane %v3330, %v3335
    %v3338 = vunpack.c.l.s4 1983009808
    %v3339 = vunpack.c.0.s8 %v3338
    %v3340 = vperm.slane %v3332, %v3339
    %v3341 = vrot.slane %v3336, 4
    %v3342 = vsel %vm282, %v3341, %v3324
    %v3343 = vrot.slane %v3324, 4
    %v3344 = vsel %vm282, %v3336, %v3343
    %v3346 = vunpack.c.l.s4 1934713408
    %v3347 = vunpack.c.0.s8 %v3346
    %v3348 = vperm.slane %v3342, %v3347
    %v3350 = vunpack.c.l.s4 1934713408
    %v3351 = vunpack.c.0.s8 %v3350
    %v3352 = vperm.slane %v3344, %v3351
    %v3353 = vrot.slane %v3340, 4
    %v3354 = vsel %vm282, %v3353, %v3328
    %v3355 = vrot.slane %v3328, 4
    %v3356 = vsel %vm282, %v3340, %v3355
    %v3358 = vunpack.c.l.s4 1934713408
    %v3359 = vunpack.c.0.s8 %v3358
    %v3360 = vperm.slane %v3354, %v3359
    %v3362 = vunpack.c.l.s4 1934713408
    %v3363 = vunpack.c.0.s8 %v3362
    %v3364 = vperm.slane %v3356, %v3363
    %v3365 = vrot.slane %v3348, 4
    %v3366 = vsel %vm282, 0.0, %v3365
    %v3367 = vrot.slane %v3352, 4
    %v3368 = vsel %vm282, 0.0, %v3367
    %v3369 = vrot.slane %v3360, 4
    %v3370 = vsel %vm282, 0.0, %v3369
    %v3371 = vrot.slane %v3364, 4
    %v3372 = vsel %vm282, 0.0, %v3371
    %v3373 = vrot.slane %v3308, 4
    %v3374 = vsel %vm282, %v3373, %v1947
    %v3375 = vrot.slane %v1947, 4
    %v3376 = vsel %vm282, %v3308, %v3375
    %v3378 = vunpack.c.l.s4 1983009808
    %v3379 = vunpack.c.0.s8 %v3378
    %v3380 = vperm.slane %v3374, %v3379
    %v3382 = vunpack.c.l.s4 1983009808
    %v3383 = vunpack.c.0.s8 %v3382
    %v3384 = vperm.slane %v3376, %v3383
    %v3385 = vrot.slane %v3314, 4
    %v3386 = vsel %vm282, %v3385, %v3302
    %v3387 = vrot.slane %v3302, 4
    %v3388 = vsel %vm282, %v3314, %v3387
    %v3390 = vunpack.c.l.s4 1983009808
    %v3391 = vunpack.c.0.s8 %v3390
    %v3392 = vperm.slane %v3386, %v3391
    %v3394 = vunpack.c.l.s4 1983009808
    %v3395 = vunpack.c.0.s8 %v3394
    %v3396 = vperm.slane %v3388, %v3395
    %v3397 = vrot.slane %v3392, 4
    %v3398 = vsel %vm282, %v3397, %v3380
    %v3399 = vrot.slane %v3380, 4
    %v3400 = vsel %vm282, %v3392, %v3399
    %v3402 = vunpack.c.l.s4 1934713408
    %v3403 = vunpack.c.0.s8 %v3402
    %v3404 = vperm.slane %v3398, %v3403
    %v3406 = vunpack.c.l.s4 1934713408
    %v3407 = vunpack.c.0.s8 %v3406
    %v3408 = vperm.slane %v3400, %v3407
    %v3409 = vrot.slane %v3396, 4
    %v3410 = vsel %vm282, %v3409, %v3384
    %v3411 = vrot.slane %v3384, 4
    %v3412 = vsel %vm282, %v3396, %v3411
    %v3414 = vunpack.c.l.s4 1934713408
    %v3415 = vunpack.c.0.s8 %v3414
    %v3416 = vperm.slane %v3410, %v3415
    %v3418 = vunpack.c.l.s4 1934713408
    %v3419 = vunpack.c.0.s8 %v3418
    %v3420 = vperm.slane %v3412, %v3419
    %v3421 = vrot.slane %v3404, 4
    %v3422 = vsel %vm282, 0.0, %v3421
    %v3423 = vrot.slane %v3408, 4
    %v3424 = vsel %vm282, 0.0, %v3423
    %v3425 = vrot.slane %v3416, 4
    %v3426 = vsel %vm282, 0.0, %v3425
    %v3427 = vrot.slane %v3420, 4
    %v3428 = vsel %vm282, 0.0, %v3427
    %v3429 = vsel %vm282, %v3367, %v3348
    %v3431 = vunpack.c.l.s4 1983009808
    %v3432 = vunpack.c.0.s8 %v3431
    %v3433 = vperm.slane %v3429, %v3432
    %v3434 = vrot.slane %v3368, 4
    %v3435 = vsel %vm282, %v3434, %v3366
    %v3437 = vunpack.c.l.s4 1983009808
    %v3438 = vunpack.c.0.s8 %v3437
    %v3439 = vperm.slane %v3435, %v3438
    %v3440 = vsel %vm282, %v3371, %v3360
    %v3442 = vunpack.c.l.s4 1983009808
    %v3443 = vunpack.c.0.s8 %v3442
    %v3444 = vperm.slane %v3440, %v3443
    %v3445 = vrot.slane %v3372, 4
    %v3446 = vsel %vm282, %v3445, %v3370
    %v3448 = vunpack.c.l.s4 1983009808
    %v3449 = vunpack.c.0.s8 %v3448
    %v3450 = vperm.slane %v3446, %v3449
    %v3451 = vrot.slane %v3439, 4
    %v3452 = vsel %vm282, %v3451, %v3433
    %v3453 = vrot.slane %v3433, 4
    %v3454 = vsel %vm282, %v3439, %v3453
    %v3456 = vunpack.c.l.s4 1934713408
    %v3457 = vunpack.c.0.s8 %v3456
    %v3458 = vperm.slane %v3452, %v3457
    %v3460 = vunpack.c.l.s4 1934713408
    %v3461 = vunpack.c.0.s8 %v3460
    %v3462 = vperm.slane %v3454, %v3461
    %v3463 = vrot.slane %v3450, 4
    %v3464 = vsel %vm282, %v3463, %v3444
    %v3465 = vrot.slane %v3444, 4
    %v3466 = vsel %vm282, %v3450, %v3465
    %v3468 = vunpack.c.l.s4 1934713408
    %v3469 = vunpack.c.0.s8 %v3468
    %v3470 = vperm.slane %v3464, %v3469
    %v3472 = vunpack.c.l.s4 1934713408
    %v3473 = vunpack.c.0.s8 %v3472
    %v3474 = vperm.slane %v3466, %v3473
    %v3475 = vrot.slane %v3470, 4
    %v3476 = vsel %vm282, %v3475, %v3458
    %v3477 = vrot.slane %v3458, 4
    %v3478 = vsel %vm282, %v3470, %v3477
    %v3479 = vrot.slane %v3474, 4
    %v3480 = vsel %vm282, %v3479, %v3462
    %v3481 = vrot.slane %v3462, 4
    %v3482 = vsel %vm282, %v3474, %v3481
    %v3483 = vsel %vm282, %v3423, %v3404
    %v3485 = vunpack.c.l.s4 1983009808
    %v3486 = vunpack.c.0.s8 %v3485
    %v3487 = vperm.slane %v3483, %v3486
    %v3488 = vrot.slane %v3424, 4
    %v3489 = vsel %vm282, %v3488, %v3422
    %v3491 = vunpack.c.l.s4 1983009808
    %v3492 = vunpack.c.0.s8 %v3491
    %v3493 = vperm.slane %v3489, %v3492
    %v3494 = vsel %vm282, %v3427, %v3416
    %v3496 = vunpack.c.l.s4 1983009808
    %v3497 = vunpack.c.0.s8 %v3496
    %v3498 = vperm.slane %v3494, %v3497
    %v3499 = vrot.slane %v3428, 4
    %v3500 = vsel %vm282, %v3499, %v3426
    %v3502 = vunpack.c.l.s4 1983009808
    %v3503 = vunpack.c.0.s8 %v3502
    %v3504 = vperm.slane %v3500, %v3503
    %v3505 = vrot.slane %v3493, 4
    %v3506 = vsel %vm282, %v3505, %v3487
    %v3507 = vrot.slane %v3487, 4
    %v3508 = vsel %vm282, %v3493, %v3507
    %v3510 = vunpack.c.l.s4 1934713408
    %v3511 = vunpack.c.0.s8 %v3510
    %v3512 = vperm.slane %v3506, %v3511
    %v3514 = vunpack.c.l.s4 1934713408
    %v3515 = vunpack.c.0.s8 %v3514
    %v3516 = vperm.slane %v3508, %v3515
    %v3517 = vrot.slane %v3504, 4
    %v3518 = vsel %vm282, %v3517, %v3498
    %v3519 = vrot.slane %v3498, 4
    %v3520 = vsel %vm282, %v3504, %v3519
    %v3522 = vunpack.c.l.s4 1934713408
    %v3523 = vunpack.c.0.s8 %v3522
    %v3524 = vperm.slane %v3518, %v3523
    %v3526 = vunpack.c.l.s4 1934713408
    %v3527 = vunpack.c.0.s8 %v3526
    %v3528 = vperm.slane %v3520, %v3527
    %v3529 = vrot.slane %v3524, 4
    %v3530 = vsel %vm282, %v3529, %v3512
    %v3531 = vrot.slane %v3512, 4
    %v3532 = vsel %vm282, %v3524, %v3531
    %v3533 = vrot.slane %v3528, 4
    %v3534 = vsel %vm282, %v3533, %v3516
    %v3535 = vrot.slane %v3516, 4
    %v3536 = vsel %vm282, %v3528, %v3535
    %v3538 = vsel %vm632, %v3050, 0
    %v3541 = vsel %vm632, %v3236, 0
    %v3544 = vsel %vm632, %v3290, 0
    %3546 = vmatpush.xpose.msra.mxu0 0.0
    %3547 = vmatpush.xpose.msra.mxu0 0.0
    %3548 = vmatpush.xpose.msra.mxu0 0.0
    %3549 = vmatpush.xpose.msra.mxu0 0.0
    %3550 = vmatpush.xpose.msra.mxu0 0.0
    %3551 = vmatpush.xpose.msra.mxu0 0.0
    %3552 = vmatpush.xpose.msra.mxu0 0.0
    %3553 = vmatpush.xpose.msra.mxu0 0.0
    %3554 = vmatpush.xpose.msra.mxu0 0.0
    %3555 = vmatpush.xpose.msra.mxu0 0.0
    %3556 = vmatpush.xpose.msra.mxu0 0.0
    %3557 = vmatpush.xpose.msra.mxu0 0.0
    %3558 = vmatpush.xpose.msra.mxu0 0.0
    %3559 = vmatpush.xpose.msra.mxu0 0.0
    %3560 = vmatpush.xpose.msra.mxu0 %v3544
    %3561 = vmatpush.xpose.msra.mxu0 %v3541
    %3562 = vmatmul.f32.gmra.mxu0 %v3538
    %v3563 = vpop.f32.mrf.mxu0
    %v3564 = vadd.f32 0.0, %v3563
    %3565 = vdwg.mxu0
    %v3567 = vsel %vm632, %v3052, 0
    %v3570 = vsel %vm632, %v3238, 0
    %v3573 = vsel %vm632, %v3292, 0
    %3575 = vmatpush.xpose.msra.mxu0 0.0
    %3576 = vmatpush.xpose.msra.mxu0 0.0
    %3577 = vmatpush.xpose.msra.mxu0 0.0
    %3578 = vmatpush.xpose.msra.mxu0 0.0
    %3579 = vmatpush.xpose.msra.mxu0 0.0
    %3580 = vmatpush.xpose.msra.mxu0 0.0
    %3581 = vmatpush.xpose.msra.mxu0 0.0
    %3582 = vmatpush.xpose.msra.mxu0 0.0
    %3583 = vmatpush.xpose.msra.mxu0 0.0
    %3584 = vmatpush.xpose.msra.mxu0 0.0
    %3585 = vmatpush.xpose.msra.mxu0 0.0
    %3586 = vmatpush.xpose.msra.mxu0 0.0
    %3587 = vmatpush.xpose.msra.mxu0 0.0
    %3588 = vmatpush.xpose.msra.mxu0 0.0
    %3589 = vmatpush.xpose.msra.mxu0 %v3573
    %3590 = vmatpush.xpose.msra.mxu0 %v3570
    %3591 = vmatmul.f32.gmra.mxu0 %v3567
    %v3592 = vpop.f32.mrf.mxu0
    %v3593 = vadd.f32 0.0, %v3592
    %3594 = vdwg.mxu0
    %v3596 = vsel %vm632, %v3054, 0
    %v3599 = vsel %vm632, %v3240, 0
    %v3602 = vsel %vm632, %v3294, 0
    %3604 = vmatpush.xpose.msra.mxu0 0.0
    %3605 = vmatpush.xpose.msra.mxu0 0.0
    %3606 = vmatpush.xpose.msra.mxu0 0.0
    %3607 = vmatpush.xpose.msra.mxu0 0.0
    %3608 = vmatpush.xpose.msra.mxu0 0.0
    %3609 = vmatpush.xpose.msra.mxu0 0.0
    %3610 = vmatpush.xpose.msra.mxu0 0.0
    %3611 = vmatpush.xpose.msra.mxu0 0.0
    %3612 = vmatpush.xpose.msra.mxu0 0.0
    %3613 = vmatpush.xpose.msra.mxu0 0.0
    %3614 = vmatpush.xpose.msra.mxu0 0.0
    %3615 = vmatpush.xpose.msra.mxu0 0.0
    %3616 = vmatpush.xpose.msra.mxu0 0.0
    %3617 = vmatpush.xpose.msra.mxu0 0.0
    %3618 = vmatpush.xpose.msra.mxu0 %v3602
    %3619 = vmatpush.xpose.msra.mxu0 %v3599
    %3620 = vmatmul.f32.gmra.mxu0 %v3596
    %v3621 = vpop.f32.mrf.mxu0
    %v3622 = vadd.f32 0.0, %v3621
    %3623 = vdwg.mxu0
    %v3625 = vsel %vm632, %v3056, 0
    %v3628 = vsel %vm632, %v3242, 0
    %v3631 = vsel %vm632, %v3296, 0
    %3633 = vmatpush.xpose.msra.mxu0 0.0
    %3634 = vmatpush.xpose.msra.mxu0 0.0
    %3635 = vmatpush.xpose.msra.mxu0 0.0
    %3636 = vmatpush.xpose.msra.mxu0 0.0
    %3637 = vmatpush.xpose.msra.mxu0 0.0
    %3638 = vmatpush.xpose.msra.mxu0 0.0
    %3639 = vmatpush.xpose.msra.mxu0 0.0
    %3640 = vmatpush.xpose.msra.mxu0 0.0
    %3641 = vmatpush.xpose.msra.mxu0 0.0
    %3642 = vmatpush.xpose.msra.mxu0 0.0
    %3643 = vmatpush.xpose.msra.mxu0 0.0
    %3644 = vmatpush.xpose.msra.mxu0 0.0
    %3645 = vmatpush.xpose.msra.mxu0 0.0
    %3646 = vmatpush.xpose.msra.mxu0 0.0
    %3647 = vmatpush.xpose.msra.mxu0 %v3631
    %3648 = vmatpush.xpose.msra.mxu0 %v3628
    %3649 = vmatmul.f32.gmra.mxu0 %v3625
    %v3650 = vpop.f32.mrf.mxu0
    %v3651 = vadd.f32 0.0, %v3650
    %3652 = vdwg.mxu0
    %v3653 = vmul.f32 %v3564, 0.35355338
    %v3654 = vmul.f32 %v3593, 0.35355338
    %v3655 = vmul.f32 %v3622, 0.35355338
    %v3656 = vmul.f32 %v3651, 0.35355338
    %v3658 = vperm.slane %v63, 0
    %v3660 = vadd.f32 %v3653, %v3658
    %v3661 = vadd.f32 %v3654, %v3658
    %v3662 = vadd.f32 %v3655, %v3658
    %v3663 = vadd.f32 %v3656, %v3658
    %v3664 = vsel %vm1004, %v3660, -inf
    %3665 = vmax.xlane.f32.xlu0 %v3664
    %v3666 = vpop.xlane.xlu0 %3665
    %v3667 = vsel %vm1004, %v3661, -inf
    %3668 = vmax.xlane.f32.xlu0 %v3667
    %v3669 = vpop.xlane.xlu0 %3668
    %v3670 = vsel %vm1004, %v3662, -inf
    %3671 = vmax.xlane.f32.xlu0 %v3670
    %v3672 = vpop.xlane.xlu0 %3671
    %v3673 = vsel %vm1004, %v3663, -inf
    %3674 = vmax.xlane.f32.xlu0 %v3673
    %v3675 = vpop.xlane.xlu0 %3674
    %v3676 = vsub.f32 %v3660, %v3666
    %v3677 = vsub.f32 %v3661, %v3669
    %v3678 = vsub.f32 %v3662, %v3672
    %v3679 = vsub.f32 %v3663, %v3675
    %v3680 = vmul.f32 %v3676, 1.442695
    %v3681 = vpow.pop %v3680
    %v3682 = vmul.f32 %v3677, 1.442695
    %v3683 = vpow.pop %v3682
    %v3684 = vmul.f32 %v3678, 1.442695
    %v3685 = vpow.pop %v3684
    %v3686 = vmul.f32 %v3679, 1.442695
    %v3687 = vpow.pop %v3686
    %v3688 = vsel %vm1004, %v3681, 0.0
    %3689 = vadd.xlane.f32.xlu0 %v3688
    %v3690 = vpop.xlane.xlu0 %3689
    %v3691 = vsel %vm1004, %v3683, 0.0
    %3692 = vadd.xlane.f32.xlu0 %v3691
    %v3693 = vpop.xlane.xlu0 %3692
    %v3694 = vsel %vm1004, %v3685, 0.0
    %3695 = vadd.xlane.f32.xlu0 %v3694
    %v3696 = vpop.xlane.xlu0 %3695
    %v3697 = vsel %vm1004, %v3687, 0.0
    %3698 = vadd.xlane.f32.xlu0 %v3697
    %v3699 = vpop.xlane.xlu0 %3698
    %v3700 = vrcp.pop %v3690
    %v3701 = vrcp.pop %v3693
    %v3702 = vrcp.pop %v3696
    %v3703 = vrcp.pop %v3699
    %v3704 = vmul.f32 %v3681, %v3700
    %v3705 = vmul.f32 %v3683, %v3701
    %v3706 = vmul.f32 %v3685, %v3702
    %v3707 = vmul.f32 %v3687, %v3703
    %v3709 = vsel %vm1004, %v3704, 0
    %3711 = vmatpush.msra.mxu0 0.0
    %3712 = vmatpush.msra.mxu0 0.0
    %3713 = vmatpush.msra.mxu0 0.0
    %3714 = vmatpush.msra.mxu0 0.0
    %3715 = vmatpush.msra.mxu0 0.0
    %3716 = vmatpush.msra.mxu0 0.0
    %3717 = vmatpush.msra.mxu0 0.0
    %3718 = vmatpush.msra.mxu0 0.0
    %3719 = vmatpush.msra.mxu0 0.0
    %3720 = vmatpush.msra.mxu0 0.0
    %3721 = vmatpush.msra.mxu0 0.0
    %3722 = vmatpush.msra.mxu0 0.0
    %3723 = vmatpush.msra.mxu0 0.0
    %3724 = vmatpush.msra.mxu0 0.0
    %3725 = vmatpush.msra.mxu0 %v3530
    %3726 = vmatpush.msra.mxu0 %v3476
    %3727 = vmatmul.f32.gmra.mxu0 %v3709
    %v3728 = vpop.f32.mrf.mxu0
    %v3729 = vadd.f32 0.0, %v3728
    %3730 = vdwg.mxu0
    %v3732 = vsel %vm1004, %v3705, 0
    %3734 = vmatpush.msra.mxu0 0.0
    %3735 = vmatpush.msra.mxu0 0.0
    %3736 = vmatpush.msra.mxu0 0.0
    %3737 = vmatpush.msra.mxu0 0.0
    %3738 = vmatpush.msra.mxu0 0.0
    %3739 = vmatpush.msra.mxu0 0.0
    %3740 = vmatpush.msra.mxu0 0.0
    %3741 = vmatpush.msra.mxu0 0.0
    %3742 = vmatpush.msra.mxu0 0.0
    %3743 = vmatpush.msra.mxu0 0.0
    %3744 = vmatpush.msra.mxu0 0.0
    %3745 = vmatpush.msra.mxu0 0.0
    %3746 = vmatpush.msra.mxu0 0.0
    %3747 = vmatpush.msra.mxu0 0.0
    %3748 = vmatpush.msra.mxu0 %v3532
    %3749 = vmatpush.msra.mxu0 %v3478
    %3750 = vmatmul.f32.gmra.mxu0 %v3732
    %v3751 = vpop.f32.mrf.mxu0
    %v3752 = vadd.f32 0.0, %v3751
    %3753 = vdwg.mxu0
    %v3755 = vsel %vm1004, %v3706, 0
    %3757 = vmatpush.msra.mxu0 0.0
    %3758 = vmatpush.msra.mxu0 0.0
    %3759 = vmatpush.msra.mxu0 0.0
    %3760 = vmatpush.msra.mxu0 0.0
    %3761 = vmatpush.msra.mxu0 0.0
    %3762 = vmatpush.msra.mxu0 0.0
    %3763 = vmatpush.msra.mxu0 0.0
    %3764 = vmatpush.msra.mxu0 0.0
    %3765 = vmatpush.msra.mxu0 0.0
    %3766 = vmatpush.msra.mxu0 0.0
    %3767 = vmatpush.msra.mxu0 0.0
    %3768 = vmatpush.msra.mxu0 0.0
    %3769 = vmatpush.msra.mxu0 0.0
    %3770 = vmatpush.msra.mxu0 0.0
    %3771 = vmatpush.msra.mxu0 %v3534
    %3772 = vmatpush.msra.mxu0 %v3480
    %3773 = vmatmul.f32.gmra.mxu0 %v3755
    %v3774 = vpop.f32.mrf.mxu0
    %v3775 = vadd.f32 0.0, %v3774
    %3776 = vdwg.mxu0
    %v3778 = vsel %vm1004, %v3707, 0
    %3780 = vmatpush.msra.mxu0 0.0
    %3781 = vmatpush.msra.mxu0 0.0
    %3782 = vmatpush.msra.mxu0 0.0
    %3783 = vmatpush.msra.mxu0 0.0
    %3784 = vmatpush.msra.mxu0 0.0
    %3785 = vmatpush.msra.mxu0 0.0
    %3786 = vmatpush.msra.mxu0 0.0
    %3787 = vmatpush.msra.mxu0 0.0
    %3788 = vmatpush.msra.mxu0 0.0
    %3789 = vmatpush.msra.mxu0 0.0
    %3790 = vmatpush.msra.mxu0 0.0
    %3791 = vmatpush.msra.mxu0 0.0
    %3792 = vmatpush.msra.mxu0 0.0
    %3793 = vmatpush.msra.mxu0 0.0
    %3794 = vmatpush.msra.mxu0 %v3536
    %3795 = vmatpush.msra.mxu0 %v3482
    %3796 = vmatmul.f32.gmra.mxu0 %v3778
    %v3797 = vpop.f32.mrf.mxu0
    %v3798 = vadd.f32 0.0, %v3797
    %3799 = vdwg.mxu0
    %v3800 = vrot.slane %v3775, 4
    %v3801 = vsel %vm282, %v3800, %v3729
    %v3802 = vrot.slane %v3729, 4
    %v3803 = vsel %vm282, %v3775, %v3802
    %v3805 = vunpack.c.l.s4 1983009808
    %v3806 = vunpack.c.0.s8 %v3805
    %v3807 = vperm.slane %v3801, %v3806
    %v3809 = vunpack.c.l.s4 1983009808
    %v3810 = vunpack.c.0.s8 %v3809
    %v3811 = vperm.slane %v3803, %v3810
    %v3812 = vrot.slane %v3798, 4
    %v3813 = vsel %vm282, %v3812, %v3752
    %v3814 = vrot.slane %v3752, 4
    %v3815 = vsel %vm282, %v3798, %v3814
    %v3817 = vunpack.c.l.s4 1983009808
    %v3818 = vunpack.c.0.s8 %v3817
    %v3819 = vperm.slane %v3813, %v3818
    %v3821 = vunpack.c.l.s4 1983009808
    %v3822 = vunpack.c.0.s8 %v3821
    %v3823 = vperm.slane %v3815, %v3822
    %v3824 = vrot.slane %v3819, 4
    %v3825 = vsel %vm282, %v3824, %v3807
    %v3826 = vrot.slane %v3807, 4
    %v3827 = vsel %vm282, %v3819, %v3826
    %v3829 = vunpack.c.l.s4 1934713408
    %v3830 = vunpack.c.0.s8 %v3829
    %v3831 = vperm.slane %v3825, %v3830
    %v3833 = vunpack.c.l.s4 1934713408
    %v3834 = vunpack.c.0.s8 %v3833
    %v3835 = vperm.slane %v3827, %v3834
    %v3836 = vrot.slane %v3823, 4
    %v3837 = vsel %vm282, %v3836, %v3811
    %v3838 = vrot.slane %v3811, 4
    %v3839 = vsel %vm282, %v3823, %v3838
    %v3841 = vunpack.c.l.s4 1934713408
    %v3842 = vunpack.c.0.s8 %v3841
    %v3843 = vperm.slane %v3837, %v3842
    %v3845 = vunpack.c.l.s4 1934713408
    %v3846 = vunpack.c.0.s8 %v3845
    %v3847 = vperm.slane %v3839, %v3846
    %v3848 = vrot.slane %v3831, 4
    %v3849 = vsel %vm282, 0.0, %v3848
    %v3850 = vrot.slane %v3835, 4
    %v3851 = vsel %vm282, 0.0, %v3850
    %v3852 = vrot.slane %v3843, 4
    %v3853 = vsel %vm282, 0.0, %v3852
    %v3854 = vrot.slane %v3847, 4
    %v3855 = vsel %vm282, 0.0, %v3854
    %v3856 = vsel %vm282, %v3850, %v3831
    %v3858 = vunpack.c.l.s4 1983009808
    %v3859 = vunpack.c.0.s8 %v3858
    %v3860 = vperm.slane %v3856, %v3859
    %v3861 = vrot.slane %v3851, 4
    %v3862 = vsel %vm282, %v3861, %v3849
    %v3864 = vunpack.c.l.s4 1983009808
    %v3865 = vunpack.c.0.s8 %v3864
    %v3866 = vperm.slane %v3862, %v3865
    %v3867 = vsel %vm282, %v3854, %v3843
    %v3869 = vunpack.c.l.s4 1983009808
    %v3870 = vunpack.c.0.s8 %v3869
    %v3871 = vperm.slane %v3867, %v3870
    %v3872 = vrot.slane %v3855, 4
    %v3873 = vsel %vm282, %v3872, %v3853
    %v3875 = vunpack.c.l.s4 1983009808
    %v3876 = vunpack.c.0.s8 %v3875
    %v3877 = vperm.slane %v3873, %v3876
    %v3878 = vrot.slane %v3866, 4
    %v3879 = vsel %vm282, %v3878, %v3860
    %v3880 = vrot.slane %v3860, 4
    %v3881 = vsel %vm282, %v3866, %v3880
    %v3883 = vunpack.c.l.s4 1934713408
    %v3884 = vunpack.c.0.s8 %v3883
    %v3885 = vperm.slane %v3879, %v3884
    %v3887 = vunpack.c.l.s4 1934713408
    %v3888 = vunpack.c.0.s8 %v3887
    %v3889 = vperm.slane %v3881, %v3888
    %v3890 = vrot.slane %v3877, 4
    %v3891 = vsel %vm282, %v3890, %v3871
    %v3892 = vrot.slane %v3871, 4
    %v3893 = vsel %vm282, %v3877, %v3892
    %v3895 = vunpack.c.l.s4 1934713408
    %v3896 = vunpack.c.0.s8 %v3895
    %v3897 = vperm.slane %v3891, %v3896
    %v3899 = vunpack.c.l.s4 1934713408
    %v3900 = vunpack.c.0.s8 %v3899
    %v3901 = vperm.slane %v3893, %v3900
    %v3902 = vrot.slane %v3897, 4
    %v3903 = vsel %vm282, %v3902, %v3885
    %v3904 = vrot.slane %v3885, 4
    %v3905 = vsel %vm282, %v3897, %v3904
    %v3906 = vrot.slane %v3901, 4
    %v3907 = vsel %vm282, %v3906, %v3889
    %v3908 = vrot.slane %v3889, 4
    %v3909 = vsel %vm282, %v3901, %v3908
    %3911 = vrot.lane.b32.xlu0 %v3905, 8
    %v3912 = vpop.permute.xlu0 %3911
    %3915 = vrot.lane.b32.xlu0 %v3907, 16
    %v3916 = vpop.permute.xlu0 %3915
    %3919 = vrot.lane.b32.xlu0 %v3909, 24
    %v3920 = vpop.permute.xlu0 %3919
    %v3922 = vsel %vm632, %v3903, %v3912
    %v3923 = vsel %vm1004, %v3922, %v3916
    %v3924 = vsel %vm1006, %v3923, %v3920
    %v3925 = vperm.slane %v97, 5
    %v3927 = vsel %vm111, %v2936, 0
    %v3930 = vsel %vm111, %v3924, 0
    %3932 = vmatpush.msra.mxu0 0.0
    %3933 = vmatpush.msra.mxu0 0.0
    %3934 = vmatpush.msra.mxu0 0.0
    %3935 = vmatpush.msra.mxu0 0.0
    %3936 = vmatpush.msra.mxu0 0.0
    %3937 = vmatpush.msra.mxu0 0.0
    %3938 = vmatpush.msra.mxu0 0.0
    %3939 = vmatpush.msra.mxu0 0.0
    %3940 = vmatpush.msra.mxu0 0.0
    %3941 = vmatpush.msra.mxu0 0.0
    %3942 = vmatpush.msra.mxu0 0.0
    %3943 = vmatpush.msra.mxu0 0.0
    %3944 = vmatpush.msra.mxu0 %v95
    %3945 = vmatpush.msra.mxu0 %v94
    %3946 = vmatpush.msra.mxu0 %v93
    %3947 = vmatpush.msra.mxu0 %v92
    %3948 = vmatmul.f32.gmra.mxu0 %v3927
    %v3949 = vpop.f32.mrf.mxu0
    %v3950 = vadd.f32 %v3925, %v3949
    %3951 = vmatmul.f32.gmra.mxu0 %v3930
    %v3952 = vpop.f32.mrf.mxu0
    %v3953 = vadd.f32 %v3925, %v3952
    %3954 = vdwg.mxu0
    %v3955 = vadd.f32 %v1771, %v3950
    %v3956 = vadd.f32 %v1772, %v3953
    %v3957 = vsel %vm111, %v3955, 0.0
    %3958 = vadd.xlane.f32.xlu0 %v3957
    %v3959 = vpop.xlane.xlu0 %3958
    %v3960 = vsel %vm111, %v3956, 0.0
    %3961 = vadd.xlane.f32.xlu0 %v3960
    %v3962 = vpop.xlane.xlu0 %3961
    %v3963 = vmul.f32 %v3959, %v124
    %v3964 = vmul.f32 %v3962, %v124
    %v3965 = vsub.f32 %v3955, %v3963
    %v3966 = vsub.f32 %v3956, %v3964
    %v3967 = vmul.f32 %v3965, %v3965
    %v3968 = vmul.f32 %v3966, %v3966
    %v3969 = vsel %vm111, %v3967, 0.0
    %3970 = vadd.xlane.f32.xlu0 %v3969
    %v3971 = vpop.xlane.xlu0 %3970
    %v3972 = vsel %vm111, %v3968, 0.0
    %3973 = vadd.xlane.f32.xlu0 %v3972
    %v3974 = vpop.xlane.xlu0 %3973
    %v3975 = vmul.f32 %v3971, 0.032258064
    %v3976 = vmul.f32 %v3974, 0.032258064
    %v3977 = vrsqrt.pop %v3975
    %v3978 = vmul.f32 %v3977, %v3975
    %v3979 = vmul.f32 %v3978, %v3977
    %v3980 = vmul.f32 0.5, %v3979
    %v3981 = vsub.f32 1.5, %v3980
    %v3982 = vmul.f32 %v3977, %v3981
    %v3983 = vmul.f32 %v3975, %v3982
    %vm3984 = vcmp.eq.f32.partialorder %v3975, inf
    %v3985 = vsel %vm3984, %v3975, %v3983
    %vm3986 = vcmp.eq.f32.partialorder %v3975, 0.0
    %v3987 = vand.u32 %v3975, 2147483648
    %v3988 = vsel %vm3986, %v3987, %v3985
    %v3989 = vrsqrt.pop %v3976
    %v3990 = vmul.f32 %v3989, %v3976
    %v3991 = vmul.f32 %v3990, %v3989
    %v3992 = vmul.f32 0.5, %v3991
    %v3993 = vsub.f32 1.5, %v3992
    %v3994 = vmul.f32 %v3989, %v3993
    %v3995 = vmul.f32 %v3976, %v3994
    %vm3996 = vcmp.eq.f32.partialorder %v3976, inf
    %v3997 = vsel %vm3996, %v3976, %v3995
    %vm3998 = vcmp.eq.f32.partialorder %v3976, 0.0
    %v3999 = vand.u32 %v3976, 2147483648
    %v4000 = vsel %vm3998, %v3999, %v3997
    %v4001 = vadd.f32 %v3988, 1e-06
    %v4002 = vadd.f32 %v4000, 1e-06
    %v4003 = vrsqrt.pop %v4001
    %v4004 = vmul.f32 %v4003, %v4001
    %v4005 = vmul.f32 %v4004, %v4003
    %v4006 = vmul.f32 0.5, %v4005
    %v4007 = vsub.f32 1.5, %v4006
    %v4008 = vmul.f32 %v4003, %v4007
    %vm4009 = vweird.f32 %v4001
    %vm4010 = vweird.f32 %v4003
    %vm4011 = vmor %vm4009, %vm4010
    %v4012 = vsel %vm4011, %v4003, %v4008
    %v4013 = vrsqrt.pop %v4002
    %v4014 = vmul.f32 %v4013, %v4002
    %v4015 = vmul.f32 %v4014, %v4013
    %v4016 = vmul.f32 0.5, %v4015
    %v4017 = vsub.f32 1.5, %v4016
    %v4018 = vmul.f32 %v4013, %v4017
    %vm4019 = vweird.f32 %v4002
    %vm4020 = vweird.f32 %v4013
    %vm4021 = vmor %vm4019, %vm4020
    %v4022 = vsel %vm4021, %v4013, %v4018
    %v4023 = vmul.f32 %v3965, %v4012
    %v4024 = vmul.f32 %v3966, %v4022
    %v4025 = vperm.slane %v96, 4
    %v4026 = vmul.f32 %v4025, %v4023
    %v4027 = vmul.f32 %v4025, %v4024
    %v4028 = vperm.slane %v96, 5
    %v4029 = vadd.f32 %v4026, %v4028
    %v4030 = vadd.f32 %v4027, %v4028
    %v4032 = vperm.slane %v102, 0
    %v4035 = vsel %vm111, %v4029, 0
    %v4038 = vsel %vm111, %v4030, 0
    %4040 = vmatpush.msra.mxu0 0.0
    %4041 = vmatpush.msra.mxu0 0.0
    %4042 = vmatpush.msra.mxu0 0.0
    %4043 = vmatpush.msra.mxu0 0.0
    %4044 = vmatpush.msra.mxu0 0.0
    %4045 = vmatpush.msra.mxu0 0.0
    %4046 = vmatpush.msra.mxu0 0.0
    %4047 = vmatpush.msra.mxu0 0.0
    %4048 = vmatpush.msra.mxu0 0.0
    %4049 = vmatpush.msra.mxu0 0.0
    %4050 = vmatpush.msra.mxu0 0.0
    %4051 = vmatpush.msra.mxu0 0.0
    %4052 = vmatpush.msra.mxu0 %v101
    %4053 = vmatpush.msra.mxu0 %v100
    %4054 = vmatpush.msra.mxu0 %v99
    %4055 = vmatpush.msra.mxu0 %v98
    %4056 = vmatmul.f32.gmra.mxu0 %v4035
    %v4057 = vpop.f32.mrf.mxu0
    %v4058 = vadd.f32 %v4032, %v4057
    %4059 = vmatmul.f32.gmra.mxu0 %v4038
    %v4060 = vpop.f32.mrf.mxu0
    %v4061 = vadd.f32 %v4032, %v4060
    %4062 = vdwg.mxu0
    %v4063 = vmax.f32 %v4058, 0.0
    %v4064 = vmax.f32 %v4061, 0.0
    %vm4065 = vcmask 523264
    %v4067 = vsel %vm4065, %v4063, 0
    %v4070 = vsel %vm4065, %v4064, 0
    %4072 = vmatpush.msra.mxu0 0.0
    %4073 = vmatpush.msra.mxu0 0.0
    %4074 = vmatpush.msra.mxu0 0.0
    %4075 = vmatpush.msra.mxu0 0.0
    %4076 = vmatpush.msra.mxu0 0.0
    %4077 = vmatpush.msra.mxu0 0.0
    %4078 = vmatpush.msra.mxu0 0.0
    %4079 = vmatpush.msra.mxu0 0.0
    %4080 = vmatpush.msra.mxu0 %v110
    %4081 = vmatpush.msra.mxu0 %v109
    %4082 = vmatpush.msra.mxu0 %v108
    %4083 = vmatpush.msra.mxu0 %v107
    %4084 = vmatpush.msra.mxu0 %v106
    %4085 = vmatpush.msra.mxu0 %v105
    %4086 = vmatpush.msra.mxu0 %v104
    %4087 = vmatpush.msra.mxu0 %v103
    %4088 = vmatmul.f32.gmra.mxu0 %v4067
    %v4089 = vpop.f32.mrf.mxu0
    %v4090 = vadd.f32 0.0, %v4089
    %4091 = vmatmul.f32.gmra.mxu0 %v4070
    %v4092 = vpop.f32.mrf.mxu0
    %v4093 = vadd.f32 0.0, %v4092
    %4094 = vdwg.mxu0
    %v4095 = vadd.f32 %v3955, %v4090
    %v4096 = vadd.f32 %v3956, %v4093
    %v4097 = vperm.slane %v97, 6
    %v4098 = vadd.f32 %v4095, %v4097
    %v4099 = vadd.f32 %v4096, %v4097
    %s4100 = scalar_lea.vmem [#allocation2], 256
    %v4101 = vld [vmem:[%s4100] sm:$0xff]
    %v4102 = vld [vmem:[%s4100 + $0x8] sm:$0xff]
    %v4103 = vld [vmem:[%s4100 + $0x10] sm:$0xff]
    %v4104 = vld [vmem:[%s4100 + $0x18] sm:$0xff]
    %v4105 = vld [vmem:[%s4100 + $0x20] sm:$0xff]
    %v4106 = vld [vmem:[%s4100 + $0x28] sm:$0xff]
    %v4107 = vld [vmem:[%s4100 + $0x30] sm:$0xff]
    %v4108 = vld [vmem:[%s4100 + $0x38] sm:$0xff]
    %v4109 = vld [vmem:[%s4100 + $0x40] sm:$0xff]
    %v4110 = vld [vmem:[%s4100 + $0x48] sm:$0xff]
    %v4111 = vld [vmem:[%s4100 + $0x50] sm:$0xff]
    %v4112 = vld [vmem:[%s4100 + $0x58] sm:$0xff]
    %v4113 = vld [vmem:[%s4100 + $0x60] sm:$0xff]
    %v4114 = vld [vmem:[%s4100 + $0x68] sm:$0xff]
    %v4115 = vld [vmem:[%s4100 + $0x70] sm:$0xff]
    %v4116 = vld [vmem:[%s4100 + $0x78] sm:$0xff]
    %v4117 = vld [vmem:[%s4100 + $0x80] sm:$0xff]
    %v4118 = vld [vmem:[%s4100 + $0x88] sm:$0xff]
    %v4119 = vld [vmem:[%s4100 + $0x90] sm:$0xff]
    %v4120 = vld [vmem:[%s4100 + $0x98] sm:$0xff]
    %v4121 = vld [vmem:[%s4100 + $0xa0] sm:$0xff]
    %v4122 = vld [vmem:[%s4100 + $0xa8] sm:$0xff]
    %v4123 = vld [vmem:[%s4100 + $0xb0] sm:$0xff]
    %v4124 = vld [vmem:[%s4100 + $0xb8] sm:$0xff]
    %v4125 = vld [vmem:[%s4100 + $0xc0] sm:$0xff]
    %v4126 = vld [vmem:[%s4100 + $0xc8] sm:$0xff]
    %v4127 = vld [vmem:[%s4100 + $0xd0] sm:$0xff]
    %v4128 = vld [vmem:[%s4100 + $0xd8] sm:$0xff]
    %v4129 = vld [vmem:[%s4100 + $0xe0] sm:$0xff]
    %v4130 = vld [vmem:[%s4100 + $0xe8] sm:$0xff]
    %v4131 = vld [vmem:[%s4100 + $0xf0] sm:$0xff]
    %v4132 = vld [vmem:[%s4100 + $0xf8] sm:$0xff]
    %s4133 = scalar_lea.vmem %s8, 16
    %v4134 = vld [vmem:[%s4133] sm:$0xff]
    %v4135 = vld [vmem:[%s4133 + $0x8] sm:$0x7f]
    %s4136 = scalar_lea.vmem %s5, 32
    %v4137 = vld [vmem:[%s4136] sm:$0xff]
    %v4138 = vld [vmem:[%s4136 + $0x8] sm:$0xff]
    %v4139 = vld [vmem:[%s4136 + $0x10] sm:$0xff]
    %v4140 = vld [vmem:[%s4136 + $0x18] sm:$0xff]
    %s4141 = scalar_lea.vmem %s6, 1
    %v4142 = vld [vmem:[%s4141] sm:$0x1]
    %s4143 = scalar_lea.vmem %s7, 64
    %v4144 = vld [vmem:[%s4143] sm:$0xff]
    %v4145 = vld [vmem:[%s4143 + $0x8] sm:$0xff]
    %v4146 = vld [vmem:[%s4143 + $0x10] sm:$0xff]
    %v4147 = vld [vmem:[%s4143 + $0x18] sm:$0xff]
    %v4148 = vld [vmem:[%s4143 + $0x20] sm:$0xff]
    %v4149 = vld [vmem:[%s4143 + $0x28] sm:$0xff]
    %v4150 = vld [vmem:[%s4143 + $0x30] sm:$0xff]
    %v4151 = vld [vmem:[%s4143 + $0x38] sm:$0xff]
    %v4152 = vsel %vm111, %v4098, 0.0
    %4153 = vadd.xlane.f32.xlu0 %v4152
    %v4154 = vpop.xlane.xlu0 %4153
    %v4155 = vsel %vm111, %v4099, 0.0
    %4156 = vadd.xlane.f32.xlu0 %v4155
    %v4157 = vpop.xlane.xlu0 %4156
    %v4158 = vmul.f32 %v4154, %v124
    %v4159 = vmul.f32 %v4157, %v124
    %v4160 = vsub.f32 %v4098, %v4158
    %v4161 = vsub.f32 %v4099, %v4159
    %v4162 = vmul.f32 %v4160, %v4160
    %v4163 = vmul.f32 %v4161, %v4161
    %v4164 = vsel %vm111, %v4162, 0.0
    %4165 = vadd.xlane.f32.xlu0 %v4164
    %v4166 = vpop.xlane.xlu0 %4165
    %v4167 = vsel %vm111, %v4163, 0.0
    %4168 = vadd.xlane.f32.xlu0 %v4167
    %v4169 = vpop.xlane.xlu0 %4168
    %v4170 = vmul.f32 %v4166, 0.032258064
    %v4171 = vmul.f32 %v4169, 0.032258064
    %v4172 = vrsqrt.pop %v4170
    %v4173 = vmul.f32 %v4172, %v4170
    %v4174 = vmul.f32 %v4173, %v4172
    %v4175 = vmul.f32 0.5, %v4174
    %v4176 = vsub.f32 1.5, %v4175
    %v4177 = vmul.f32 %v4172, %v4176
    %v4178 = vmul.f32 %v4170, %v4177
    %vm4179 = vcmp.eq.f32.partialorder %v4170, inf
    %v4180 = vsel %vm4179, %v4170, %v4178
    %vm4181 = vcmp.eq.f32.partialorder %v4170, 0.0
    %v4182 = vand.u32 %v4170, 2147483648
    %v4183 = vsel %vm4181, %v4182, %v4180
    %v4184 = vrsqrt.pop %v4171
    %v4185 = vmul.f32 %v4184, %v4171
    %v4186 = vmul.f32 %v4185, %v4184
    %v4187 = vmul.f32 0.5, %v4186
    %v4188 = vsub.f32 1.5, %v4187
    %v4189 = vmul.f32 %v4184, %v4188
    %v4190 = vmul.f32 %v4171, %v4189
    %vm4191 = vcmp.eq.f32.partialorder %v4171, inf
    %v4192 = vsel %vm4191, %v4171, %v4190
    %vm4193 = vcmp.eq.f32.partialorder %v4171, 0.0
    %v4194 = vand.u32 %v4171, 2147483648
    %v4195 = vsel %vm4193, %v4194, %v4192
    %v4196 = vadd.f32 %v4183, 1e-06
    %v4197 = vadd.f32 %v4195, 1e-06
    %v4198 = vrsqrt.pop %v4196
    %v4199 = vmul.f32 %v4198, %v4196
    %v4200 = vmul.f32 %v4199, %v4198
    %v4201 = vmul.f32 0.5, %v4200
    %v4202 = vsub.f32 1.5, %v4201
    %v4203 = vmul.f32 %v4198, %v4202
    %vm4204 = vweird.f32 %v4196
    %vm4205 = vweird.f32 %v4198
    %vm4206 = vmor %vm4204, %vm4205
    %v4207 = vsel %vm4206, %v4198, %v4203
    %v4208 = vrsqrt.pop %v4197
    %v4209 = vmul.f32 %v4208, %v4197
    %v4210 = vmul.f32 %v4209, %v4208
    %v4211 = vmul.f32 0.5, %v4210
    %v4212 = vsub.f32 1.5, %v4211
    %v4213 = vmul.f32 %v4208, %v4212
    %vm4214 = vweird.f32 %v4197
    %vm4215 = vweird.f32 %v4208
    %vm4216 = vmor %vm4214, %vm4215
    %v4217 = vsel %vm4216, %v4208, %v4213
    %v4218 = vmul.f32 %v4160, %v4207
    %v4219 = vmul.f32 %v4161, %v4217
    %v4220 = vperm.slane %v4134, 0
    %v4221 = vmul.f32 %v4220, %v4218
    %v4222 = vmul.f32 %v4220, %v4219
    %v4223 = vperm.slane %v4134, 1
    %v4224 = vadd.f32 %v4221, %v4223
    %v4225 = vadd.f32 %v4222, %v4223
    %v4226 = vperm.slane %v4134, 6
    %v4228 = vsel %vm111, %v4224, 0
    %v4231 = vsel %vm111, %v4225, 0
    %4233 = vmatpush.msra.mxu0 0.0
    %4234 = vmatpush.msra.mxu0 0.0
    %4235 = vmatpush.msra.mxu0 0.0
    %4236 = vmatpush.msra.mxu0 0.0
    %4237 = vmatpush.msra.mxu0 0.0
    %4238 = vmatpush.msra.mxu0 0.0
    %4239 = vmatpush.msra.mxu0 0.0
    %4240 = vmatpush.msra.mxu0 0.0
    %4241 = vmatpush.msra.mxu0 0.0
    %4242 = vmatpush.msra.mxu0 0.0
    %4243 = vmatpush.msra.mxu0 0.0
    %4244 = vmatpush.msra.mxu0 0.0
    %4245 = vmatpush.msra.mxu0 %v4104
    %4246 = vmatpush.msra.mxu0 %v4103
    %4247 = vmatpush.msra.mxu0 %v4102
    %4248 = vmatpush.msra.mxu0 %v4101
    %4249 = vmatmul.f32.gmra.mxu0 %v4228
    %v4250 = vpop.f32.mrf.mxu0
    %v4251 = vadd.f32 %v4226, %v4250
    %4252 = vmatmul.f32.gmra.mxu0 %v4231
    %v4253 = vpop.f32.mrf.mxu0
    %v4254 = vadd.f32 %v4226, %v4253
    %4255 = vdwg.mxu0
    %v4256 = vperm.slane %v4134, 7
    %4257 = vmatpush.msra.mxu0 0.0
    %4258 = vmatpush.msra.mxu0 0.0
    %4259 = vmatpush.msra.mxu0 0.0
    %4260 = vmatpush.msra.mxu0 0.0
    %4261 = vmatpush.msra.mxu0 0.0
    %4262 = vmatpush.msra.mxu0 0.0
    %4263 = vmatpush.msra.mxu0 0.0
    %4264 = vmatpush.msra.mxu0 0.0
    %4265 = vmatpush.msra.mxu0 0.0
    %4266 = vmatpush.msra.mxu0 0.0
    %4267 = vmatpush.msra.mxu0 0.0
    %4268 = vmatpush.msra.mxu0 0.0
    %4269 = vmatpush.msra.mxu0 %v4108
    %4270 = vmatpush.msra.mxu0 %v4107
    %4271 = vmatpush.msra.mxu0 %v4106
    %4272 = vmatpush.msra.mxu0 %v4105
    %4273 = vmatmul.f32.gmra.mxu0 %v4228
    %v4274 = vpop.f32.mrf.mxu0
    %v4275 = vadd.f32 %v4256, %v4274
    %4276 = vmatmul.f32.gmra.mxu0 %v4231
    %v4277 = vpop.f32.mrf.mxu0
    %v4278 = vadd.f32 %v4256, %v4277
    %4279 = vdwg.mxu0
    %v4280 = vperm.slane %v4135, 0
    %4281 = vmatpush.msra.mxu0 0.0
    %4282 = vmatpush.msra.mxu0 0.0
    %4283 = vmatpush.msra.mxu0 0.0
    %4284 = vmatpush.msra.mxu0 0.0
    %4285 = vmatpush.msra.mxu0 0.0
    %4286 = vmatpush.msra.mxu0 0.0
    %4287 = vmatpush.msra.mxu0 0.0
    %4288 = vmatpush.msra.mxu0 0.0
    %4289 = vmatpush.msra.mxu0 0.0
    %4290 = vmatpush.msra.mxu0 0.0
    %4291 = vmatpush.msra.mxu0 0.0
    %4292 = vmatpush.msra.mxu0 0.0
    %4293 = vmatpush.msra.mxu0 %v4112
    %4294 = vmatpush.msra.mxu0 %v4111
    %4295 = vmatpush.msra.mxu0 %v4110
    %4296 = vmatpush.msra.mxu0 %v4109
    %4297 = vmatmul.f32.gmra.mxu0 %v4228
    %v4298 = vpop.f32.mrf.mxu0
    %v4299 = vadd.f32 %v4280, %v4298
    %4300 = vmatmul.f32.gmra.mxu0 %v4231
    %v4301 = vpop.f32.mrf.mxu0
    %v4302 = vadd.f32 %v4280, %v4301
    %4303 = vdwg.mxu0
    %4305 = vrot.lane.b32.xlu0 %v4251, 120
    %v4306 = vpop.permute.xlu0 %4305
    %4308 = vrot.lane.b32.xlu0 %v4251, 112
    %v4309 = vpop.permute.xlu0 %4308
    %4311 = vrot.lane.b32.xlu0 %v4251, 104
    %v4312 = vpop.permute.xlu0 %4311
    %v4314 = vrot.slane %v4309, 4
    %v4315 = vsel %vm282, %v4314, %v4251
    %v4316 = vrot.slane %v4251, 4
    %v4317 = vsel %vm282, %v4309, %v4316
    %v4319 = vunpack.c.l.s4 1983009808
    %v4320 = vunpack.c.0.s8 %v4319
    %v4321 = vperm.slane %v4315, %v4320
    %v4323 = vunpack.c.l.s4 1983009808
    %v4324 = vunpack.c.0.s8 %v4323
    %v4325 = vperm.slane %v4317, %v4324
    %v4326 = vrot.slane %v4312, 4
    %v4327 = vsel %vm282, %v4326, %v4306
    %v4328 = vrot.slane %v4306, 4
    %v4329 = vsel %vm282, %v4312, %v4328
    %v4331 = vunpack.c.l.s4 1983009808
    %v4332 = vunpack.c.0.s8 %v4331
    %v4333 = vperm.slane %v4327, %v4332
    %v4335 = vunpack.c.l.s4 1983009808
    %v4336 = vunpack.c.0.s8 %v4335
    %v4337 = vperm.slane %v4329, %v4336
    %v4338 = vrot.slane %v4333, 4
    %v4339 = vsel %vm282, %v4338, %v4321
    %v4340 = vrot.slane %v4321, 4
    %v4341 = vsel %vm282, %v4333, %v4340
    %v4343 = vunpack.c.l.s4 1934713408
    %v4344 = vunpack.c.0.s8 %v4343
    %v4345 = vperm.slane %v4339, %v4344
    %v4347 = vunpack.c.l.s4 1934713408
    %v4348 = vunpack.c.0.s8 %v4347
    %v4349 = vperm.slane %v4341, %v4348
    %v4350 = vrot.slane %v4337, 4
    %v4351 = vsel %vm282, %v4350, %v4325
    %v4352 = vrot.slane %v4325, 4
    %v4353 = vsel %vm282, %v4337, %v4352
    %v4355 = vunpack.c.l.s4 1934713408
    %v4356 = vunpack.c.0.s8 %v4355
    %v4357 = vperm.slane %v4351, %v4356
    %v4359 = vunpack.c.l.s4 1934713408
    %v4360 = vunpack.c.0.s8 %v4359
    %v4361 = vperm.slane %v4353, %v4360
    %v4362 = vrot.slane %v4345, 4
    %v4363 = vsel %vm282, 0.0, %v4362
    %v4364 = vrot.slane %v4349, 4
    %v4365 = vsel %vm282, 0.0, %v4364
    %v4366 = vrot.slane %v4357, 4
    %v4367 = vsel %vm282, 0.0, %v4366
    %v4368 = vrot.slane %v4361, 4
    %v4369 = vsel %vm282, 0.0, %v4368
    %v4370 = vsel %vm282, %v4364, %v4345
    %v4372 = vunpack.c.l.s4 1983009808
    %v4373 = vunpack.c.0.s8 %v4372
    %v4374 = vperm.slane %v4370, %v4373
    %v4375 = vrot.slane %v4365, 4
    %v4376 = vsel %vm282, %v4375, %v4363
    %v4378 = vunpack.c.l.s4 1983009808
    %v4379 = vunpack.c.0.s8 %v4378
    %v4380 = vperm.slane %v4376, %v4379
    %v4381 = vsel %vm282, %v4368, %v4357
    %v4383 = vunpack.c.l.s4 1983009808
    %v4384 = vunpack.c.0.s8 %v4383
    %v4385 = vperm.slane %v4381, %v4384
    %v4386 = vrot.slane %v4369, 4
    %v4387 = vsel %vm282, %v4386, %v4367
    %v4389 = vunpack.c.l.s4 1983009808
    %v4390 = vunpack.c.0.s8 %v4389
    %v4391 = vperm.slane %v4387, %v4390
    %v4392 = vrot.slane %v4380, 4
    %v4393 = vsel %vm282, %v4392, %v4374
    %v4394 = vrot.slane %v4374, 4
    %v4395 = vsel %vm282, %v4380, %v4394
    %v4397 = vunpack.c.l.s4 1934713408
    %v4398 = vunpack.c.0.s8 %v4397
    %v4399 = vperm.slane %v4393, %v4398
    %v4401 = vunpack.c.l.s4 1934713408
    %v4402 = vunpack.c.0.s8 %v4401
    %v4403 = vperm.slane %v4395, %v4402
    %v4404 = vrot.slane %v4391, 4
    %v4405 = vsel %vm282, %v4404, %v4385
    %v4406 = vrot.slane %v4385, 4
    %v4407 = vsel %vm282, %v4391, %v4406
    %v4409 = vunpack.c.l.s4 1934713408
    %v4410 = vunpack.c.0.s8 %v4409
    %v4411 = vperm.slane %v4405, %v4410
    %v4413 = vunpack.c.l.s4 1934713408
    %v4414 = vunpack.c.0.s8 %v4413
    %v4415 = vperm.slane %v4407, %v4414
    %v4416 = vrot.slane %v4411, 4
    %v4417 = vsel %vm282, %v4416, %v4399
    %v4418 = vrot.slane %v4399, 4
    %v4419 = vsel %vm282, %v4411, %v4418
    %v4420 = vrot.slane %v4415, 4
    %v4421 = vsel %vm282, %v4420, %v4403
    %v4422 = vrot.slane %v4403, 4
    %v4423 = vsel %vm282, %v4415, %v4422
    %4425 = vrot.lane.b32.xlu0 %v4275, 120
    %v4426 = vpop.permute.xlu0 %4425
    %4428 = vrot.lane.b32.xlu0 %v4275, 112
    %v4429 = vpop.permute.xlu0 %4428
    %4431 = vrot.lane.b32.xlu0 %v4275, 104
    %v4432 = vpop.permute.xlu0 %4431
    %v4434 = vrot.slane %v4429, 4
    %v4435 = vsel %vm282, %v4434, %v4275
    %v4436 = vrot.slane %v4275, 4
    %v4437 = vsel %vm282, %v4429, %v4436
    %v4439 = vunpack.c.l.s4 1983009808
    %v4440 = vunpack.c.0.s8 %v4439
    %v4441 = vperm.slane %v4435, %v4440
    %v4443 = vunpack.c.l.s4 1983009808
    %v4444 = vunpack.c.0.s8 %v4443
    %v4445 = vperm.slane %v4437, %v4444
    %v4446 = vrot.slane %v4432, 4
    %v4447 = vsel %vm282, %v4446, %v4426
    %v4448 = vrot.slane %v4426, 4
    %v4449 = vsel %vm282, %v4432, %v4448
    %v4451 = vunpack.c.l.s4 1983009808
    %v4452 = vunpack.c.0.s8 %v4451
    %v4453 = vperm.slane %v4447, %v4452
    %v4455 = vunpack.c.l.s4 1983009808
    %v4456 = vunpack.c.0.s8 %v4455
    %v4457 = vperm.slane %v4449, %v4456
    %v4458 = vrot.slane %v4453, 4
    %v4459 = vsel %vm282, %v4458, %v4441
    %v4460 = vrot.slane %v4441, 4
    %v4461 = vsel %vm282, %v4453, %v4460
    %v4463 = vunpack.c.l.s4 1934713408
    %v4464 = vunpack.c.0.s8 %v4463
    %v4465 = vperm.slane %v4459, %v4464
    %v4467 = vunpack.c.l.s4 1934713408
    %v4468 = vunpack.c.0.s8 %v4467
    %v4469 = vperm.slane %v4461, %v4468
    %v4470 = vrot.slane %v4457, 4
    %v4471 = vsel %vm282, %v4470, %v4445
    %v4472 = vrot.slane %v4445, 4
    %v4473 = vsel %vm282, %v4457, %v4472
    %v4475 = vunpack.c.l.s4 1934713408
    %v4476 = vunpack.c.0.s8 %v4475
    %v4477 = vperm.slane %v4471, %v4476
    %v4479 = vunpack.c.l.s4 1934713408
    %v4480 = vunpack.c.0.s8 %v4479
    %v4481 = vperm.slane %v4473, %v4480
    %v4482 = vrot.slane %v4465, 4
    %v4483 = vsel %vm282, 0.0, %v4482
    %v4484 = vrot.slane %v4469, 4
    %v4485 = vsel %vm282, 0.0, %v4484
    %v4486 = vrot.slane %v4477, 4
    %v4487 = vsel %vm282, 0.0, %v4486
    %v4488 = vrot.slane %v4481, 4
    %v4489 = vsel %vm282, 0.0, %v4488
    %v4490 = vsel %vm282, %v4484, %v4465
    %v4492 = vunpack.c.l.s4 1983009808
    %v4493 = vunpack.c.0.s8 %v4492
    %v4494 = vperm.slane %v4490, %v4493
    %v4495 = vrot.slane %v4485, 4
    %v4496 = vsel %vm282, %v4495, %v4483
    %v4498 = vunpack.c.l.s4 1983009808
    %v4499 = vunpack.c.0.s8 %v4498
    %v4500 = vperm.slane %v4496, %v4499
    %v4501 = vsel %vm282, %v4488, %v4477
    %v4503 = vunpack.c.l.s4 1983009808
    %v4504 = vunpack.c.0.s8 %v4503
    %v4505 = vperm.slane %v4501, %v4504
    %v4506 = vrot.slane %v4489, 4
    %v4507 = vsel %vm282, %v4506, %v4487
    %v4509 = vunpack.c.l.s4 1983009808
    %v4510 = vunpack.c.0.s8 %v4509
    %v4511 = vperm.slane %v4507, %v4510
    %v4512 = vrot.slane %v4500, 4
    %v4513 = vsel %vm282, %v4512, %v4494
    %v4514 = vrot.slane %v4494, 4
    %v4515 = vsel %vm282, %v4500, %v4514
    %v4517 = vunpack.c.l.s4 1934713408
    %v4518 = vunpack.c.0.s8 %v4517
    %v4519 = vperm.slane %v4513, %v4518
    %v4521 = vunpack.c.l.s4 1934713408
    %v4522 = vunpack.c.0.s8 %v4521
    %v4523 = vperm.slane %v4515, %v4522
    %v4524 = vrot.slane %v4511, 4
    %v4525 = vsel %vm282, %v4524, %v4505
    %v4526 = vrot.slane %v4505, 4
    %v4527 = vsel %vm282, %v4511, %v4526
    %v4529 = vunpack.c.l.s4 1934713408
    %v4530 = vunpack.c.0.s8 %v4529
    %v4531 = vperm.slane %v4525, %v4530
    %v4533 = vunpack.c.l.s4 1934713408
    %v4534 = vunpack.c.0.s8 %v4533
    %v4535 = vperm.slane %v4527, %v4534
    %v4536 = vrot.slane %v4531, 4
    %v4537 = vsel %vm282, %v4536, %v4519
    %v4538 = vrot.slane %v4519, 4
    %v4539 = vsel %vm282, %v4531, %v4538
    %v4540 = vrot.slane %v4535, 4
    %v4541 = vsel %vm282, %v4540, %v4523
    %v4542 = vrot.slane %v4523, 4
    %v4543 = vsel %vm282, %v4535, %v4542
    %4545 = vrot.lane.b32.xlu0 %v4299, 120
    %v4546 = vpop.permute.xlu0 %4545
    %4548 = vrot.lane.b32.xlu0 %v4299, 112
    %v4549 = vpop.permute.xlu0 %4548
    %4551 = vrot.lane.b32.xlu0 %v4299, 104
    %v4552 = vpop.permute.xlu0 %4551
    %v4554 = vrot.slane %v4549, 4
    %v4555 = vsel %vm282, %v4554, %v4299
    %v4556 = vrot.slane %v4299, 4
    %v4557 = vsel %vm282, %v4549, %v4556
    %v4559 = vunpack.c.l.s4 1983009808
    %v4560 = vunpack.c.0.s8 %v4559
    %v4561 = vperm.slane %v4555, %v4560
    %v4563 = vunpack.c.l.s4 1983009808
    %v4564 = vunpack.c.0.s8 %v4563
    %v4565 = vperm.slane %v4557, %v4564
    %v4566 = vrot.slane %v4552, 4
    %v4567 = vsel %vm282, %v4566, %v4546
    %v4568 = vrot.slane %v4546, 4
    %v4569 = vsel %vm282, %v4552, %v4568
    %v4571 = vunpack.c.l.s4 1983009808
    %v4572 = vunpack.c.0.s8 %v4571
    %v4573 = vperm.slane %v4567, %v4572
    %v4575 = vunpack.c.l.s4 1983009808
    %v4576 = vunpack.c.0.s8 %v4575
    %v4577 = vperm.slane %v4569, %v4576
    %v4578 = vrot.slane %v4573, 4
    %v4579 = vsel %vm282, %v4578, %v4561
    %v4580 = vrot.slane %v4561, 4
    %v4581 = vsel %vm282, %v4573, %v4580
    %v4583 = vunpack.c.l.s4 1934713408
    %v4584 = vunpack.c.0.s8 %v4583
    %v4585 = vperm.slane %v4579, %v4584
    %v4587 = vunpack.c.l.s4 1934713408
    %v4588 = vunpack.c.0.s8 %v4587
    %v4589 = vperm.slane %v4581, %v4588
    %v4590 = vrot.slane %v4577, 4
    %v4591 = vsel %vm282, %v4590, %v4565
    %v4592 = vrot.slane %v4565, 4
    %v4593 = vsel %vm282, %v4577, %v4592
    %v4595 = vunpack.c.l.s4 1934713408
    %v4596 = vunpack.c.0.s8 %v4595
    %v4597 = vperm.slane %v4591, %v4596
    %v4599 = vunpack.c.l.s4 1934713408
    %v4600 = vunpack.c.0.s8 %v4599
    %v4601 = vperm.slane %v4593, %v4600
    %v4602 = vrot.slane %v4585, 4
    %v4603 = vsel %vm282, 0.0, %v4602
    %v4604 = vrot.slane %v4589, 4
    %v4605 = vsel %vm282, 0.0, %v4604
    %v4606 = vrot.slane %v4597, 4
    %v4607 = vsel %vm282, 0.0, %v4606
    %v4608 = vrot.slane %v4601, 4
    %v4609 = vsel %vm282, 0.0, %v4608
    %v4610 = vsel %vm282, %v4604, %v4585
    %v4612 = vunpack.c.l.s4 1983009808
    %v4613 = vunpack.c.0.s8 %v4612
    %v4614 = vperm.slane %v4610, %v4613
    %v4615 = vrot.slane %v4605, 4
    %v4616 = vsel %vm282, %v4615, %v4603
    %v4618 = vunpack.c.l.s4 1983009808
    %v4619 = vunpack.c.0.s8 %v4618
    %v4620 = vperm.slane %v4616, %v4619
    %v4621 = vsel %vm282, %v4608, %v4597
    %v4623 = vunpack.c.l.s4 1983009808
    %v4624 = vunpack.c.0.s8 %v4623
    %v4625 = vperm.slane %v4621, %v4624
    %v4626 = vrot.slane %v4609, 4
    %v4627 = vsel %vm282, %v4626, %v4607
    %v4629 = vunpack.c.l.s4 1983009808
    %v4630 = vunpack.c.0.s8 %v4629
    %v4631 = vperm.slane %v4627, %v4630
    %v4632 = vrot.slane %v4620, 4
    %v4633 = vsel %vm282, %v4632, %v4614
    %v4634 = vrot.slane %v4614, 4
    %v4635 = vsel %vm282, %v4620, %v4634
    %v4637 = vunpack.c.l.s4 1934713408
    %v4638 = vunpack.c.0.s8 %v4637
    %v4639 = vperm.slane %v4633, %v4638
    %v4641 = vunpack.c.l.s4 1934713408
    %v4642 = vunpack.c.0.s8 %v4641
    %v4643 = vperm.slane %v4635, %v4642
    %v4644 = vrot.slane %v4631, 4
    %v4645 = vsel %vm282, %v4644, %v4625
    %v4646 = vrot.slane %v4625, 4
    %v4647 = vsel %vm282, %v4631, %v4646
    %v4649 = vunpack.c.l.s4 1934713408
    %v4650 = vunpack.c.0.s8 %v4649
    %v4651 = vperm.slane %v4645, %v4650
    %v4653 = vunpack.c.l.s4 1934713408
    %v4654 = vunpack.c.0.s8 %v4653
    %v4655 = vperm.slane %v4647, %v4654
    %v4656 = vrot.slane %v4651, 4
    %v4657 = vsel %vm282, %v4656, %v4639
    %v4658 = vrot.slane %v4639, 4
    %v4659 = vsel %vm282, %v4651, %v4658
    %v4660 = vrot.slane %v4655, 4
    %v4661 = vsel %vm282, %v4660, %v4643
    %v4662 = vrot.slane %v4643, 4
    %v4663 = vsel %vm282, %v4655, %v4662
    %v4665 = vsel %vm632, %v4417, 0
    %v4668 = vsel %vm632, %v4537, 0
    %4670 = vmatpush.xpose.msra.mxu0 0.0
    %4671 = vmatpush.xpose.msra.mxu0 0.0
    %4672 = vmatpush.xpose.msra.mxu0 0.0
    %4673 = vmatpush.xpose.msra.mxu0 0.0
    %4674 = vmatpush.xpose.msra.mxu0 0.0
    %4675 = vmatpush.xpose.msra.mxu0 0.0
    %4676 = vmatpush.xpose.msra.mxu0 0.0
    %4677 = vmatpush.xpose.msra.mxu0 0.0
    %4678 = vmatpush.xpose.msra.mxu0 0.0
    %4679 = vmatpush.xpose.msra.mxu0 0.0
    %4680 = vmatpush.xpose.msra.mxu0 0.0
    %4681 = vmatpush.xpose.msra.mxu0 0.0
    %4682 = vmatpush.xpose.msra.mxu0 0.0
    %4683 = vmatpush.xpose.msra.mxu0 0.0
    %4684 = vmatpush.xpose.msra.mxu0 0.0
    %4685 = vmatpush.xpose.msra.mxu0 %v4668
    %4686 = vmatmul.f32.gmra.mxu0 %v4665
    %v4687 = vpop.f32.mrf.mxu0
    %v4688 = vadd.f32 0.0, %v4687
    %4689 = vdwg.mxu0
    %v4691 = vsel %vm632, %v4419, 0
    %v4694 = vsel %vm632, %v4539, 0
    %4696 = vmatpush.xpose.msra.mxu0 0.0
    %4697 = vmatpush.xpose.msra.mxu0 0.0
    %4698 = vmatpush.xpose.msra.mxu0 0.0
    %4699 = vmatpush.xpose.msra.mxu0 0.0
    %4700 = vmatpush.xpose.msra.mxu0 0.0
    %4701 = vmatpush.xpose.msra.mxu0 0.0
    %4702 = vmatpush.xpose.msra.mxu0 0.0
    %4703 = vmatpush.xpose.msra.mxu0 0.0
    %4704 = vmatpush.xpose.msra.mxu0 0.0
    %4705 = vmatpush.xpose.msra.mxu0 0.0
    %4706 = vmatpush.xpose.msra.mxu0 0.0
    %4707 = vmatpush.xpose.msra.mxu0 0.0
    %4708 = vmatpush.xpose.msra.mxu0 0.0
    %4709 = vmatpush.xpose.msra.mxu0 0.0
    %4710 = vmatpush.xpose.msra.mxu0 0.0
    %4711 = vmatpush.xpose.msra.mxu0 %v4694
    %4712 = vmatmul.f32.gmra.mxu0 %v4691
    %v4713 = vpop.f32.mrf.mxu0
    %v4714 = vadd.f32 0.0, %v4713
    %4715 = vdwg.mxu0
    %v4717 = vsel %vm632, %v4421, 0
    %v4720 = vsel %vm632, %v4541, 0
    %4722 = vmatpush.xpose.msra.mxu0 0.0
    %4723 = vmatpush.xpose.msra.mxu0 0.0
    %4724 = vmatpush.xpose.msra.mxu0 0.0
    %4725 = vmatpush.xpose.msra.mxu0 0.0
    %4726 = vmatpush.xpose.msra.mxu0 0.0
    %4727 = vmatpush.xpose.msra.mxu0 0.0
    %4728 = vmatpush.xpose.msra.mxu0 0.0
    %4729 = vmatpush.xpose.msra.mxu0 0.0
    %4730 = vmatpush.xpose.msra.mxu0 0.0
    %4731 = vmatpush.xpose.msra.mxu0 0.0
    %4732 = vmatpush.xpose.msra.mxu0 0.0
    %4733 = vmatpush.xpose.msra.mxu0 0.0
    %4734 = vmatpush.xpose.msra.mxu0 0.0
    %4735 = vmatpush.xpose.msra.mxu0 0.0
    %4736 = vmatpush.xpose.msra.mxu0 0.0
    %4737 = vmatpush.xpose.msra.mxu0 %v4720
    %4738 = vmatmul.f32.gmra.mxu0 %v4717
    %v4739 = vpop.f32.mrf.mxu0
    %v4740 = vadd.f32 0.0, %v4739
    %4741 = vdwg.mxu0
    %v4743 = vsel %vm632, %v4423, 0
    %v4746 = vsel %vm632, %v4543, 0
    %4748 = vmatpush.xpose.msra.mxu0 0.0
    %4749 = vmatpush.xpose.msra.mxu0 0.0
    %4750 = vmatpush.xpose.msra.mxu0 0.0
    %4751 = vmatpush.xpose.msra.mxu0 0.0
    %4752 = vmatpush.xpose.msra.mxu0 0.0
    %4753 = vmatpush.xpose.msra.mxu0 0.0
    %4754 = vmatpush.xpose.msra.mxu0 0.0
    %4755 = vmatpush.xpose.msra.mxu0 0.0
    %4756 = vmatpush.xpose.msra.mxu0 0.0
    %4757 = vmatpush.xpose.msra.mxu0 0.0
    %4758 = vmatpush.xpose.msra.mxu0 0.0
    %4759 = vmatpush.xpose.msra.mxu0 0.0
    %4760 = vmatpush.xpose.msra.mxu0 0.0
    %4761 = vmatpush.xpose.msra.mxu0 0.0
    %4762 = vmatpush.xpose.msra.mxu0 0.0
    %4763 = vmatpush.xpose.msra.mxu0 %v4746
    %4764 = vmatmul.f32.gmra.mxu0 %v4743
    %v4765 = vpop.f32.mrf.mxu0
    %v4766 = vadd.f32 0.0, %v4765
    %4767 = vdwg.mxu0
    %v4768 = vmul.f32 %v4688, 0.35355338
    %v4769 = vmul.f32 %v4714, 0.35355338
    %v4770 = vmul.f32 %v4740, 0.35355338
    %v4771 = vmul.f32 %v4766, 0.35355338
    %v4772 = vadd.f32 %v4768, %v58
    %v4773 = vadd.f32 %v4769, %v58
    %v4774 = vadd.f32 %v4770, %v58
    %v4775 = vadd.f32 %v4771, %v58
    %v4776 = vsel %vm632, %v4772, -inf
    %4777 = vmax.xlane.f32.xlu0 %v4776
    %v4778 = vpop.xlane.xlu0 %4777
    %v4779 = vsel %vm632, %v4773, -inf
    %4780 = vmax.xlane.f32.xlu0 %v4779
    %v4781 = vpop.xlane.xlu0 %4780
    %v4782 = vsel %vm632, %v4774, -inf
    %4783 = vmax.xlane.f32.xlu0 %v4782
    %v4784 = vpop.xlane.xlu0 %4783
    %v4785 = vsel %vm632, %v4775, -inf
    %4786 = vmax.xlane.f32.xlu0 %v4785
    %v4787 = vpop.xlane.xlu0 %4786
    %v4788 = vsub.f32 %v4772, %v4778
    %v4789 = vsub.f32 %v4773, %v4781
    %v4790 = vsub.f32 %v4774, %v4784
    %v4791 = vsub.f32 %v4775, %v4787
    %v4792 = vmul.f32 %v4788, 1.442695
    %v4793 = vpow.pop %v4792
    %v4794 = vmul.f32 %v4789, 1.442695
    %v4795 = vpow.pop %v4794
    %v4796 = vmul.f32 %v4790, 1.442695
    %v4797 = vpow.pop %v4796
    %v4798 = vmul.f32 %v4791, 1.442695
    %v4799 = vpow.pop %v4798
    %v4800 = vsel %vm632, %v4793, 0.0
    %4801 = vadd.xlane.f32.xlu0 %v4800
    %v4802 = vpop.xlane.xlu0 %4801
    %v4803 = vsel %vm632, %v4795, 0.0
    %4804 = vadd.xlane.f32.xlu0 %v4803
    %v4805 = vpop.xlane.xlu0 %4804
    %v4806 = vsel %vm632, %v4797, 0.0
    %4807 = vadd.xlane.f32.xlu0 %v4806
    %v4808 = vpop.xlane.xlu0 %4807
    %v4809 = vsel %vm632, %v4799, 0.0
    %4810 = vadd.xlane.f32.xlu0 %v4809
    %v4811 = vpop.xlane.xlu0 %4810
    %v4812 = vrcp.pop %v4802
    %v4813 = vrcp.pop %v4805
    %v4814 = vrcp.pop %v4808
    %v4815 = vrcp.pop %v4811
    %v4816 = vmul.f32 %v4793, %v4812
    %v4817 = vmul.f32 %v4795, %v4813
    %v4818 = vmul.f32 %v4797, %v4814
    %v4819 = vmul.f32 %v4799, %v4815
    %v4821 = vsel %vm632, %v4816, 0
    %4823 = vmatpush.msra.mxu0 0.0
    %4824 = vmatpush.msra.mxu0 0.0
    %4825 = vmatpush.msra.mxu0 0.0
    %4826 = vmatpush.msra.mxu0 0.0
    %4827 = vmatpush.msra.mxu0 0.0
    %4828 = vmatpush.msra.mxu0 0.0
    %4829 = vmatpush.msra.mxu0 0.0
    %4830 = vmatpush.msra.mxu0 0.0
    %4831 = vmatpush.msra.mxu0 0.0
    %4832 = vmatpush.msra.mxu0 0.0
    %4833 = vmatpush.msra.mxu0 0.0
    %4834 = vmatpush.msra.mxu0 0.0
    %4835 = vmatpush.msra.mxu0 0.0
    %4836 = vmatpush.msra.mxu0 0.0
    %4837 = vmatpush.msra.mxu0 0.0
    %4838 = vmatpush.msra.mxu0 %v4657
    %4839 = vmatmul.f32.gmra.mxu0 %v4821
    %v4840 = vpop.f32.mrf.mxu0
    %v4841 = vadd.f32 0.0, %v4840
    %4842 = vdwg.mxu0
    %v4844 = vsel %vm632, %v4817, 0
    %4846 = vmatpush.msra.mxu0 0.0
    %4847 = vmatpush.msra.mxu0 0.0
    %4848 = vmatpush.msra.mxu0 0.0
    %4849 = vmatpush.msra.mxu0 0.0
    %4850 = vmatpush.msra.mxu0 0.0
    %4851 = vmatpush.msra.mxu0 0.0
    %4852 = vmatpush.msra.mxu0 0.0
    %4853 = vmatpush.msra.mxu0 0.0
    %4854 = vmatpush.msra.mxu0 0.0
    %4855 = vmatpush.msra.mxu0 0.0
    %4856 = vmatpush.msra.mxu0 0.0
    %4857 = vmatpush.msra.mxu0 0.0
    %4858 = vmatpush.msra.mxu0 0.0
    %4859 = vmatpush.msra.mxu0 0.0
    %4860 = vmatpush.msra.mxu0 0.0
    %4861 = vmatpush.msra.mxu0 %v4659
    %4862 = vmatmul.f32.gmra.mxu0 %v4844
    %v4863 = vpop.f32.mrf.mxu0
    %v4864 = vadd.f32 0.0, %v4863
    %4865 = vdwg.mxu0
    %v4867 = vsel %vm632, %v4818, 0
    %4869 = vmatpush.msra.mxu0 0.0
    %4870 = vmatpush.msra.mxu0 0.0
    %4871 = vmatpush.msra.mxu0 0.0
    %4872 = vmatpush.msra.mxu0 0.0
    %4873 = vmatpush.msra.mxu0 0.0
    %4874 = vmatpush.msra.mxu0 0.0
    %4875 = vmatpush.msra.mxu0 0.0
    %4876 = vmatpush.msra.mxu0 0.0
    %4877 = vmatpush.msra.mxu0 0.0
    %4878 = vmatpush.msra.mxu0 0.0
    %4879 = vmatpush.msra.mxu0 0.0
    %4880 = vmatpush.msra.mxu0 0.0
    %4881 = vmatpush.msra.mxu0 0.0
    %4882 = vmatpush.msra.mxu0 0.0
    %4883 = vmatpush.msra.mxu0 0.0
    %4884 = vmatpush.msra.mxu0 %v4661
    %4885 = vmatmul.f32.gmra.mxu0 %v4867
    %v4886 = vpop.f32.mrf.mxu0
    %v4887 = vadd.f32 0.0, %v4886
    %4888 = vdwg.mxu0
    %v4890 = vsel %vm632, %v4819, 0
    %4892 = vmatpush.msra.mxu0 0.0
    %4893 = vmatpush.msra.mxu0 0.0
    %4894 = vmatpush.msra.mxu0 0.0
    %4895 = vmatpush.msra.mxu0 0.0
    %4896 = vmatpush.msra.mxu0 0.0
    %4897 = vmatpush.msra.mxu0 0.0
    %4898 = vmatpush.msra.mxu0 0.0
    %4899 = vmatpush.msra.mxu0 0.0
    %4900 = vmatpush.msra.mxu0 0.0
    %4901 = vmatpush.msra.mxu0 0.0
    %4902 = vmatpush.msra.mxu0 0.0
    %4903 = vmatpush.msra.mxu0 0.0
    %4904 = vmatpush.msra.mxu0 0.0
    %4905 = vmatpush.msra.mxu0 0.0
    %4906 = vmatpush.msra.mxu0 0.0
    %4907 = vmatpush.msra.mxu0 %v4663
    %4908 = vmatmul.f32.gmra.mxu0 %v4890
    %v4909 = vpop.f32.mrf.mxu0
    %v4910 = vadd.f32 0.0, %v4909
    %4911 = vdwg.mxu0
    %v4912 = vrot.slane %v4887, 4
    %v4913 = vsel %vm282, %v4912, %v4841
    %v4914 = vrot.slane %v4841, 4
    %v4915 = vsel %vm282, %v4887, %v4914
    %v4917 = vunpack.c.l.s4 1983009808
    %v4918 = vunpack.c.0.s8 %v4917
    %v4919 = vperm.slane %v4913, %v4918
    %v4921 = vunpack.c.l.s4 1983009808
    %v4922 = vunpack.c.0.s8 %v4921
    %v4923 = vperm.slane %v4915, %v4922
    %v4924 = vrot.slane %v4910, 4
    %v4925 = vsel %vm282, %v4924, %v4864
    %v4926 = vrot.slane %v4864, 4
    %v4927 = vsel %vm282, %v4910, %v4926
    %v4929 = vunpack.c.l.s4 1983009808
    %v4930 = vunpack.c.0.s8 %v4929
    %v4931 = vperm.slane %v4925, %v4930
    %v4933 = vunpack.c.l.s4 1983009808
    %v4934 = vunpack.c.0.s8 %v4933
    %v4935 = vperm.slane %v4927, %v4934
    %v4936 = vrot.slane %v4931, 4
    %v4937 = vsel %vm282, %v4936, %v4919
    %v4938 = vrot.slane %v4919, 4
    %v4939 = vsel %vm282, %v4931, %v4938
    %v4941 = vunpack.c.l.s4 1934713408
    %v4942 = vunpack.c.0.s8 %v4941
    %v4943 = vperm.slane %v4937, %v4942
    %v4945 = vunpack.c.l.s4 1934713408
    %v4946 = vunpack.c.0.s8 %v4945
    %v4947 = vperm.slane %v4939, %v4946
    %v4948 = vrot.slane %v4935, 4
    %v4949 = vsel %vm282, %v4948, %v4923
    %v4950 = vrot.slane %v4923, 4
    %v4951 = vsel %vm282, %v4935, %v4950
    %v4953 = vunpack.c.l.s4 1934713408
    %v4954 = vunpack.c.0.s8 %v4953
    %v4955 = vperm.slane %v4949, %v4954
    %v4957 = vunpack.c.l.s4 1934713408
    %v4958 = vunpack.c.0.s8 %v4957
    %v4959 = vperm.slane %v4951, %v4958
    %v4960 = vrot.slane %v4943, 4
    %v4961 = vsel %vm282, 0.0, %v4960
    %v4962 = vrot.slane %v4947, 4
    %v4963 = vsel %vm282, 0.0, %v4962
    %v4964 = vrot.slane %v4955, 4
    %v4965 = vsel %vm282, 0.0, %v4964
    %v4966 = vrot.slane %v4959, 4
    %v4967 = vsel %vm282, 0.0, %v4966
    %v4968 = vsel %vm282, %v4962, %v4943
    %v4970 = vunpack.c.l.s4 1983009808
    %v4971 = vunpack.c.0.s8 %v4970
    %v4972 = vperm.slane %v4968, %v4971
    %v4973 = vrot.slane %v4963, 4
    %v4974 = vsel %vm282, %v4973, %v4961
    %v4976 = vunpack.c.l.s4 1983009808
    %v4977 = vunpack.c.0.s8 %v4976
    %v4978 = vperm.slane %v4974, %v4977
    %v4979 = vsel %vm282, %v4966, %v4955
    %v4981 = vunpack.c.l.s4 1983009808
    %v4982 = vunpack.c.0.s8 %v4981
    %v4983 = vperm.slane %v4979, %v4982
    %v4984 = vrot.slane %v4967, 4
    %v4985 = vsel %vm282, %v4984, %v4965
    %v4987 = vunpack.c.l.s4 1983009808
    %v4988 = vunpack.c.0.s8 %v4987
    %v4989 = vperm.slane %v4985, %v4988
    %v4990 = vrot.slane %v4978, 4
    %v4991 = vsel %vm282, %v4990, %v4972
    %v4992 = vrot.slane %v4972, 4
    %v4993 = vsel %vm282, %v4978, %v4992
    %v4995 = vunpack.c.l.s4 1934713408
    %v4996 = vunpack.c.0.s8 %v4995
    %v4997 = vperm.slane %v4991, %v4996
    %v4999 = vunpack.c.l.s4 1934713408
    %v5000 = vunpack.c.0.s8 %v4999
    %v5001 = vperm.slane %v4993, %v5000
    %v5002 = vrot.slane %v4989, 4
    %v5003 = vsel %vm282, %v5002, %v4983
    %v5004 = vrot.slane %v4983, 4
    %v5005 = vsel %vm282, %v4989, %v5004
    %v5007 = vunpack.c.l.s4 1934713408
    %v5008 = vunpack.c.0.s8 %v5007
    %v5009 = vperm.slane %v5003, %v5008
    %v5011 = vunpack.c.l.s4 1934713408
    %v5012 = vunpack.c.0.s8 %v5011
    %v5013 = vperm.slane %v5005, %v5012
    %v5014 = vrot.slane %v5009, 4
    %v5015 = vsel %vm282, %v5014, %v4997
    %v5016 = vrot.slane %v4997, 4
    %v5017 = vsel %vm282, %v5009, %v5016
    %v5018 = vrot.slane %v5013, 4
    %v5019 = vsel %vm282, %v5018, %v5001
    %v5020 = vrot.slane %v5001, 4
    %v5021 = vsel %vm282, %v5013, %v5020
    %5023 = vrot.lane.b32.xlu0 %v5017, 8
    %v5024 = vpop.permute.xlu0 %5023
    %5027 = vrot.lane.b32.xlu0 %v5019, 16
    %v5028 = vpop.permute.xlu0 %5027
    %5031 = vrot.lane.b32.xlu0 %v5021, 24
    %v5032 = vpop.permute.xlu0 %5031
    %v5034 = vsel %vm632, %v5015, %v5024
    %v5035 = vsel %vm1004, %v5034, %v5028
    %v5036 = vsel %vm1006, %v5035, %v5032
    %5038 = vrot.lane.b32.xlu0 %v4254, 120
    %v5039 = vpop.permute.xlu0 %5038
    %5041 = vrot.lane.b32.xlu0 %v4254, 112
    %v5042 = vpop.permute.xlu0 %5041
    %5044 = vrot.lane.b32.xlu0 %v4254, 104
    %v5045 = vpop.permute.xlu0 %5044
    %v5047 = vrot.slane %v5042, 4
    %v5048 = vsel %vm282, %v5047, %v4254
    %v5049 = vrot.slane %v4254, 4
    %v5050 = vsel %vm282, %v5042, %v5049
    %v5052 = vunpack.c.l.s4 1983009808
    %v5053 = vunpack.c.0.s8 %v5052
    %v5054 = vperm.slane %v5048, %v5053
    %v5056 = vunpack.c.l.s4 1983009808
    %v5057 = vunpack.c.0.s8 %v5056
    %v5058 = vperm.slane %v5050, %v5057
    %v5059 = vrot.slane %v5045, 4
    %v5060 = vsel %vm282, %v5059, %v5039
    %v5061 = vrot.slane %v5039, 4
    %v5062 = vsel %vm282, %v5045, %v5061
    %v5064 = vunpack.c.l.s4 1983009808
    %v5065 = vunpack.c.0.s8 %v5064
    %v5066 = vperm.slane %v5060, %v5065
    %v5068 = vunpack.c.l.s4 1983009808
    %v5069 = vunpack.c.0.s8 %v5068
    %v5070 = vperm.slane %v5062, %v5069
    %v5071 = vrot.slane %v5066, 4
    %v5072 = vsel %vm282, %v5071, %v5054
    %v5073 = vrot.slane %v5054, 4
    %v5074 = vsel %vm282, %v5066, %v5073
    %v5076 = vunpack.c.l.s4 1934713408
    %v5077 = vunpack.c.0.s8 %v5076
    %v5078 = vperm.slane %v5072, %v5077
    %v5080 = vunpack.c.l.s4 1934713408
    %v5081 = vunpack.c.0.s8 %v5080
    %v5082 = vperm.slane %v5074, %v5081
    %v5083 = vrot.slane %v5070, 4
    %v5084 = vsel %vm282, %v5083, %v5058
    %v5085 = vrot.slane %v5058, 4
    %v5086 = vsel %vm282, %v5070, %v5085
    %v5088 = vunpack.c.l.s4 1934713408
    %v5089 = vunpack.c.0.s8 %v5088
    %v5090 = vperm.slane %v5084, %v5089
    %v5092 = vunpack.c.l.s4 1934713408
    %v5093 = vunpack.c.0.s8 %v5092
    %v5094 = vperm.slane %v5086, %v5093
    %v5095 = vrot.slane %v5078, 4
    %v5096 = vsel %vm282, 0.0, %v5095
    %v5097 = vrot.slane %v5082, 4
    %v5098 = vsel %vm282, 0.0, %v5097
    %v5099 = vrot.slane %v5090, 4
    %v5100 = vsel %vm282, 0.0, %v5099
    %v5101 = vrot.slane %v5094, 4
    %v5102 = vsel %vm282, 0.0, %v5101
    %v5103 = vsel %vm282, %v5097, %v5078
    %v5105 = vunpack.c.l.s4 1983009808
    %v5106 = vunpack.c.0.s8 %v5105
    %v5107 = vperm.slane %v5103, %v5106
    %v5108 = vrot.slane %v5098, 4
    %v5109 = vsel %vm282, %v5108, %v5096
    %v5111 = vunpack.c.l.s4 1983009808
    %v5112 = vunpack.c.0.s8 %v5111
    %v5113 = vperm.slane %v5109, %v5112
    %v5114 = vsel %vm282, %v5101, %v5090
    %v5116 = vunpack.c.l.s4 1983009808
    %v5117 = vunpack.c.0.s8 %v5116
    %v5118 = vperm.slane %v5114, %v5117
    %v5119 = vrot.slane %v5102, 4
    %v5120 = vsel %vm282, %v5119, %v5100
    %v5122 = vunpack.c.l.s4 1983009808
    %v5123 = vunpack.c.0.s8 %v5122
    %v5124 = vperm.slane %v5120, %v5123
    %v5125 = vrot.slane %v5113, 4
    %v5126 = vsel %vm282, %v5125, %v5107
    %v5127 = vrot.slane %v5107, 4
    %v5128 = vsel %vm282, %v5113, %v5127
    %v5130 = vunpack.c.l.s4 1934713408
    %v5131 = vunpack.c.0.s8 %v5130
    %v5132 = vperm.slane %v5126, %v5131
    %v5134 = vunpack.c.l.s4 1934713408
    %v5135 = vunpack.c.0.s8 %v5134
    %v5136 = vperm.slane %v5128, %v5135
    %v5137 = vrot.slane %v5124, 4
    %v5138 = vsel %vm282, %v5137, %v5118
    %v5139 = vrot.slane %v5118, 4
    %v5140 = vsel %vm282, %v5124, %v5139
    %v5142 = vunpack.c.l.s4 1934713408
    %v5143 = vunpack.c.0.s8 %v5142
    %v5144 = vperm.slane %v5138, %v5143
    %v5146 = vunpack.c.l.s4 1934713408
    %v5147 = vunpack.c.0.s8 %v5146
    %v5148 = vperm.slane %v5140, %v5147
    %v5149 = vrot.slane %v5144, 4
    %v5150 = vsel %vm282, %v5149, %v5132
    %v5151 = vrot.slane %v5132, 4
    %v5152 = vsel %vm282, %v5144, %v5151
    %v5153 = vrot.slane %v5148, 4
    %v5154 = vsel %vm282, %v5153, %v5136
    %v5155 = vrot.slane %v5136, 4
    %v5156 = vsel %vm282, %v5148, %v5155
    %5158 = vrot.lane.b32.xlu0 %v4278, 120
    %v5159 = vpop.permute.xlu0 %5158
    %5161 = vrot.lane.b32.xlu0 %v4278, 112
    %v5162 = vpop.permute.xlu0 %5161
    %5164 = vrot.lane.b32.xlu0 %v4278, 104
    %v5165 = vpop.permute.xlu0 %5164
    %v5167 = vrot.slane %v5162, 4
    %v5168 = vsel %vm282, %v5167, %v4278
    %v5169 = vrot.slane %v4278, 4
    %v5170 = vsel %vm282, %v5162, %v5169
    %v5172 = vunpack.c.l.s4 1983009808
    %v5173 = vunpack.c.0.s8 %v5172
    %v5174 = vperm.slane %v5168, %v5173
    %v5176 = vunpack.c.l.s4 1983009808
    %v5177 = vunpack.c.0.s8 %v5176
    %v5178 = vperm.slane %v5170, %v5177
    %v5179 = vrot.slane %v5165, 4
    %v5180 = vsel %vm282, %v5179, %v5159
    %v5181 = vrot.slane %v5159, 4
    %v5182 = vsel %vm282, %v5165, %v5181
    %v5184 = vunpack.c.l.s4 1983009808
    %v5185 = vunpack.c.0.s8 %v5184
    %v5186 = vperm.slane %v5180, %v5185
    %v5188 = vunpack.c.l.s4 1983009808
    %v5189 = vunpack.c.0.s8 %v5188
    %v5190 = vperm.slane %v5182, %v5189
    %v5191 = vrot.slane %v5186, 4
    %v5192 = vsel %vm282, %v5191, %v5174
    %v5193 = vrot.slane %v5174, 4
    %v5194 = vsel %vm282, %v5186, %v5193
    %v5196 = vunpack.c.l.s4 1934713408
    %v5197 = vunpack.c.0.s8 %v5196
    %v5198 = vperm.slane %v5192, %v5197
    %v5200 = vunpack.c.l.s4 1934713408
    %v5201 = vunpack.c.0.s8 %v5200
    %v5202 = vperm.slane %v5194, %v5201
    %v5203 = vrot.slane %v5190, 4
    %v5204 = vsel %vm282, %v5203, %v5178
    %v5205 = vrot.slane %v5178, 4
    %v5206 = vsel %vm282, %v5190, %v5205
    %v5208 = vunpack.c.l.s4 1934713408
    %v5209 = vunpack.c.0.s8 %v5208
    %v5210 = vperm.slane %v5204, %v5209
    %v5212 = vunpack.c.l.s4 1934713408
    %v5213 = vunpack.c.0.s8 %v5212
    %v5214 = vperm.slane %v5206, %v5213
    %v5215 = vrot.slane %v5198, 4
    %v5216 = vsel %vm282, 0.0, %v5215
    %v5217 = vrot.slane %v5202, 4
    %v5218 = vsel %vm282, 0.0, %v5217
    %v5219 = vrot.slane %v5210, 4
    %v5220 = vsel %vm282, 0.0, %v5219
    %v5221 = vrot.slane %v5214, 4
    %v5222 = vsel %vm282, 0.0, %v5221
    %v5223 = vsel %vm282, %v5217, %v5198
    %v5225 = vunpack.c.l.s4 1983009808
    %v5226 = vunpack.c.0.s8 %v5225
    %v5227 = vperm.slane %v5223, %v5226
    %v5228 = vrot.slane %v5218, 4
    %v5229 = vsel %vm282, %v5228, %v5216
    %v5231 = vunpack.c.l.s4 1983009808
    %v5232 = vunpack.c.0.s8 %v5231
    %v5233 = vperm.slane %v5229, %v5232
    %v5234 = vsel %vm282, %v5221, %v5210
    %v5236 = vunpack.c.l.s4 1983009808
    %v5237 = vunpack.c.0.s8 %v5236
    %v5238 = vperm.slane %v5234, %v5237
    %v5239 = vrot.slane %v5222, 4
    %v5240 = vsel %vm282, %v5239, %v5220
    %v5242 = vunpack.c.l.s4 1983009808
    %v5243 = vunpack.c.0.s8 %v5242
    %v5244 = vperm.slane %v5240, %v5243
    %v5245 = vrot.slane %v5233, 4
    %v5246 = vsel %vm282, %v5245, %v5227
    %v5247 = vrot.slane %v5227, 4
    %v5248 = vsel %vm282, %v5233, %v5247
    %v5250 = vunpack.c.l.s4 1934713408
    %v5251 = vunpack.c.0.s8 %v5250
    %v5252 = vperm.slane %v5246, %v5251
    %v5254 = vunpack.c.l.s4 1934713408
    %v5255 = vunpack.c.0.s8 %v5254
    %v5256 = vperm.slane %v5248, %v5255
    %v5257 = vrot.slane %v5244, 4
    %v5258 = vsel %vm282, %v5257, %v5238
    %v5259 = vrot.slane %v5238, 4
    %v5260 = vsel %vm282, %v5244, %v5259
    %v5262 = vunpack.c.l.s4 1934713408
    %v5263 = vunpack.c.0.s8 %v5262
    %v5264 = vperm.slane %v5258, %v5263
    %v5266 = vunpack.c.l.s4 1934713408
    %v5267 = vunpack.c.0.s8 %v5266
    %v5268 = vperm.slane %v5260, %v5267
    %v5269 = vrot.slane %v5264, 4
    %v5270 = vsel %vm282, %v5269, %v5252
    %v5271 = vrot.slane %v5252, 4
    %v5272 = vsel %vm282, %v5264, %v5271
    %v5273 = vrot.slane %v5268, 4
    %v5274 = vsel %vm282, %v5273, %v5256
    %v5275 = vrot.slane %v5256, 4
    %v5276 = vsel %vm282, %v5268, %v5275
    %5278 = vrot.lane.b32.xlu0 %v4302, 120
    %v5279 = vpop.permute.xlu0 %5278
    %5281 = vrot.lane.b32.xlu0 %v4302, 112
    %v5282 = vpop.permute.xlu0 %5281
    %5284 = vrot.lane.b32.xlu0 %v4302, 104
    %v5285 = vpop.permute.xlu0 %5284
    %v5287 = vrot.slane %v5282, 4
    %v5288 = vsel %vm282, %v5287, %v4302
    %v5289 = vrot.slane %v4302, 4
    %v5290 = vsel %vm282, %v5282, %v5289
    %v5292 = vunpack.c.l.s4 1983009808
    %v5293 = vunpack.c.0.s8 %v5292
    %v5294 = vperm.slane %v5288, %v5293
    %v5296 = vunpack.c.l.s4 1983009808
    %v5297 = vunpack.c.0.s8 %v5296
    %v5298 = vperm.slane %v5290, %v5297
    %v5299 = vrot.slane %v5285, 4
    %v5300 = vsel %vm282, %v5299, %v5279
    %v5301 = vrot.slane %v5279, 4
    %v5302 = vsel %vm282, %v5285, %v5301
    %v5304 = vunpack.c.l.s4 1983009808
    %v5305 = vunpack.c.0.s8 %v5304
    %v5306 = vperm.slane %v5300, %v5305
    %v5308 = vunpack.c.l.s4 1983009808
    %v5309 = vunpack.c.0.s8 %v5308
    %v5310 = vperm.slane %v5302, %v5309
    %v5311 = vrot.slane %v5306, 4
    %v5312 = vsel %vm282, %v5311, %v5294
    %v5313 = vrot.slane %v5294, 4
    %v5314 = vsel %vm282, %v5306, %v5313
    %v5316 = vunpack.c.l.s4 1934713408
    %v5317 = vunpack.c.0.s8 %v5316
    %v5318 = vperm.slane %v5312, %v5317
    %v5320 = vunpack.c.l.s4 1934713408
    %v5321 = vunpack.c.0.s8 %v5320
    %v5322 = vperm.slane %v5314, %v5321
    %v5323 = vrot.slane %v5310, 4
    %v5324 = vsel %vm282, %v5323, %v5298
    %v5325 = vrot.slane %v5298, 4
    %v5326 = vsel %vm282, %v5310, %v5325
    %v5328 = vunpack.c.l.s4 1934713408
    %v5329 = vunpack.c.0.s8 %v5328
    %v5330 = vperm.slane %v5324, %v5329
    %v5332 = vunpack.c.l.s4 1934713408
    %v5333 = vunpack.c.0.s8 %v5332
    %v5334 = vperm.slane %v5326, %v5333
    %v5335 = vrot.slane %v5318, 4
    %v5336 = vsel %vm282, 0.0, %v5335
    %v5337 = vrot.slane %v5322, 4
    %v5338 = vsel %vm282, 0.0, %v5337
    %v5339 = vrot.slane %v5330, 4
    %v5340 = vsel %vm282, 0.0, %v5339
    %v5341 = vrot.slane %v5334, 4
    %v5342 = vsel %vm282, 0.0, %v5341
    %v5343 = vsel %vm282, %v5337, %v5318
    %v5345 = vunpack.c.l.s4 1983009808
    %v5346 = vunpack.c.0.s8 %v5345
    %v5347 = vperm.slane %v5343, %v5346
    %v5348 = vrot.slane %v5338, 4
    %v5349 = vsel %vm282, %v5348, %v5336
    %v5351 = vunpack.c.l.s4 1983009808
    %v5352 = vunpack.c.0.s8 %v5351
    %v5353 = vperm.slane %v5349, %v5352
    %v5354 = vsel %vm282, %v5341, %v5330
    %v5356 = vunpack.c.l.s4 1983009808
    %v5357 = vunpack.c.0.s8 %v5356
    %v5358 = vperm.slane %v5354, %v5357
    %v5359 = vrot.slane %v5342, 4
    %v5360 = vsel %vm282, %v5359, %v5340
    %v5362 = vunpack.c.l.s4 1983009808
    %v5363 = vunpack.c.0.s8 %v5362
    %v5364 = vperm.slane %v5360, %v5363
    %v5365 = vrot.slane %v5353, 4
    %v5366 = vsel %vm282, %v5365, %v5347
    %v5367 = vrot.slane %v5347, 4
    %v5368 = vsel %vm282, %v5353, %v5367
    %v5370 = vunpack.c.l.s4 1934713408
    %v5371 = vunpack.c.0.s8 %v5370
    %v5372 = vperm.slane %v5366, %v5371
    %v5374 = vunpack.c.l.s4 1934713408
    %v5375 = vunpack.c.0.s8 %v5374
    %v5376 = vperm.slane %v5368, %v5375
    %v5377 = vrot.slane %v5364, 4
    %v5378 = vsel %vm282, %v5377, %v5358
    %v5379 = vrot.slane %v5358, 4
    %v5380 = vsel %vm282, %v5364, %v5379
    %v5382 = vunpack.c.l.s4 1934713408
    %v5383 = vunpack.c.0.s8 %v5382
    %v5384 = vperm.slane %v5378, %v5383
    %v5386 = vunpack.c.l.s4 1934713408
    %v5387 = vunpack.c.0.s8 %v5386
    %v5388 = vperm.slane %v5380, %v5387
    %v5389 = vrot.slane %v5384, 4
    %v5390 = vsel %vm282, %v5389, %v5372
    %v5391 = vrot.slane %v5372, 4
    %v5392 = vsel %vm282, %v5384, %v5391
    %v5393 = vrot.slane %v5388, 4
    %v5394 = vsel %vm282, %v5393, %v5376
    %v5395 = vrot.slane %v5376, 4
    %v5396 = vsel %vm282, %v5388, %v5395
    %v5398 = vsel %vm632, %v5150, 0
    %v5401 = vsel %vm632, %v5270, 0
    %5403 = vmatpush.xpose.msra.mxu0 0.0
    %5404 = vmatpush.xpose.msra.mxu0 0.0
    %5405 = vmatpush.xpose.msra.mxu0 0.0
    %5406 = vmatpush.xpose.msra.mxu0 0.0
    %5407 = vmatpush.xpose.msra.mxu0 0.0
    %5408 = vmatpush.xpose.msra.mxu0 0.0
    %5409 = vmatpush.xpose.msra.mxu0 0.0
    %5410 = vmatpush.xpose.msra.mxu0 0.0
    %5411 = vmatpush.xpose.msra.mxu0 0.0
    %5412 = vmatpush.xpose.msra.mxu0 0.0
    %5413 = vmatpush.xpose.msra.mxu0 0.0
    %5414 = vmatpush.xpose.msra.mxu0 0.0
    %5415 = vmatpush.xpose.msra.mxu0 0.0
    %5416 = vmatpush.xpose.msra.mxu0 0.0
    %5417 = vmatpush.xpose.msra.mxu0 0.0
    %5418 = vmatpush.xpose.msra.mxu0 %v5401
    %5419 = vmatmul.f32.gmra.mxu0 %v5398
    %v5420 = vpop.f32.mrf.mxu0
    %v5421 = vadd.f32 0.0, %v5420
    %5422 = vdwg.mxu0
    %v5424 = vsel %vm632, %v5152, 0
    %v5427 = vsel %vm632, %v5272, 0
    %5429 = vmatpush.xpose.msra.mxu0 0.0
    %5430 = vmatpush.xpose.msra.mxu0 0.0
    %5431 = vmatpush.xpose.msra.mxu0 0.0
    %5432 = vmatpush.xpose.msra.mxu0 0.0
    %5433 = vmatpush.xpose.msra.mxu0 0.0
    %5434 = vmatpush.xpose.msra.mxu0 0.0
    %5435 = vmatpush.xpose.msra.mxu0 0.0
    %5436 = vmatpush.xpose.msra.mxu0 0.0
    %5437 = vmatpush.xpose.msra.mxu0 0.0
    %5438 = vmatpush.xpose.msra.mxu0 0.0
    %5439 = vmatpush.xpose.msra.mxu0 0.0
    %5440 = vmatpush.xpose.msra.mxu0 0.0
    %5441 = vmatpush.xpose.msra.mxu0 0.0
    %5442 = vmatpush.xpose.msra.mxu0 0.0
    %5443 = vmatpush.xpose.msra.mxu0 0.0
    %5444 = vmatpush.xpose.msra.mxu0 %v5427
    %5445 = vmatmul.f32.gmra.mxu0 %v5424
    %v5446 = vpop.f32.mrf.mxu0
    %v5447 = vadd.f32 0.0, %v5446
    %5448 = vdwg.mxu0
    %v5450 = vsel %vm632, %v5154, 0
    %v5453 = vsel %vm632, %v5274, 0
    %5455 = vmatpush.xpose.msra.mxu0 0.0
    %5456 = vmatpush.xpose.msra.mxu0 0.0
    %5457 = vmatpush.xpose.msra.mxu0 0.0
    %5458 = vmatpush.xpose.msra.mxu0 0.0
    %5459 = vmatpush.xpose.msra.mxu0 0.0
    %5460 = vmatpush.xpose.msra.mxu0 0.0
    %5461 = vmatpush.xpose.msra.mxu0 0.0
    %5462 = vmatpush.xpose.msra.mxu0 0.0
    %5463 = vmatpush.xpose.msra.mxu0 0.0
    %5464 = vmatpush.xpose.msra.mxu0 0.0
    %5465 = vmatpush.xpose.msra.mxu0 0.0
    %5466 = vmatpush.xpose.msra.mxu0 0.0
    %5467 = vmatpush.xpose.msra.mxu0 0.0
    %5468 = vmatpush.xpose.msra.mxu0 0.0
    %5469 = vmatpush.xpose.msra.mxu0 0.0
    %5470 = vmatpush.xpose.msra.mxu0 %v5453
    %5471 = vmatmul.f32.gmra.mxu0 %v5450
    %v5472 = vpop.f32.mrf.mxu0
    %v5473 = vadd.f32 0.0, %v5472
    %5474 = vdwg.mxu0
    %v5476 = vsel %vm632, %v5156, 0
    %v5479 = vsel %vm632, %v5276, 0
    %5481 = vmatpush.xpose.msra.mxu0 0.0
    %5482 = vmatpush.xpose.msra.mxu0 0.0
    %5483 = vmatpush.xpose.msra.mxu0 0.0
    %5484 = vmatpush.xpose.msra.mxu0 0.0
    %5485 = vmatpush.xpose.msra.mxu0 0.0
    %5486 = vmatpush.xpose.msra.mxu0 0.0
    %5487 = vmatpush.xpose.msra.mxu0 0.0
    %5488 = vmatpush.xpose.msra.mxu0 0.0
    %5489 = vmatpush.xpose.msra.mxu0 0.0
    %5490 = vmatpush.xpose.msra.mxu0 0.0
    %5491 = vmatpush.xpose.msra.mxu0 0.0
    %5492 = vmatpush.xpose.msra.mxu0 0.0
    %5493 = vmatpush.xpose.msra.mxu0 0.0
    %5494 = vmatpush.xpose.msra.mxu0 0.0
    %5495 = vmatpush.xpose.msra.mxu0 0.0
    %5496 = vmatpush.xpose.msra.mxu0 %v5479
    %5497 = vmatmul.f32.gmra.mxu0 %v5476
    %v5498 = vpop.f32.mrf.mxu0
    %v5499 = vadd.f32 0.0, %v5498
    %5500 = vdwg.mxu0
    %v5501 = vmul.f32 %v5421, 0.35355338
    %v5502 = vmul.f32 %v5447, 0.35355338
    %v5503 = vmul.f32 %v5473, 0.35355338
    %v5504 = vmul.f32 %v5499, 0.35355338
    %v5505 = vadd.f32 %v5501, %v60
    %v5506 = vadd.f32 %v5502, %v60
    %v5507 = vadd.f32 %v5503, %v60
    %v5508 = vadd.f32 %v5504, %v60
    %v5509 = vsel %vm632, %v5505, -inf
    %5510 = vmax.xlane.f32.xlu0 %v5509
    %v5511 = vpop.xlane.xlu0 %5510
    %v5512 = vsel %vm632, %v5506, -inf
    %5513 = vmax.xlane.f32.xlu0 %v5512
    %v5514 = vpop.xlane.xlu0 %5513
    %v5515 = vsel %vm632, %v5507, -inf
    %5516 = vmax.xlane.f32.xlu0 %v5515
    %v5517 = vpop.xlane.xlu0 %5516
    %v5518 = vsel %vm632, %v5508, -inf
    %5519 = vmax.xlane.f32.xlu0 %v5518
    %v5520 = vpop.xlane.xlu0 %5519
    %v5521 = vsub.f32 %v5505, %v5511
    %v5522 = vsub.f32 %v5506, %v5514
    %v5523 = vsub.f32 %v5507, %v5517
    %v5524 = vsub.f32 %v5508, %v5520
    %v5525 = vmul.f32 %v5521, 1.442695
    %v5526 = vpow.pop %v5525
    %v5527 = vmul.f32 %v5522, 1.442695
    %v5528 = vpow.pop %v5527
    %v5529 = vmul.f32 %v5523, 1.442695
    %v5530 = vpow.pop %v5529
    %v5531 = vmul.f32 %v5524, 1.442695
    %v5532 = vpow.pop %v5531
    %v5533 = vsel %vm632, %v5526, 0.0
    %5534 = vadd.xlane.f32.xlu0 %v5533
    %v5535 = vpop.xlane.xlu0 %5534
    %v5536 = vsel %vm632, %v5528, 0.0
    %5537 = vadd.xlane.f32.xlu0 %v5536
    %v5538 = vpop.xlane.xlu0 %5537
    %v5539 = vsel %vm632, %v5530, 0.0
    %5540 = vadd.xlane.f32.xlu0 %v5539
    %v5541 = vpop.xlane.xlu0 %5540
    %v5542 = vsel %vm632, %v5532, 0.0
    %5543 = vadd.xlane.f32.xlu0 %v5542
    %v5544 = vpop.xlane.xlu0 %5543
    %v5545 = vrcp.pop %v5535
    %v5546 = vrcp.pop %v5538
    %v5547 = vrcp.pop %v5541
    %v5548 = vrcp.pop %v5544
    %v5549 = vmul.f32 %v5526, %v5545
    %v5550 = vmul.f32 %v5528, %v5546
    %v5551 = vmul.f32 %v5530, %v5547
    %v5552 = vmul.f32 %v5532, %v5548
    %v5554 = vsel %vm632, %v5549, 0
    %5556 = vmatpush.msra.mxu0 0.0
    %5557 = vmatpush.msra.mxu0 0.0
    %5558 = vmatpush.msra.mxu0 0.0
    %5559 = vmatpush.msra.mxu0 0.0
    %5560 = vmatpush.msra.mxu0 0.0
    %5561 = vmatpush.msra.mxu0 0.0
    %5562 = vmatpush.msra.mxu0 0.0
    %5563 = vmatpush.msra.mxu0 0.0
    %5564 = vmatpush.msra.mxu0 0.0
    %5565 = vmatpush.msra.mxu0 0.0
    %5566 = vmatpush.msra.mxu0 0.0
    %5567 = vmatpush.msra.mxu0 0.0
    %5568 = vmatpush.msra.mxu0 0.0
    %5569 = vmatpush.msra.mxu0 0.0
    %5570 = vmatpush.msra.mxu0 0.0
    %5571 = vmatpush.msra.mxu0 %v5390
    %5572 = vmatmul.f32.gmra.mxu0 %v5554
    %v5573 = vpop.f32.mrf.mxu0
    %v5574 = vadd.f32 0.0, %v5573
    %5575 = vdwg.mxu0
    %v5577 = vsel %vm632, %v5550, 0
    %5579 = vmatpush.msra.mxu0 0.0
    %5580 = vmatpush.msra.mxu0 0.0
    %5581 = vmatpush.msra.mxu0 0.0
    %5582 = vmatpush.msra.mxu0 0.0
    %5583 = vmatpush.msra.mxu0 0.0
    %5584 = vmatpush.msra.mxu0 0.0
    %5585 = vmatpush.msra.mxu0 0.0
    %5586 = vmatpush.msra.mxu0 0.0
    %5587 = vmatpush.msra.mxu0 0.0
    %5588 = vmatpush.msra.mxu0 0.0
    %5589 = vmatpush.msra.mxu0 0.0
    %5590 = vmatpush.msra.mxu0 0.0
    %5591 = vmatpush.msra.mxu0 0.0
    %5592 = vmatpush.msra.mxu0 0.0
    %5593 = vmatpush.msra.mxu0 0.0
    %5594 = vmatpush.msra.mxu0 %v5392
    %5595 = vmatmul.f32.gmra.mxu0 %v5577
    %v5596 = vpop.f32.mrf.mxu0
    %v5597 = vadd.f32 0.0, %v5596
    %5598 = vdwg.mxu0
    %v5600 = vsel %vm632, %v5551, 0
    %5602 = vmatpush.msra.mxu0 0.0
    %5603 = vmatpush.msra.mxu0 0.0
    %5604 = vmatpush.msra.mxu0 0.0
    %5605 = vmatpush.msra.mxu0 0.0
    %5606 = vmatpush.msra.mxu0 0.0
    %5607 = vmatpush.msra.mxu0 0.0
    %5608 = vmatpush.msra.mxu0 0.0
    %5609 = vmatpush.msra.mxu0 0.0
    %5610 = vmatpush.msra.mxu0 0.0
    %5611 = vmatpush.msra.mxu0 0.0
    %5612 = vmatpush.msra.mxu0 0.0
    %5613 = vmatpush.msra.mxu0 0.0
    %5614 = vmatpush.msra.mxu0 0.0
    %5615 = vmatpush.msra.mxu0 0.0
    %5616 = vmatpush.msra.mxu0 0.0
    %5617 = vmatpush.msra.mxu0 %v5394
    %5618 = vmatmul.f32.gmra.mxu0 %v5600
    %v5619 = vpop.f32.mrf.mxu0
    %v5620 = vadd.f32 0.0, %v5619
    %5621 = vdwg.mxu0
    %v5623 = vsel %vm632, %v5552, 0
    %5625 = vmatpush.msra.mxu0 0.0
    %5626 = vmatpush.msra.mxu0 0.0
    %5627 = vmatpush.msra.mxu0 0.0
    %5628 = vmatpush.msra.mxu0 0.0
    %5629 = vmatpush.msra.mxu0 0.0
    %5630 = vmatpush.msra.mxu0 0.0
    %5631 = vmatpush.msra.mxu0 0.0
    %5632 = vmatpush.msra.mxu0 0.0
    %5633 = vmatpush.msra.mxu0 0.0
    %5634 = vmatpush.msra.mxu0 0.0
    %5635 = vmatpush.msra.mxu0 0.0
    %5636 = vmatpush.msra.mxu0 0.0
    %5637 = vmatpush.msra.mxu0 0.0
    %5638 = vmatpush.msra.mxu0 0.0
    %5639 = vmatpush.msra.mxu0 0.0
    %5640 = vmatpush.msra.mxu0 %v5396
    %5641 = vmatmul.f32.gmra.mxu0 %v5623
    %v5642 = vpop.f32.mrf.mxu0
    %v5643 = vadd.f32 0.0, %v5642
    %5644 = vdwg.mxu0
    %v5645 = vrot.slane %v5620, 4
    %v5646 = vsel %vm282, %v5645, %v5574
    %v5647 = vrot.slane %v5574, 4
    %v5648 = vsel %vm282, %v5620, %v5647
    %v5650 = vunpack.c.l.s4 1983009808
    %v5651 = vunpack.c.0.s8 %v5650
    %v5652 = vperm.slane %v5646, %v5651
    %v5654 = vunpack.c.l.s4 1983009808
    %v5655 = vunpack.c.0.s8 %v5654
    %v5656 = vperm.slane %v5648, %v5655
    %v5657 = vrot.slane %v5643, 4
    %v5658 = vsel %vm282, %v5657, %v5597
    %v5659 = vrot.slane %v5597, 4
    %v5660 = vsel %vm282, %v5643, %v5659
    %v5662 = vunpack.c.l.s4 1983009808
    %v5663 = vunpack.c.0.s8 %v5662
    %v5664 = vperm.slane %v5658, %v5663
    %v5666 = vunpack.c.l.s4 1983009808
    %v5667 = vunpack.c.0.s8 %v5666
    %v5668 = vperm.slane %v5660, %v5667
    %v5669 = vrot.slane %v5664, 4
    %v5670 = vsel %vm282, %v5669, %v5652
    %v5671 = vrot.slane %v5652, 4
    %v5672 = vsel %vm282, %v5664, %v5671
    %v5674 = vunpack.c.l.s4 1934713408
    %v5675 = vunpack.c.0.s8 %v5674
    %v5676 = vperm.slane %v5670, %v5675
    %v5678 = vunpack.c.l.s4 1934713408
    %v5679 = vunpack.c.0.s8 %v5678
    %v5680 = vperm.slane %v5672, %v5679
    %v5681 = vrot.slane %v5668, 4
    %v5682 = vsel %vm282, %v5681, %v5656
    %v5683 = vrot.slane %v5656, 4
    %v5684 = vsel %vm282, %v5668, %v5683
    %v5686 = vunpack.c.l.s4 1934713408
    %v5687 = vunpack.c.0.s8 %v5686
    %v5688 = vperm.slane %v5682, %v5687
    %v5690 = vunpack.c.l.s4 1934713408
    %v5691 = vunpack.c.0.s8 %v5690
    %v5692 = vperm.slane %v5684, %v5691
    %v5693 = vrot.slane %v5676, 4
    %v5694 = vsel %vm282, 0.0, %v5693
    %v5695 = vrot.slane %v5680, 4
    %v5696 = vsel %vm282, 0.0, %v5695
    %v5697 = vrot.slane %v5688, 4
    %v5698 = vsel %vm282, 0.0, %v5697
    %v5699 = vrot.slane %v5692, 4
    %v5700 = vsel %vm282, 0.0, %v5699
    %v5701 = vsel %vm282, %v5695, %v5676
    %v5703 = vunpack.c.l.s4 1983009808
    %v5704 = vunpack.c.0.s8 %v5703
    %v5705 = vperm.slane %v5701, %v5704
    %v5706 = vrot.slane %v5696, 4
    %v5707 = vsel %vm282, %v5706, %v5694
    %v5709 = vunpack.c.l.s4 1983009808
    %v5710 = vunpack.c.0.s8 %v5709
    %v5711 = vperm.slane %v5707, %v5710
    %v5712 = vsel %vm282, %v5699, %v5688
    %v5714 = vunpack.c.l.s4 1983009808
    %v5715 = vunpack.c.0.s8 %v5714
    %v5716 = vperm.slane %v5712, %v5715
    %v5717 = vrot.slane %v5700, 4
    %v5718 = vsel %vm282, %v5717, %v5698
    %v5720 = vunpack.c.l.s4 1983009808
    %v5721 = vunpack.c.0.s8 %v5720
    %v5722 = vperm.slane %v5718, %v5721
    %v5723 = vrot.slane %v5711, 4
    %v5724 = vsel %vm282, %v5723, %v5705
    %v5725 = vrot.slane %v5705, 4
    %v5726 = vsel %vm282, %v5711, %v5725
    %v5728 = vunpack.c.l.s4 1934713408
    %v5729 = vunpack.c.0.s8 %v5728
    %v5730 = vperm.slane %v5724, %v5729
    %v5732 = vunpack.c.l.s4 1934713408
    %v5733 = vunpack.c.0.s8 %v5732
    %v5734 = vperm.slane %v5726, %v5733
    %v5735 = vrot.slane %v5722, 4
    %v5736 = vsel %vm282, %v5735, %v5716
    %v5737 = vrot.slane %v5716, 4
    %v5738 = vsel %vm282, %v5722, %v5737
    %v5740 = vunpack.c.l.s4 1934713408
    %v5741 = vunpack.c.0.s8 %v5740
    %v5742 = vperm.slane %v5736, %v5741
    %v5744 = vunpack.c.l.s4 1934713408
    %v5745 = vunpack.c.0.s8 %v5744
    %v5746 = vperm.slane %v5738, %v5745
    %v5747 = vrot.slane %v5742, 4
    %v5748 = vsel %vm282, %v5747, %v5730
    %v5749 = vrot.slane %v5730, 4
    %v5750 = vsel %vm282, %v5742, %v5749
    %v5751 = vrot.slane %v5746, 4
    %v5752 = vsel %vm282, %v5751, %v5734
    %v5753 = vrot.slane %v5734, 4
    %v5754 = vsel %vm282, %v5746, %v5753
    %5756 = vrot.lane.b32.xlu0 %v5750, 8
    %v5757 = vpop.permute.xlu0 %5756
    %5760 = vrot.lane.b32.xlu0 %v5752, 16
    %v5761 = vpop.permute.xlu0 %5760
    %5764 = vrot.lane.b32.xlu0 %v5754, 24
    %v5765 = vpop.permute.xlu0 %5764
    %v5767 = vsel %vm632, %v5748, %v5757
    %v5768 = vsel %vm1004, %v5767, %v5761
    %v5769 = vsel %vm1006, %v5768, %v5765
    %v5770 = vperm.slane %v4135, 1
    %v5772 = vsel %vm111, %v5036, 0
    %v5775 = vsel %vm111, %v5769, 0
    %5777 = vmatpush.msra.mxu0 0.0
    %5778 = vmatpush.msra.mxu0 0.0
    %5779 = vmatpush.msra.mxu0 0.0
    %5780 = vmatpush.msra.mxu0 0.0
    %5781 = vmatpush.msra.mxu0 0.0
    %5782 = vmatpush.msra.mxu0 0.0
    %5783 = vmatpush.msra.mxu0 0.0
    %5784 = vmatpush.msra.mxu0 0.0
    %5785 = vmatpush.msra.mxu0 0.0
    %5786 = vmatpush.msra.mxu0 0.0
    %5787 = vmatpush.msra.mxu0 0.0
    %5788 = vmatpush.msra.mxu0 0.0
    %5789 = vmatpush.msra.mxu0 %v4116
    %5790 = vmatpush.msra.mxu0 %v4115
    %5791 = vmatpush.msra.mxu0 %v4114
    %5792 = vmatpush.msra.mxu0 %v4113
    %5793 = vmatmul.f32.gmra.mxu0 %v5772
    %v5794 = vpop.f32.mrf.mxu0
    %v5795 = vadd.f32 %v5770, %v5794
    %5796 = vmatmul.f32.gmra.mxu0 %v5775
    %v5797 = vpop.f32.mrf.mxu0
    %v5798 = vadd.f32 %v5770, %v5797
    %5799 = vdwg.mxu0
    %v5800 = vadd.f32 %v4098, %v5795
    %v5801 = vadd.f32 %v4099, %v5798
    %v5802 = vsel %vm111, %v5800, 0.0
    %5803 = vadd.xlane.f32.xlu0 %v5802
    %v5804 = vpop.xlane.xlu0 %5803
    %v5805 = vsel %vm111, %v5801, 0.0
    %5806 = vadd.xlane.f32.xlu0 %v5805
    %v5807 = vpop.xlane.xlu0 %5806
    %v5808 = vmul.f32 %v5804, %v124
    %v5809 = vmul.f32 %v5807, %v124
    %v5810 = vsub.f32 %v5800, %v5808
    %v5811 = vsub.f32 %v5801, %v5809
    %v5812 = vmul.f32 %v5810, %v5810
    %v5813 = vmul.f32 %v5811, %v5811
    %v5814 = vsel %vm111, %v5812, 0.0
    %5815 = vadd.xlane.f32.xlu0 %v5814
    %v5816 = vpop.xlane.xlu0 %5815
    %v5817 = vsel %vm111, %v5813, 0.0
    %5818 = vadd.xlane.f32.xlu0 %v5817
    %v5819 = vpop.xlane.xlu0 %5818
    %v5820 = vmul.f32 %v5816, 0.032258064
    %v5821 = vmul.f32 %v5819, 0.032258064
    %v5822 = vrsqrt.pop %v5820
    %v5823 = vmul.f32 %v5822, %v5820
    %v5824 = vmul.f32 %v5823, %v5822
    %v5825 = vmul.f32 0.5, %v5824
    %v5826 = vsub.f32 1.5, %v5825
    %v5827 = vmul.f32 %v5822, %v5826
    %v5828 = vmul.f32 %v5820, %v5827
    %vm5829 = vcmp.eq.f32.partialorder %v5820, inf
    %v5830 = vsel %vm5829, %v5820, %v5828
    %vm5831 = vcmp.eq.f32.partialorder %v5820, 0.0
    %v5832 = vand.u32 %v5820, 2147483648
    %v5833 = vsel %vm5831, %v5832, %v5830
    %v5834 = vrsqrt.pop %v5821
    %v5835 = vmul.f32 %v5834, %v5821
    %v5836 = vmul.f32 %v5835, %v5834
    %v5837 = vmul.f32 0.5, %v5836
    %v5838 = vsub.f32 1.5, %v5837
    %v5839 = vmul.f32 %v5834, %v5838
    %v5840 = vmul.f32 %v5821, %v5839
    %vm5841 = vcmp.eq.f32.partialorder %v5821, inf
    %v5842 = vsel %vm5841, %v5821, %v5840
    %vm5843 = vcmp.eq.f32.partialorder %v5821, 0.0
    %v5844 = vand.u32 %v5821, 2147483648
    %v5845 = vsel %vm5843, %v5844, %v5842
    %v5846 = vadd.f32 %v5833, 1e-06
    %v5847 = vadd.f32 %v5845, 1e-06
    %v5848 = vrsqrt.pop %v5846
    %v5849 = vmul.f32 %v5848, %v5846
    %v5850 = vmul.f32 %v5849, %v5848
    %v5851 = vmul.f32 0.5, %v5850
    %v5852 = vsub.f32 1.5, %v5851
    %v5853 = vmul.f32 %v5848, %v5852
    %vm5854 = vweird.f32 %v5846
    %vm5855 = vweird.f32 %v5848
    %vm5856 = vmor %vm5854, %vm5855
    %v5857 = vsel %vm5856, %v5848, %v5853
    %v5858 = vrsqrt.pop %v5847
    %v5859 = vmul.f32 %v5858, %v5847
    %v5860 = vmul.f32 %v5859, %v5858
    %v5861 = vmul.f32 0.5, %v5860
    %v5862 = vsub.f32 1.5, %v5861
    %v5863 = vmul.f32 %v5858, %v5862
    %vm5864 = vweird.f32 %v5847
    %vm5865 = vweird.f32 %v5858
    %vm5866 = vmor %vm5864, %vm5865
    %v5867 = vsel %vm5866, %v5858, %v5863
    %v5868 = vmul.f32 %v5810, %v5857
    %v5869 = vmul.f32 %v5811, %v5867
    %v5870 = vperm.slane %v4134, 2
    %v5871 = vmul.f32 %v5870, %v5868
    %v5872 = vmul.f32 %v5870, %v5869
    %v5873 = vperm.slane %v4134, 3
    %v5874 = vadd.f32 %v5871, %v5873
    %v5875 = vadd.f32 %v5872, %v5873
    %v5876 = vperm.slane %v4135, 2
    %v5878 = vsel %vm111, %v5874, 0
    %v5881 = vsel %vm111, %v5875, 0
    %5883 = vmatpush.msra.mxu0 0.0
    %5884 = vmatpush.msra.mxu0 0.0
    %5885 = vmatpush.msra.mxu0 0.0
    %5886 = vmatpush.msra.mxu0 0.0
    %5887 = vmatpush.msra.mxu0 0.0
    %5888 = vmatpush.msra.mxu0 0.0
    %5889 = vmatpush.msra.mxu0 0.0
    %5890 = vmatpush.msra.mxu0 0.0
    %5891 = vmatpush.msra.mxu0 0.0
    %5892 = vmatpush.msra.mxu0 0.0
    %5893 = vmatpush.msra.mxu0 0.0
    %5894 = vmatpush.msra.mxu0 0.0
    %5895 = vmatpush.msra.mxu0 %v4120
    %5896 = vmatpush.msra.mxu0 %v4119
    %5897 = vmatpush.msra.mxu0 %v4118
    %5898 = vmatpush.msra.mxu0 %v4117
    %5899 = vmatmul.f32.gmra.mxu0 %v5878
    %v5900 = vpop.f32.mrf.mxu0
    %v5901 = vadd.f32 %v5876, %v5900
    %5902 = vmatmul.f32.gmra.mxu0 %v5881
    %v5903 = vpop.f32.mrf.mxu0
    %v5904 = vadd.f32 %v5876, %v5903
    %5905 = vdwg.mxu0
    %v5906 = vperm.slane %v4135, 3
    %5907 = vmatpush.msra.mxu0 0.0
    %5908 = vmatpush.msra.mxu0 0.0
    %5909 = vmatpush.msra.mxu0 0.0
    %5910 = vmatpush.msra.mxu0 0.0
    %5911 = vmatpush.msra.mxu0 0.0
    %5912 = vmatpush.msra.mxu0 0.0
    %5913 = vmatpush.msra.mxu0 0.0
    %5914 = vmatpush.msra.mxu0 0.0
    %5915 = vmatpush.msra.mxu0 0.0
    %5916 = vmatpush.msra.mxu0 0.0
    %5917 = vmatpush.msra.mxu0 0.0
    %5918 = vmatpush.msra.mxu0 0.0
    %5919 = vmatpush.msra.mxu0 %v4124
    %5920 = vmatpush.msra.mxu0 %v4123
    %5921 = vmatpush.msra.mxu0 %v4122
    %5922 = vmatpush.msra.mxu0 %v4121
    %5923 = vmatmul.f32.gmra.mxu0 %v1879
    %v5924 = vpop.f32.mrf.mxu0
    %v5925 = vadd.f32 %v5906, %v5924
    %5926 = vmatmul.f32.gmra.mxu0 %v1882
    %v5927 = vpop.f32.mrf.mxu0
    %v5928 = vadd.f32 %v5906, %v5927
    %5929 = vmatmul.f32.gmra.mxu0 %v1885
    %v5930 = vpop.f32.mrf.mxu0
    %v5931 = vadd.f32 %v5906, %v5930
    %5932 = vmatmul.f32.gmra.mxu0 %v1888
    %v5933 = vpop.f32.mrf.mxu0
    %v5934 = vadd.f32 %v5906, %v5933
    %5935 = vdwg.mxu0
    %v5936 = vperm.slane %v4135, 4
    %5937 = vmatpush.msra.mxu0 0.0
    %5938 = vmatpush.msra.mxu0 0.0
    %5939 = vmatpush.msra.mxu0 0.0
    %5940 = vmatpush.msra.mxu0 0.0
    %5941 = vmatpush.msra.mxu0 0.0
    %5942 = vmatpush.msra.mxu0 0.0
    %5943 = vmatpush.msra.mxu0 0.0
    %5944 = vmatpush.msra.mxu0 0.0
    %5945 = vmatpush.msra.mxu0 0.0
    %5946 = vmatpush.msra.mxu0 0.0
    %5947 = vmatpush.msra.mxu0 0.0
    %5948 = vmatpush.msra.mxu0 0.0
    %5949 = vmatpush.msra.mxu0 %v4128
    %5950 = vmatpush.msra.mxu0 %v4127
    %5951 = vmatpush.msra.mxu0 %v4126
    %5952 = vmatpush.msra.mxu0 %v4125
    %5953 = vmatmul.f32.gmra.mxu0 %v1879
    %v5954 = vpop.f32.mrf.mxu0
    %v5955 = vadd.f32 %v5936, %v5954
    %5956 = vmatmul.f32.gmra.mxu0 %v1882
    %v5957 = vpop.f32.mrf.mxu0
    %v5958 = vadd.f32 %v5936, %v5957
    %5959 = vmatmul.f32.gmra.mxu0 %v1885
    %v5960 = vpop.f32.mrf.mxu0
    %v5961 = vadd.f32 %v5936, %v5960
    %5962 = vmatmul.f32.gmra.mxu0 %v1888
    %v5963 = vpop.f32.mrf.mxu0
    %v5964 = vadd.f32 %v5936, %v5963
    %5965 = vdwg.mxu0
    %5967 = vrot.lane.b32.xlu0 %v5901, 120
    %v5968 = vpop.permute.xlu0 %5967
    %5970 = vrot.lane.b32.xlu0 %v5901, 112
    %v5971 = vpop.permute.xlu0 %5970
    %5973 = vrot.lane.b32.xlu0 %v5901, 104
    %v5974 = vpop.permute.xlu0 %5973
    %v5976 = vrot.slane %v5971, 4
    %v5977 = vsel %vm282, %v5976, %v5901
    %v5978 = vrot.slane %v5901, 4
    %v5979 = vsel %vm282, %v5971, %v5978
    %v5981 = vunpack.c.l.s4 1983009808
    %v5982 = vunpack.c.0.s8 %v5981
    %v5983 = vperm.slane %v5977, %v5982
    %v5985 = vunpack.c.l.s4 1983009808
    %v5986 = vunpack.c.0.s8 %v5985
    %v5987 = vperm.slane %v5979, %v5986
    %v5988 = vrot.slane %v5974, 4
    %v5989 = vsel %vm282, %v5988, %v5968
    %v5990 = vrot.slane %v5968, 4
    %v5991 = vsel %vm282, %v5974, %v5990
    %v5993 = vunpack.c.l.s4 1983009808
    %v5994 = vunpack.c.0.s8 %v5993
    %v5995 = vperm.slane %v5989, %v5994
    %v5997 = vunpack.c.l.s4 1983009808
    %v5998 = vunpack.c.0.s8 %v5997
    %v5999 = vperm.slane %v5991, %v5998
    %v6000 = vrot.slane %v5995, 4
    %v6001 = vsel %vm282, %v6000, %v5983
    %v6002 = vrot.slane %v5983, 4
    %v6003 = vsel %vm282, %v5995, %v6002
    %v6005 = vunpack.c.l.s4 1934713408
    %v6006 = vunpack.c.0.s8 %v6005
    %v6007 = vperm.slane %v6001, %v6006
    %v6009 = vunpack.c.l.s4 1934713408
    %v6010 = vunpack.c.0.s8 %v6009
    %v6011 = vperm.slane %v6003, %v6010
    %v6012 = vrot.slane %v5999, 4
    %v6013 = vsel %vm282, %v6012, %v5987
    %v6014 = vrot.slane %v5987, 4
    %v6015 = vsel %vm282, %v5999, %v6014
    %v6017 = vunpack.c.l.s4 1934713408
    %v6018 = vunpack.c.0.s8 %v6017
    %v6019 = vperm.slane %v6013, %v6018
    %v6021 = vunpack.c.l.s4 1934713408
    %v6022 = vunpack.c.0.s8 %v6021
    %v6023 = vperm.slane %v6015, %v6022
    %v6024 = vrot.slane %v6007, 4
    %v6025 = vsel %vm282, 0.0, %v6024
    %v6026 = vrot.slane %v6011, 4
    %v6027 = vsel %vm282, 0.0, %v6026
    %v6028 = vrot.slane %v6019, 4
    %v6029 = vsel %vm282, 0.0, %v6028
    %v6030 = vrot.slane %v6023, 4
    %v6031 = vsel %vm282, 0.0, %v6030
    %v6032 = vsel %vm282, %v6026, %v6007
    %v6034 = vunpack.c.l.s4 1983009808
    %v6035 = vunpack.c.0.s8 %v6034
    %v6036 = vperm.slane %v6032, %v6035
    %v6037 = vrot.slane %v6027, 4
    %v6038 = vsel %vm282, %v6037, %v6025
    %v6040 = vunpack.c.l.s4 1983009808
    %v6041 = vunpack.c.0.s8 %v6040
    %v6042 = vperm.slane %v6038, %v6041
    %v6043 = vsel %vm282, %v6030, %v6019
    %v6045 = vunpack.c.l.s4 1983009808
    %v6046 = vunpack.c.0.s8 %v6045
    %v6047 = vperm.slane %v6043, %v6046
    %v6048 = vrot.slane %v6031, 4
    %v6049 = vsel %vm282, %v6048, %v6029
    %v6051 = vunpack.c.l.s4 1983009808
    %v6052 = vunpack.c.0.s8 %v6051
    %v6053 = vperm.slane %v6049, %v6052
    %v6054 = vrot.slane %v6042, 4
    %v6055 = vsel %vm282, %v6054, %v6036
    %v6056 = vrot.slane %v6036, 4
    %v6057 = vsel %vm282, %v6042, %v6056
    %v6059 = vunpack.c.l.s4 1934713408
    %v6060 = vunpack.c.0.s8 %v6059
    %v6061 = vperm.slane %v6055, %v6060
    %v6063 = vunpack.c.l.s4 1934713408
    %v6064 = vunpack.c.0.s8 %v6063
    %v6065 = vperm.slane %v6057, %v6064
    %v6066 = vrot.slane %v6053, 4
    %v6067 = vsel %vm282, %v6066, %v6047
    %v6068 = vrot.slane %v6047, 4
    %v6069 = vsel %vm282, %v6053, %v6068
    %v6071 = vunpack.c.l.s4 1934713408
    %v6072 = vunpack.c.0.s8 %v6071
    %v6073 = vperm.slane %v6067, %v6072
    %v6075 = vunpack.c.l.s4 1934713408
    %v6076 = vunpack.c.0.s8 %v6075
    %v6077 = vperm.slane %v6069, %v6076
    %v6078 = vrot.slane %v6073, 4
    %v6079 = vsel %vm282, %v6078, %v6061
    %v6080 = vrot.slane %v6061, 4
    %v6081 = vsel %vm282, %v6073, %v6080
    %v6082 = vrot.slane %v6077, 4
    %v6083 = vsel %vm282, %v6082, %v6065
    %v6084 = vrot.slane %v6065, 4
    %v6085 = vsel %vm282, %v6077, %v6084
    %6088 = vrot.lane.b32.xlu0 %v5925, 120
    %v6089 = vpop.permute.xlu0 %6088
    %6090 = vrot.lane.b32.xlu0 %v5928, 120
    %v6091 = vpop.permute.xlu0 %6090
    %6094 = vrot.lane.b32.xlu0 %v5925, 112
    %v6095 = vpop.permute.xlu0 %6094
    %6096 = vrot.lane.b32.xlu0 %v5928, 112
    %v6097 = vpop.permute.xlu0 %6096
    %6100 = vrot.lane.b32.xlu0 %v5925, 104
    %v6101 = vpop.permute.xlu0 %6100
    %6102 = vrot.lane.b32.xlu0 %v5928, 104
    %v6103 = vpop.permute.xlu0 %6102
    %v6106 = vrot.slane %v6095, 4
    %v6107 = vsel %vm282, %v6106, %v5925
    %v6108 = vrot.slane %v5925, 4
    %v6109 = vsel %vm282, %v6095, %v6108
    %v6111 = vunpack.c.l.s4 1983009808
    %v6112 = vunpack.c.0.s8 %v6111
    %v6113 = vperm.slane %v6107, %v6112
    %v6115 = vunpack.c.l.s4 1983009808
    %v6116 = vunpack.c.0.s8 %v6115
    %v6117 = vperm.slane %v6109, %v6116
    %v6118 = vrot.slane %v6101, 4
    %v6119 = vsel %vm282, %v6118, %v6089
    %v6120 = vrot.slane %v6089, 4
    %v6121 = vsel %vm282, %v6101, %v6120
    %v6123 = vunpack.c.l.s4 1983009808
    %v6124 = vunpack.c.0.s8 %v6123
    %v6125 = vperm.slane %v6119, %v6124
    %v6127 = vunpack.c.l.s4 1983009808
    %v6128 = vunpack.c.0.s8 %v6127
    %v6129 = vperm.slane %v6121, %v6128
    %v6130 = vrot.slane %v6125, 4
    %v6131 = vsel %vm282, %v6130, %v6113
    %v6132 = vrot.slane %v6113, 4
    %v6133 = vsel %vm282, %v6125, %v6132
    %v6135 = vunpack.c.l.s4 1934713408
    %v6136 = vunpack.c.0.s8 %v6135
    %v6137 = vperm.slane %v6131, %v6136
    %v6139 = vunpack.c.l.s4 1934713408
    %v6140 = vunpack.c.0.s8 %v6139
    %v6141 = vperm.slane %v6133, %v6140
    %v6142 = vrot.slane %v6129, 4
    %v6143 = vsel %vm282, %v6142, %v6117
    %v6144 = vrot.slane %v6117, 4
    %v6145 = vsel %vm282, %v6129, %v6144
    %v6147 = vunpack.c.l.s4 1934713408
    %v6148 = vunpack.c.0.s8 %v6147
    %v6149 = vperm.slane %v6143, %v6148
    %v6151 = vunpack.c.l.s4 1934713408
    %v6152 = vunpack.c.0.s8 %v6151
    %v6153 = vperm.slane %v6145, %v6152
    %v6154 = vrot.slane %v6137, 4
    %v6155 = vsel %vm282, 0.0, %v6154
    %v6156 = vrot.slane %v6141, 4
    %v6157 = vsel %vm282, 0.0, %v6156
    %v6158 = vrot.slane %v6149, 4
    %v6159 = vsel %vm282, 0.0, %v6158
    %v6160 = vrot.slane %v6153, 4
    %v6161 = vsel %vm282, 0.0, %v6160
    %v6162 = vrot.slane %v6097, 4
    %v6163 = vsel %vm282, %v6162, %v5928
    %v6164 = vrot.slane %v5928, 4
    %v6165 = vsel %vm282, %v6097, %v6164
    %v6167 = vunpack.c.l.s4 1983009808
    %v6168 = vunpack.c.0.s8 %v6167
    %v6169 = vperm.slane %v6163, %v6168
    %v6171 = vunpack.c.l.s4 1983009808
    %v6172 = vunpack.c.0.s8 %v6171
    %v6173 = vperm.slane %v6165, %v6172
    %v6174 = vrot.slane %v6103, 4
    %v6175 = vsel %vm282, %v6174, %v6091
    %v6176 = vrot.slane %v6091, 4
    %v6177 = vsel %vm282, %v6103, %v6176
    %v6179 = vunpack.c.l.s4 1983009808
    %v6180 = vunpack.c.0.s8 %v6179
    %v6181 = vperm.slane %v6175, %v6180
    %v6183 = vunpack.c.l.s4 1983009808
    %v6184 = vunpack.c.0.s8 %v6183
    %v6185 = vperm.slane %v6177, %v6184
    %v6186 = vrot.slane %v6181, 4
    %v6187 = vsel %vm282, %v6186, %v6169
    %v6188 = vrot.slane %v6169, 4
    %v6189 = vsel %vm282, %v6181, %v6188
    %v6191 = vunpack.c.l.s4 1934713408
    %v6192 = vunpack.c.0.s8 %v6191
    %v6193 = vperm.slane %v6187, %v6192
    %v6195 = vunpack.c.l.s4 1934713408
    %v6196 = vunpack.c.0.s8 %v6195
    %v6197 = vperm.slane %v6189, %v6196
    %v6198 = vrot.slane %v6185, 4
    %v6199 = vsel %vm282, %v6198, %v6173
    %v6200 = vrot.slane %v6173, 4
    %v6201 = vsel %vm282, %v6185, %v6200
    %v6203 = vunpack.c.l.s4 1934713408
    %v6204 = vunpack.c.0.s8 %v6203
    %v6205 = vperm.slane %v6199, %v6204
    %v6207 = vunpack.c.l.s4 1934713408
    %v6208 = vunpack.c.0.s8 %v6207
    %v6209 = vperm.slane %v6201, %v6208
    %v6210 = vrot.slane %v6193, 4
    %v6211 = vsel %vm282, 0.0, %v6210
    %v6212 = vrot.slane %v6197, 4
    %v6213 = vsel %vm282, 0.0, %v6212
    %v6214 = vrot.slane %v6205, 4
    %v6215 = vsel %vm282, 0.0, %v6214
    %v6216 = vrot.slane %v6209, 4
    %v6217 = vsel %vm282, 0.0, %v6216
    %v6218 = vsel %vm282, %v6156, %v6137
    %v6220 = vunpack.c.l.s4 1983009808
    %v6221 = vunpack.c.0.s8 %v6220
    %v6222 = vperm.slane %v6218, %v6221
    %v6223 = vrot.slane %v6157, 4
    %v6224 = vsel %vm282, %v6223, %v6155
    %v6226 = vunpack.c.l.s4 1983009808
    %v6227 = vunpack.c.0.s8 %v6226
    %v6228 = vperm.slane %v6224, %v6227
    %v6229 = vsel %vm282, %v6160, %v6149
    %v6231 = vunpack.c.l.s4 1983009808
    %v6232 = vunpack.c.0.s8 %v6231
    %v6233 = vperm.slane %v6229, %v6232
    %v6234 = vrot.slane %v6161, 4
    %v6235 = vsel %vm282, %v6234, %v6159
    %v6237 = vunpack.c.l.s4 1983009808
    %v6238 = vunpack.c.0.s8 %v6237
    %v6239 = vperm.slane %v6235, %v6238
    %v6240 = vrot.slane %v6228, 4
    %v6241 = vsel %vm282, %v6240, %v6222
    %v6242 = vrot.slane %v6222, 4
    %v6243 = vsel %vm282, %v6228, %v6242
    %v6245 = vunpack.c.l.s4 1934713408
    %v6246 = vunpack.c.0.s8 %v6245
    %v6247 = vperm.slane %v6241, %v6246
    %v6249 = vunpack.c.l.s4 1934713408
    %v6250 = vunpack.c.0.s8 %v6249
    %v6251 = vperm.slane %v6243, %v6250
    %v6252 = vrot.slane %v6239, 4
    %v6253 = vsel %vm282, %v6252, %v6233
    %v6254 = vrot.slane %v6233, 4
    %v6255 = vsel %vm282, %v6239, %v6254
    %v6257 = vunpack.c.l.s4 1934713408
    %v6258 = vunpack.c.0.s8 %v6257
    %v6259 = vperm.slane %v6253, %v6258
    %v6261 = vunpack.c.l.s4 1934713408
    %v6262 = vunpack.c.0.s8 %v6261
    %v6263 = vperm.slane %v6255, %v6262
    %v6264 = vrot.slane %v6259, 4
    %v6265 = vsel %vm282, %v6264, %v6247
    %v6266 = vrot.slane %v6247, 4
    %v6267 = vsel %vm282, %v6259, %v6266
    %v6268 = vrot.slane %v6263, 4
    %v6269 = vsel %vm282, %v6268, %v6251
    %v6270 = vrot.slane %v6251, 4
    %v6271 = vsel %vm282, %v6263, %v6270
    %v6272 = vsel %vm282, %v6212, %v6193
    %v6274 = vunpack.c.l.s4 1983009808
    %v6275 = vunpack.c.0.s8 %v6274
    %v6276 = vperm.slane %v6272, %v6275
    %v6277 = vrot.slane %v6213, 4
    %v6278 = vsel %vm282, %v6277, %v6211
    %v6280 = vunpack.c.l.s4 1983009808
    %v6281 = vunpack.c.0.s8 %v6280
    %v6282 = vperm.slane %v6278, %v6281
    %v6283 = vsel %vm282, %v6216, %v6205
    %v6285 = vunpack.c.l.s4 1983009808
    %v6286 = vunpack.c.0.s8 %v6285
    %v6287 = vperm.slane %v6283, %v6286
    %v6288 = vrot.slane %v6217, 4
    %v6289 = vsel %vm282, %v6288, %v6215
    %v6291 = vunpack.c.l.s4 1983009808
    %v6292 = vunpack.c.0.s8 %v6291
    %v6293 = vperm.slane %v6289, %v6292
    %v6294 = vrot.slane %v6282, 4
    %v6295 = vsel %vm282, %v6294, %v6276
    %v6296 = vrot.slane %v6276, 4
    %v6297 = vsel %vm282, %v6282, %v6296
    %v6299 = vunpack.c.l.s4 1934713408
    %v6300 = vunpack.c.0.s8 %v6299
    %v6301 = vperm.slane %v6295, %v6300
    %v6303 = vunpack.c.l.s4 1934713408
    %v6304 = vunpack.c.0.s8 %v6303
    %v6305 = vperm.slane %v6297, %v6304
    %v6306 = vrot.slane %v6293, 4
    %v6307 = vsel %vm282, %v6306, %v6287
    %v6308 = vrot.slane %v6287, 4
    %v6309 = vsel %vm282, %v6293, %v6308
    %v6311 = vunpack.c.l.s4 1934713408
    %v6312 = vunpack.c.0.s8 %v6311
    %v6313 = vperm.slane %v6307, %v6312
    %v6315 = vunpack.c.l.s4 1934713408
    %v6316 = vunpack.c.0.s8 %v6315
    %v6317 = vperm.slane %v6309, %v6316
    %v6318 = vrot.slane %v6313, 4
    %v6319 = vsel %vm282, %v6318, %v6301
    %v6320 = vrot.slane %v6301, 4
    %v6321 = vsel %vm282, %v6313, %v6320
    %v6322 = vrot.slane %v6317, 4
    %v6323 = vsel %vm282, %v6322, %v6305
    %v6324 = vrot.slane %v6305, 4
    %v6325 = vsel %vm282, %v6317, %v6324
    %6328 = vrot.lane.b32.xlu0 %v5955, 120
    %v6329 = vpop.permute.xlu0 %6328
    %6330 = vrot.lane.b32.xlu0 %v5958, 120
    %v6331 = vpop.permute.xlu0 %6330
    %6334 = vrot.lane.b32.xlu0 %v5955, 112
    %v6335 = vpop.permute.xlu0 %6334
    %6336 = vrot.lane.b32.xlu0 %v5958, 112
    %v6337 = vpop.permute.xlu0 %6336
    %6340 = vrot.lane.b32.xlu0 %v5955, 104
    %v6341 = vpop.permute.xlu0 %6340
    %6342 = vrot.lane.b32.xlu0 %v5958, 104
    %v6343 = vpop.permute.xlu0 %6342
    %v6346 = vrot.slane %v6335, 4
    %v6347 = vsel %vm282, %v6346, %v5955
    %v6348 = vrot.slane %v5955, 4
    %v6349 = vsel %vm282, %v6335, %v6348
    %v6351 = vunpack.c.l.s4 1983009808
    %v6352 = vunpack.c.0.s8 %v6351
    %v6353 = vperm.slane %v6347, %v6352
    %v6355 = vunpack.c.l.s4 1983009808
    %v6356 = vunpack.c.0.s8 %v6355
    %v6357 = vperm.slane %v6349, %v6356
    %v6358 = vrot.slane %v6341, 4
    %v6359 = vsel %vm282, %v6358, %v6329
    %v6360 = vrot.slane %v6329, 4
    %v6361 = vsel %vm282, %v6341, %v6360
    %v6363 = vunpack.c.l.s4 1983009808
    %v6364 = vunpack.c.0.s8 %v6363
    %v6365 = vperm.slane %v6359, %v6364
    %v6367 = vunpack.c.l.s4 1983009808
    %v6368 = vunpack.c.0.s8 %v6367
    %v6369 = vperm.slane %v6361, %v6368
    %v6370 = vrot.slane %v6365, 4
    %v6371 = vsel %vm282, %v6370, %v6353
    %v6372 = vrot.slane %v6353, 4
    %v6373 = vsel %vm282, %v6365, %v6372
    %v6375 = vunpack.c.l.s4 1934713408
    %v6376 = vunpack.c.0.s8 %v6375
    %v6377 = vperm.slane %v6371, %v6376
    %v6379 = vunpack.c.l.s4 1934713408
    %v6380 = vunpack.c.0.s8 %v6379
    %v6381 = vperm.slane %v6373, %v6380
    %v6382 = vrot.slane %v6369, 4
    %v6383 = vsel %vm282, %v6382, %v6357
    %v6384 = vrot.slane %v6357, 4
    %v6385 = vsel %vm282, %v6369, %v6384
    %v6387 = vunpack.c.l.s4 1934713408
    %v6388 = vunpack.c.0.s8 %v6387
    %v6389 = vperm.slane %v6383, %v6388
    %v6391 = vunpack.c.l.s4 1934713408
    %v6392 = vunpack.c.0.s8 %v6391
    %v6393 = vperm.slane %v6385, %v6392
    %v6394 = vrot.slane %v6377, 4
    %v6395 = vsel %vm282, 0.0, %v6394
    %v6396 = vrot.slane %v6381, 4
    %v6397 = vsel %vm282, 0.0, %v6396
    %v6398 = vrot.slane %v6389, 4
    %v6399 = vsel %vm282, 0.0, %v6398
    %v6400 = vrot.slane %v6393, 4
    %v6401 = vsel %vm282, 0.0, %v6400
    %v6402 = vrot.slane %v6337, 4
    %v6403 = vsel %vm282, %v6402, %v5958
    %v6404 = vrot.slane %v5958, 4
    %v6405 = vsel %vm282, %v6337, %v6404
    %v6407 = vunpack.c.l.s4 1983009808
    %v6408 = vunpack.c.0.s8 %v6407
    %v6409 = vperm.slane %v6403, %v6408
    %v6411 = vunpack.c.l.s4 1983009808
    %v6412 = vunpack.c.0.s8 %v6411
    %v6413 = vperm.slane %v6405, %v6412
    %v6414 = vrot.slane %v6343, 4
    %v6415 = vsel %vm282, %v6414, %v6331
    %v6416 = vrot.slane %v6331, 4
    %v6417 = vsel %vm282, %v6343, %v6416
    %v6419 = vunpack.c.l.s4 1983009808
    %v6420 = vunpack.c.0.s8 %v6419
    %v6421 = vperm.slane %v6415, %v6420
    %v6423 = vunpack.c.l.s4 1983009808
    %v6424 = vunpack.c.0.s8 %v6423
    %v6425 = vperm.slane %v6417, %v6424
    %v6426 = vrot.slane %v6421, 4
    %v6427 = vsel %vm282, %v6426, %v6409
    %v6428 = vrot.slane %v6409, 4
    %v6429 = vsel %vm282, %v6421, %v6428
    %v6431 = vunpack.c.l.s4 1934713408
    %v6432 = vunpack.c.0.s8 %v6431
    %v6433 = vperm.slane %v6427, %v6432
    %v6435 = vunpack.c.l.s4 1934713408
    %v6436 = vunpack.c.0.s8 %v6435
    %v6437 = vperm.slane %v6429, %v6436
    %v6438 = vrot.slane %v6425, 4
    %v6439 = vsel %vm282, %v6438, %v6413
    %v6440 = vrot.slane %v6413, 4
    %v6441 = vsel %vm282, %v6425, %v6440
    %v6443 = vunpack.c.l.s4 1934713408
    %v6444 = vunpack.c.0.s8 %v6443
    %v6445 = vperm.slane %v6439, %v6444
    %v6447 = vunpack.c.l.s4 1934713408
    %v6448 = vunpack.c.0.s8 %v6447
    %v6449 = vperm.slane %v6441, %v6448
    %v6450 = vrot.slane %v6433, 4
    %v6451 = vsel %vm282, 0.0, %v6450
    %v6452 = vrot.slane %v6437, 4
    %v6453 = vsel %vm282, 0.0, %v6452
    %v6454 = vrot.slane %v6445, 4
    %v6455 = vsel %vm282, 0.0, %v6454
    %v6456 = vrot.slane %v6449, 4
    %v6457 = vsel %vm282, 0.0, %v6456
    %v6458 = vsel %vm282, %v6396, %v6377
    %v6460 = vunpack.c.l.s4 1983009808
    %v6461 = vunpack.c.0.s8 %v6460
    %v6462 = vperm.slane %v6458, %v6461
    %v6463 = vrot.slane %v6397, 4
    %v6464 = vsel %vm282, %v6463, %v6395
    %v6466 = vunpack.c.l.s4 1983009808
    %v6467 = vunpack.c.0.s8 %v6466
    %v6468 = vperm.slane %v6464, %v6467
    %v6469 = vsel %vm282, %v6400, %v6389
    %v6471 = vunpack.c.l.s4 1983009808
    %v6472 = vunpack.c.0.s8 %v6471
    %v6473 = vperm.slane %v6469, %v6472
    %v6474 = vrot.slane %v6401, 4
    %v6475 = vsel %vm282, %v6474, %v6399
    %v6477 = vunpack.c.l.s4 1983009808
    %v6478 = vunpack.c.0.s8 %v6477
    %v6479 = vperm.slane %v6475, %v6478
    %v6480 = vrot.slane %v6468, 4
    %v6481 = vsel %vm282, %v6480, %v6462
    %v6482 = vrot.slane %v6462, 4
    %v6483 = vsel %vm282, %v6468, %v6482
    %v6485 = vunpack.c.l.s4 1934713408
    %v6486 = vunpack.c.0.s8 %v6485
    %v6487 = vperm.slane %v6481, %v6486
    %v6489 = vunpack.c.l.s4 1934713408
    %v6490 = vunpack.c.0.s8 %v6489
    %v6491 = vperm.slane %v6483, %v6490
    %v6492 = vrot.slane %v6479, 4
    %v6493 = vsel %vm282, %v6492, %v6473
    %v6494 = vrot.slane %v6473, 4
    %v6495 = vsel %vm282, %v6479, %v6494
    %v6497 = vunpack.c.l.s4 1934713408
    %v6498 = vunpack.c.0.s8 %v6497
    %v6499 = vperm.slane %v6493, %v6498
    %v6501 = vunpack.c.l.s4 1934713408
    %v6502 = vunpack.c.0.s8 %v6501
    %v6503 = vperm.slane %v6495, %v6502
    %v6504 = vrot.slane %v6499, 4
    %v6505 = vsel %vm282, %v6504, %v6487
    %v6506 = vrot.slane %v6487, 4
    %v6507 = vsel %vm282, %v6499, %v6506
    %v6508 = vrot.slane %v6503, 4
    %v6509 = vsel %vm282, %v6508, %v6491
    %v6510 = vrot.slane %v6491, 4
    %v6511 = vsel %vm282, %v6503, %v6510
    %v6512 = vsel %vm282, %v6452, %v6433
    %v6514 = vunpack.c.l.s4 1983009808
    %v6515 = vunpack.c.0.s8 %v6514
    %v6516 = vperm.slane %v6512, %v6515
    %v6517 = vrot.slane %v6453, 4
    %v6518 = vsel %vm282, %v6517, %v6451
    %v6520 = vunpack.c.l.s4 1983009808
    %v6521 = vunpack.c.0.s8 %v6520
    %v6522 = vperm.slane %v6518, %v6521
    %v6523 = vsel %vm282, %v6456, %v6445
    %v6525 = vunpack.c.l.s4 1983009808
    %v6526 = vunpack.c.0.s8 %v6525
    %v6527 = vperm.slane %v6523, %v6526
    %v6528 = vrot.slane %v6457, 4
    %v6529 = vsel %vm282, %v6528, %v6455
    %v6531 = vunpack.c.l.s4 1983009808
    %v6532 = vunpack.c.0.s8 %v6531
    %v6533 = vperm.slane %v6529, %v6532
    %v6534 = vrot.slane %v6522, 4
    %v6535 = vsel %vm282, %v6534, %v6516
    %v6536 = vrot.slane %v6516, 4
    %v6537 = vsel %vm282, %v6522, %v6536
    %v6539 = vunpack.c.l.s4 1934713408
    %v6540 = vunpack.c.0.s8 %v6539
    %v6541 = vperm.slane %v6535, %v6540
    %v6543 = vunpack.c.l.s4 1934713408
    %v6544 = vunpack.c.0.s8 %v6543
    %v6545 = vperm.slane %v6537, %v6544
    %v6546 = vrot.slane %v6533, 4
    %v6547 = vsel %vm282, %v6546, %v6527
    %v6548 = vrot.slane %v6527, 4
    %v6549 = vsel %vm282, %v6533, %v6548
    %v6551 = vunpack.c.l.s4 1934713408
    %v6552 = vunpack.c.0.s8 %v6551
    %v6553 = vperm.slane %v6547, %v6552
    %v6555 = vunpack.c.l.s4 1934713408
    %v6556 = vunpack.c.0.s8 %v6555
    %v6557 = vperm.slane %v6549, %v6556
    %v6558 = vrot.slane %v6553, 4
    %v6559 = vsel %vm282, %v6558, %v6541
    %v6560 = vrot.slane %v6541, 4
    %v6561 = vsel %vm282, %v6553, %v6560
    %v6562 = vrot.slane %v6557, 4
    %v6563 = vsel %vm282, %v6562, %v6545
    %v6564 = vrot.slane %v6545, 4
    %v6565 = vsel %vm282, %v6557, %v6564
    %v6567 = vsel %vm632, %v6079, 0
    %v6570 = vsel %vm632, %v6265, 0
    %v6573 = vsel %vm632, %v6319, 0
    %6575 = vmatpush.xpose.msra.mxu0 0.0
    %6576 = vmatpush.xpose.msra.mxu0 0.0
    %6577 = vmatpush.xpose.msra.mxu0 0.0
    %6578 = vmatpush.xpose.msra.mxu0 0.0
    %6579 = vmatpush.xpose.msra.mxu0 0.0
    %6580 = vmatpush.xpose.msra.mxu0 0.0
    %6581 = vmatpush.xpose.msra.mxu0 0.0
    %6582 = vmatpush.xpose.msra.mxu0 0.0
    %6583 = vmatpush.xpose.msra.mxu0 0.0
    %6584 = vmatpush.xpose.msra.mxu0 0.0
    %6585 = vmatpush.xpose.msra.mxu0 0.0
    %6586 = vmatpush.xpose.msra.mxu0 0.0
    %6587 = vmatpush.xpose.msra.mxu0 0.0
    %6588 = vmatpush.xpose.msra.mxu0 0.0
    %6589 = vmatpush.xpose.msra.mxu0 %v6573
    %6590 = vmatpush.xpose.msra.mxu0 %v6570
    %6591 = vmatmul.f32.gmra.mxu0 %v6567
    %v6592 = vpop.f32.mrf.mxu0
    %v6593 = vadd.f32 0.0, %v6592
    %6594 = vdwg.mxu0
    %v6596 = vsel %vm632, %v6081, 0
    %v6599 = vsel %vm632, %v6267, 0
    %v6602 = vsel %vm632, %v6321, 0
    %6604 = vmatpush.xpose.msra.mxu0 0.0
    %6605 = vmatpush.xpose.msra.mxu0 0.0
    %6606 = vmatpush.xpose.msra.mxu0 0.0
    %6607 = vmatpush.xpose.msra.mxu0 0.0
    %6608 = vmatpush.xpose.msra.mxu0 0.0
    %6609 = vmatpush.xpose.msra.mxu0 0.0
    %6610 = vmatpush.xpose.msra.mxu0 0.0
    %6611 = vmatpush.xpose.msra.mxu0 0.0
    %6612 = vmatpush.xpose.msra.mxu0 0.0
    %6613 = vmatpush.xpose.msra.mxu0 0.0
    %6614 = vmatpush.xpose.msra.mxu0 0.0
    %6615 = vmatpush.xpose.msra.mxu0 0.0
    %6616 = vmatpush.xpose.msra.mxu0 0.0
    %6617 = vmatpush.xpose.msra.mxu0 0.0
    %6618 = vmatpush.xpose.msra.mxu0 %v6602
    %6619 = vmatpush.xpose.msra.mxu0 %v6599
    %6620 = vmatmul.f32.gmra.mxu0 %v6596
    %v6621 = vpop.f32.mrf.mxu0
    %v6622 = vadd.f32 0.0, %v6621
    %6623 = vdwg.mxu0
    %v6625 = vsel %vm632, %v6083, 0
    %v6628 = vsel %vm632, %v6269, 0
    %v6631 = vsel %vm632, %v6323, 0
    %6633 = vmatpush.xpose.msra.mxu0 0.0
    %6634 = vmatpush.xpose.msra.mxu0 0.0
    %6635 = vmatpush.xpose.msra.mxu0 0.0
    %6636 = vmatpush.xpose.msra.mxu0 0.0
    %6637 = vmatpush.xpose.msra.mxu0 0.0
    %6638 = vmatpush.xpose.msra.mxu0 0.0
    %6639 = vmatpush.xpose.msra.mxu0 0.0
    %6640 = vmatpush.xpose.msra.mxu0 0.0
    %6641 = vmatpush.xpose.msra.mxu0 0.0
    %6642 = vmatpush.xpose.msra.mxu0 0.0
    %6643 = vmatpush.xpose.msra.mxu0 0.0
    %6644 = vmatpush.xpose.msra.mxu0 0.0
    %6645 = vmatpush.xpose.msra.mxu0 0.0
    %6646 = vmatpush.xpose.msra.mxu0 0.0
    %6647 = vmatpush.xpose.msra.mxu0 %v6631
    %6648 = vmatpush.xpose.msra.mxu0 %v6628
    %6649 = vmatmul.f32.gmra.mxu0 %v6625
    %v6650 = vpop.f32.mrf.mxu0
    %v6651 = vadd.f32 0.0, %v6650
    %6652 = vdwg.mxu0
    %v6654 = vsel %vm632, %v6085, 0
    %v6657 = vsel %vm632, %v6271, 0
    %v6660 = vsel %vm632, %v6325, 0
    %6662 = vmatpush.xpose.msra.mxu0 0.0
    %6663 = vmatpush.xpose.msra.mxu0 0.0
    %6664 = vmatpush.xpose.msra.mxu0 0.0
    %6665 = vmatpush.xpose.msra.mxu0 0.0
    %6666 = vmatpush.xpose.msra.mxu0 0.0
    %6667 = vmatpush.xpose.msra.mxu0 0.0
    %6668 = vmatpush.xpose.msra.mxu0 0.0
    %6669 = vmatpush.xpose.msra.mxu0 0.0
    %6670 = vmatpush.xpose.msra.mxu0 0.0
    %6671 = vmatpush.xpose.msra.mxu0 0.0
    %6672 = vmatpush.xpose.msra.mxu0 0.0
    %6673 = vmatpush.xpose.msra.mxu0 0.0
    %6674 = vmatpush.xpose.msra.mxu0 0.0
    %6675 = vmatpush.xpose.msra.mxu0 0.0
    %6676 = vmatpush.xpose.msra.mxu0 %v6660
    %6677 = vmatpush.xpose.msra.mxu0 %v6657
    %6678 = vmatmul.f32.gmra.mxu0 %v6654
    %v6679 = vpop.f32.mrf.mxu0
    %v6680 = vadd.f32 0.0, %v6679
    %6681 = vdwg.mxu0
    %v6682 = vmul.f32 %v6593, 0.35355338
    %v6683 = vmul.f32 %v6622, 0.35355338
    %v6684 = vmul.f32 %v6651, 0.35355338
    %v6685 = vmul.f32 %v6680, 0.35355338
    %v6686 = vadd.f32 %v6682, %v2670
    %v6687 = vadd.f32 %v6683, %v2670
    %v6688 = vadd.f32 %v6684, %v2670
    %v6689 = vadd.f32 %v6685, %v2670
    %v6690 = vsel %vm1004, %v6686, -inf
    %6691 = vmax.xlane.f32.xlu0 %v6690
    %v6692 = vpop.xlane.xlu0 %6691
    %v6693 = vsel %vm1004, %v6687, -inf
    %6694 = vmax.xlane.f32.xlu0 %v6693
    %v6695 = vpop.xlane.xlu0 %6694
    %v6696 = vsel %vm1004, %v6688, -inf
    %6697 = vmax.xlane.f32.xlu0 %v6696
    %v6698 = vpop.xlane.xlu0 %6697
    %v6699 = vsel %vm1004, %v6689, -inf
    %6700 = vmax.xlane.f32.xlu0 %v6699
    %v6701 = vpop.xlane.xlu0 %6700
    %v6702 = vsub.f32 %v6686, %v6692
    %v6703 = vsub.f32 %v6687, %v6695
    %v6704 = vsub.f32 %v6688, %v6698
    %v6705 = vsub.f32 %v6689, %v6701
    %v6706 = vmul.f32 %v6702, 1.442695
    %v6707 = vpow.pop %v6706
    %v6708 = vmul.f32 %v6703, 1.442695
    %v6709 = vpow.pop %v6708
    %v6710 = vmul.f32 %v6704, 1.442695
    %v6711 = vpow.pop %v6710
    %v6712 = vmul.f32 %v6705, 1.442695
    %v6713 = vpow.pop %v6712
    %v6714 = vsel %vm1004, %v6707, 0.0
    %6715 = vadd.xlane.f32.xlu0 %v6714
    %v6716 = vpop.xlane.xlu0 %6715
    %v6717 = vsel %vm1004, %v6709, 0.0
    %6718 = vadd.xlane.f32.xlu0 %v6717
    %v6719 = vpop.xlane.xlu0 %6718
    %v6720 = vsel %vm1004, %v6711, 0.0
    %6721 = vadd.xlane.f32.xlu0 %v6720
    %v6722 = vpop.xlane.xlu0 %6721
    %v6723 = vsel %vm1004, %v6713, 0.0
    %6724 = vadd.xlane.f32.xlu0 %v6723
    %v6725 = vpop.xlane.xlu0 %6724
    %v6726 = vrcp.pop %v6716
    %v6727 = vrcp.pop %v6719
    %v6728 = vrcp.pop %v6722
    %v6729 = vrcp.pop %v6725
    %v6730 = vmul.f32 %v6707, %v6726
    %v6731 = vmul.f32 %v6709, %v6727
    %v6732 = vmul.f32 %v6711, %v6728
    %v6733 = vmul.f32 %v6713, %v6729
    %v6735 = vsel %vm1004, %v6730, 0
    %6737 = vmatpush.msra.mxu0 0.0
    %6738 = vmatpush.msra.mxu0 0.0
    %6739 = vmatpush.msra.mxu0 0.0
    %6740 = vmatpush.msra.mxu0 0.0
    %6741 = vmatpush.msra.mxu0 0.0
    %6742 = vmatpush.msra.mxu0 0.0
    %6743 = vmatpush.msra.mxu0 0.0
    %6744 = vmatpush.msra.mxu0 0.0
    %6745 = vmatpush.msra.mxu0 0.0
    %6746 = vmatpush.msra.mxu0 0.0
    %6747 = vmatpush.msra.mxu0 0.0
    %6748 = vmatpush.msra.mxu0 0.0
    %6749 = vmatpush.msra.mxu0 0.0
    %6750 = vmatpush.msra.mxu0 0.0
    %6751 = vmatpush.msra.mxu0 %v6559
    %6752 = vmatpush.msra.mxu0 %v6505
    %6753 = vmatmul.f32.gmra.mxu0 %v6735
    %v6754 = vpop.f32.mrf.mxu0
    %v6755 = vadd.f32 0.0, %v6754
    %6756 = vdwg.mxu0
    %v6758 = vsel %vm1004, %v6731, 0
    %6760 = vmatpush.msra.mxu0 0.0
    %6761 = vmatpush.msra.mxu0 0.0
    %6762 = vmatpush.msra.mxu0 0.0
    %6763 = vmatpush.msra.mxu0 0.0
    %6764 = vmatpush.msra.mxu0 0.0
    %6765 = vmatpush.msra.mxu0 0.0
    %6766 = vmatpush.msra.mxu0 0.0
    %6767 = vmatpush.msra.mxu0 0.0
    %6768 = vmatpush.msra.mxu0 0.0
    %6769 = vmatpush.msra.mxu0 0.0
    %6770 = vmatpush.msra.mxu0 0.0
    %6771 = vmatpush.msra.mxu0 0.0
    %6772 = vmatpush.msra.mxu0 0.0
    %6773 = vmatpush.msra.mxu0 0.0
    %6774 = vmatpush.msra.mxu0 %v6561
    %6775 = vmatpush.msra.mxu0 %v6507
    %6776 = vmatmul.f32.gmra.mxu0 %v6758
    %v6777 = vpop.f32.mrf.mxu0
    %v6778 = vadd.f32 0.0, %v6777
    %6779 = vdwg.mxu0
    %v6781 = vsel %vm1004, %v6732, 0
    %6783 = vmatpush.msra.mxu0 0.0
    %6784 = vmatpush.msra.mxu0 0.0
    %6785 = vmatpush.msra.mxu0 0.0
    %6786 = vmatpush.msra.mxu0 0.0
    %6787 = vmatpush.msra.mxu0 0.0
    %6788 = vmatpush.msra.mxu0 0.0
    %6789 = vmatpush.msra.mxu0 0.0
    %6790 = vmatpush.msra.mxu0 0.0
    %6791 = vmatpush.msra.mxu0 0.0
    %6792 = vmatpush.msra.mxu0 0.0
    %6793 = vmatpush.msra.mxu0 0.0
    %6794 = vmatpush.msra.mxu0 0.0
    %6795 = vmatpush.msra.mxu0 0.0
    %6796 = vmatpush.msra.mxu0 0.0
    %6797 = vmatpush.msra.mxu0 %v6563
    %6798 = vmatpush.msra.mxu0 %v6509
    %6799 = vmatmul.f32.gmra.mxu0 %v6781
    %v6800 = vpop.f32.mrf.mxu0
    %v6801 = vadd.f32 0.0, %v6800
    %6802 = vdwg.mxu0
    %v6804 = vsel %vm1004, %v6733, 0
    %6806 = vmatpush.msra.mxu0 0.0
    %6807 = vmatpush.msra.mxu0 0.0
    %6808 = vmatpush.msra.mxu0 0.0
    %6809 = vmatpush.msra.mxu0 0.0
    %6810 = vmatpush.msra.mxu0 0.0
    %6811 = vmatpush.msra.mxu0 0.0
    %6812 = vmatpush.msra.mxu0 0.0
    %6813 = vmatpush.msra.mxu0 0.0
    %6814 = vmatpush.msra.mxu0 0.0
    %6815 = vmatpush.msra.mxu0 0.0
    %6816 = vmatpush.msra.mxu0 0.0
    %6817 = vmatpush.msra.mxu0 0.0
    %6818 = vmatpush.msra.mxu0 0.0
    %6819 = vmatpush.msra.mxu0 0.0
    %6820 = vmatpush.msra.mxu0 %v6565
    %6821 = vmatpush.msra.mxu0 %v6511
    %6822 = vmatmul.f32.gmra.mxu0 %v6804
    %v6823 = vpop.f32.mrf.mxu0
    %v6824 = vadd.f32 0.0, %v6823
    %6825 = vdwg.mxu0
    %v6826 = vrot.slane %v6801, 4
    %v6827 = vsel %vm282, %v6826, %v6755
    %v6828 = vrot.slane %v6755, 4
    %v6829 = vsel %vm282, %v6801, %v6828
    %v6831 = vunpack.c.l.s4 1983009808
    %v6832 = vunpack.c.0.s8 %v6831
    %v6833 = vperm.slane %v6827, %v6832
    %v6835 = vunpack.c.l.s4 1983009808
    %v6836 = vunpack.c.0.s8 %v6835
    %v6837 = vperm.slane %v6829, %v6836
    %v6838 = vrot.slane %v6824, 4
    %v6839 = vsel %vm282, %v6838, %v6778
    %v6840 = vrot.slane %v6778, 4
    %v6841 = vsel %vm282, %v6824, %v6840
    %v6843 = vunpack.c.l.s4 1983009808
    %v6844 = vunpack.c.0.s8 %v6843
    %v6845 = vperm.slane %v6839, %v6844
    %v6847 = vunpack.c.l.s4 1983009808
    %v6848 = vunpack.c.0.s8 %v6847
    %v6849 = vperm.slane %v6841, %v6848
    %v6850 = vrot.slane %v6845, 4
    %v6851 = vsel %vm282, %v6850, %v6833
    %v6852 = vrot.slane %v6833, 4
    %v6853 = vsel %vm282, %v6845, %v6852
    %v6855 = vunpack.c.l.s4 1934713408
    %v6856 = vunpack.c.0.s8 %v6855
    %v6857 = vperm.slane %v6851, %v6856
    %v6859 = vunpack.c.l.s4 1934713408
    %v6860 = vunpack.c.0.s8 %v6859
    %v6861 = vperm.slane %v6853, %v6860
    %v6862 = vrot.slane %v6849, 4
    %v6863 = vsel %vm282, %v6862, %v6837
    %v6864 = vrot.slane %v6837, 4
    %v6865 = vsel %vm282, %v6849, %v6864
    %v6867 = vunpack.c.l.s4 1934713408
    %v6868 = vunpack.c.0.s8 %v6867
    %v6869 = vperm.slane %v6863, %v6868
    %v6871 = vunpack.c.l.s4 1934713408
    %v6872 = vunpack.c.0.s8 %v6871
    %v6873 = vperm.slane %v6865, %v6872
    %v6874 = vrot.slane %v6857, 4
    %v6875 = vsel %vm282, 0.0, %v6874
    %v6876 = vrot.slane %v6861, 4
    %v6877 = vsel %vm282, 0.0, %v6876
    %v6878 = vrot.slane %v6869, 4
    %v6879 = vsel %vm282, 0.0, %v6878
    %v6880 = vrot.slane %v6873, 4
    %v6881 = vsel %vm282, 0.0, %v6880
    %v6882 = vsel %vm282, %v6876, %v6857
    %v6884 = vunpack.c.l.s4 1983009808
    %v6885 = vunpack.c.0.s8 %v6884
    %v6886 = vperm.slane %v6882, %v6885
    %v6887 = vrot.slane %v6877, 4
    %v6888 = vsel %vm282, %v6887, %v6875
    %v6890 = vunpack.c.l.s4 1983009808
    %v6891 = vunpack.c.0.s8 %v6890
    %v6892 = vperm.slane %v6888, %v6891
    %v6893 = vsel %vm282, %v6880, %v6869
    %v6895 = vunpack.c.l.s4 1983009808
    %v6896 = vunpack.c.0.s8 %v6895
    %v6897 = vperm.slane %v6893, %v6896
    %v6898 = vrot.slane %v6881, 4
    %v6899 = vsel %vm282, %v6898, %v6879
    %v6901 = vunpack.c.l.s4 1983009808
    %v6902 = vunpack.c.0.s8 %v6901
    %v6903 = vperm.slane %v6899, %v6902
    %v6904 = vrot.slane %v6892, 4
    %v6905 = vsel %vm282, %v6904, %v6886
    %v6906 = vrot.slane %v6886, 4
    %v6907 = vsel %vm282, %v6892, %v6906
    %v6909 = vunpack.c.l.s4 1934713408
    %v6910 = vunpack.c.0.s8 %v6909
    %v6911 = vperm.slane %v6905, %v6910
    %v6913 = vunpack.c.l.s4 1934713408
    %v6914 = vunpack.c.0.s8 %v6913
    %v6915 = vperm.slane %v6907, %v6914
    %v6916 = vrot.slane %v6903, 4
    %v6917 = vsel %vm282, %v6916, %v6897
    %v6918 = vrot.slane %v6897, 4
    %v6919 = vsel %vm282, %v6903, %v6918
    %v6921 = vunpack.c.l.s4 1934713408
    %v6922 = vunpack.c.0.s8 %v6921
    %v6923 = vperm.slane %v6917, %v6922
    %v6925 = vunpack.c.l.s4 1934713408
    %v6926 = vunpack.c.0.s8 %v6925
    %v6927 = vperm.slane %v6919, %v6926
    %v6928 = vrot.slane %v6923, 4
    %v6929 = vsel %vm282, %v6928, %v6911
    %v6930 = vrot.slane %v6911, 4
    %v6931 = vsel %vm282, %v6923, %v6930
    %v6932 = vrot.slane %v6927, 4
    %v6933 = vsel %vm282, %v6932, %v6915
    %v6934 = vrot.slane %v6915, 4
    %v6935 = vsel %vm282, %v6927, %v6934
    %6937 = vrot.lane.b32.xlu0 %v6931, 8
    %v6938 = vpop.permute.xlu0 %6937
    %6941 = vrot.lane.b32.xlu0 %v6933, 16
    %v6942 = vpop.permute.xlu0 %6941
    %6945 = vrot.lane.b32.xlu0 %v6935, 24
    %v6946 = vpop.permute.xlu0 %6945
    %v6948 = vsel %vm632, %v6929, %v6938
    %v6949 = vsel %vm1004, %v6948, %v6942
    %v6950 = vsel %vm1006, %v6949, %v6946
    %6952 = vrot.lane.b32.xlu0 %v5904, 120
    %v6953 = vpop.permute.xlu0 %6952
    %6955 = vrot.lane.b32.xlu0 %v5904, 112
    %v6956 = vpop.permute.xlu0 %6955
    %6958 = vrot.lane.b32.xlu0 %v5904, 104
    %v6959 = vpop.permute.xlu0 %6958
    %v6961 = vrot.slane %v6956, 4
    %v6962 = vsel %vm282, %v6961, %v5904
    %v6963 = vrot.slane %v5904, 4
    %v6964 = vsel %vm282, %v6956, %v6963
    %v6966 = vunpack.c.l.s4 1983009808
    %v6967 = vunpack.c.0.s8 %v6966
    %v6968 = vperm.slane %v6962, %v6967
    %v6970 = vunpack.c.l.s4 1983009808
    %v6971 = vunpack.c.0.s8 %v6970
    %v6972 = vperm.slane %v6964, %v6971
    %v6973 = vrot.slane %v6959, 4
    %v6974 = vsel %vm282, %v6973, %v6953
    %v6975 = vrot.slane %v6953, 4
    %v6976 = vsel %vm282, %v6959, %v6975
    %v6978 = vunpack.c.l.s4 1983009808
    %v6979 = vunpack.c.0.s8 %v6978
    %v6980 = vperm.slane %v6974, %v6979
    %v6982 = vunpack.c.l.s4 1983009808
    %v6983 = vunpack.c.0.s8 %v6982
    %v6984 = vperm.slane %v6976, %v6983
    %v6985 = vrot.slane %v6980, 4
    %v6986 = vsel %vm282, %v6985, %v6968
    %v6987 = vrot.slane %v6968, 4
    %v6988 = vsel %vm282, %v6980, %v6987
    %v6990 = vunpack.c.l.s4 1934713408
    %v6991 = vunpack.c.0.s8 %v6990
    %v6992 = vperm.slane %v6986, %v6991
    %v6994 = vunpack.c.l.s4 1934713408
    %v6995 = vunpack.c.0.s8 %v6994
    %v6996 = vperm.slane %v6988, %v6995
    %v6997 = vrot.slane %v6984, 4
    %v6998 = vsel %vm282, %v6997, %v6972
    %v6999 = vrot.slane %v6972, 4
    %v7000 = vsel %vm282, %v6984, %v6999
    %v7002 = vunpack.c.l.s4 1934713408
    %v7003 = vunpack.c.0.s8 %v7002
    %v7004 = vperm.slane %v6998, %v7003
    %v7006 = vunpack.c.l.s4 1934713408
    %v7007 = vunpack.c.0.s8 %v7006
    %v7008 = vperm.slane %v7000, %v7007
    %v7009 = vrot.slane %v6992, 4
    %v7010 = vsel %vm282, 0.0, %v7009
    %v7011 = vrot.slane %v6996, 4
    %v7012 = vsel %vm282, 0.0, %v7011
    %v7013 = vrot.slane %v7004, 4
    %v7014 = vsel %vm282, 0.0, %v7013
    %v7015 = vrot.slane %v7008, 4
    %v7016 = vsel %vm282, 0.0, %v7015
    %v7017 = vsel %vm282, %v7011, %v6992
    %v7019 = vunpack.c.l.s4 1983009808
    %v7020 = vunpack.c.0.s8 %v7019
    %v7021 = vperm.slane %v7017, %v7020
    %v7022 = vrot.slane %v7012, 4
    %v7023 = vsel %vm282, %v7022, %v7010
    %v7025 = vunpack.c.l.s4 1983009808
    %v7026 = vunpack.c.0.s8 %v7025
    %v7027 = vperm.slane %v7023, %v7026
    %v7028 = vsel %vm282, %v7015, %v7004
    %v7030 = vunpack.c.l.s4 1983009808
    %v7031 = vunpack.c.0.s8 %v7030
    %v7032 = vperm.slane %v7028, %v7031
    %v7033 = vrot.slane %v7016, 4
    %v7034 = vsel %vm282, %v7033, %v7014
    %v7036 = vunpack.c.l.s4 1983009808
    %v7037 = vunpack.c.0.s8 %v7036
    %v7038 = vperm.slane %v7034, %v7037
    %v7039 = vrot.slane %v7027, 4
    %v7040 = vsel %vm282, %v7039, %v7021
    %v7041 = vrot.slane %v7021, 4
    %v7042 = vsel %vm282, %v7027, %v7041
    %v7044 = vunpack.c.l.s4 1934713408
    %v7045 = vunpack.c.0.s8 %v7044
    %v7046 = vperm.slane %v7040, %v7045
    %v7048 = vunpack.c.l.s4 1934713408
    %v7049 = vunpack.c.0.s8 %v7048
    %v7050 = vperm.slane %v7042, %v7049
    %v7051 = vrot.slane %v7038, 4
    %v7052 = vsel %vm282, %v7051, %v7032
    %v7053 = vrot.slane %v7032, 4
    %v7054 = vsel %vm282, %v7038, %v7053
    %v7056 = vunpack.c.l.s4 1934713408
    %v7057 = vunpack.c.0.s8 %v7056
    %v7058 = vperm.slane %v7052, %v7057
    %v7060 = vunpack.c.l.s4 1934713408
    %v7061 = vunpack.c.0.s8 %v7060
    %v7062 = vperm.slane %v7054, %v7061
    %v7063 = vrot.slane %v7058, 4
    %v7064 = vsel %vm282, %v7063, %v7046
    %v7065 = vrot.slane %v7046, 4
    %v7066 = vsel %vm282, %v7058, %v7065
    %v7067 = vrot.slane %v7062, 4
    %v7068 = vsel %vm282, %v7067, %v7050
    %v7069 = vrot.slane %v7050, 4
    %v7070 = vsel %vm282, %v7062, %v7069
    %7073 = vrot.lane.b32.xlu0 %v5931, 120
    %v7074 = vpop.permute.xlu0 %7073
    %7075 = vrot.lane.b32.xlu0 %v5934, 120
    %v7076 = vpop.permute.xlu0 %7075
    %7079 = vrot.lane.b32.xlu0 %v5931, 112
    %v7080 = vpop.permute.xlu0 %7079
    %7081 = vrot.lane.b32.xlu0 %v5934, 112
    %v7082 = vpop.permute.xlu0 %7081
    %7085 = vrot.lane.b32.xlu0 %v5931, 104
    %v7086 = vpop.permute.xlu0 %7085
    %7087 = vrot.lane.b32.xlu0 %v5934, 104
    %v7088 = vpop.permute.xlu0 %7087
    %v7091 = vrot.slane %v7080, 4
    %v7092 = vsel %vm282, %v7091, %v5931
    %v7093 = vrot.slane %v5931, 4
    %v7094 = vsel %vm282, %v7080, %v7093
    %v7096 = vunpack.c.l.s4 1983009808
    %v7097 = vunpack.c.0.s8 %v7096
    %v7098 = vperm.slane %v7092, %v7097
    %v7100 = vunpack.c.l.s4 1983009808
    %v7101 = vunpack.c.0.s8 %v7100
    %v7102 = vperm.slane %v7094, %v7101
    %v7103 = vrot.slane %v7086, 4
    %v7104 = vsel %vm282, %v7103, %v7074
    %v7105 = vrot.slane %v7074, 4
    %v7106 = vsel %vm282, %v7086, %v7105
    %v7108 = vunpack.c.l.s4 1983009808
    %v7109 = vunpack.c.0.s8 %v7108
    %v7110 = vperm.slane %v7104, %v7109
    %v7112 = vunpack.c.l.s4 1983009808
    %v7113 = vunpack.c.0.s8 %v7112
    %v7114 = vperm.slane %v7106, %v7113
    %v7115 = vrot.slane %v7110, 4
    %v7116 = vsel %vm282, %v7115, %v7098
    %v7117 = vrot.slane %v7098, 4
    %v7118 = vsel %vm282, %v7110, %v7117
    %v7120 = vunpack.c.l.s4 1934713408
    %v7121 = vunpack.c.0.s8 %v7120
    %v7122 = vperm.slane %v7116, %v7121
    %v7124 = vunpack.c.l.s4 1934713408
    %v7125 = vunpack.c.0.s8 %v7124
    %v7126 = vperm.slane %v7118, %v7125
    %v7127 = vrot.slane %v7114, 4
    %v7128 = vsel %vm282, %v7127, %v7102
    %v7129 = vrot.slane %v7102, 4
    %v7130 = vsel %vm282, %v7114, %v7129
    %v7132 = vunpack.c.l.s4 1934713408
    %v7133 = vunpack.c.0.s8 %v7132
    %v7134 = vperm.slane %v7128, %v7133
    %v7136 = vunpack.c.l.s4 1934713408
    %v7137 = vunpack.c.0.s8 %v7136
    %v7138 = vperm.slane %v7130, %v7137
    %v7139 = vrot.slane %v7122, 4
    %v7140 = vsel %vm282, 0.0, %v7139
    %v7141 = vrot.slane %v7126, 4
    %v7142 = vsel %vm282, 0.0, %v7141
    %v7143 = vrot.slane %v7134, 4
    %v7144 = vsel %vm282, 0.0, %v7143
    %v7145 = vrot.slane %v7138, 4
    %v7146 = vsel %vm282, 0.0, %v7145
    %v7147 = vrot.slane %v7082, 4
    %v7148 = vsel %vm282, %v7147, %v5934
    %v7149 = vrot.slane %v5934, 4
    %v7150 = vsel %vm282, %v7082, %v7149
    %v7152 = vunpack.c.l.s4 1983009808
    %v7153 = vunpack.c.0.s8 %v7152
    %v7154 = vperm.slane %v7148, %v7153
    %v7156 = vunpack.c.l.s4 1983009808
    %v7157 = vunpack.c.0.s8 %v7156
    %v7158 = vperm.slane %v7150, %v7157
    %v7159 = vrot.slane %v7088, 4
    %v7160 = vsel %vm282, %v7159, %v7076
    %v7161 = vrot.slane %v7076, 4
    %v7162 = vsel %vm282, %v7088, %v7161
    %v7164 = vunpack.c.l.s4 1983009808
    %v7165 = vunpack.c.0.s8 %v7164
    %v7166 = vperm.slane %v7160, %v7165
    %v7168 = vunpack.c.l.s4 1983009808
    %v7169 = vunpack.c.0.s8 %v7168
    %v7170 = vperm.slane %v7162, %v7169
    %v7171 = vrot.slane %v7166, 4
    %v7172 = vsel %vm282, %v7171, %v7154
    %v7173 = vrot.slane %v7154, 4
    %v7174 = vsel %vm282, %v7166, %v7173
    %v7176 = vunpack.c.l.s4 1934713408
    %v7177 = vunpack.c.0.s8 %v7176
    %v7178 = vperm.slane %v7172, %v7177
    %v7180 = vunpack.c.l.s4 1934713408
    %v7181 = vunpack.c.0.s8 %v7180
    %v7182 = vperm.slane %v7174, %v7181
    %v7183 = vrot.slane %v7170, 4
    %v7184 = vsel %vm282, %v7183, %v7158
    %v7185 = vrot.slane %v7158, 4
    %v7186 = vsel %vm282, %v7170, %v7185
    %v7188 = vunpack.c.l.s4 1934713408
    %v7189 = vunpack.c.0.s8 %v7188
    %v7190 = vperm.slane %v7184, %v7189
    %v7192 = vunpack.c.l.s4 1934713408
    %v7193 = vunpack.c.0.s8 %v7192
    %v7194 = vperm.slane %v7186, %v7193
    %v7195 = vrot.slane %v7178, 4
    %v7196 = vsel %vm282, 0.0, %v7195
    %v7197 = vrot.slane %v7182, 4
    %v7198 = vsel %vm282, 0.0, %v7197
    %v7199 = vrot.slane %v7190, 4
    %v7200 = vsel %vm282, 0.0, %v7199
    %v7201 = vrot.slane %v7194, 4
    %v7202 = vsel %vm282, 0.0, %v7201
    %v7203 = vsel %vm282, %v7141, %v7122
    %v7205 = vunpack.c.l.s4 1983009808
    %v7206 = vunpack.c.0.s8 %v7205
    %v7207 = vperm.slane %v7203, %v7206
    %v7208 = vrot.slane %v7142, 4
    %v7209 = vsel %vm282, %v7208, %v7140
    %v7211 = vunpack.c.l.s4 1983009808
    %v7212 = vunpack.c.0.s8 %v7211
    %v7213 = vperm.slane %v7209, %v7212
    %v7214 = vsel %vm282, %v7145, %v7134
    %v7216 = vunpack.c.l.s4 1983009808
    %v7217 = vunpack.c.0.s8 %v7216
    %v7218 = vperm.slane %v7214, %v7217
    %v7219 = vrot.slane %v7146, 4
    %v7220 = vsel %vm282, %v7219, %v7144
    %v7222 = vunpack.c.l.s4 1983009808
    %v7223 = vunpack.c.0.s8 %v7222
    %v7224 = vperm.slane %v7220, %v7223
    %v7225 = vrot.slane %v7213, 4
    %v7226 = vsel %vm282, %v7225, %v7207
    %v7227 = vrot.slane %v7207, 4
    %v7228 = vsel %vm282, %v7213, %v7227
    %v7230 = vunpack.c.l.s4 1934713408
    %v7231 = vunpack.c.0.s8 %v7230
    %v7232 = vperm.slane %v7226, %v7231
    %v7234 = vunpack.c.l.s4 1934713408
    %v7235 = vunpack.c.0.s8 %v7234
    %v7236 = vperm.slane %v7228, %v7235
    %v7237 = vrot.slane %v7224, 4
    %v7238 = vsel %vm282, %v7237, %v7218
    %v7239 = vrot.slane %v7218, 4
    %v7240 = vsel %vm282, %v7224, %v7239
    %v7242 = vunpack.c.l.s4 1934713408
    %v7243 = vunpack.c.0.s8 %v7242
    %v7244 = vperm.slane %v7238, %v7243
    %v7246 = vunpack.c.l.s4 1934713408
    %v7247 = vunpack.c.0.s8 %v7246
    %v7248 = vperm.slane %v7240, %v7247
    %v7249 = vrot.slane %v7244, 4
    %v7250 = vsel %vm282, %v7249, %v7232
    %v7251 = vrot.slane %v7232, 4
    %v7252 = vsel %vm282, %v7244, %v7251
    %v7253 = vrot.slane %v7248, 4
    %v7254 = vsel %vm282, %v7253, %v7236
    %v7255 = vrot.slane %v7236, 4
    %v7256 = vsel %vm282, %v7248, %v7255
    %v7257 = vsel %vm282, %v7197, %v7178
    %v7259 = vunpack.c.l.s4 1983009808
    %v7260 = vunpack.c.0.s8 %v7259
    %v7261 = vperm.slane %v7257, %v7260
    %v7262 = vrot.slane %v7198, 4
    %v7263 = vsel %vm282, %v7262, %v7196
    %v7265 = vunpack.c.l.s4 1983009808
    %v7266 = vunpack.c.0.s8 %v7265
    %v7267 = vperm.slane %v7263, %v7266
    %v7268 = vsel %vm282, %v7201, %v7190
    %v7270 = vunpack.c.l.s4 1983009808
    %v7271 = vunpack.c.0.s8 %v7270
    %v7272 = vperm.slane %v7268, %v7271
    %v7273 = vrot.slane %v7202, 4
    %v7274 = vsel %vm282, %v7273, %v7200
    %v7276 = vunpack.c.l.s4 1983009808
    %v7277 = vunpack.c.0.s8 %v7276
    %v7278 = vperm.slane %v7274, %v7277
    %v7279 = vrot.slane %v7267, 4
    %v7280 = vsel %vm282, %v7279, %v7261
    %v7281 = vrot.slane %v7261, 4
    %v7282 = vsel %vm282, %v7267, %v7281
    %v7284 = vunpack.c.l.s4 1934713408
    %v7285 = vunpack.c.0.s8 %v7284
    %v7286 = vperm.slane %v7280, %v7285
    %v7288 = vunpack.c.l.s4 1934713408
    %v7289 = vunpack.c.0.s8 %v7288
    %v7290 = vperm.slane %v7282, %v7289
    %v7291 = vrot.slane %v7278, 4
    %v7292 = vsel %vm282, %v7291, %v7272
    %v7293 = vrot.slane %v7272, 4
    %v7294 = vsel %vm282, %v7278, %v7293
    %v7296 = vunpack.c.l.s4 1934713408
    %v7297 = vunpack.c.0.s8 %v7296
    %v7298 = vperm.slane %v7292, %v7297
    %v7300 = vunpack.c.l.s4 1934713408
    %v7301 = vunpack.c.0.s8 %v7300
    %v7302 = vperm.slane %v7294, %v7301
    %v7303 = vrot.slane %v7298, 4
    %v7304 = vsel %vm282, %v7303, %v7286
    %v7305 = vrot.slane %v7286, 4
    %v7306 = vsel %vm282, %v7298, %v7305
    %v7307 = vrot.slane %v7302, 4
    %v7308 = vsel %vm282, %v7307, %v7290
    %v7309 = vrot.slane %v7290, 4
    %v7310 = vsel %vm282, %v7302, %v7309
    %7313 = vrot.lane.b32.xlu0 %v5961, 120
    %v7314 = vpop.permute.xlu0 %7313
    %7315 = vrot.lane.b32.xlu0 %v5964, 120
    %v7316 = vpop.permute.xlu0 %7315
    %7319 = vrot.lane.b32.xlu0 %v5961, 112
    %v7320 = vpop.permute.xlu0 %7319
    %7321 = vrot.lane.b32.xlu0 %v5964, 112
    %v7322 = vpop.permute.xlu0 %7321
    %7325 = vrot.lane.b32.xlu0 %v5961, 104
    %v7326 = vpop.permute.xlu0 %7325
    %7327 = vrot.lane.b32.xlu0 %v5964, 104
    %v7328 = vpop.permute.xlu0 %7327
    %v7331 = vrot.slane %v7320, 4
    %v7332 = vsel %vm282, %v7331, %v5961
    %v7333 = vrot.slane %v5961, 4
    %v7334 = vsel %vm282, %v7320, %v7333
    %v7336 = vunpack.c.l.s4 1983009808
    %v7337 = vunpack.c.0.s8 %v7336
    %v7338 = vperm.slane %v7332, %v7337
    %v7340 = vunpack.c.l.s4 1983009808
    %v7341 = vunpack.c.0.s8 %v7340
    %v7342 = vperm.slane %v7334, %v7341
    %v7343 = vrot.slane %v7326, 4
    %v7344 = vsel %vm282, %v7343, %v7314
    %v7345 = vrot.slane %v7314, 4
    %v7346 = vsel %vm282, %v7326, %v7345
    %v7348 = vunpack.c.l.s4 1983009808
    %v7349 = vunpack.c.0.s8 %v7348
    %v7350 = vperm.slane %v7344, %v7349
    %v7352 = vunpack.c.l.s4 1983009808
    %v7353 = vunpack.c.0.s8 %v7352
    %v7354 = vperm.slane %v7346, %v7353
    %v7355 = vrot.slane %v7350, 4
    %v7356 = vsel %vm282, %v7355, %v7338
    %v7357 = vrot.slane %v7338, 4
    %v7358 = vsel %vm282, %v7350, %v7357
    %v7360 = vunpack.c.l.s4 1934713408
    %v7361 = vunpack.c.0.s8 %v7360
    %v7362 = vperm.slane %v7356, %v7361
    %v7364 = vunpack.c.l.s4 1934713408
    %v7365 = vunpack.c.0.s8 %v7364
    %v7366 = vperm.slane %v7358, %v7365
    %v7367 = vrot.slane %v7354, 4
    %v7368 = vsel %vm282, %v7367, %v7342
    %v7369 = vrot.slane %v7342, 4
    %v7370 = vsel %vm282, %v7354, %v7369
    %v7372 = vunpack.c.l.s4 1934713408
    %v7373 = vunpack.c.0.s8 %v7372
    %v7374 = vperm.slane %v7368, %v7373
    %v7376 = vunpack.c.l.s4 1934713408
    %v7377 = vunpack.c.0.s8 %v7376
    %v7378 = vperm.slane %v7370, %v7377
    %v7379 = vrot.slane %v7362, 4
    %v7380 = vsel %vm282, 0.0, %v7379
    %v7381 = vrot.slane %v7366, 4
    %v7382 = vsel %vm282, 0.0, %v7381
    %v7383 = vrot.slane %v7374, 4
    %v7384 = vsel %vm282, 0.0, %v7383
    %v7385 = vrot.slane %v7378, 4
    %v7386 = vsel %vm282, 0.0, %v7385
    %v7387 = vrot.slane %v7322, 4
    %v7388 = vsel %vm282, %v7387, %v5964
    %v7389 = vrot.slane %v5964, 4
    %v7390 = vsel %vm282, %v7322, %v7389
    %v7392 = vunpack.c.l.s4 1983009808
    %v7393 = vunpack.c.0.s8 %v7392
    %v7394 = vperm.slane %v7388, %v7393
    %v7396 = vunpack.c.l.s4 1983009808
    %v7397 = vunpack.c.0.s8 %v7396
    %v7398 = vperm.slane %v7390, %v7397
    %v7399 = vrot.slane %v7328, 4
    %v7400 = vsel %vm282, %v7399, %v7316
    %v7401 = vrot.slane %v7316, 4
    %v7402 = vsel %vm282, %v7328, %v7401
    %v7404 = vunpack.c.l.s4 1983009808
    %v7405 = vunpack.c.0.s8 %v7404
    %v7406 = vperm.slane %v7400, %v7405
    %v7408 = vunpack.c.l.s4 1983009808
    %v7409 = vunpack.c.0.s8 %v7408
    %v7410 = vperm.slane %v7402, %v7409
    %v7411 = vrot.slane %v7406, 4
    %v7412 = vsel %vm282, %v7411, %v7394
    %v7413 = vrot.slane %v7394, 4
    %v7414 = vsel %vm282, %v7406, %v7413
    %v7416 = vunpack.c.l.s4 1934713408
    %v7417 = vunpack.c.0.s8 %v7416
    %v7418 = vperm.slane %v7412, %v7417
    %v7420 = vunpack.c.l.s4 1934713408
    %v7421 = vunpack.c.0.s8 %v7420
    %v7422 = vperm.slane %v7414, %v7421
    %v7423 = vrot.slane %v7410, 4
    %v7424 = vsel %vm282, %v7423, %v7398
    %v7425 = vrot.slane %v7398, 4
    %v7426 = vsel %vm282, %v7410, %v7425
    %v7428 = vunpack.c.l.s4 1934713408
    %v7429 = vunpack.c.0.s8 %v7428
    %v7430 = vperm.slane %v7424, %v7429
    %v7432 = vunpack.c.l.s4 1934713408
    %v7433 = vunpack.c.0.s8 %v7432
    %v7434 = vperm.slane %v7426, %v7433
    %v7435 = vrot.slane %v7418, 4
    %v7436 = vsel %vm282, 0.0, %v7435
    %v7437 = vrot.slane %v7422, 4
    %v7438 = vsel %vm282, 0.0, %v7437
    %v7439 = vrot.slane %v7430, 4
    %v7440 = vsel %vm282, 0.0, %v7439
    %v7441 = vrot.slane %v7434, 4
    %v7442 = vsel %vm282, 0.0, %v7441
    %v7443 = vsel %vm282, %v7381, %v7362
    %v7445 = vunpack.c.l.s4 1983009808
    %v7446 = vunpack.c.0.s8 %v7445
    %v7447 = vperm.slane %v7443, %v7446
    %v7448 = vrot.slane %v7382, 4
    %v7449 = vsel %vm282, %v7448, %v7380
    %v7451 = vunpack.c.l.s4 1983009808
    %v7452 = vunpack.c.0.s8 %v7451
    %v7453 = vperm.slane %v7449, %v7452
    %v7454 = vsel %vm282, %v7385, %v7374
    %v7456 = vunpack.c.l.s4 1983009808
    %v7457 = vunpack.c.0.s8 %v7456
    %v7458 = vperm.slane %v7454, %v7457
    %v7459 = vrot.slane %v7386, 4
    %v7460 = vsel %vm282, %v7459, %v7384
    %v7462 = vunpack.c.l.s4 1983009808
    %v7463 = vunpack.c.0.s8 %v7462
    %v7464 = vperm.slane %v7460, %v7463
    %v7465 = vrot.slane %v7453, 4
    %v7466 = vsel %vm282, %v7465, %v7447
    %v7467 = vrot.slane %v7447, 4
    %v7468 = vsel %vm282, %v7453, %v7467
    %v7470 = vunpack.c.l.s4 1934713408
    %v7471 = vunpack.c.0.s8 %v7470
    %v7472 = vperm.slane %v7466, %v7471
    %v7474 = vunpack.c.l.s4 1934713408
    %v7475 = vunpack.c.0.s8 %v7474
    %v7476 = vperm.slane %v7468, %v7475
    %v7477 = vrot.slane %v7464, 4
    %v7478 = vsel %vm282, %v7477, %v7458
    %v7479 = vrot.slane %v7458, 4
    %v7480 = vsel %vm282, %v7464, %v7479
    %v7482 = vunpack.c.l.s4 1934713408
    %v7483 = vunpack.c.0.s8 %v7482
    %v7484 = vperm.slane %v7478, %v7483
    %v7486 = vunpack.c.l.s4 1934713408
    %v7487 = vunpack.c.0.s8 %v7486
    %v7488 = vperm.slane %v7480, %v7487
    %v7489 = vrot.slane %v7484, 4
    %v7490 = vsel %vm282, %v7489, %v7472
    %v7491 = vrot.slane %v7472, 4
    %v7492 = vsel %vm282, %v7484, %v7491
    %v7493 = vrot.slane %v7488, 4
    %v7494 = vsel %vm282, %v7493, %v7476
    %v7495 = vrot.slane %v7476, 4
    %v7496 = vsel %vm282, %v7488, %v7495
    %v7497 = vsel %vm282, %v7437, %v7418
    %v7499 = vunpack.c.l.s4 1983009808
    %v7500 = vunpack.c.0.s8 %v7499
    %v7501 = vperm.slane %v7497, %v7500
    %v7502 = vrot.slane %v7438, 4
    %v7503 = vsel %vm282, %v7502, %v7436
    %v7505 = vunpack.c.l.s4 1983009808
    %v7506 = vunpack.c.0.s8 %v7505
    %v7507 = vperm.slane %v7503, %v7506
    %v7508 = vsel %vm282, %v7441, %v7430
    %v7510 = vunpack.c.l.s4 1983009808
    %v7511 = vunpack.c.0.s8 %v7510
    %v7512 = vperm.slane %v7508, %v7511
    %v7513 = vrot.slane %v7442, 4
    %v7514 = vsel %vm282, %v7513, %v7440
    %v7516 = vunpack.c.l.s4 1983009808
    %v7517 = vunpack.c.0.s8 %v7516
    %v7518 = vperm.slane %v7514, %v7517
    %v7519 = vrot.slane %v7507, 4
    %v7520 = vsel %vm282, %v7519, %v7501
    %v7521 = vrot.slane %v7501, 4
    %v7522 = vsel %vm282, %v7507, %v7521
    %v7524 = vunpack.c.l.s4 1934713408
    %v7525 = vunpack.c.0.s8 %v7524
    %v7526 = vperm.slane %v7520, %v7525
    %v7528 = vunpack.c.l.s4 1934713408
    %v7529 = vunpack.c.0.s8 %v7528
    %v7530 = vperm.slane %v7522, %v7529
    %v7531 = vrot.slane %v7518, 4
    %v7532 = vsel %vm282, %v7531, %v7512
    %v7533 = vrot.slane %v7512, 4
    %v7534 = vsel %vm282, %v7518, %v7533
    %v7536 = vunpack.c.l.s4 1934713408
    %v7537 = vunpack.c.0.s8 %v7536
    %v7538 = vperm.slane %v7532, %v7537
    %v7540 = vunpack.c.l.s4 1934713408
    %v7541 = vunpack.c.0.s8 %v7540
    %v7542 = vperm.slane %v7534, %v7541
    %v7543 = vrot.slane %v7538, 4
    %v7544 = vsel %vm282, %v7543, %v7526
    %v7545 = vrot.slane %v7526, 4
    %v7546 = vsel %vm282, %v7538, %v7545
    %v7547 = vrot.slane %v7542, 4
    %v7548 = vsel %vm282, %v7547, %v7530
    %v7549 = vrot.slane %v7530, 4
    %v7550 = vsel %vm282, %v7542, %v7549
    %v7552 = vsel %vm632, %v7064, 0
    %v7555 = vsel %vm632, %v7250, 0
    %v7558 = vsel %vm632, %v7304, 0
    %7560 = vmatpush.xpose.msra.mxu0 0.0
    %7561 = vmatpush.xpose.msra.mxu0 0.0
    %7562 = vmatpush.xpose.msra.mxu0 0.0
    %7563 = vmatpush.xpose.msra.mxu0 0.0
    %7564 = vmatpush.xpose.msra.mxu0 0.0
    %7565 = vmatpush.xpose.msra.mxu0 0.0
    %7566 = vmatpush.xpose.msra.mxu0 0.0
    %7567 = vmatpush.xpose.msra.mxu0 0.0
    %7568 = vmatpush.xpose.msra.mxu0 0.0
    %7569 = vmatpush.xpose.msra.mxu0 0.0
    %7570 = vmatpush.xpose.msra.mxu0 0.0
    %7571 = vmatpush.xpose.msra.mxu0 0.0
    %7572 = vmatpush.xpose.msra.mxu0 0.0
    %7573 = vmatpush.xpose.msra.mxu0 0.0
    %7574 = vmatpush.xpose.msra.mxu0 %v7558
    %7575 = vmatpush.xpose.msra.mxu0 %v7555
    %7576 = vmatmul.f32.gmra.mxu0 %v7552
    %v7577 = vpop.f32.mrf.mxu0
    %v7578 = vadd.f32 0.0, %v7577
    %7579 = vdwg.mxu0
    %v7581 = vsel %vm632, %v7066, 0
    %v7584 = vsel %vm632, %v7252, 0
    %v7587 = vsel %vm632, %v7306, 0
    %7589 = vmatpush.xpose.msra.mxu0 0.0
    %7590 = vmatpush.xpose.msra.mxu0 0.0
    %7591 = vmatpush.xpose.msra.mxu0 0.0
    %7592 = vmatpush.xpose.msra.mxu0 0.0
    %7593 = vmatpush.xpose.msra.mxu0 0.0
    %7594 = vmatpush.xpose.msra.mxu0 0.0
    %7595 = vmatpush.xpose.msra.mxu0 0.0
    %7596 = vmatpush.xpose.msra.mxu0 0.0
    %7597 = vmatpush.xpose.msra.mxu0 0.0
    %7598 = vmatpush.xpose.msra.mxu0 0.0
    %7599 = vmatpush.xpose.msra.mxu0 0.0
    %7600 = vmatpush.xpose.msra.mxu0 0.0
    %7601 = vmatpush.xpose.msra.mxu0 0.0
    %7602 = vmatpush.xpose.msra.mxu0 0.0
    %7603 = vmatpush.xpose.msra.mxu0 %v7587
    %7604 = vmatpush.xpose.msra.mxu0 %v7584
    %7605 = vmatmul.f32.gmra.mxu0 %v7581
    %v7606 = vpop.f32.mrf.mxu0
    %v7607 = vadd.f32 0.0, %v7606
    %7608 = vdwg.mxu0
    %v7610 = vsel %vm632, %v7068, 0
    %v7613 = vsel %vm632, %v7254, 0
    %v7616 = vsel %vm632, %v7308, 0
    %7618 = vmatpush.xpose.msra.mxu0 0.0
    %7619 = vmatpush.xpose.msra.mxu0 0.0
    %7620 = vmatpush.xpose.msra.mxu0 0.0
    %7621 = vmatpush.xpose.msra.mxu0 0.0
    %7622 = vmatpush.xpose.msra.mxu0 0.0
    %7623 = vmatpush.xpose.msra.mxu0 0.0
    %7624 = vmatpush.xpose.msra.mxu0 0.0
    %7625 = vmatpush.xpose.msra.mxu0 0.0
    %7626 = vmatpush.xpose.msra.mxu0 0.0
    %7627 = vmatpush.xpose.msra.mxu0 0.0
    %7628 = vmatpush.xpose.msra.mxu0 0.0
    %7629 = vmatpush.xpose.msra.mxu0 0.0
    %7630 = vmatpush.xpose.msra.mxu0 0.0
    %7631 = vmatpush.xpose.msra.mxu0 0.0
    %7632 = vmatpush.xpose.msra.mxu0 %v7616
    %7633 = vmatpush.xpose.msra.mxu0 %v7613
    %7634 = vmatmul.f32.gmra.mxu0 %v7610
    %v7635 = vpop.f32.mrf.mxu0
    %v7636 = vadd.f32 0.0, %v7635
    %7637 = vdwg.mxu0
    %v7639 = vsel %vm632, %v7070, 0
    %v7642 = vsel %vm632, %v7256, 0
    %v7645 = vsel %vm632, %v7310, 0
    %7647 = vmatpush.xpose.msra.mxu0 0.0
    %7648 = vmatpush.xpose.msra.mxu0 0.0
    %7649 = vmatpush.xpose.msra.mxu0 0.0
    %7650 = vmatpush.xpose.msra.mxu0 0.0
    %7651 = vmatpush.xpose.msra.mxu0 0.0
    %7652 = vmatpush.xpose.msra.mxu0 0.0
    %7653 = vmatpush.xpose.msra.mxu0 0.0
    %7654 = vmatpush.xpose.msra.mxu0 0.0
    %7655 = vmatpush.xpose.msra.mxu0 0.0
    %7656 = vmatpush.xpose.msra.mxu0 0.0
    %7657 = vmatpush.xpose.msra.mxu0 0.0
    %7658 = vmatpush.xpose.msra.mxu0 0.0
    %7659 = vmatpush.xpose.msra.mxu0 0.0
    %7660 = vmatpush.xpose.msra.mxu0 0.0
    %7661 = vmatpush.xpose.msra.mxu0 %v7645
    %7662 = vmatpush.xpose.msra.mxu0 %v7642
    %7663 = vmatmul.f32.gmra.mxu0 %v7639
    %v7664 = vpop.f32.mrf.mxu0
    %v7665 = vadd.f32 0.0, %v7664
    %7666 = vdwg.mxu0
    %v7667 = vmul.f32 %v7578, 0.35355338
    %v7668 = vmul.f32 %v7607, 0.35355338
    %v7669 = vmul.f32 %v7636, 0.35355338
    %v7670 = vmul.f32 %v7665, 0.35355338
    %v7671 = vadd.f32 %v7667, %v3658
    %v7672 = vadd.f32 %v7668, %v3658
    %v7673 = vadd.f32 %v7669, %v3658
    %v7674 = vadd.f32 %v7670, %v3658
    %v7675 = vsel %vm1004, %v7671, -inf
    %7676 = vmax.xlane.f32.xlu0 %v7675
    %v7677 = vpop.xlane.xlu0 %7676
    %v7678 = vsel %vm1004, %v7672, -inf
    %7679 = vmax.xlane.f32.xlu0 %v7678
    %v7680 = vpop.xlane.xlu0 %7679
    %v7681 = vsel %vm1004, %v7673, -inf
    %7682 = vmax.xlane.f32.xlu0 %v7681
    %v7683 = vpop.xlane.xlu0 %7682
    %v7684 = vsel %vm1004, %v7674, -inf
    %7685 = vmax.xlane.f32.xlu0 %v7684
    %v7686 = vpop.xlane.xlu0 %7685
    %v7687 = vsub.f32 %v7671, %v7677
    %v7688 = vsub.f32 %v7672, %v7680
    %v7689 = vsub.f32 %v7673, %v7683
    %v7690 = vsub.f32 %v7674, %v7686
    %v7691 = vmul.f32 %v7687, 1.442695
    %v7692 = vpow.pop %v7691
    %v7693 = vmul.f32 %v7688, 1.442695
    %v7694 = vpow.pop %v7693
    %v7695 = vmul.f32 %v7689, 1.442695
    %v7696 = vpow.pop %v7695
    %v7697 = vmul.f32 %v7690, 1.442695
    %v7698 = vpow.pop %v7697
    %v7699 = vsel %vm1004, %v7692, 0.0
    %7700 = vadd.xlane.f32.xlu0 %v7699
    %v7701 = vpop.xlane.xlu0 %7700
    %v7702 = vsel %vm1004, %v7694, 0.0
    %7703 = vadd.xlane.f32.xlu0 %v7702
    %v7704 = vpop.xlane.xlu0 %7703
    %v7705 = vsel %vm1004, %v7696, 0.0
    %7706 = vadd.xlane.f32.xlu0 %v7705
    %v7707 = vpop.xlane.xlu0 %7706
    %v7708 = vsel %vm1004, %v7698, 0.0
    %7709 = vadd.xlane.f32.xlu0 %v7708
    %v7710 = vpop.xlane.xlu0 %7709
    %v7711 = vrcp.pop %v7701
    %v7712 = vrcp.pop %v7704
    %v7713 = vrcp.pop %v7707
    %v7714 = vrcp.pop %v7710
    %v7715 = vmul.f32 %v7692, %v7711
    %v7716 = vmul.f32 %v7694, %v7712
    %v7717 = vmul.f32 %v7696, %v7713
    %v7718 = vmul.f32 %v7698, %v7714
    %v7720 = vsel %vm1004, %v7715, 0
    %7722 = vmatpush.msra.mxu0 0.0
    %7723 = vmatpush.msra.mxu0 0.0
    %7724 = vmatpush.msra.mxu0 0.0
    %7725 = vmatpush.msra.mxu0 0.0
    %7726 = vmatpush.msra.mxu0 0.0
    %7727 = vmatpush.msra.mxu0 0.0
    %7728 = vmatpush.msra.mxu0 0.0
    %7729 = vmatpush.msra.mxu0 0.0
    %7730 = vmatpush.msra.mxu0 0.0
    %7731 = vmatpush.msra.mxu0 0.0
    %7732 = vmatpush.msra.mxu0 0.0
    %7733 = vmatpush.msra.mxu0 0.0
    %7734 = vmatpush.msra.mxu0 0.0
    %7735 = vmatpush.msra.mxu0 0.0
    %7736 = vmatpush.msra.mxu0 %v7544
    %7737 = vmatpush.msra.mxu0 %v7490
    %7738 = vmatmul.f32.gmra.mxu0 %v7720
    %v7739 = vpop.f32.mrf.mxu0
    %v7740 = vadd.f32 0.0, %v7739
    %7741 = vdwg.mxu0
    %v7743 = vsel %vm1004, %v7716, 0
    %7745 = vmatpush.msra.mxu0 0.0
    %7746 = vmatpush.msra.mxu0 0.0
    %7747 = vmatpush.msra.mxu0 0.0
    %7748 = vmatpush.msra.mxu0 0.0
    %7749 = vmatpush.msra.mxu0 0.0
    %7750 = vmatpush.msra.mxu0 0.0
    %7751 = vmatpush.msra.mxu0 0.0
    %7752 = vmatpush.msra.mxu0 0.0
    %7753 = vmatpush.msra.mxu0 0.0
    %7754 = vmatpush.msra.mxu0 0.0
    %7755 = vmatpush.msra.mxu0 0.0
    %7756 = vmatpush.msra.mxu0 0.0
    %7757 = vmatpush.msra.mxu0 0.0
    %7758 = vmatpush.msra.mxu0 0.0
    %7759 = vmatpush.msra.mxu0 %v7546
    %7760 = vmatpush.msra.mxu0 %v7492
    %7761 = vmatmul.f32.gmra.mxu0 %v7743
    %v7762 = vpop.f32.mrf.mxu0
    %v7763 = vadd.f32 0.0, %v7762
    %7764 = vdwg.mxu0
    %v7766 = vsel %vm1004, %v7717, 0
    %7768 = vmatpush.msra.mxu0 0.0
    %7769 = vmatpush.msra.mxu0 0.0
    %7770 = vmatpush.msra.mxu0 0.0
    %7771 = vmatpush.msra.mxu0 0.0
    %7772 = vmatpush.msra.mxu0 0.0
    %7773 = vmatpush.msra.mxu0 0.0
    %7774 = vmatpush.msra.mxu0 0.0
    %7775 = vmatpush.msra.mxu0 0.0
    %7776 = vmatpush.msra.mxu0 0.0
    %7777 = vmatpush.msra.mxu0 0.0
    %7778 = vmatpush.msra.mxu0 0.0
    %7779 = vmatpush.msra.mxu0 0.0
    %7780 = vmatpush.msra.mxu0 0.0
    %7781 = vmatpush.msra.mxu0 0.0
    %7782 = vmatpush.msra.mxu0 %v7548
    %7783 = vmatpush.msra.mxu0 %v7494
    %7784 = vmatmul.f32.gmra.mxu0 %v7766
    %v7785 = vpop.f32.mrf.mxu0
    %v7786 = vadd.f32 0.0, %v7785
    %7787 = vdwg.mxu0
    %v7789 = vsel %vm1004, %v7718, 0
    %7791 = vmatpush.msra.mxu0 0.0
    %7792 = vmatpush.msra.mxu0 0.0
    %7793 = vmatpush.msra.mxu0 0.0
    %7794 = vmatpush.msra.mxu0 0.0
    %7795 = vmatpush.msra.mxu0 0.0
    %7796 = vmatpush.msra.mxu0 0.0
    %7797 = vmatpush.msra.mxu0 0.0
    %7798 = vmatpush.msra.mxu0 0.0
    %7799 = vmatpush.msra.mxu0 0.0
    %7800 = vmatpush.msra.mxu0 0.0
    %7801 = vmatpush.msra.mxu0 0.0
    %7802 = vmatpush.msra.mxu0 0.0
    %7803 = vmatpush.msra.mxu0 0.0
    %7804 = vmatpush.msra.mxu0 0.0
    %7805 = vmatpush.msra.mxu0 %v7550
    %7806 = vmatpush.msra.mxu0 %v7496
    %7807 = vmatmul.f32.gmra.mxu0 %v7789
    %v7808 = vpop.f32.mrf.mxu0
    %v7809 = vadd.f32 0.0, %v7808
    %7810 = vdwg.mxu0
    %v7811 = vrot.slane %v7786, 4
    %v7812 = vsel %vm282, %v7811, %v7740
    %v7813 = vrot.slane %v7740, 4
    %v7814 = vsel %vm282, %v7786, %v7813
    %v7816 = vunpack.c.l.s4 1983009808
    %v7817 = vunpack.c.0.s8 %v7816
    %v7818 = vperm.slane %v7812, %v7817
    %v7820 = vunpack.c.l.s4 1983009808
    %v7821 = vunpack.c.0.s8 %v7820
    %v7822 = vperm.slane %v7814, %v7821
    %v7823 = vrot.slane %v7809, 4
    %v7824 = vsel %vm282, %v7823, %v7763
    %v7825 = vrot.slane %v7763, 4
    %v7826 = vsel %vm282, %v7809, %v7825
    %v7828 = vunpack.c.l.s4 1983009808
    %v7829 = vunpack.c.0.s8 %v7828
    %v7830 = vperm.slane %v7824, %v7829
    %v7832 = vunpack.c.l.s4 1983009808
    %v7833 = vunpack.c.0.s8 %v7832
    %v7834 = vperm.slane %v7826, %v7833
    %v7835 = vrot.slane %v7830, 4
    %v7836 = vsel %vm282, %v7835, %v7818
    %v7837 = vrot.slane %v7818, 4
    %v7838 = vsel %vm282, %v7830, %v7837
    %v7840 = vunpack.c.l.s4 1934713408
    %v7841 = vunpack.c.0.s8 %v7840
    %v7842 = vperm.slane %v7836, %v7841
    %v7844 = vunpack.c.l.s4 1934713408
    %v7845 = vunpack.c.0.s8 %v7844
    %v7846 = vperm.slane %v7838, %v7845
    %v7847 = vrot.slane %v7834, 4
    %v7848 = vsel %vm282, %v7847, %v7822
    %v7849 = vrot.slane %v7822, 4
    %v7850 = vsel %vm282, %v7834, %v7849
    %v7852 = vunpack.c.l.s4 1934713408
    %v7853 = vunpack.c.0.s8 %v7852
    %v7854 = vperm.slane %v7848, %v7853
    %v7856 = vunpack.c.l.s4 1934713408
    %v7857 = vunpack.c.0.s8 %v7856
    %v7858 = vperm.slane %v7850, %v7857
    %v7859 = vrot.slane %v7842, 4
    %v7860 = vsel %vm282, 0.0, %v7859
    %v7861 = vrot.slane %v7846, 4
    %v7862 = vsel %vm282, 0.0, %v7861
    %v7863 = vrot.slane %v7854, 4
    %v7864 = vsel %vm282, 0.0, %v7863
    %v7865 = vrot.slane %v7858, 4
    %v7866 = vsel %vm282, 0.0, %v7865
    %v7867 = vsel %vm282, %v7861, %v7842
    %v7869 = vunpack.c.l.s4 1983009808
    %v7870 = vunpack.c.0.s8 %v7869
    %v7871 = vperm.slane %v7867, %v7870
    %v7872 = vrot.slane %v7862, 4
    %v7873 = vsel %vm282, %v7872, %v7860
    %v7875 = vunpack.c.l.s4 1983009808
    %v7876 = vunpack.c.0.s8 %v7875
    %v7877 = vperm.slane %v7873, %v7876
    %v7878 = vsel %vm282, %v7865, %v7854
    %v7880 = vunpack.c.l.s4 1983009808
    %v7881 = vunpack.c.0.s8 %v7880
    %v7882 = vperm.slane %v7878, %v7881
    %v7883 = vrot.slane %v7866, 4
    %v7884 = vsel %vm282, %v7883, %v7864
    %v7886 = vunpack.c.l.s4 1983009808
    %v7887 = vunpack.c.0.s8 %v7886
    %v7888 = vperm.slane %v7884, %v7887
    %v7889 = vrot.slane %v7877, 4
    %v7890 = vsel %vm282, %v7889, %v7871
    %v7891 = vrot.slane %v7871, 4
    %v7892 = vsel %vm282, %v7877, %v7891
    %v7894 = vunpack.c.l.s4 1934713408
    %v7895 = vunpack.c.0.s8 %v7894
    %v7896 = vperm.slane %v7890, %v7895
    %v7898 = vunpack.c.l.s4 1934713408
    %v7899 = vunpack.c.0.s8 %v7898
    %v7900 = vperm.slane %v7892, %v7899
    %v7901 = vrot.slane %v7888, 4
    %v7902 = vsel %vm282, %v7901, %v7882
    %v7903 = vrot.slane %v7882, 4
    %v7904 = vsel %vm282, %v7888, %v7903
    %v7906 = vunpack.c.l.s4 1934713408
    %v7907 = vunpack.c.0.s8 %v7906
    %v7908 = vperm.slane %v7902, %v7907
    %v7910 = vunpack.c.l.s4 1934713408
    %v7911 = vunpack.c.0.s8 %v7910
    %v7912 = vperm.slane %v7904, %v7911
    %v7913 = vrot.slane %v7908, 4
    %v7914 = vsel %vm282, %v7913, %v7896
    %v7915 = vrot.slane %v7896, 4
    %v7916 = vsel %vm282, %v7908, %v7915
    %v7917 = vrot.slane %v7912, 4
    %v7918 = vsel %vm282, %v7917, %v7900
    %v7919 = vrot.slane %v7900, 4
    %v7920 = vsel %vm282, %v7912, %v7919
    %7922 = vrot.lane.b32.xlu0 %v7916, 8
    %v7923 = vpop.permute.xlu0 %7922
    %7926 = vrot.lane.b32.xlu0 %v7918, 16
    %v7927 = vpop.permute.xlu0 %7926
    %7930 = vrot.lane.b32.xlu0 %v7920, 24
    %v7931 = vpop.permute.xlu0 %7930
    %v7933 = vsel %vm632, %v7914, %v7923
    %v7934 = vsel %vm1004, %v7933, %v7927
    %v7935 = vsel %vm1006, %v7934, %v7931
    %v7936 = vperm.slane %v4135, 5
    %v7938 = vsel %vm111, %v6950, 0
    %v7941 = vsel %vm111, %v7935, 0
    %7943 = vmatpush.msra.mxu0 0.0
    %7944 = vmatpush.msra.mxu0 0.0
    %7945 = vmatpush.msra.mxu0 0.0
    %7946 = vmatpush.msra.mxu0 0.0
    %7947 = vmatpush.msra.mxu0 0.0
    %7948 = vmatpush.msra.mxu0 0.0
    %7949 = vmatpush.msra.mxu0 0.0
    %7950 = vmatpush.msra.mxu0 0.0
    %7951 = vmatpush.msra.mxu0 0.0
    %7952 = vmatpush.msra.mxu0 0.0
    %7953 = vmatpush.msra.mxu0 0.0
    %7954 = vmatpush.msra.mxu0 0.0
    %7955 = vmatpush.msra.mxu0 %v4132
    %7956 = vmatpush.msra.mxu0 %v4131
    %7957 = vmatpush.msra.mxu0 %v4130
    %7958 = vmatpush.msra.mxu0 %v4129
    %7959 = vmatmul.f32.gmra.mxu0 %v7938
    %v7960 = vpop.f32.mrf.mxu0
    %v7961 = vadd.f32 %v7936, %v7960
    %7962 = vmatmul.f32.gmra.mxu0 %v7941
    %v7963 = vpop.f32.mrf.mxu0
    %v7964 = vadd.f32 %v7936, %v7963
    %7965 = vdwg.mxu0
    %v7966 = vadd.f32 %v5800, %v7961
    %v7967 = vadd.f32 %v5801, %v7964
    %v7968 = vsel %vm111, %v7966, 0.0
    %7969 = vadd.xlane.f32.xlu0 %v7968
    %v7970 = vpop.xlane.xlu0 %7969
    %v7971 = vsel %vm111, %v7967, 0.0
    %7972 = vadd.xlane.f32.xlu0 %v7971
    %v7973 = vpop.xlane.xlu0 %7972
    %v7974 = vmul.f32 %v7970, %v124
    %v7975 = vmul.f32 %v7973, %v124
    %v7976 = vsub.f32 %v7966, %v7974
    %v7977 = vsub.f32 %v7967, %v7975
    %v7978 = vmul.f32 %v7976, %v7976
    %v7979 = vmul.f32 %v7977, %v7977
    %v7980 = vsel %vm111, %v7978, 0.0
    %7981 = vadd.xlane.f32.xlu0 %v7980
    %v7982 = vpop.xlane.xlu0 %7981
    %v7983 = vsel %vm111, %v7979, 0.0
    %7984 = vadd.xlane.f32.xlu0 %v7983
    %v7985 = vpop.xlane.xlu0 %7984
    %v7986 = vmul.f32 %v7982, 0.032258064
    %v7987 = vmul.f32 %v7985, 0.032258064
    %v7988 = vrsqrt.pop %v7986
    %v7989 = vmul.f32 %v7988, %v7986
    %v7990 = vmul.f32 %v7989, %v7988
    %v7991 = vmul.f32 0.5, %v7990
    %v7992 = vsub.f32 1.5, %v7991
    %v7993 = vmul.f32 %v7988, %v7992
    %v7994 = vmul.f32 %v7986, %v7993
    %vm7995 = vcmp.eq.f32.partialorder %v7986, inf
    %v7996 = vsel %vm7995, %v7986, %v7994
    %vm7997 = vcmp.eq.f32.partialorder %v7986, 0.0
    %v7998 = vand.u32 %v7986, 2147483648
    %v7999 = vsel %vm7997, %v7998, %v7996
    %v8000 = vrsqrt.pop %v7987
    %v8001 = vmul.f32 %v8000, %v7987
    %v8002 = vmul.f32 %v8001, %v8000
    %v8003 = vmul.f32 0.5, %v8002
    %v8004 = vsub.f32 1.5, %v8003
    %v8005 = vmul.f32 %v8000, %v8004
    %v8006 = vmul.f32 %v7987, %v8005
    %vm8007 = vcmp.eq.f32.partialorder %v7987, inf
    %v8008 = vsel %vm8007, %v7987, %v8006
    %vm8009 = vcmp.eq.f32.partialorder %v7987, 0.0
    %v8010 = vand.u32 %v7987, 2147483648
    %v8011 = vsel %vm8009, %v8010, %v8008
    %v8012 = vadd.f32 %v7999, 1e-06
    %v8013 = vadd.f32 %v8011, 1e-06
    %v8014 = vrsqrt.pop %v8012
    %v8015 = vmul.f32 %v8014, %v8012
    %v8016 = vmul.f32 %v8015, %v8014
    %v8017 = vmul.f32 0.5, %v8016
    %v8018 = vsub.f32 1.5, %v8017
    %v8019 = vmul.f32 %v8014, %v8018
    %vm8020 = vweird.f32 %v8012
    %vm8021 = vweird.f32 %v8014
    %vm8022 = vmor %vm8020, %vm8021
    %v8023 = vsel %vm8022, %v8014, %v8019
    %v8024 = vrsqrt.pop %v8013
    %v8025 = vmul.f32 %v8024, %v8013
    %v8026 = vmul.f32 %v8025, %v8024
    %v8027 = vmul.f32 0.5, %v8026
    %v8028 = vsub.f32 1.5, %v8027
    %v8029 = vmul.f32 %v8024, %v8028
    %vm8030 = vweird.f32 %v8013
    %vm8031 = vweird.f32 %v8024
    %vm8032 = vmor %vm8030, %vm8031
    %v8033 = vsel %vm8032, %v8024, %v8029
    %v8034 = vmul.f32 %v7976, %v8023
    %v8035 = vmul.f32 %v7977, %v8033
    %v8036 = vperm.slane %v4134, 4
    %v8037 = vmul.f32 %v8036, %v8034
    %v8038 = vmul.f32 %v8036, %v8035
    %v8039 = vperm.slane %v4134, 5
    %v8040 = vadd.f32 %v8037, %v8039
    %v8041 = vadd.f32 %v8038, %v8039
    %v8043 = vperm.slane %v4142, 0
    %v8046 = vsel %vm111, %v8040, 0
    %v8049 = vsel %vm111, %v8041, 0
    %8051 = vmatpush.msra.mxu0 0.0
    %8052 = vmatpush.msra.mxu0 0.0
    %8053 = vmatpush.msra.mxu0 0.0
    %8054 = vmatpush.msra.mxu0 0.0
    %8055 = vmatpush.msra.mxu0 0.0
    %8056 = vmatpush.msra.mxu0 0.0
    %8057 = vmatpush.msra.mxu0 0.0
    %8058 = vmatpush.msra.mxu0 0.0
    %8059 = vmatpush.msra.mxu0 0.0
    %8060 = vmatpush.msra.mxu0 0.0
    %8061 = vmatpush.msra.mxu0 0.0
    %8062 = vmatpush.msra.mxu0 0.0
    %8063 = vmatpush.msra.mxu0 %v4140
    %8064 = vmatpush.msra.mxu0 %v4139
    %8065 = vmatpush.msra.mxu0 %v4138
    %8066 = vmatpush.msra.mxu0 %v4137
    %8067 = vmatmul.f32.gmra.mxu0 %v8046
    %v8068 = vpop.f32.mrf.mxu0
    %v8069 = vadd.f32 %v8043, %v8068
    %8070 = vmatmul.f32.gmra.mxu0 %v8049
    %v8071 = vpop.f32.mrf.mxu0
    %v8072 = vadd.f32 %v8043, %v8071
    %8073 = vdwg.mxu0
    %v8074 = vmax.f32 %v8069, 0.0
    %v8075 = vmax.f32 %v8072, 0.0
    %v8077 = vsel %vm4065, %v8074, 0
    %v8080 = vsel %vm4065, %v8075, 0
    %8082 = vmatpush.msra.mxu0 0.0
    %8083 = vmatpush.msra.mxu0 0.0
    %8084 = vmatpush.msra.mxu0 0.0
    %8085 = vmatpush.msra.mxu0 0.0
    %8086 = vmatpush.msra.mxu0 0.0
    %8087 = vmatpush.msra.mxu0 0.0
    %8088 = vmatpush.msra.mxu0 0.0
    %8089 = vmatpush.msra.mxu0 0.0
    %8090 = vmatpush.msra.mxu0 %v4151
    %8091 = vmatpush.msra.mxu0 %v4150
    %8092 = vmatpush.msra.mxu0 %v4149
    %8093 = vmatpush.msra.mxu0 %v4148
    %8094 = vmatpush.msra.mxu0 %v4147
    %8095 = vmatpush.msra.mxu0 %v4146
    %8096 = vmatpush.msra.mxu0 %v4145
    %8097 = vmatpush.msra.mxu0 %v4144
    %8098 = vmatmul.f32.gmra.mxu0 %v8077
    %v8099 = vpop.f32.mrf.mxu0
    %v8100 = vadd.f32 0.0, %v8099
    %8101 = vmatmul.f32.gmra.mxu0 %v8080
    %v8102 = vpop.f32.mrf.mxu0
    %v8103 = vadd.f32 0.0, %v8102
    %8104 = vdwg.mxu0
    %v8105 = vadd.f32 %v7966, %v8100
    %v8106 = vadd.f32 %v7967, %v8103
    %v8107 = vperm.slane %v4135, 6
    %v8108 = vadd.f32 %v8105, %v8107
    %v8109 = vadd.f32 %v8106, %v8107
    %v8110 = vld [vmem:[%s9] sm:$0x3]
    %v8111 = vsel %vm111, %v8108, 0.0
    %8112 = vadd.xlane.f32.xlu0 %v8111
    %v8113 = vpop.xlane.xlu0 %8112
    %v8114 = vsel %vm111, %v8109, 0.0
    %8115 = vadd.xlane.f32.xlu0 %v8114
    %v8116 = vpop.xlane.xlu0 %8115
    %v8117 = vmul.f32 %v8113, %v124
    %v8118 = vmul.f32 %v8116, %v124
    %v8119 = vsub.f32 %v8108, %v8117
    %v8120 = vsub.f32 %v8109, %v8118
    %v8121 = vmul.f32 %v8119, %v8119
    %v8122 = vmul.f32 %v8120, %v8120
    %v8123 = vsel %vm111, %v8121, 0.0
    %8124 = vadd.xlane.f32.xlu0 %v8123
    %v8125 = vpop.xlane.xlu0 %8124
    %v8126 = vsel %vm111, %v8122, 0.0
    %8127 = vadd.xlane.f32.xlu0 %v8126
    %v8128 = vpop.xlane.xlu0 %8127
    %v8129 = vmul.f32 %v8125, 0.032258064
    %v8130 = vmul.f32 %v8128, 0.032258064
    %v8131 = vrsqrt.pop %v8129
    %v8132 = vmul.f32 %v8131, %v8129
    %v8133 = vmul.f32 %v8132, %v8131
    %v8134 = vmul.f32 0.5, %v8133
    %v8135 = vsub.f32 1.5, %v8134
    %v8136 = vmul.f32 %v8131, %v8135
    %v8137 = vmul.f32 %v8129, %v8136
    %vm8138 = vcmp.eq.f32.partialorder %v8129, inf
    %v8139 = vsel %vm8138, %v8129, %v8137
    %vm8140 = vcmp.eq.f32.partialorder %v8129, 0.0
    %v8141 = vand.u32 %v8129, 2147483648
    %v8142 = vsel %vm8140, %v8141, %v8139
    %v8143 = vrsqrt.pop %v8130
    %v8144 = vmul.f32 %v8143, %v8130
    %v8145 = vmul.f32 %v8144, %v8143
    %v8146 = vmul.f32 0.5, %v8145
    %v8147 = vsub.f32 1.5, %v8146
    %v8148 = vmul.f32 %v8143, %v8147
    %v8149 = vmul.f32 %v8130, %v8148
    %vm8150 = vcmp.eq.f32.partialorder %v8130, inf
    %v8151 = vsel %vm8150, %v8130, %v8149
    %vm8152 = vcmp.eq.f32.partialorder %v8130, 0.0
    %v8153 = vand.u32 %v8130, 2147483648
    %v8154 = vsel %vm8152, %v8153, %v8151
    %v8155 = vadd.f32 %v8142, 1e-06
    %v8156 = vadd.f32 %v8154, 1e-06
    %v8157 = vrsqrt.pop %v8155
    %v8158 = vmul.f32 %v8157, %v8155
    %v8159 = vmul.f32 %v8158, %v8157
    %v8160 = vmul.f32 0.5, %v8159
    %v8161 = vsub.f32 1.5, %v8160
    %v8162 = vmul.f32 %v8157, %v8161
    %vm8163 = vweird.f32 %v8155
    %vm8164 = vweird.f32 %v8157
    %vm8165 = vmor %vm8163, %vm8164
    %v8166 = vsel %vm8165, %v8157, %v8162
    %v8167 = vrsqrt.pop %v8156
    %v8168 = vmul.f32 %v8167, %v8156
    %v8169 = vmul.f32 %v8168, %v8167
    %v8170 = vmul.f32 0.5, %v8169
    %v8171 = vsub.f32 1.5, %v8170
    %v8172 = vmul.f32 %v8167, %v8171
    %vm8173 = vweird.f32 %v8156
    %vm8174 = vweird.f32 %v8167
    %vm8175 = vmor %vm8173, %vm8174
    %v8176 = vsel %vm8175, %v8167, %v8172
    %v8177 = vmul.f32 %v8119, %v8166
    %v8178 = vmul.f32 %v8120, %v8176
    %v8179 = vperm.slane %v8110, 0
    %v8180 = vmul.f32 %v8179, %v8177
    %v8181 = vmul.f32 %v8179, %v8178
    %v8182 = vperm.slane %v8110, 1
    %v8183 = vadd.f32 %v8180, %v8182
    %v8184 = vadd.f32 %v8181, %v8182
    %8185 = vst.msk [vmem:[#allocation5] sm:$0xff] %vm111, %v8183
    %8186 = vst.msk [vmem:[#allocation5 + $0x8] sm:$0xff] %vm111, %v8184
    // Predicated region
    $region46: #{tpu_custom_call.1} parent=1 // pred_check
      _
    $region47: #{tpu_custom_call.1} parent=1 // pred_check_branch
      %8188 = sbr.rel (0) target = $region49
    $region48: #{tpu_custom_call.1} parent=1 // pred_region
      %8190 = vsyncadd [#allocation4], 0
      %s8191 = sshll.u32 [#allocation5], 4
      %s8192 = int_to_ptr.vmem [resolvable:$true] %s8191
      %s8193 = sshll.u32 %s10, 4
      %s8194 = int_to_ptr.hbm [resolvable:$true] %s8193
      %8199 = dma.vmem_to_hbm [thread:$0]  %s8192, 256, %s8194, [#allocation4], 128, 128, 8
    $region49: #{tpu_custom_call.1} parent=1 // pred_fallthru
      _
    // Predicated region
    $region50: #{tpu_custom_call.1} parent=1 // pred_check
      _
    $region51: #{tpu_custom_call.1} parent=1 // pred_check_branch
      %8201 = sbr.rel (0) target = $region53
    $region52: #{tpu_custom_call.1} parent=1 // pred_region
      %8203 = dma.done [#allocation4], 256
    $region53: #{tpu_custom_call.1} parent=1 // pred_fallthru
      _
    %8204 = vsyncpa [#allocation3], 1
    %8205 = vsyncpa [#allocation4], 1

</llo_original>
